<compile_context>
chip_gen: v7x
topology: tpu7x:2x2x1
jax: 0.10.0
libtpu: 0.0.40
codegen_flags: <defaults>
</compile_context>

<pallas_src>
import functools

import numpy as np
import jax
import jax.numpy as jnp
from jax.experimental import pallas as pl
from jax.experimental.pallas import tpu as pltpu

BN_EPS = 1e-5
LANE = 128                        # pad channel dims to multiples of the 128-wide lane axis
TM_MAX = 512                      # row-tile upper bound (256-1024 sensible; 512 ~ HBM roofline)
VMEM_LIMIT_BYTES = 48 * 1024 * 1024   # bounded scoped VMEM (fits v7x 64 MiB physical)


# ----------------------------------------------------------------------------
# small shape helpers
# ----------------------------------------------------------------------------
def _round_up(x, m):
    return (x + m - 1) // m * m


def _pick_tm(m_rows):
    return min(TM_MAX, _round_up(m_rows, 8))


def _pad_rows(x2d, tm):
    m = x2d.shape[0]
    mp = _round_up(m, tm)
    if mp != m:
        x2d = jnp.pad(x2d, ((0, mp - m), (0, 0)))     # zero rows: do not bias BN stats
    return x2d


def _pad_last(x, c):
    pad = c - x.shape[-1]
    if pad:
        x = jnp.pad(x, [(0, 0)] * (x.ndim - 1) + [(0, pad)])
    return x


def _pad2d(a, shape):
    return jnp.pad(a, ((0, shape[0] - a.shape[0]), (0, shape[1] - a.shape[1])))


# ----------------------------------------------------------------------------
# Pass 1 kernels: conv (bf16 MXU, f32 acc) + per-channel sum / sum-of-squares
# ----------------------------------------------------------------------------
def _mm_stats_kernel(x_ref, w_ref, y_ref, stats_ref):
    """One row tile of y = x @ w plus BN-stat accumulation (resident (2, C) output)."""
    @pl.when(pl.program_id(0) == 0)
    def _init():
        stats_ref[...] = jnp.zeros_like(stats_ref)

    y = jnp.dot(x_ref[...].astype(jnp.bfloat16), w_ref[...],
                preferred_element_type=jnp.float32)              # (tm, Cout) f32
    y_ref[...] = y
    stats_ref[...] += jnp.concatenate(
        [jnp.sum(y, axis=0, keepdims=True),
         jnp.sum(y * y, axis=0, keepdims=True)], axis=0)


def _matmul_stats(x2d, w2d, *, tm):
    mp, cin = x2d.shape
    cout = w2d.shape[1]
    y, stats = pl.pallas_call(
        _mm_stats_kernel,
        grid=(mp // tm,),
        in_specs=[pl.BlockSpec((tm, cin), lambda i: (i, 0)),
                  pl.BlockSpec((cin, cout), lambda i: (0, 0))],
        out_specs=[pl.BlockSpec((tm, cout), lambda i: (i, 0)),
                   pl.BlockSpec((2, cout), lambda i: (0, 0))],
        out_shape=[jax.ShapeDtypeStruct((mp, cout), jnp.float32),
                   jax.ShapeDtypeStruct((2, cout), jnp.float32)],
        compiler_params=pltpu.CompilerParams(
            dimension_semantics=("arbitrary",),   # stats accumulate sequentially over tiles
            vmem_limit_bytes=VMEM_LIMIT_BYTES),
    )(x2d, w2d)
    return y, stats


def _conv3x3_s1_kernel(x_ref, w_ref, y_ref, stats_ref, *, out_hw):
    """3x3 / stride-1 conv for one image: 9 unit-stride taps assembled into a
    (Ho*Wo, 9*Cin) patch, one deep bf16 MXU matmul, plus BN-stat accumulation."""
    ho, wo = out_hw
    cin = x_ref.shape[-1]
    cout = w_ref.shape[-1]

    @pl.when(pl.program_id(0) == 0)
    def _init():
        stats_ref[...] = jnp.zeros_like(stats_ref)

    x = x_ref[...]                                               # (1, Ho+2, Wo+2, Cin) f32
    taps = [jax.lax.slice(x, (0, kh, kw, 0), (1, kh + ho, kw + wo, cin))
            for kh in range(3) for kw in range(3)]
    patch = jnp.concatenate(taps, axis=-1)                       # (1, Ho, Wo, 9*Cin)
    patch = patch.reshape(ho * wo, 9 * cin).astype(jnp.bfloat16)
    y = jnp.dot(patch, w_ref[...], preferred_element_type=jnp.float32)
    y_ref[...] = y.reshape(1, ho * wo, cout)
    stats_ref[...] += jnp.concatenate(
        [jnp.sum(y, axis=0, keepdims=True),
         jnp.sum(y * y, axis=0, keepdims=True)], axis=0)


def _conv3x3_s1_stats(xp, w2d, *, ho, wo):
    n, hp, wp, cin = xp.shape
    cout = w2d.shape[-1]
    y, stats = pl.pallas_call(
        functools.partial(_conv3x3_s1_kernel, out_hw=(ho, wo)),
        grid=(n,),
        in_specs=[pl.BlockSpec((1, hp, wp, cin), lambda i: (i, 0, 0, 0)),
                  pl.BlockSpec((9 * cin, cout), lambda i: (0, 0))],
        out_specs=[pl.BlockSpec((1, ho * wo, cout), lambda i: (i, 0, 0)),
                   pl.BlockSpec((2, cout), lambda i: (0, 0))],
        out_shape=[jax.ShapeDtypeStruct((n, ho * wo, cout), jnp.float32),
                   jax.ShapeDtypeStruct((2, cout), jnp.float32)],
        compiler_params=pltpu.CompilerParams(
            dimension_semantics=("arbitrary",),
            vmem_limit_bytes=VMEM_LIMIT_BYTES),
    )(xp, w2d)
    return y.reshape(n * ho * wo, cout), stats


# ----------------------------------------------------------------------------
# Pass 2 kernel: BN apply (+ optional residual, + optional ReLU)
# ----------------------------------------------------------------------------
def _bn_apply_kernel(y_ref, scale_ref, shift_ref, *rest, relu, has_res):
    if has_res:
        res_ref, o_ref = rest
    else:
        (o_ref,) = rest
    out = y_ref[...] * scale_ref[...] + shift_ref[...]
    if has_res:
        out = out + res_ref[...]
    if relu:
        out = jnp.maximum(out, 0.0)
    o_ref[...] = out


def _bn_apply(y2d, scale, shift, *, tm, relu, residual=None):
    mp, c = y2d.shape
    inputs = [y2d, scale.reshape(1, c), shift.reshape(1, c)]
    in_specs = [pl.BlockSpec((tm, c), lambda i: (i, 0)),
                pl.BlockSpec((1, c), lambda i: (0, 0)),
                pl.BlockSpec((1, c), lambda i: (0, 0))]
    if residual is not None:
        inputs.append(residual)
        in_specs.append(pl.BlockSpec((tm, c), lambda i: (i, 0)))
    return pl.pallas_call(
        functools.partial(_bn_apply_kernel, relu=relu, has_res=residual is not None),
        grid=(mp // tm,),
        in_specs=in_specs,
        out_specs=pl.BlockSpec((tm, c), lambda i: (i, 0)),
        out_shape=jax.ShapeDtypeStruct((mp, c), jnp.float32),
        compiler_params=pltpu.CompilerParams(
            dimension_semantics=("parallel",),        # independent tiles -> megacore split
            vmem_limit_bytes=VMEM_LIMIT_BYTES),
    )(*inputs)


def _bn_scale_shift(stats, m_real, gamma, beta):
    """Global batch stats (sum / sumsq over the real rows) -> per-channel scale/shift."""
    c = stats.shape[1]
    mean = stats[0] / m_real
    var = jnp.maximum(stats[1] / m_real - mean * mean, 0.0)      # biased (train-mode) var
    scale = _pad_last(gamma, c) * jax.lax.rsqrt(var + BN_EPS)
    shift = _pad_last(beta, c) - mean * scale
    return scale, shift


# ----------------------------------------------------------------------------
# Conv + BN stage wrappers (channel-padded rows in, channel-padded rows out)
# ----------------------------------------------------------------------------
def conv1x1_bn(x_rows, w_hwio, gamma, beta, *, relu, residual=None):
    """1x1 conv + train-mode BN [+ residual] [+ ReLU] on flattened (M, Cin_pad) rows."""
    m, cin_pad = x_rows.shape
    cout = w_hwio.shape[-1]
    cout_pad = _round_up(cout, LANE)
    w2d = _pad2d(w_hwio.reshape(-1, cout), (cin_pad, cout_pad)).astype(jnp.bfloat16)
    tm = _pick_tm(m)
    y, stats = _matmul_stats(_pad_rows(x_rows, tm), w2d, tm=tm)
    scale, shift = _bn_scale_shift(stats, m, gamma, beta)
    res = None if residual is None else _pad_rows(residual, tm)
    out = _bn_apply(y, scale, shift, tm=tm, relu=relu, residual=res)
    return out[:m]


def conv3x3_bn(x_nhwc, w_hwio, gamma, beta, *, stride, relu):
    """3x3 conv (padding=1, given stride) + BN + ReLU; x channels already lane-padded."""
    n, h, w, cpad = x_nhwc.shape
    cout = w_hwio.shape[-1]
    cout_pad = _round_up(cout, LANE)
    ho = (h - 1) // stride + 1
    wo = (w - 1) // stride + 1
    m = n * ho * wo

    xp = jnp.pad(x_nhwc, ((0, 0), (1, 1), (1, 1), (0, 0)))       # spatial halo (pad=1)
    wp = jnp.pad(w_hwio, ((0, 0), (0, 0),
                          (0, cpad - w_hwio.shape[2]), (0, cout_pad - cout)))
    w2d = wp.reshape(9 * cpad, cout_pad).astype(jnp.bfloat16)

    tm = _pick_tm(m)
    if stride == 1:
        y_rows, stats = _conv3x3_s1_stats(xp, w2d, ho=ho, wo=wo)
        y_rows = _pad_rows(y_rows, tm)
    else:
        # TODO(synk): stride>1 falls back to wrapper-side im2col (9x HBM read of this
        # activation); an in-kernel polyphase / halo BlockSpec would avoid that traffic.
        taps = [xp[:, kh:kh + stride * (ho - 1) + 1:stride,
                   kw:kw + stride * (wo - 1) + 1:stride, :]
                for kh in range(3) for kw in range(3)]
        rows = jnp.concatenate(taps, axis=-1).reshape(m, 9 * cpad)
        y_rows, stats = _matmul_stats(_pad_rows(rows, tm), w2d, tm=tm)

    scale, shift = _bn_scale_shift(stats, m, gamma, beta)
    out = _bn_apply(y_rows, scale, shift, tm=tm, relu=relu)
    return out[:m], (ho, wo)


# ----------------------------------------------------------------------------
# FedPara parameter construction (plain-JAX glue, mirrors the PyTorch __init__)
# ----------------------------------------------------------------------------
def calc_low_rank(in_c, out_c, k, ratio=0.1):
    r1 = int(np.ceil(np.sqrt(out_c)))
    r2 = int(np.ceil(np.sqrt(in_c)))
    r = np.max((r1, r2))
    num_target = out_c * in_c * k ** 2 * ratio
    r3 = (np.sqrt((out_c + in_c) ** 2 / (4 * k ** 4) + num_target / (2 * k ** 2))
          - (out_c + in_c) / (2 * k ** 2))
    r3 = int(np.ceil(r3))
    return int(np.max((r, r3)))


def init_lowrank(key, in_c, out_c, r, k):
    gain = np.sqrt(2.0)                      # calculate_gain('relu', 0)
    std_t = gain / np.sqrt(r * k * k)        # fan_in of T = r * k * k
    std_o = gain / np.sqrt(out_c)            # fan_in of O = out_c
    std_i = gain / np.sqrt(in_c)             # fan_in of I = in_c
    kt, ko, ki = jax.random.split(key, 3)
    T = jax.random.normal(kt, (r, r, k, k), jnp.float32) * std_t
    O = jax.random.normal(ko, (r, out_c), jnp.float32) * std_o
    I = jax.random.normal(ki, (r, in_c), jnp.float32) * std_i
    return T, O, I


def lowrank_weight(T, O, I):
    return jnp.einsum('xyzw,xo,yi->oizw', T, O, I)   # (out, in, k, k)  OIHW


def fedpara_conv_weight(key, in_c, out_c, k, ratio=0.1):
    r = calc_low_rank(in_c, out_c, k, ratio)
    k1, k2 = jax.random.split(key)
    W1 = lowrank_weight(*init_lowrank(k1, in_c, out_c, r, k))
    W2 = lowrank_weight(*init_lowrank(k2, in_c, out_c, r, k))
    return jnp.transpose(W1 * W2, (2, 3, 1, 0))      # Hadamard (FedPara); OIHW -> HWIO


def init_bottleneck_params(key, in_planes, planes, stride=1, expansion=4):
    ks = jax.random.split(key, 4)
    out_planes = expansion * planes
    params = {
        'w1': fedpara_conv_weight(ks[0], in_planes, planes, 1),
        'g1': jnp.ones((planes,), jnp.float32), 'b1': jnp.zeros((planes,), jnp.float32),
        'w2': fedpara_conv_weight(ks[1], planes, planes, 3),
        'g2': jnp.ones((planes,), jnp.float32), 'b2': jnp.zeros((planes,), jnp.float32),
        'w3': fedpara_conv_weight(ks[2], planes, out_planes, 1),
        'g3': jnp.ones((out_planes,), jnp.float32), 'b3': jnp.zeros((out_planes,), jnp.float32),
    }
    if stride != 1 or in_planes != out_planes:
        params['w_sc'] = fedpara_conv_weight(ks[3], in_planes, out_planes, 1)
        params['g_sc'] = jnp.ones((out_planes,), jnp.float32)
        params['b_sc'] = jnp.zeros((out_planes,), jnp.float32)
    return params


# ----------------------------------------------------------------------------
# Bottleneck forward (NCHW in / NCHW out, matching the PyTorch module)
# ----------------------------------------------------------------------------
@functools.partial(jax.jit, static_argnames=("stride",))
def bottleneck_forward(x_nchw, params, stride=1):
    x = jnp.transpose(x_nchw, (0, 2, 3, 1)).astype(jnp.float32)   # NCHW -> NHWC
    n, h, w, cin = x.shape
    cpad = _round_up(cin, LANE)
    x = _pad_last(x, cpad)                  # lane-dense channels; padded lanes stay 0
    x_rows = x.reshape(n * h * w, cpad)

    # conv1 (1x1) + BN + ReLU
    out = conv1x1_bn(x_rows, params['w1'], params['g1'], params['b1'], relu=True)
    out = out.reshape(n, h, w, out.shape[-1])

    # conv2 (3x3, stride, pad 1) + BN + ReLU
    out, (ho, wo) = conv3x3_bn(out, params['w2'], params['g2'], params['b2'],
                               stride=stride, relu=True)

    # shortcut
    if 'w_sc' in params:
        xs = x if stride == 1 else x[:, ::stride, ::stride, :]
        sc = conv1x1_bn(xs.reshape(n * ho * wo, cpad),
                        params['w_sc'], params['g_sc'], params['b_sc'], relu=False)
    else:
        sc = x_rows                          # identity shortcut (stride==1, Cin==4*planes)

    # conv3 (1x1) + BN + residual add + ReLU
    out = conv1x1_bn(out, params['w3'], params['g3'], params['b3'],
                     relu=True, residual=sc)
    out_planes = params['w3'].shape[-1]
    out = out.reshape(n, ho, wo, -1)[..., :out_planes]
    return jnp.transpose(out, (0, 3, 1, 2))  # NHWC -> NCHW


# ----------------------------------------------------------------------------
# Pure-JAX references for correctness checks
# ----------------------------------------------------------------------------
def _ref_conv_bn(x, w, gamma, beta, stride, padding, relu, residual=None,
                 op_dtype=jnp.float32):
    prec = jax.lax.Precision.HIGHEST if op_dtype == jnp.float32 else None
    out = jax.lax.conv_general_dilated(
        x.astype(op_dtype), w.astype(op_dtype), (stride, stride),
        [(padding, padding), (padding, padding)],
        dimension_numbers=('NHWC', 'HWIO', 'NHWC'),
        precision=prec, preferred_element_type=jnp.float32)
    mean = out.mean(axis=(0, 1, 2), keepdims=True)
    var = ((out - mean) ** 2).mean(axis=(0, 1, 2), keepdims=True)
    out = (out - mean) * gamma.reshape(1, 1, 1, -1) * jax.lax.rsqrt(var + BN_EPS) \
        + beta.reshape(1, 1, 1, -1)
    if residual is not None:
        out = out + residual
    if relu:
        out = jnp.maximum(out, 0.0)
    return out


def _ref_bottleneck(x_nchw, params, stride=1, op_dtype=jnp.float32):
    x = jnp.transpose(x_nchw, (0, 2, 3, 1))
    out = _ref_conv_bn(x, params['w1'], params['g1'], params['b1'], 1, 0, True,
                       op_dtype=op_dtype)
    out = _ref_conv_bn(out, params['w2'], params['g2'], params['b2'], stride, 1, True,
                       op_dtype=op_dtype)
    if 'w_sc' in params:
        sc = _ref_conv_bn(x, params['w_sc'], params['g_sc'], params['b_sc'],
                          stride, 0, False, op_dtype=op_dtype)
    else:
        sc = x
    out = _ref_conv_bn(out, params['w3'], params['g3'], params['b3'], 1, 0, True,
                       residual=sc, op_dtype=op_dtype)
    return jnp.transpose(out, (0, 3, 1, 2))


if __name__ == "__main__":
    root = jax.random.PRNGKey(0)

    configs = [
        # (in_planes, planes, stride, N, H, W)
        (4, 4, 1, 2, 24, 24),   # projection shortcut; multi-tile rows + row-pad handling
        (8, 4, 2, 2, 16, 16),   # strided block: strided 3x3 path + strided shortcut
    ]
    for idx, (in_planes, planes, stride, n, h, w) in enumerate(configs):
        k_params, k_x = jax.random.split(jax.random.fold_in(root, idx))
        x = jax.random.normal(k_x, (n, in_planes, h, w), jnp.float32)   # NCHW input
        params = init_bottleneck_params(k_params, in_planes, planes, stride=stride)

        out = jax.block_until_ready(bottleneck_forward(x, params, stride=stride))
        ho = (h - 1) // stride + 1
        wo = (w - 1) // stride + 1
        assert out.shape == (n, 4 * planes, ho, wo), out.shape

        # Tight check vs. a reference that also feeds the MXU bf16 operands (f32 accumulate).
        ref_bf16 = jax.block_until_ready(
            _ref_bottleneck(x, params, stride=stride, op_dtype=jnp.bfloat16))
        np.testing.assert_allclose(np.asarray(out), np.asarray(ref_bf16),
                                   rtol=5e-3, atol=5e-3)

        # Loose check vs. the pure-f32 module semantics (gap = bf16 MXU operand rounding).
        ref_f32 = jax.block_until_ready(
            _ref_bottleneck(x, params, stride=stride, op_dtype=jnp.float32))
        np.testing.assert_allclose(np.asarray(out), np.asarray(ref_f32),
                                   rtol=5e-2, atol=1e-1)

    print("KERNEL_OK")
</pallas_src>

<mosaic_0001>
module attributes {stable_mosaic.version = 11 : i64} {
  func.func @_mm_stats_kernel(%arg0: i32, %arg1: memref<512x128xf32, #tpu.memory_space<vmem>>, %arg2: memref<128x128xbf16, #tpu.memory_space<vmem>>, %arg3: memref<512x128xf32, #tpu.memory_space<vmem>>, %arg4: memref<2x128xf32, #tpu.memory_space<vmem>>) attributes {dimension_semantics = [#tpu.dimension_semantics<arbitrary>], iteration_bounds = array<i64: 3>, scalar_prefetch = 0 : i64, scratch_operands = 0 : i64, tpu.core_type = #tpu.core_type<tc>, window_params = [{transform_indices = @transform_0, window_bounds = array<i64: 512, 128>}, {pipeline_mode = #tpu.pipeline_mode<synchronous>, transform_indices = @transform_1, window_bounds = array<i64: 128, 128>}, {transform_indices = @transform_2, window_bounds = array<i64: 512, 128>}, {pipeline_mode = #tpu.pipeline_mode<synchronous>, transform_indices = @transform_3, window_bounds = array<i64: 2, 128>}]} {
    %c0_i32 = arith.constant 0 : i32
    %0 = arith.cmpi eq, %arg0, %c0_i32 : i32
    %1 = arith.extui %0 : i1 to i32
    %c0_i32_0 = arith.constant 0 : i32
    %2 = arith.cmpi ne, %1, %c0_i32_0 : i32
    scf.if %2 {
      %cst_12 = arith.constant 0.000000e+00 : f32
      %17 = vector.broadcast %cst_12 : f32 to vector<2x128xf32>
      %c0_13 = arith.constant 0 : index
      %c0_14 = arith.constant 0 : index
      %18 = vector.load %arg4[%c0_13, %c0_14] : memref<2x128xf32, #tpu.memory_space<vmem>>, vector<2x128xf32>
      tpu.vector_store %arg4[%c0_13, %c0_14], %17 {strides = array<i32>} : memref<2x128xf32, #tpu.memory_space<vmem>>, vector<2x128xf32>,
    } else {
    }
    %c0 = arith.constant 0 : index
    %c0_1 = arith.constant 0 : index
    %3 = vector.load %arg1[%c0, %c0_1] : memref<512x128xf32, #tpu.memory_space<vmem>>, vector<512x128xf32>
    %4 = arith.truncf %3 : vector<512x128xf32> to vector<512x128xbf16>
    %c0_2 = arith.constant 0 : index
    %c0_3 = arith.constant 0 : index
    %5 = vector.load %arg2[%c0_2, %c0_3] : memref<128x128xbf16, #tpu.memory_space<vmem>>, vector<128x128xbf16>
    %cst = arith.constant dense<0.000000e+00> : vector<512x128xf32>
    %6 = tpu.matmul %4, %5, %cst {dimension_numbers = #tpu.dot_dimension_numbers<[1], [0], [0], [1], [0, 0, 1, 1], [], []>} : vector<512x128xbf16>, vector<128x128xbf16>, vector<512x128xf32> -> vector<512x128xf32>
    %c0_4 = arith.constant 0 : index
    %c0_5 = arith.constant 0 : index
    %7 = vector.load %arg3[%c0_4, %c0_5] : memref<512x128xf32, #tpu.memory_space<vmem>>, vector<512x128xf32>
    tpu.vector_store %arg3[%c0_4, %c0_5], %6 {strides = array<i32>} : memref<512x128xf32, #tpu.memory_space<vmem>>, vector<512x128xf32>,
    %c0_6 = arith.constant 0 : index
    %c0_7 = arith.constant 0 : index
    %8 = vector.load %arg4[%c0_6, %c0_7] : memref<2x128xf32, #tpu.memory_space<vmem>>, vector<2x128xf32>
    %cst_8 = arith.constant dense<0.000000e+00> : vector<128xf32>
    %9 = vector.multi_reduction <add>, %6, %cst_8 [0] : vector<512x128xf32> to vector<128xf32>
    %10 = vector.shape_cast %9 : vector<128xf32> to vector<1x128xf32>
    %11 = arith.mulf %6, %6 : vector<512x128xf32>
    %cst_9 = arith.constant dense<0.000000e+00> : vector<128xf32>
    %12 = vector.multi_reduction <add>, %11, %cst_9 [0] : vector<512x128xf32> to vector<128xf32>
    %13 = vector.shape_cast %12 : vector<128xf32> to vector<1x128xf32>
    %14 = tpu.concatenate %10, %13 in 0 : vector<1x128xf32>, vector<1x128xf32> -> vector<2x128xf32>
    %15 = arith.addf %8, %14 : vector<2x128xf32>
    %c0_10 = arith.constant 0 : index
    %c0_11 = arith.constant 0 : index
    %16 = vector.load %arg4[%c0_10, %c0_11] : memref<2x128xf32, #tpu.memory_space<vmem>>, vector<2x128xf32>
    tpu.vector_store %arg4[%c0_10, %c0_11], %15 {strides = array<i32>} : memref<2x128xf32, #tpu.memory_space<vmem>>, vector<2x128xf32>,
    return
  }
  func.func @transform_0(%arg0: i32) -> (i32, i32) {
    %c0_i32 = arith.constant 0 : i32
    %c0_i32_0 = arith.constant 0 : i32
    return %arg0, %c0_i32 : i32, i32
  }
  func.func @transform_1(%arg0: i32) -> (i32, i32) {
    %c0_i32 = arith.constant 0 : i32
    %c0_i32_0 = arith.constant 0 : i32
    %c0_i32_1 = arith.constant 0 : i32
    return %c0_i32, %c0_i32_0 : i32, i32
  }
  func.func @transform_2(%arg0: i32) -> (i32, i32) {
    %c0_i32 = arith.constant 0 : i32
    %c0_i32_0 = arith.constant 0 : i32
    return %arg0, %c0_i32 : i32, i32
  }
  func.func @transform_3(%arg0: i32) -> (i32, i32) {
    %c0_i32 = arith.constant 0 : i32
    %c0_i32_0 = arith.constant 0 : i32
    %c0_i32_1 = arith.constant 0 : i32
    return %c0_i32, %c0_i32_0 : i32, i32
  }
}

module attributes {stable_mosaic.version = 11 : i64} {
  func.func @_bn_apply_kernel(%arg0: i32, %arg1: memref<512x128xf32, #tpu.memory_space<vmem>>, %arg2: memref<1x128xf32, #tpu.memory_space<vmem>>, %arg3: memref<1x128xf32, #tpu.memory_space<vmem>>, %arg4: memref<512x128xf32, #tpu.memory_space<vmem>>) attributes {dimension_semantics = [#tpu.dimension_semantics<parallel>], iteration_bounds = array<i64: 3>, scalar_prefetch = 0 : i64, scratch_operands = 0 : i64, tpu.core_type = #tpu.core_type<tc>, window_params = [{transform_indices = @transform_0, window_bounds = array<i64: 512, 128>}, {pipeline_mode = #tpu.pipeline_mode<synchronous>, transform_indices = @transform_1, window_bounds = array<i64: 1, 128>}, {pipeline_mode = #tpu.pipeline_mode<synchronous>, transform_indices = @transform_2, window_bounds = array<i64: 1, 128>}, {transform_indices = @transform_3, window_bounds = array<i64: 512, 128>}]} {
    %c0 = arith.constant 0 : index
    %c0_0 = arith.constant 0 : index
    %0 = vector.load %arg1[%c0, %c0_0] : memref<512x128xf32, #tpu.memory_space<vmem>>, vector<512x128xf32>
    %c0_1 = arith.constant 0 : index
    %c0_2 = arith.constant 0 : index
    %1 = vector.load %arg2[%c0_1, %c0_2] : memref<1x128xf32, #tpu.memory_space<vmem>>, vector<1x128xf32>
    %2 = vector.broadcast %1 : vector<1x128xf32> to vector<512x128xf32>
    %3 = arith.mulf %0, %2 : vector<512x128xf32>
    %c0_3 = arith.constant 0 : index
    %c0_4 = arith.constant 0 : index
    %4 = vector.load %arg3[%c0_3, %c0_4] : memref<1x128xf32, #tpu.memory_space<vmem>>, vector<1x128xf32>
    %5 = vector.broadcast %4 : vector<1x128xf32> to vector<512x128xf32>
    %6 = arith.addf %3, %5 : vector<512x128xf32>
    %cst = arith.constant 0.000000e+00 : f32
    %7 = vector.broadcast %cst : f32 to vector<512x128xf32>
    %8 = arith.maximumf %6, %7 : vector<512x128xf32>
    %c0_5 = arith.constant 0 : index
    %c0_6 = arith.constant 0 : index
    %9 = vector.load %arg4[%c0_5, %c0_6] : memref<512x128xf32, #tpu.memory_space<vmem>>, vector<512x128xf32>
    tpu.vector_store %arg4[%c0_5, %c0_6], %8 {strides = array<i32>} : memref<512x128xf32, #tpu.memory_space<vmem>>, vector<512x128xf32>,
    return
  }
  func.func @transform_0(%arg0: i32) -> (i32, i32) {
    %c0_i32 = arith.constant 0 : i32
    %c0_i32_0 = arith.constant 0 : i32
    return %arg0, %c0_i32 : i32, i32
  }
  func.func @transform_1(%arg0: i32) -> (i32, i32) {
    %c0_i32 = arith.constant 0 : i32
    %c0_i32_0 = arith.constant 0 : i32
    %c0_i32_1 = arith.constant 0 : i32
    return %c0_i32, %c0_i32_0 : i32, i32
  }
  func.func @transform_2(%arg0: i32) -> (i32, i32) {
    %c0_i32 = arith.constant 0 : i32
    %c0_i32_0 = arith.constant 0 : i32
    %c0_i32_1 = arith.constant 0 : i32
    return %c0_i32, %c0_i32_0 : i32, i32
  }
  func.func @transform_3(%arg0: i32) -> (i32, i32) {
    %c0_i32 = arith.constant 0 : i32
    %c0_i32_0 = arith.constant 0 : i32
    return %arg0, %c0_i32 : i32, i32
  }
}

module attributes {stable_mosaic.version = 11 : i64} {
  func.func @_conv3x3_s1_kernel(%arg0: i32, %arg1: memref<1x26x26x128xf32, #tpu.memory_space<vmem>>, %arg2: memref<1152x128xbf16, #tpu.memory_space<vmem>>, %arg3: memref<1x576x128xf32, #tpu.memory_space<vmem>>, %arg4: memref<2x128xf32, #tpu.memory_space<vmem>>) attributes {dimension_semantics = [#tpu.dimension_semantics<arbitrary>], iteration_bounds = array<i64: 2>, scalar_prefetch = 0 : i64, scratch_operands = 0 : i64, tpu.core_type = #tpu.core_type<tc>, window_params = [{transform_indices = @transform_0, window_bounds = array<i64: 1, 26, 26, 128>}, {pipeline_mode = #tpu.pipeline_mode<synchronous>, transform_indices = @transform_1, window_bounds = array<i64: 1152, 128>}, {transform_indices = @transform_2, window_bounds = array<i64: 1, 576, 128>}, {pipeline_mode = #tpu.pipeline_mode<synchronous>, transform_indices = @transform_3, window_bounds = array<i64: 2, 128>}]} {
    %c0_i32 = arith.constant 0 : i32
    %0 = arith.cmpi eq, %arg0, %c0_i32 : i32
    %1 = arith.extui %0 : i1 to i32
    %c0_i32_0 = arith.constant 0 : i32
    %2 = arith.cmpi ne, %1, %c0_i32_0 : i32
    scf.if %2 {
      %cst_15 = arith.constant 0.000000e+00 : f32
      %29 = vector.broadcast %cst_15 : f32 to vector<2x128xf32>
      %c0_16 = arith.constant 0 : index
      %c0_17 = arith.constant 0 : index
      %30 = vector.load %arg4[%c0_16, %c0_17] : memref<2x128xf32, #tpu.memory_space<vmem>>, vector<2x128xf32>
      tpu.vector_store %arg4[%c0_16, %c0_17], %29 {strides = array<i32>} : memref<2x128xf32, #tpu.memory_space<vmem>>, vector<2x128xf32>,
    } else {
    }
    %c0 = arith.constant 0 : index
    %c0_1 = arith.constant 0 : index
    %c0_2 = arith.constant 0 : index
    %c0_3 = arith.constant 0 : index
    %3 = vector.load %arg1[%c0, %c0_1, %c0_2, %c0_3] : memref<1x26x26x128xf32, #tpu.memory_space<vmem>>, vector<1x26x26x128xf32>
    %4 = vector.extract_strided_slice %3 {offsets = [0, 0, 0, 0], sizes = [1, 24, 24, 128], strides = [1, 1, 1, 1]} : vector<1x26x26x128xf32> to vector<1x24x24x128xf32>
    %5 = vector.extract_strided_slice %3 {offsets = [0, 0, 1, 0], sizes = [1, 24, 24, 128], strides = [1, 1, 1, 1]} : vector<1x26x26x128xf32> to vector<1x24x24x128xf32>
    %6 = vector.extract_strided_slice %3 {offsets = [0, 0, 2, 0], sizes = [1, 24, 24, 128], strides = [1, 1, 1, 1]} : vector<1x26x26x128xf32> to vector<1x24x24x128xf32>
    %7 = vector.extract_strided_slice %3 {offsets = [0, 1, 0, 0], sizes = [1, 24, 24, 128], strides = [1, 1, 1, 1]} : vector<1x26x26x128xf32> to vector<1x24x24x128xf32>
    %8 = vector.extract_strided_slice %3 {offsets = [0, 1, 1, 0], sizes = [1, 24, 24, 128], strides = [1, 1, 1, 1]} : vector<1x26x26x128xf32> to vector<1x24x24x128xf32>
    %9 = vector.extract_strided_slice %3 {offsets = [0, 1, 2, 0], sizes = [1, 24, 24, 128], strides = [1, 1, 1, 1]} : vector<1x26x26x128xf32> to vector<1x24x24x128xf32>
    %10 = vector.extract_strided_slice %3 {offsets = [0, 2, 0, 0], sizes = [1, 24, 24, 128], strides = [1, 1, 1, 1]} : vector<1x26x26x128xf32> to vector<1x24x24x128xf32>
    %11 = vector.extract_strided_slice %3 {offsets = [0, 2, 1, 0], sizes = [1, 24, 24, 128], strides = [1, 1, 1, 1]} : vector<1x26x26x128xf32> to vector<1x24x24x128xf32>
    %12 = vector.extract_strided_slice %3 {offsets = [0, 2, 2, 0], sizes = [1, 24, 24, 128], strides = [1, 1, 1, 1]} : vector<1x26x26x128xf32> to vector<1x24x24x128xf32>
    %13 = tpu.concatenate %4, %5, %6, %7, %8, %9, %10, %11, %12 in 3 : vector<1x24x24x128xf32>, vector<1x24x24x128xf32>, vector<1x24x24x128xf32>, vector<1x24x24x128xf32>, vector<1x24x24x128xf32>, vector<1x24x24x128xf32>, vector<1x24x24x128xf32>, vector<1x24x24x128xf32>, vector<1x24x24x128xf32> -> vector<1x24x24x1152xf32>
    %14 = vector.shape_cast %13 : vector<1x24x24x1152xf32> to vector<576x1152xf32>
    %15 = arith.truncf %14 : vector<576x1152xf32> to vector<576x1152xbf16>
    %c0_4 = arith.constant 0 : index
    %c0_5 = arith.constant 0 : index
    %16 = vector.load %arg2[%c0_4, %c0_5] : memref<1152x128xbf16, #tpu.memory_space<vmem>>, vector<1152x128xbf16>
    %cst = arith.constant dense<0.000000e+00> : vector<576x128xf32>
    %17 = tpu.matmul %15, %16, %cst {dimension_numbers = #tpu.dot_dimension_numbers<[1], [0], [0], [1], [0, 0, 1, 1], [], []>} : vector<576x1152xbf16>, vector<1152x128xbf16>, vector<576x128xf32> -> vector<576x128xf32>
    %18 = vector.shape_cast %17 : vector<576x128xf32> to vector<1x576x128xf32>
    %c0_6 = arith.constant 0 : index
    %c0_7 = arith.constant 0 : index
    %c0_8 = arith.constant 0 : index
    %19 = vector.load %arg3[%c0_6, %c0_7, %c0_8] : memref<1x576x128xf32, #tpu.memory_space<vmem>>, vector<1x576x128xf32>
    tpu.vector_store %arg3[%c0_6, %c0_7, %c0_8], %18 {strides = array<i32>} : memref<1x576x128xf32, #tpu.memory_space<vmem>>, vector<1x576x128xf32>,
    %c0_9 = arith.constant 0 : index
    %c0_10 = arith.constant 0 : index
    %20 = vector.load %arg4[%c0_9, %c0_10] : memref<2x128xf32, #tpu.memory_space<vmem>>, vector<2x128xf32>
    %cst_11 = arith.constant dense<0.000000e+00> : vector<128xf32>
    %21 = vector.multi_reduction <add>, %17, %cst_11 [0] : vector<576x128xf32> to vector<128xf32>
    %22 = vector.shape_cast %21 : vector<128xf32> to vector<1x128xf32>
    %23 = arith.mulf %17, %17 : vector<576x128xf32>
    %cst_12 = arith.constant dense<0.000000e+00> : vector<128xf32>
    %24 = vector.multi_reduction <add>, %23, %cst_12 [0] : vector<576x128xf32> to vector<128xf32>
    %25 = vector.shape_cast %24 : vector<128xf32> to vector<1x128xf32>
    %26 = tpu.concatenate %22, %25 in 0 : vector<1x128xf32>, vector<1x128xf32> -> vector<2x128xf32>
    %27 = arith.addf %20, %26 : vector<2x128xf32>
    %c0_13 = arith.constant 0 : index
    %c0_14 = arith.constant 0 : index
    %28 = vector.load %arg4[%c0_13, %c0_14] : memref<2x128xf32, #tpu.memory_space<vmem>>, vector<2x128xf32>
    tpu.vector_store %arg4[%c0_13, %c0_14], %27 {strides = array<i32>} : memref<2x128xf32, #tpu.memory_space<vmem>>, vector<2x128xf32>,
    return
  }
  func.func @transform_0(%arg0: i32) -> (i32, i32, i32, i32) {
    %c0_i32 = arith.constant 0 : i32
    %c0_i32_0 = arith.constant 0 : i32
    %c0_i32_1 = arith.constant 0 : i32
    %c0_i32_2 = arith.constant 0 : i32
    return %arg0, %c0_i32, %c0_i32_0, %c0_i32_1 : i32, i32, i32, i32
  }
  func.func @transform_1(%arg0: i32) -> (i32, i32) {
    %c0_i32 = arith.constant 0 : i32
    %c0_i32_0 = arith.constant 0 : i32
    %c0_i32_1 = arith.constant 0 : i32
    return %c0_i32, %c0_i32_0 : i32, i32
  }
  func.func @transform_2(%arg0: i32) -> (i32, i32, i32) {
    %c0_i32 = arith.constant 0 : i32
    %c0_i32_0 = arith.constant 0 : i32
    %c0_i32_1 = arith.constant 0 : i32
    return %arg0, %c0_i32, %c0_i32_0 : i32, i32, i32
  }
  func.func @transform_3(%arg0: i32) -> (i32, i32) {
    %c0_i32 = arith.constant 0 : i32
    %c0_i32_0 = arith.constant 0 : i32
    %c0_i32_1 = arith.constant 0 : i32
    return %c0_i32, %c0_i32_0 : i32, i32
  }
}

module attributes {stable_mosaic.version = 11 : i64} {
  func.func @_bn_apply_kernel(%arg0: i32, %arg1: memref<512x128xf32, #tpu.memory_space<vmem>>, %arg2: memref<1x128xf32, #tpu.memory_space<vmem>>, %arg3: memref<1x128xf32, #tpu.memory_space<vmem>>, %arg4: memref<512x128xf32, #tpu.memory_space<vmem>>) attributes {dimension_semantics = [#tpu.dimension_semantics<parallel>], iteration_bounds = array<i64: 3>, scalar_prefetch = 0 : i64, scratch_operands = 0 : i64, tpu.core_type = #tpu.core_type<tc>, window_params = [{transform_indices = @transform_0, window_bounds = array<i64: 512, 128>}, {pipeline_mode = #tpu.pipeline_mode<synchronous>, transform_indices = @transform_1, window_bounds = array<i64: 1, 128>}, {pipeline_mode = #tpu.pipeline_mode<synchronous>, transform_indices = @transform_2, window_bounds = array<i64: 1, 128>}, {transform_indices = @transform_3, window_bounds = array<i64: 512, 128>}]} {
    %c0 = arith.constant 0 : index
    %c0_0 = arith.constant 0 : index
    %0 = vector.load %arg1[%c0, %c0_0] : memref<512x128xf32, #tpu.memory_space<vmem>>, vector<512x128xf32>
    %c0_1 = arith.constant 0 : index
    %c0_2 = arith.constant 0 : index
    %1 = vector.load %arg2[%c0_1, %c0_2] : memref<1x128xf32, #tpu.memory_space<vmem>>, vector<1x128xf32>
    %2 = vector.broadcast %1 : vector<1x128xf32> to vector<512x128xf32>
    %3 = arith.mulf %0, %2 : vector<512x128xf32>
    %c0_3 = arith.constant 0 : index
    %c0_4 = arith.constant 0 : index
    %4 = vector.load %arg3[%c0_3, %c0_4] : memref<1x128xf32, #tpu.memory_space<vmem>>, vector<1x128xf32>
    %5 = vector.broadcast %4 : vector<1x128xf32> to vector<512x128xf32>
    %6 = arith.addf %3, %5 : vector<512x128xf32>
    %c0_5 = arith.constant 0 : index
    %c0_6 = arith.constant 0 : index
    %7 = vector.load %arg4[%c0_5, %c0_6] : memref<512x128xf32, #tpu.memory_space<vmem>>, vector<512x128xf32>
    tpu.vector_store %arg4[%c0_5, %c0_6], %6 {strides = array<i32>} : memref<512x128xf32, #tpu.memory_space<vmem>>, vector<512x128xf32>,
    return
  }
  func.func @transform_0(%arg0: i32) -> (i32, i32) {
    %c0_i32 = arith.constant 0 : i32
    %c0_i32_0 = arith.constant 0 : i32
    return %arg0, %c0_i32 : i32, i32
  }
  func.func @transform_1(%arg0: i32) -> (i32, i32) {
    %c0_i32 = arith.constant 0 : i32
    %c0_i32_0 = arith.constant 0 : i32
    %c0_i32_1 = arith.constant 0 : i32
    return %c0_i32, %c0_i32_0 : i32, i32
  }
  func.func @transform_2(%arg0: i32) -> (i32, i32) {
    %c0_i32 = arith.constant 0 : i32
    %c0_i32_0 = arith.constant 0 : i32
    %c0_i32_1 = arith.constant 0 : i32
    return %c0_i32, %c0_i32_0 : i32, i32
  }
  func.func @transform_3(%arg0: i32) -> (i32, i32) {
    %c0_i32 = arith.constant 0 : i32
    %c0_i32_0 = arith.constant 0 : i32
    return %arg0, %c0_i32 : i32, i32
  }
}

module attributes {stable_mosaic.version = 11 : i64} {
  func.func @_bn_apply_kernel(%arg0: i32, %arg1: memref<512x128xf32, #tpu.memory_space<vmem>>, %arg2: memref<1x128xf32, #tpu.memory_space<vmem>>, %arg3: memref<1x128xf32, #tpu.memory_space<vmem>>, %arg4: memref<512x128xf32, #tpu.memory_space<vmem>>, %arg5: memref<512x128xf32, #tpu.memory_space<vmem>>) attributes {dimension_semantics = [#tpu.dimension_semantics<parallel>], iteration_bounds = array<i64: 3>, scalar_prefetch = 0 : i64, scratch_operands = 0 : i64, tpu.core_type = #tpu.core_type<tc>, window_params = [{transform_indices = @transform_0, window_bounds = array<i64: 512, 128>}, {pipeline_mode = #tpu.pipeline_mode<synchronous>, transform_indices = @transform_1, window_bounds = array<i64: 1, 128>}, {pipeline_mode = #tpu.pipeline_mode<synchronous>, transform_indices = @transform_2, window_bounds = array<i64: 1, 128>}, {transform_indices = @transform_3, window_bounds = array<i64: 512, 128>}, {transform_indices = @transform_4, window_bounds = array<i64: 512, 128>}]} {
    %c0 = arith.constant 0 : index
    %c0_0 = arith.constant 0 : index
    %0 = vector.load %arg1[%c0, %c0_0] : memref<512x128xf32, #tpu.memory_space<vmem>>, vector<512x128xf32>
    %c0_1 = arith.constant 0 : index
    %c0_2 = arith.constant 0 : index
    %1 = vector.load %arg2[%c0_1, %c0_2] : memref<1x128xf32, #tpu.memory_space<vmem>>, vector<1x128xf32>
    %2 = vector.broadcast %1 : vector<1x128xf32> to vector<512x128xf32>
    %3 = arith.mulf %0, %2 : vector<512x128xf32>
    %c0_3 = arith.constant 0 : index
    %c0_4 = arith.constant 0 : index
    %4 = vector.load %arg3[%c0_3, %c0_4] : memref<1x128xf32, #tpu.memory_space<vmem>>, vector<1x128xf32>
    %5 = vector.broadcast %4 : vector<1x128xf32> to vector<512x128xf32>
    %6 = arith.addf %3, %5 : vector<512x128xf32>
    %c0_5 = arith.constant 0 : index
    %c0_6 = arith.constant 0 : index
    %7 = vector.load %arg4[%c0_5, %c0_6] : memref<512x128xf32, #tpu.memory_space<vmem>>, vector<512x128xf32>
    %8 = arith.addf %6, %7 : vector<512x128xf32>
    %cst = arith.constant 0.000000e+00 : f32
    %9 = vector.broadcast %cst : f32 to vector<512x128xf32>
    %10 = arith.maximumf %8, %9 : vector<512x128xf32>
    %c0_7 = arith.constant 0 : index
    %c0_8 = arith.constant 0 : index
    %11 = vector.load %arg5[%c0_7, %c0_8] : memref<512x128xf32, #tpu.memory_space<vmem>>, vector<512x128xf32>
    tpu.vector_store %arg5[%c0_7, %c0_8], %10 {strides = array<i32>} : memref<512x128xf32, #tpu.memory_space<vmem>>, vector<512x128xf32>,
    return
  }
  func.func @transform_0(%arg0: i32) -> (i32, i32) {
    %c0_i32 = arith.constant 0 : i32
    %c0_i32_0 = arith.constant 0 : i32
    return %arg0, %c0_i32 : i32, i32
  }
  func.func @transform_1(%arg0: i32) -> (i32, i32) {
    %c0_i32 = arith.constant 0 : i32
    %c0_i32_0 = arith.constant 0 : i32
    %c0_i32_1 = arith.constant 0 : i32
    return %c0_i32, %c0_i32_0 : i32, i32
  }
  func.func @transform_2(%arg0: i32) -> (i32, i32) {
    %c0_i32 = arith.constant 0 : i32
    %c0_i32_0 = arith.constant 0 : i32
    %c0_i32_1 = arith.constant 0 : i32
    return %c0_i32, %c0_i32_0 : i32, i32
  }
  func.func @transform_3(%arg0: i32) -> (i32, i32) {
    %c0_i32 = arith.constant 0 : i32
    %c0_i32_0 = arith.constant 0 : i32
    return %arg0, %c0_i32 : i32, i32
  }
  func.func @transform_4(%arg0: i32) -> (i32, i32) {
    %c0_i32 = arith.constant 0 : i32
    %c0_i32_0 = arith.constant 0 : i32
    return %arg0, %c0_i32 : i32, i32
  }
}

</mosaic_0001>

<llo_original>
// kernel: bottleneck_forward.9
$region0: #{bottleneck_forward.9}
  #allocation0 [shape = 'u32[]', space=smem, size = 0x4, offset = 0x4, fixed_abs, tag = 'smem constant byte address 0x4 - core index']
  #allocation1 [shape = 'u32[144,128]{1,0:T(1,128)}', space=vmem, size = 0x12000, scoped, tag = 'internal scratch']
  %s0 = inlined_call_operand.vmem [shape: f32[1536,128], index: 0, kind: input, shape index: {}]
  %s1 = inlined_call_operand.vmem [shape: f32[1,128], index: 1, kind: input, shape index: {}]
  %s2 = inlined_call_operand.vmem [shape: f32[1,128], index: 2, kind: input, shape index: {}]
  %s3 = inlined_call_operand.vmem [shape: f32[1536,128], index: 3, kind: output, shape index: {}]
  %s4 = sld [smem:[#allocation0]]
  $region45: #{bottleneck_forward.9} parent=0
    _
  %s6 = ssub.s32 1, %s4
  %s7 = scalar_select 0, %s6, %s4
  loop: start=0, step=1, limit=5
  $region2: #{bottleneck_forward.9} parent=0 // loop_pre_header
    _
  $region3: #{bottleneck_forward.9} parent=0 // loop_header
    %s9 = sphi 0, %s13
    %p10 = scmp.ge.s32.totalorder %s9, 5
    %s19 = sphi 0, %s21
    %s22 = sphi 0, %s19
    %s23 = sphi 0, %s22
    %s39 = sphi 0, %s23
    %s43 = sphi 0, %s43
    %s45 = sphi 0, %s43
    %s46 = sphi 0, %s45
    %s60 = sphi 0, %s46
    %s64 = sphi 0, %s64
    %s66 = sphi 0, %s64
    %s67 = sphi 0, %s66
    %s81 = sphi 0, %s67
    %s87 = sphi 0, %s89
    %s90 = sphi 0, %s87
    %s91 = sphi 0, %s90
    %s107 = sphi 0, %s91
  $region4: #{bottleneck_forward.9} parent=0 // loop_header_branch
    %12 = sbr.rel (%p10) target = $region8
  $region5: #{bottleneck_forward.9} parent=0 // loop_body
    %s14 = ssub.s32 %s9, 1
    %s15 = ssub.s32 %s9, 2
    %s16 = sadd.s32 %s9, 1
    %s17 = ssub.s32 %s9, %s16
    %p18 = scmp.eq.s32.totalorder %s17, 0
    %s20 = sadd.s32 %s19, 1
    %s21 = scalar_select %p18, %s19, %s20
    %p24 = pneg %p18
    %p25 = scmp.eq.s32.totalorder %s9, 2
    %p26 = por %p24, %p25
    %p27 = scmp.ne.s32.totalorder %s19, %s22
    %p28 = scmp.eq.s32.totalorder %s9, 0
    %p29 = por %p27, %p28
    %p30 = scmp.ne.s32.totalorder %s19, %s22
    %p31 = scmp.eq.s32.totalorder %s14, 2
    %p32 = por %p30, %p31
    %p33 = scmp.ne.s32.totalorder %s22, %s23
    %p34 = scmp.eq.s32.totalorder %s14, 0
    %p35 = por %p33, %p34
    %p36 = scmp.ne.s32.totalorder %s22, %s23
    %p37 = scmp.eq.s32.totalorder %s15, 2
    %p38 = por %p36, %p37
    %p40 = scmp.ne.s32.totalorder %s23, %s39
    %p41 = scmp.eq.s32.totalorder %s15, 0
    %p42 = por %p40, %p41
    %s44 = sadd.s32 %s43, 1
    %p47 = scmp.eq.s32.totalorder %s9, 2
    %p48 = scmp.ne.s32.totalorder %s43, %s45
    %p49 = scmp.eq.s32.totalorder %s9, 0
    %p50 = por %p48, %p49
    %p51 = scmp.ne.s32.totalorder %s43, %s45
    %p52 = scmp.eq.s32.totalorder %s14, 2
    %p53 = por %p51, %p52
    %p54 = scmp.ne.s32.totalorder %s45, %s46
    %p55 = scmp.eq.s32.totalorder %s14, 0
    %p56 = por %p54, %p55
    %p57 = scmp.ne.s32.totalorder %s45, %s46
    %p58 = scmp.eq.s32.totalorder %s15, 2
    %p59 = por %p57, %p58
    %p61 = scmp.ne.s32.totalorder %s46, %s60
    %p62 = scmp.eq.s32.totalorder %s15, 0
    %p63 = por %p61, %p62
    %s65 = sadd.s32 %s64, 1
    %p68 = scmp.eq.s32.totalorder %s9, 2
    %p69 = scmp.ne.s32.totalorder %s64, %s66
    %p70 = scmp.eq.s32.totalorder %s9, 0
    %p71 = por %p69, %p70
    %p72 = scmp.ne.s32.totalorder %s64, %s66
    %p73 = scmp.eq.s32.totalorder %s14, 2
    %p74 = por %p72, %p73
    %p75 = scmp.ne.s32.totalorder %s66, %s67
    %p76 = scmp.eq.s32.totalorder %s14, 0
    %p77 = por %p75, %p76
    %p78 = scmp.ne.s32.totalorder %s66, %s67
    %p79 = scmp.eq.s32.totalorder %s15, 2
    %p80 = por %p78, %p79
    %p82 = scmp.ne.s32.totalorder %s67, %s81
    %p83 = scmp.eq.s32.totalorder %s15, 0
    %p84 = por %p82, %p83
    %s85 = ssub.s32 %s9, %s16
    %p86 = scmp.eq.s32.totalorder %s85, 0
    %s88 = sadd.s32 %s87, 1
    %s89 = scalar_select %p86, %s87, %s88
    %p92 = pneg %p86
    %p93 = scmp.eq.s32.totalorder %s9, 2
    %p94 = por %p92, %p93
    %p95 = scmp.ne.s32.totalorder %s87, %s90
    %p96 = scmp.eq.s32.totalorder %s9, 0
    %p97 = por %p95, %p96
    %p98 = scmp.ne.s32.totalorder %s87, %s90
    %p99 = scmp.eq.s32.totalorder %s14, 2
    %p100 = por %p98, %p99
    %p101 = scmp.ne.s32.totalorder %s90, %s91
    %p102 = scmp.eq.s32.totalorder %s14, 0
    %p103 = por %p101, %p102
    %p104 = scmp.ne.s32.totalorder %s90, %s91
    %p105 = scmp.eq.s32.totalorder %s15, 2
    %p106 = por %p104, %p105
    %p108 = scmp.ne.s32.totalorder %s91, %s107
    %p109 = scmp.eq.s32.totalorder %s15, 0
    %p110 = por %p108, %p109
    %p111 = scmp.le.s32.totalorder 1, %s9
    %p112 = scmp.lt.s32.totalorder %s9, 4
    %p113 = pnand %p111, %p112
    %p114 = pneg %p113
    // Predicated region
    $region9: #{bottleneck_forward.9} parent=5 // pred_check
      _
    $region10: #{bottleneck_forward.9} parent=5 // pred_check_branch
      %116 = sbr.rel (%p113) target = $region12
    $region11: #{bottleneck_forward.9} parent=5 // pred_region
      %s117 = ssub.s32 %s9, 1
      // Predicated region
      $region13: #{bottleneck_forward.9} parent=11 // pred_check
        %p118 = pneg %p56
      $region14: #{bottleneck_forward.9} parent=11 // pred_check_branch
        %120 = sbr.rel (%p118) target = $region16
      $region15: #{bottleneck_forward.9} parent=11 // pred_region
        _
      $region16: #{bottleneck_forward.9} parent=11 // pred_fallthru
        _
      // Predicated region
      $region17: #{bottleneck_forward.9} parent=11 // pred_check
        %p121 = pneg %p77
      $region18: #{bottleneck_forward.9} parent=11 // pred_check_branch
        %123 = sbr.rel (%p121) target = $region20
      $region19: #{bottleneck_forward.9} parent=11 // pred_region
        _
      $region20: #{bottleneck_forward.9} parent=11 // pred_fallthru
        _
    $region12: #{bottleneck_forward.9} parent=5 // pred_fallthru
      _
    %p124 = scmp.lt.s32.totalorder %s9, 3
    // Predicated region
    $region21: #{bottleneck_forward.9} parent=5 // pred_check
      %p125 = pneg %p124
    $region22: #{bottleneck_forward.9} parent=5 // pred_check_branch
      %127 = sbr.rel (%p125) target = $region24
    $region23: #{bottleneck_forward.9} parent=5 // pred_region
      // Predicated region
      $region25: #{bottleneck_forward.9} parent=23 // pred_check
        %p128 = pneg %p29
      $region26: #{bottleneck_forward.9} parent=23 // pred_check_branch
        %130 = sbr.rel (%p128) target = $region28
      $region27: #{bottleneck_forward.9} parent=23 // pred_region
        %s131 = smul.u32 64, %s9
        %p132 = scmp.lt.s32.totalorder %s131, 191
        %s133 = scalar_select %p132, %s131, 191
        %s134 = smul.addr %s133, 8
        %s135 = scalar_lea.vmem %s0, %s134
        %s136 = smul.u32 64, %s9
      $region28: #{bottleneck_forward.9} parent=23 // pred_fallthru
        _
    $region24: #{bottleneck_forward.9} parent=5 // pred_fallthru
      _
    %p137 = scmp.le.s32.totalorder 1, %s9
    %p138 = scmp.lt.s32.totalorder %s9, 4
    %p139 = pnand %p137, %p138
    %p140 = pneg %p139
    // Predicated region
    $region29: #{bottleneck_forward.9} parent=5 // pred_check
      _
    $region30: #{bottleneck_forward.9} parent=5 // pred_check_branch
      %142 = sbr.rel (%p139) target = $region32
    $region31: #{bottleneck_forward.9} parent=5 // pred_region
      %s143 = ssub.s32 %s9, 1
      %s144 = smul.u32 64, %s14
      %p145 = scmp.lt.s32.totalorder %s144, 191
      %s146 = scalar_select %p145, %s144, 191
      %s147 = smul.addr %s146, 8
      %s148 = scalar_lea.vmem %s0, %s147
      %p149 = pneg %p35
      %p150 = pneg %p32
      %p151 = pneg %p56
      %p152 = pneg %p53
      %p153 = pneg %p77
      %p154 = pneg %p74
      %p155 = pneg %p103
      %p156 = pneg %p100
      %s157 = smul.u32 64, %s14
      %p158 = scmp.lt.s32.totalorder %s157, 191
      %s159 = scalar_select %p158, %s157, 191
      %s160 = smul.addr %s159, 8
      %s161 = scalar_lea.vmem %s3, %s160
      %s162 = smul.u32 64, %s14
      %p163 = scmp.lt.s32.totalorder %s162, 191
      %s164 = scalar_select %p163, %s162, 191
      %s165 = smul.addr %s164, 8
      %s166 = scalar_lea.vmem %s0, %s165
      %s167 = smul.u32 64, %s14
      %s168 = smul.u32 64, %s14
      %p169 = scmp.lt.s32.totalorder %s168, 191
      %s170 = scalar_select %p169, %s168, 191
      %s171 = smul.addr %s170, 8
      %s172 = scalar_lea.vmem %s3, %s171
      %s173 = smul.u32 64, %s14
      %v174 = vld [vmem:[%s166] sm:$0xff]
      %v175 = vld [vmem:[%s166 + $0x8] sm:$0xff]
      %v176 = vld [vmem:[%s166 + $0x10] sm:$0xff]
      %v177 = vld [vmem:[%s166 + $0x18] sm:$0xff]
      %v178 = vld [vmem:[%s166 + $0x20] sm:$0xff]
      %v179 = vld [vmem:[%s166 + $0x28] sm:$0xff]
      %v180 = vld [vmem:[%s166 + $0x30] sm:$0xff]
      %v181 = vld [vmem:[%s166 + $0x38] sm:$0xff]
      %v182 = vld [vmem:[%s166 + $0x40] sm:$0xff]
      %v183 = vld [vmem:[%s166 + $0x48] sm:$0xff]
      %v184 = vld [vmem:[%s166 + $0x50] sm:$0xff]
      %v185 = vld [vmem:[%s166 + $0x58] sm:$0xff]
      %v186 = vld [vmem:[%s166 + $0x60] sm:$0xff]
      %v187 = vld [vmem:[%s166 + $0x68] sm:$0xff]
      %v188 = vld [vmem:[%s166 + $0x70] sm:$0xff]
      %v189 = vld [vmem:[%s166 + $0x78] sm:$0xff]
      %v190 = vld [vmem:[%s166 + $0x80] sm:$0xff]
      %v191 = vld [vmem:[%s166 + $0x88] sm:$0xff]
      %v192 = vld [vmem:[%s166 + $0x90] sm:$0xff]
      %v193 = vld [vmem:[%s166 + $0x98] sm:$0xff]
      %v194 = vld [vmem:[%s166 + $0xa0] sm:$0xff]
      %v195 = vld [vmem:[%s166 + $0xa8] sm:$0xff]
      %v196 = vld [vmem:[%s166 + $0xb0] sm:$0xff]
      %v197 = vld [vmem:[%s166 + $0xb8] sm:$0xff]
      %v198 = vld [vmem:[%s166 + $0xc0] sm:$0xff]
      %v199 = vld [vmem:[%s166 + $0xc8] sm:$0xff]
      %v200 = vld [vmem:[%s166 + $0xd0] sm:$0xff]
      %v201 = vld [vmem:[%s166 + $0xd8] sm:$0xff]
      %v202 = vld [vmem:[%s166 + $0xe0] sm:$0xff]
      %v203 = vld [vmem:[%s166 + $0xe8] sm:$0xff]
      %v204 = vld [vmem:[%s166 + $0xf0] sm:$0xff]
      %v205 = vld [vmem:[%s166 + $0xf8] sm:$0xff]
      %v206 = vld [vmem:[%s166 + $0x100] sm:$0xff]
      %v207 = vld [vmem:[%s166 + $0x108] sm:$0xff]
      %v208 = vld [vmem:[%s166 + $0x110] sm:$0xff]
      %v209 = vld [vmem:[%s166 + $0x118] sm:$0xff]
      %v210 = vld [vmem:[%s166 + $0x120] sm:$0xff]
      %v211 = vld [vmem:[%s166 + $0x128] sm:$0xff]
      %v212 = vld [vmem:[%s166 + $0x130] sm:$0xff]
      %v213 = vld [vmem:[%s166 + $0x138] sm:$0xff]
      %v214 = vld [vmem:[%s166 + $0x140] sm:$0xff]
      %v215 = vld [vmem:[%s166 + $0x148] sm:$0xff]
      %v216 = vld [vmem:[%s166 + $0x150] sm:$0xff]
      %v217 = vld [vmem:[%s166 + $0x158] sm:$0xff]
      %v218 = vld [vmem:[%s166 + $0x160] sm:$0xff]
      %v219 = vld [vmem:[%s166 + $0x168] sm:$0xff]
      %v220 = vld [vmem:[%s166 + $0x170] sm:$0xff]
      %v221 = vld [vmem:[%s166 + $0x178] sm:$0xff]
      %v222 = vld [vmem:[%s166 + $0x180] sm:$0xff]
      %v223 = vld [vmem:[%s166 + $0x188] sm:$0xff]
      %v224 = vld [vmem:[%s166 + $0x190] sm:$0xff]
      %v225 = vld [vmem:[%s166 + $0x198] sm:$0xff]
      %v226 = vld [vmem:[%s166 + $0x1a0] sm:$0xff]
      %v227 = vld [vmem:[%s166 + $0x1a8] sm:$0xff]
      %v228 = vld [vmem:[%s166 + $0x1b0] sm:$0xff]
      %v229 = vld [vmem:[%s166 + $0x1b8] sm:$0xff]
      %v230 = vld [vmem:[%s166 + $0x1c0] sm:$0xff]
      %v231 = vld [vmem:[%s166 + $0x1c8] sm:$0xff]
      %v232 = vld [vmem:[%s166 + $0x1d0] sm:$0xff]
      %v233 = vld [vmem:[%s166 + $0x1d8] sm:$0xff]
      %v234 = vld [vmem:[%s166 + $0x1e0] sm:$0xff]
      %v235 = vld [vmem:[%s166 + $0x1e8] sm:$0xff]
      %v236 = vld [vmem:[%s166 + $0x1f0] sm:$0xff]
      %v237 = vld [vmem:[%s166 + $0x1f8] sm:$0xff]
      %v238 = vld [vmem:[%s1] sm:$0x1]
      %v240 = vlaneseq
      %v241 = vshrl.u32 %v240, 7
      %v242 = vsub.s32 0, %v241
      %v243 = vrot.slane %v238, %v242
      %v245 = vmul.f32 %v174, %v243
      %v246 = vmul.f32 %v175, %v243
      %v247 = vmul.f32 %v176, %v243
      %v248 = vmul.f32 %v177, %v243
      %v249 = vmul.f32 %v178, %v243
      %v250 = vmul.f32 %v179, %v243
      %v251 = vmul.f32 %v180, %v243
      %v252 = vmul.f32 %v181, %v243
      %v253 = vmul.f32 %v182, %v243
      %v254 = vmul.f32 %v183, %v243
      %v255 = vmul.f32 %v184, %v243
      %v256 = vmul.f32 %v185, %v243
      %v257 = vmul.f32 %v186, %v243
      %v258 = vmul.f32 %v187, %v243
      %v259 = vmul.f32 %v188, %v243
      %v260 = vmul.f32 %v189, %v243
      %v261 = vmul.f32 %v190, %v243
      %v262 = vmul.f32 %v191, %v243
      %v263 = vmul.f32 %v192, %v243
      %v264 = vmul.f32 %v193, %v243
      %v265 = vmul.f32 %v194, %v243
      %v266 = vmul.f32 %v195, %v243
      %v267 = vmul.f32 %v196, %v243
      %v268 = vmul.f32 %v197, %v243
      %v269 = vmul.f32 %v198, %v243
      %v270 = vmul.f32 %v199, %v243
      %v271 = vmul.f32 %v200, %v243
      %v272 = vmul.f32 %v201, %v243
      %v273 = vmul.f32 %v202, %v243
      %v274 = vmul.f32 %v203, %v243
      %v275 = vmul.f32 %v204, %v243
      %v276 = vmul.f32 %v205, %v243
      %v277 = vmul.f32 %v206, %v243
      %v278 = vmul.f32 %v207, %v243
      %v279 = vmul.f32 %v208, %v243
      %v280 = vmul.f32 %v209, %v243
      %v281 = vmul.f32 %v210, %v243
      %v282 = vmul.f32 %v211, %v243
      %v283 = vmul.f32 %v212, %v243
      %v284 = vmul.f32 %v213, %v243
      %v285 = vmul.f32 %v214, %v243
      %v286 = vmul.f32 %v215, %v243
      %v287 = vmul.f32 %v216, %v243
      %v288 = vmul.f32 %v217, %v243
      %v289 = vmul.f32 %v218, %v243
      %v290 = vmul.f32 %v219, %v243
      %v291 = vmul.f32 %v220, %v243
      %v292 = vmul.f32 %v221, %v243
      %v293 = vmul.f32 %v222, %v243
      %v294 = vmul.f32 %v223, %v243
      %v295 = vmul.f32 %v224, %v243
      %v296 = vmul.f32 %v225, %v243
      %v297 = vmul.f32 %v226, %v243
      %v298 = vmul.f32 %v227, %v243
      %v299 = vmul.f32 %v228, %v243
      %v300 = vmul.f32 %v229, %v243
      %v301 = vmul.f32 %v230, %v243
      %v302 = vmul.f32 %v231, %v243
      %v303 = vmul.f32 %v232, %v243
      %v304 = vmul.f32 %v233, %v243
      %v305 = vmul.f32 %v234, %v243
      %v306 = vmul.f32 %v235, %v243
      %v307 = vmul.f32 %v236, %v243
      %v308 = vmul.f32 %v237, %v243
      %v309 = vld [vmem:[%s2] sm:$0x1]
      %v311 = vlaneseq
      %v312 = vshrl.u32 %v311, 7
      %v313 = vsub.s32 0, %v312
      %v314 = vrot.slane %v309, %v313
      %v316 = vadd.f32 %v245, %v314
      %v317 = vadd.f32 %v246, %v314
      %v318 = vadd.f32 %v247, %v314
      %v319 = vadd.f32 %v248, %v314
      %v320 = vadd.f32 %v249, %v314
      %v321 = vadd.f32 %v250, %v314
      %v322 = vadd.f32 %v251, %v314
      %v323 = vadd.f32 %v252, %v314
      %v324 = vadd.f32 %v253, %v314
      %v325 = vadd.f32 %v254, %v314
      %v326 = vadd.f32 %v255, %v314
      %v327 = vadd.f32 %v256, %v314
      %v328 = vadd.f32 %v257, %v314
      %v329 = vadd.f32 %v258, %v314
      %v330 = vadd.f32 %v259, %v314
      %v331 = vadd.f32 %v260, %v314
      %v332 = vadd.f32 %v261, %v314
      %v333 = vadd.f32 %v262, %v314
      %v334 = vadd.f32 %v263, %v314
      %v335 = vadd.f32 %v264, %v314
      %v336 = vadd.f32 %v265, %v314
      %v337 = vadd.f32 %v266, %v314
      %v338 = vadd.f32 %v267, %v314
      %v339 = vadd.f32 %v268, %v314
      %v340 = vadd.f32 %v269, %v314
      %v341 = vadd.f32 %v270, %v314
      %v342 = vadd.f32 %v271, %v314
      %v343 = vadd.f32 %v272, %v314
      %v344 = vadd.f32 %v273, %v314
      %v345 = vadd.f32 %v274, %v314
      %v346 = vadd.f32 %v275, %v314
      %v347 = vadd.f32 %v276, %v314
      %v348 = vadd.f32 %v277, %v314
      %v349 = vadd.f32 %v278, %v314
      %v350 = vadd.f32 %v279, %v314
      %v351 = vadd.f32 %v280, %v314
      %v352 = vadd.f32 %v281, %v314
      %v353 = vadd.f32 %v282, %v314
      %v354 = vadd.f32 %v283, %v314
      %v355 = vadd.f32 %v284, %v314
      %v356 = vadd.f32 %v285, %v314
      %v357 = vadd.f32 %v286, %v314
      %v358 = vadd.f32 %v287, %v314
      %v359 = vadd.f32 %v288, %v314
      %v360 = vadd.f32 %v289, %v314
      %v361 = vadd.f32 %v290, %v314
      %v362 = vadd.f32 %v291, %v314
      %v363 = vadd.f32 %v292, %v314
      %v364 = vadd.f32 %v293, %v314
      %v365 = vadd.f32 %v294, %v314
      %v366 = vadd.f32 %v295, %v314
      %v367 = vadd.f32 %v296, %v314
      %v368 = vadd.f32 %v297, %v314
      %v369 = vadd.f32 %v298, %v314
      %v370 = vadd.f32 %v299, %v314
      %v371 = vadd.f32 %v300, %v314
      %v372 = vadd.f32 %v301, %v314
      %v373 = vadd.f32 %v302, %v314
      %v374 = vadd.f32 %v303, %v314
      %v375 = vadd.f32 %v304, %v314
      %v376 = vadd.f32 %v305, %v314
      %v377 = vadd.f32 %v306, %v314
      %v378 = vadd.f32 %v307, %v314
      %v379 = vadd.f32 %v308, %v314
      %v380 = vmax.f32 %v316, 0.0
      %v381 = vmax.f32 %v317, 0.0
      %v382 = vmax.f32 %v318, 0.0
      %v383 = vmax.f32 %v319, 0.0
      %v384 = vmax.f32 %v320, 0.0
      %v385 = vmax.f32 %v321, 0.0
      %v386 = vmax.f32 %v322, 0.0
      %v387 = vmax.f32 %v323, 0.0
      %v388 = vmax.f32 %v324, 0.0
      %v389 = vmax.f32 %v325, 0.0
      %v390 = vmax.f32 %v326, 0.0
      %v391 = vmax.f32 %v327, 0.0
      %v392 = vmax.f32 %v328, 0.0
      %v393 = vmax.f32 %v329, 0.0
      %v394 = vmax.f32 %v330, 0.0
      %v395 = vmax.f32 %v331, 0.0
      %v396 = vmax.f32 %v332, 0.0
      %v397 = vmax.f32 %v333, 0.0
      %v398 = vmax.f32 %v334, 0.0
      %v399 = vmax.f32 %v335, 0.0
      %v400 = vmax.f32 %v336, 0.0
      %v401 = vmax.f32 %v337, 0.0
      %v402 = vmax.f32 %v338, 0.0
      %v403 = vmax.f32 %v339, 0.0
      %v404 = vmax.f32 %v340, 0.0
      %v405 = vmax.f32 %v341, 0.0
      %v406 = vmax.f32 %v342, 0.0
      %v407 = vmax.f32 %v343, 0.0
      %v408 = vmax.f32 %v344, 0.0
      %v409 = vmax.f32 %v345, 0.0
      %v410 = vmax.f32 %v346, 0.0
      %v411 = vmax.f32 %v347, 0.0
      %v412 = vmax.f32 %v348, 0.0
      %v413 = vmax.f32 %v349, 0.0
      %v414 = vmax.f32 %v350, 0.0
      %v415 = vmax.f32 %v351, 0.0
      %v416 = vmax.f32 %v352, 0.0
      %v417 = vmax.f32 %v353, 0.0
      %v418 = vmax.f32 %v354, 0.0
      %v419 = vmax.f32 %v355, 0.0
      %v420 = vmax.f32 %v356, 0.0
      %v421 = vmax.f32 %v357, 0.0
      %v422 = vmax.f32 %v358, 0.0
      %v423 = vmax.f32 %v359, 0.0
      %v424 = vmax.f32 %v360, 0.0
      %v425 = vmax.f32 %v361, 0.0
      %v426 = vmax.f32 %v362, 0.0
      %v427 = vmax.f32 %v363, 0.0
      %v428 = vmax.f32 %v364, 0.0
      %v429 = vmax.f32 %v365, 0.0
      %v430 = vmax.f32 %v366, 0.0
      %v431 = vmax.f32 %v367, 0.0
      %v432 = vmax.f32 %v368, 0.0
      %v433 = vmax.f32 %v369, 0.0
      %v434 = vmax.f32 %v370, 0.0
      %v435 = vmax.f32 %v371, 0.0
      %v436 = vmax.f32 %v372, 0.0
      %v437 = vmax.f32 %v373, 0.0
      %v438 = vmax.f32 %v374, 0.0
      %v439 = vmax.f32 %v375, 0.0
      %v440 = vmax.f32 %v376, 0.0
      %v441 = vmax.f32 %v377, 0.0
      %v442 = vmax.f32 %v378, 0.0
      %v443 = vmax.f32 %v379, 0.0
      %444 = vst [vmem:[%s172] sm:$0xff] %v380
      %445 = vst [vmem:[%s172 + $0x8] sm:$0xff] %v381
      %446 = vst [vmem:[%s172 + $0x10] sm:$0xff] %v382
      %447 = vst [vmem:[%s172 + $0x18] sm:$0xff] %v383
      %448 = vst [vmem:[%s172 + $0x20] sm:$0xff] %v384
      %449 = vst [vmem:[%s172 + $0x28] sm:$0xff] %v385
      %450 = vst [vmem:[%s172 + $0x30] sm:$0xff] %v386
      %451 = vst [vmem:[%s172 + $0x38] sm:$0xff] %v387
      %452 = vst [vmem:[%s172 + $0x40] sm:$0xff] %v388
      %453 = vst [vmem:[%s172 + $0x48] sm:$0xff] %v389
      %454 = vst [vmem:[%s172 + $0x50] sm:$0xff] %v390
      %455 = vst [vmem:[%s172 + $0x58] sm:$0xff] %v391
      %456 = vst [vmem:[%s172 + $0x60] sm:$0xff] %v392
      %457 = vst [vmem:[%s172 + $0x68] sm:$0xff] %v393
      %458 = vst [vmem:[%s172 + $0x70] sm:$0xff] %v394
      %459 = vst [vmem:[%s172 + $0x78] sm:$0xff] %v395
      %460 = vst [vmem:[%s172 + $0x80] sm:$0xff] %v396
      %461 = vst [vmem:[%s172 + $0x88] sm:$0xff] %v397
      %462 = vst [vmem:[%s172 + $0x90] sm:$0xff] %v398
      %463 = vst [vmem:[%s172 + $0x98] sm:$0xff] %v399
      %464 = vst [vmem:[%s172 + $0xa0] sm:$0xff] %v400
      %465 = vst [vmem:[%s172 + $0xa8] sm:$0xff] %v401
      %466 = vst [vmem:[%s172 + $0xb0] sm:$0xff] %v402
      %467 = vst [vmem:[%s172 + $0xb8] sm:$0xff] %v403
      %468 = vst [vmem:[%s172 + $0xc0] sm:$0xff] %v404
      %469 = vst [vmem:[%s172 + $0xc8] sm:$0xff] %v405
      %470 = vst [vmem:[%s172 + $0xd0] sm:$0xff] %v406
      %471 = vst [vmem:[%s172 + $0xd8] sm:$0xff] %v407
      %472 = vst [vmem:[%s172 + $0xe0] sm:$0xff] %v408
      %473 = vst [vmem:[%s172 + $0xe8] sm:$0xff] %v409
      %474 = vst [vmem:[%s172 + $0xf0] sm:$0xff] %v410
      %475 = vst [vmem:[%s172 + $0xf8] sm:$0xff] %v411
      %476 = vst [vmem:[%s172 + $0x100] sm:$0xff] %v412
      %477 = vst [vmem:[%s172 + $0x108] sm:$0xff] %v413
      %478 = vst [vmem:[%s172 + $0x110] sm:$0xff] %v414
      %479 = vst [vmem:[%s172 + $0x118] sm:$0xff] %v415
      %480 = vst [vmem:[%s172 + $0x120] sm:$0xff] %v416
      %481 = vst [vmem:[%s172 + $0x128] sm:$0xff] %v417
      %482 = vst [vmem:[%s172 + $0x130] sm:$0xff] %v418
      %483 = vst [vmem:[%s172 + $0x138] sm:$0xff] %v419
      %484 = vst [vmem:[%s172 + $0x140] sm:$0xff] %v420
      %485 = vst [vmem:[%s172 + $0x148] sm:$0xff] %v421
      %486 = vst [vmem:[%s172 + $0x150] sm:$0xff] %v422
      %487 = vst [vmem:[%s172 + $0x158] sm:$0xff] %v423
      %488 = vst [vmem:[%s172 + $0x160] sm:$0xff] %v424
      %489 = vst [vmem:[%s172 + $0x168] sm:$0xff] %v425
      %490 = vst [vmem:[%s172 + $0x170] sm:$0xff] %v426
      %491 = vst [vmem:[%s172 + $0x178] sm:$0xff] %v427
      %492 = vst [vmem:[%s172 + $0x180] sm:$0xff] %v428
      %493 = vst [vmem:[%s172 + $0x188] sm:$0xff] %v429
      %494 = vst [vmem:[%s172 + $0x190] sm:$0xff] %v430
      %495 = vst [vmem:[%s172 + $0x198] sm:$0xff] %v431
      %496 = vst [vmem:[%s172 + $0x1a0] sm:$0xff] %v432
      %497 = vst [vmem:[%s172 + $0x1a8] sm:$0xff] %v433
      %498 = vst [vmem:[%s172 + $0x1b0] sm:$0xff] %v434
      %499 = vst [vmem:[%s172 + $0x1b8] sm:$0xff] %v435
      %500 = vst [vmem:[%s172 + $0x1c0] sm:$0xff] %v436
      %501 = vst [vmem:[%s172 + $0x1c8] sm:$0xff] %v437
      %502 = vst [vmem:[%s172 + $0x1d0] sm:$0xff] %v438
      %503 = vst [vmem:[%s172 + $0x1d8] sm:$0xff] %v439
      %504 = vst [vmem:[%s172 + $0x1e0] sm:$0xff] %v440
      %505 = vst [vmem:[%s172 + $0x1e8] sm:$0xff] %v441
      %506 = vst [vmem:[%s172 + $0x1f0] sm:$0xff] %v442
      %507 = vst [vmem:[%s172 + $0x1f8] sm:$0xff] %v443
      %s508 = smul.u32 64, %s14
      %p509 = scmp.lt.s32.totalorder %s508, 191
      %s510 = scalar_select %p509, %s508, 191
      %s511 = smul.addr %s510, 8
      %s512 = scalar_lea.vmem %s3, %s511
      // Predicated region
      $region33: #{bottleneck_forward.9} parent=31 // pred_check
        %p513 = pneg %p100
      $region34: #{bottleneck_forward.9} parent=31 // pred_check_branch
        %515 = sbr.rel (%p513) target = $region36
      $region35: #{bottleneck_forward.9} parent=31 // pred_region
        %s516 = smul.u32 64, %s14
      $region36: #{bottleneck_forward.9} parent=31 // pred_fallthru
        _
    $region32: #{bottleneck_forward.9} parent=5 // pred_fallthru
      _
    %p517 = scmp.le.s32.totalorder 2, %s9
    // Predicated region
    $region37: #{bottleneck_forward.9} parent=5 // pred_check
      %p518 = pneg %p517
    $region38: #{bottleneck_forward.9} parent=5 // pred_check_branch
      %520 = sbr.rel (%p518) target = $region40
    $region39: #{bottleneck_forward.9} parent=5 // pred_region
      %s521 = ssub.s32 %s9, 2
      // Predicated region
      $region41: #{bottleneck_forward.9} parent=39 // pred_check
        %p522 = pneg %p106
      $region42: #{bottleneck_forward.9} parent=39 // pred_check_branch
        %524 = sbr.rel (%p522) target = $region44
      $region43: #{bottleneck_forward.9} parent=39 // pred_region
        %s525 = smul.u32 64, %s15
        %p526 = scmp.lt.s32.totalorder %s525, 191
        %s527 = scalar_select %p526, %s525, 191
        %s528 = smul.addr %s527, 8
        %s529 = scalar_lea.vmem %s3, %s528
      $region44: #{bottleneck_forward.9} parent=39 // pred_fallthru
        _
    $region40: #{bottleneck_forward.9} parent=5 // pred_fallthru
      _
  $region6: #{bottleneck_forward.9} parent=0 // loop_footer
    %s13 = sadd.s32 1, %s9
  $region7: #{bottleneck_forward.9} parent=0 // loop_footer_branch
    %8 = sbr.rel target = $region3
  $region8: #{bottleneck_forward.9} parent=0 // loop_exit
    _

// kernel: bottleneck_forward.8
$region0: #{bottleneck_forward.8}
  #allocation0 [shape = 'u32[]', space=smem, size = 0x4, offset = 0x4, fixed_abs, tag = 'smem constant byte address 0x4 - core index']
  #allocation1 [shape = 'u32[144,128]{1,0:T(1,128)}', space=vmem, size = 0x12000, scoped, tag = 'internal scratch']
  %s0 = inlined_call_operand.vmem [shape: f32[1536,128], index: 0, kind: input, shape index: {}]
  %s1 = inlined_call_operand.vmem [shape: bf16[128,128], index: 1, kind: input, shape index: {}]
  %s2 = inlined_call_operand.vmem [shape: f32[1536,128], index: 2, kind: output, shape index: {0}]
  %s3 = inlined_call_operand.vmem [shape: f32[2,128], index: 3, kind: output, shape index: {1}]
  %4 = xla_tuple %s2, %s3
  %s5 = sld [smem:[#allocation0]]
  $region53: #{bottleneck_forward.8} parent=0
    _
  %s7 = ssub.s32 1, %s5
  %s8 = scalar_select 0, %s7, %s5
  loop: start=0, step=1, limit=5
  $region2: #{bottleneck_forward.8} parent=0 // loop_pre_header
    _
  $region3: #{bottleneck_forward.8} parent=0 // loop_header
    %s10 = sphi 0, %s14
    %p11 = scmp.ge.s32.totalorder %s10, 5
    %s20 = sphi 0, %s22
    %s23 = sphi 0, %s20
    %s24 = sphi 0, %s23
    %s40 = sphi 0, %s24
    %s44 = sphi 0, %s44
    %s46 = sphi 0, %s44
    %s47 = sphi 0, %s46
    %s61 = sphi 0, %s47
    %s67 = sphi 0, %s69
    %s70 = sphi 0, %s67
    %s71 = sphi 0, %s70
    %s87 = sphi 0, %s71
    %s91 = sphi 0, %s91
    %s93 = sphi 0, %s91
    %s94 = sphi 0, %s93
    %s108 = sphi 0, %s94
  $region4: #{bottleneck_forward.8} parent=0 // loop_header_branch
    %13 = sbr.rel (%p11) target = $region8
  $region5: #{bottleneck_forward.8} parent=0 // loop_body
    %s15 = ssub.s32 %s10, 1
    %s16 = ssub.s32 %s10, 2
    %s17 = sadd.s32 %s10, 1
    %s18 = ssub.s32 %s10, %s17
    %p19 = scmp.eq.s32.totalorder %s18, 0
    %s21 = sadd.s32 %s20, 1
    %s22 = scalar_select %p19, %s20, %s21
    %p25 = pneg %p19
    %p26 = scmp.eq.s32.totalorder %s10, 2
    %p27 = por %p25, %p26
    %p28 = scmp.ne.s32.totalorder %s20, %s23
    %p29 = scmp.eq.s32.totalorder %s10, 0
    %p30 = por %p28, %p29
    %p31 = scmp.ne.s32.totalorder %s20, %s23
    %p32 = scmp.eq.s32.totalorder %s15, 2
    %p33 = por %p31, %p32
    %p34 = scmp.ne.s32.totalorder %s23, %s24
    %p35 = scmp.eq.s32.totalorder %s15, 0
    %p36 = por %p34, %p35
    %p37 = scmp.ne.s32.totalorder %s23, %s24
    %p38 = scmp.eq.s32.totalorder %s16, 2
    %p39 = por %p37, %p38
    %p41 = scmp.ne.s32.totalorder %s24, %s40
    %p42 = scmp.eq.s32.totalorder %s16, 0
    %p43 = por %p41, %p42
    %s45 = sadd.s32 %s44, 1
    %p48 = scmp.eq.s32.totalorder %s10, 2
    %p49 = scmp.ne.s32.totalorder %s44, %s46
    %p50 = scmp.eq.s32.totalorder %s10, 0
    %p51 = por %p49, %p50
    %p52 = scmp.ne.s32.totalorder %s44, %s46
    %p53 = scmp.eq.s32.totalorder %s15, 2
    %p54 = por %p52, %p53
    %p55 = scmp.ne.s32.totalorder %s46, %s47
    %p56 = scmp.eq.s32.totalorder %s15, 0
    %p57 = por %p55, %p56
    %p58 = scmp.ne.s32.totalorder %s46, %s47
    %p59 = scmp.eq.s32.totalorder %s16, 2
    %p60 = por %p58, %p59
    %p62 = scmp.ne.s32.totalorder %s47, %s61
    %p63 = scmp.eq.s32.totalorder %s16, 0
    %p64 = por %p62, %p63
    %s65 = ssub.s32 %s10, %s17
    %p66 = scmp.eq.s32.totalorder %s65, 0
    %s68 = sadd.s32 %s67, 1
    %s69 = scalar_select %p66, %s67, %s68
    %p72 = pneg %p66
    %p73 = scmp.eq.s32.totalorder %s10, 2
    %p74 = por %p72, %p73
    %p75 = scmp.ne.s32.totalorder %s67, %s70
    %p76 = scmp.eq.s32.totalorder %s10, 0
    %p77 = por %p75, %p76
    %p78 = scmp.ne.s32.totalorder %s67, %s70
    %p79 = scmp.eq.s32.totalorder %s15, 2
    %p80 = por %p78, %p79
    %p81 = scmp.ne.s32.totalorder %s70, %s71
    %p82 = scmp.eq.s32.totalorder %s15, 0
    %p83 = por %p81, %p82
    %p84 = scmp.ne.s32.totalorder %s70, %s71
    %p85 = scmp.eq.s32.totalorder %s16, 2
    %p86 = por %p84, %p85
    %p88 = scmp.ne.s32.totalorder %s71, %s87
    %p89 = scmp.eq.s32.totalorder %s16, 0
    %p90 = por %p88, %p89
    %s92 = sadd.s32 %s91, 1
    %p95 = scmp.eq.s32.totalorder %s10, 2
    %p96 = scmp.ne.s32.totalorder %s91, %s93
    %p97 = scmp.eq.s32.totalorder %s10, 0
    %p98 = por %p96, %p97
    %p99 = scmp.ne.s32.totalorder %s91, %s93
    %p100 = scmp.eq.s32.totalorder %s15, 2
    %p101 = por %p99, %p100
    %p102 = scmp.ne.s32.totalorder %s93, %s94
    %p103 = scmp.eq.s32.totalorder %s15, 0
    %p104 = por %p102, %p103
    %p105 = scmp.ne.s32.totalorder %s93, %s94
    %p106 = scmp.eq.s32.totalorder %s16, 2
    %p107 = por %p105, %p106
    %p109 = scmp.ne.s32.totalorder %s94, %s108
    %p110 = scmp.eq.s32.totalorder %s16, 0
    %p111 = por %p109, %p110
    %p112 = scmp.le.s32.totalorder 1, %s10
    %p113 = scmp.lt.s32.totalorder %s10, 4
    %p114 = pnand %p112, %p113
    %p115 = pneg %p114
    // Predicated region
    $region9: #{bottleneck_forward.8} parent=5 // pred_check
      _
    $region10: #{bottleneck_forward.8} parent=5 // pred_check_branch
      %117 = sbr.rel (%p114) target = $region12
    $region11: #{bottleneck_forward.8} parent=5 // pred_region
      %s118 = ssub.s32 %s10, 1
      // Predicated region
      $region13: #{bottleneck_forward.8} parent=11 // pred_check
        %p119 = pneg %p57
      $region14: #{bottleneck_forward.8} parent=11 // pred_check_branch
        %121 = sbr.rel (%p119) target = $region16
      $region15: #{bottleneck_forward.8} parent=11 // pred_region
        _
      $region16: #{bottleneck_forward.8} parent=11 // pred_fallthru
        _
    $region12: #{bottleneck_forward.8} parent=5 // pred_fallthru
      _
    %p122 = scmp.lt.s32.totalorder %s10, 3
    // Predicated region
    $region17: #{bottleneck_forward.8} parent=5 // pred_check
      %p123 = pneg %p122
    $region18: #{bottleneck_forward.8} parent=5 // pred_check_branch
      %125 = sbr.rel (%p123) target = $region20
    $region19: #{bottleneck_forward.8} parent=5 // pred_region
      // Predicated region
      $region21: #{bottleneck_forward.8} parent=19 // pred_check
        %p126 = pneg %p30
      $region22: #{bottleneck_forward.8} parent=19 // pred_check_branch
        %128 = sbr.rel (%p126) target = $region24
      $region23: #{bottleneck_forward.8} parent=19 // pred_region
        %s129 = smul.u32 64, %s10
        %p130 = scmp.lt.s32.totalorder %s129, 191
        %s131 = scalar_select %p130, %s129, 191
        %s132 = smul.addr %s131, 8
        %s133 = scalar_lea.vmem %s0, %s132
        %s134 = smul.u32 64, %s10
      $region24: #{bottleneck_forward.8} parent=19 // pred_fallthru
        _
    $region20: #{bottleneck_forward.8} parent=5 // pred_fallthru
      _
    %p135 = scmp.le.s32.totalorder 1, %s10
    %p136 = scmp.lt.s32.totalorder %s10, 4
    %p137 = pnand %p135, %p136
    %p138 = pneg %p137
    // Predicated region
    $region25: #{bottleneck_forward.8} parent=5 // pred_check
      _
    $region26: #{bottleneck_forward.8} parent=5 // pred_check_branch
      %140 = sbr.rel (%p137) target = $region28
    $region27: #{bottleneck_forward.8} parent=5 // pred_region
      %s141 = ssub.s32 %s10, 1
      %s142 = smul.u32 64, %s15
      %p143 = scmp.lt.s32.totalorder %s142, 191
      %s144 = scalar_select %p143, %s142, 191
      %s145 = smul.addr %s144, 8
      %s146 = scalar_lea.vmem %s0, %s145
      %p147 = pneg %p36
      %p148 = pneg %p33
      %p149 = pneg %p57
      %p150 = pneg %p54
      %p151 = pneg %p83
      %p152 = pneg %p80
      %s153 = smul.u32 64, %s15
      %p154 = scmp.lt.s32.totalorder %s153, 191
      %s155 = scalar_select %p154, %s153, 191
      %s156 = smul.addr %s155, 8
      %s157 = scalar_lea.vmem %s2, %s156
      %p158 = pneg %p104
      %p159 = pneg %p101
      %s160 = smul.u32 64, %s15
      %p161 = scmp.lt.s32.totalorder %s160, 191
      %s162 = scalar_select %p161, %s160, 191
      %s163 = smul.addr %s162, 8
      %s164 = scalar_lea.vmem %s0, %s163
      %s165 = smul.u32 64, %s15
      %s166 = smul.u32 64, %s15
      %p167 = scmp.lt.s32.totalorder %s166, 191
      %s168 = scalar_select %p167, %s166, 191
      %s169 = smul.addr %s168, 8
      %s170 = scalar_lea.vmem %s2, %s169
      %s171 = smul.u32 64, %s15
      %p173 = scmp.eq.s32.totalorder %s15, 0
      // Predicated region
      $region29: #{bottleneck_forward.8} parent=27 // pred_check
        %p174 = pneg %p173
      $region30: #{bottleneck_forward.8} parent=27 // pred_check_branch
        %176 = sbr.rel (%p174) target = $region32
      $region31: #{bottleneck_forward.8} parent=27 // pred_region
        %177 = vst [vmem:[%s3] sm:$0x3] 0.0
      $region32: #{bottleneck_forward.8} parent=27 // pred_fallthru
        _
      %v178 = vld [vmem:[%s164] sm:$0xff]
      %v179 = vld [vmem:[%s164 + $0x8] sm:$0xff]
      %v180 = vld [vmem:[%s164 + $0x10] sm:$0xff]
      %v181 = vld [vmem:[%s164 + $0x18] sm:$0xff]
      %v182 = vld [vmem:[%s164 + $0x20] sm:$0xff]
      %v183 = vld [vmem:[%s164 + $0x28] sm:$0xff]
      %v184 = vld [vmem:[%s164 + $0x30] sm:$0xff]
      %v185 = vld [vmem:[%s164 + $0x38] sm:$0xff]
      %v186 = vld [vmem:[%s164 + $0x40] sm:$0xff]
      %v187 = vld [vmem:[%s164 + $0x48] sm:$0xff]
      %v188 = vld [vmem:[%s164 + $0x50] sm:$0xff]
      %v189 = vld [vmem:[%s164 + $0x58] sm:$0xff]
      %v190 = vld [vmem:[%s164 + $0x60] sm:$0xff]
      %v191 = vld [vmem:[%s164 + $0x68] sm:$0xff]
      %v192 = vld [vmem:[%s164 + $0x70] sm:$0xff]
      %v193 = vld [vmem:[%s164 + $0x78] sm:$0xff]
      %v194 = vld [vmem:[%s164 + $0x80] sm:$0xff]
      %v195 = vld [vmem:[%s164 + $0x88] sm:$0xff]
      %v196 = vld [vmem:[%s164 + $0x90] sm:$0xff]
      %v197 = vld [vmem:[%s164 + $0x98] sm:$0xff]
      %v198 = vld [vmem:[%s164 + $0xa0] sm:$0xff]
      %v199 = vld [vmem:[%s164 + $0xa8] sm:$0xff]
      %v200 = vld [vmem:[%s164 + $0xb0] sm:$0xff]
      %v201 = vld [vmem:[%s164 + $0xb8] sm:$0xff]
      %v202 = vld [vmem:[%s164 + $0xc0] sm:$0xff]
      %v203 = vld [vmem:[%s164 + $0xc8] sm:$0xff]
      %v204 = vld [vmem:[%s164 + $0xd0] sm:$0xff]
      %v205 = vld [vmem:[%s164 + $0xd8] sm:$0xff]
      %v206 = vld [vmem:[%s164 + $0xe0] sm:$0xff]
      %v207 = vld [vmem:[%s164 + $0xe8] sm:$0xff]
      %v208 = vld [vmem:[%s164 + $0xf0] sm:$0xff]
      %v209 = vld [vmem:[%s164 + $0xf8] sm:$0xff]
      %v210 = vld [vmem:[%s164 + $0x100] sm:$0xff]
      %v211 = vld [vmem:[%s164 + $0x108] sm:$0xff]
      %v212 = vld [vmem:[%s164 + $0x110] sm:$0xff]
      %v213 = vld [vmem:[%s164 + $0x118] sm:$0xff]
      %v214 = vld [vmem:[%s164 + $0x120] sm:$0xff]
      %v215 = vld [vmem:[%s164 + $0x128] sm:$0xff]
      %v216 = vld [vmem:[%s164 + $0x130] sm:$0xff]
      %v217 = vld [vmem:[%s164 + $0x138] sm:$0xff]
      %v218 = vld [vmem:[%s164 + $0x140] sm:$0xff]
      %v219 = vld [vmem:[%s164 + $0x148] sm:$0xff]
      %v220 = vld [vmem:[%s164 + $0x150] sm:$0xff]
      %v221 = vld [vmem:[%s164 + $0x158] sm:$0xff]
      %v222 = vld [vmem:[%s164 + $0x160] sm:$0xff]
      %v223 = vld [vmem:[%s164 + $0x168] sm:$0xff]
      %v224 = vld [vmem:[%s164 + $0x170] sm:$0xff]
      %v225 = vld [vmem:[%s164 + $0x178] sm:$0xff]
      %v226 = vld [vmem:[%s164 + $0x180] sm:$0xff]
      %v227 = vld [vmem:[%s164 + $0x188] sm:$0xff]
      %v228 = vld [vmem:[%s164 + $0x190] sm:$0xff]
      %v229 = vld [vmem:[%s164 + $0x198] sm:$0xff]
      %v230 = vld [vmem:[%s164 + $0x1a0] sm:$0xff]
      %v231 = vld [vmem:[%s164 + $0x1a8] sm:$0xff]
      %v232 = vld [vmem:[%s164 + $0x1b0] sm:$0xff]
      %v233 = vld [vmem:[%s164 + $0x1b8] sm:$0xff]
      %v234 = vld [vmem:[%s164 + $0x1c0] sm:$0xff]
      %v235 = vld [vmem:[%s164 + $0x1c8] sm:$0xff]
      %v236 = vld [vmem:[%s164 + $0x1d0] sm:$0xff]
      %v237 = vld [vmem:[%s164 + $0x1d8] sm:$0xff]
      %v238 = vld [vmem:[%s164 + $0x1e0] sm:$0xff]
      %v239 = vld [vmem:[%s164 + $0x1e8] sm:$0xff]
      %v240 = vld [vmem:[%s164 + $0x1f0] sm:$0xff]
      %v241 = vld [vmem:[%s164 + $0x1f8] sm:$0xff]
      %v242 = vpack.c.bf16 %v179, %v178
      %v243 = vpack.c.bf16 %v181, %v180
      %v244 = vpack.c.bf16 %v183, %v182
      %v245 = vpack.c.bf16 %v185, %v184
      %v246 = vpack.c.bf16 %v187, %v186
      %v247 = vpack.c.bf16 %v189, %v188
      %v248 = vpack.c.bf16 %v191, %v190
      %v249 = vpack.c.bf16 %v193, %v192
      %v250 = vpack.c.bf16 %v195, %v194
      %v251 = vpack.c.bf16 %v197, %v196
      %v252 = vpack.c.bf16 %v199, %v198
      %v253 = vpack.c.bf16 %v201, %v200
      %v254 = vpack.c.bf16 %v203, %v202
      %v255 = vpack.c.bf16 %v205, %v204
      %v256 = vpack.c.bf16 %v207, %v206
      %v257 = vpack.c.bf16 %v209, %v208
      %v258 = vpack.c.bf16 %v211, %v210
      %v259 = vpack.c.bf16 %v213, %v212
      %v260 = vpack.c.bf16 %v215, %v214
      %v261 = vpack.c.bf16 %v217, %v216
      %v262 = vpack.c.bf16 %v219, %v218
      %v263 = vpack.c.bf16 %v221, %v220
      %v264 = vpack.c.bf16 %v223, %v222
      %v265 = vpack.c.bf16 %v225, %v224
      %v266 = vpack.c.bf16 %v227, %v226
      %v267 = vpack.c.bf16 %v229, %v228
      %v268 = vpack.c.bf16 %v231, %v230
      %v269 = vpack.c.bf16 %v233, %v232
      %v270 = vpack.c.bf16 %v235, %v234
      %v271 = vpack.c.bf16 %v237, %v236
      %v272 = vpack.c.bf16 %v239, %v238
      %v273 = vpack.c.bf16 %v241, %v240
      %v274 = vld [vmem:[%s1] sm:$0xf]
      %v275 = vld [vmem:[%s1 + $0x4] sm:$0xf]
      %v276 = vld [vmem:[%s1 + $0x8] sm:$0xf]
      %v277 = vld [vmem:[%s1 + $0xc] sm:$0xf]
      %v278 = vld [vmem:[%s1 + $0x10] sm:$0xf]
      %v279 = vld [vmem:[%s1 + $0x14] sm:$0xf]
      %v280 = vld [vmem:[%s1 + $0x18] sm:$0xf]
      %v281 = vld [vmem:[%s1 + $0x1c] sm:$0xf]
      %v282 = vld [vmem:[%s1 + $0x20] sm:$0xf]
      %v283 = vld [vmem:[%s1 + $0x24] sm:$0xf]
      %v284 = vld [vmem:[%s1 + $0x28] sm:$0xf]
      %v285 = vld [vmem:[%s1 + $0x2c] sm:$0xf]
      %v286 = vld [vmem:[%s1 + $0x30] sm:$0xf]
      %v287 = vld [vmem:[%s1 + $0x34] sm:$0xf]
      %v288 = vld [vmem:[%s1 + $0x38] sm:$0xf]
      %v289 = vld [vmem:[%s1 + $0x3c] sm:$0xf]
      %v306 = vunpack.c.l.b16 %v274
      %v307 = vunpack.c.l.b16 %v275
      %v308 = vunpack.c.l.b16 %v276
      %v309 = vunpack.c.l.b16 %v277
      %v310 = vunpack.c.l.b16 %v278
      %v311 = vunpack.c.l.b16 %v279
      %v312 = vunpack.c.l.b16 %v280
      %v313 = vunpack.c.l.b16 %v281
      %v314 = vunpack.c.l.b16 %v282
      %v315 = vunpack.c.l.b16 %v283
      %v316 = vunpack.c.l.b16 %v284
      %v317 = vunpack.c.l.b16 %v285
      %v318 = vunpack.c.l.b16 %v286
      %v319 = vunpack.c.l.b16 %v287
      %v320 = vunpack.c.l.b16 %v288
      %v321 = vunpack.c.l.b16 %v289
      %v322 = vpack.c.b16 %v307, %v306
      %v323 = vpack.c.b16 %v309, %v308
      %v324 = vpack.c.b16 %v311, %v310
      %v325 = vpack.c.b16 %v313, %v312
      %v326 = vpack.c.b16 %v315, %v314
      %v327 = vpack.c.b16 %v317, %v316
      %v328 = vpack.c.b16 %v319, %v318
      %v329 = vpack.c.b16 %v321, %v320
      %338 = vmatprep.subr.bf16.mxu0 0
      %339 = vmatpush1.bf16.msra.mxu0 %v322
      %340 = vmatprep.subr.bf16.mxu0 0
      %341 = vmatpush1.bf16.msra.mxu0 %v323
      %342 = vmatprep.subr.bf16.mxu0 0
      %343 = vmatpush1.bf16.msra.mxu0 %v324
      %344 = vmatprep.subr.bf16.mxu0 0
      %345 = vmatpush1.bf16.msra.mxu0 %v325
      %346 = vmatprep.subr.bf16.mxu0 0
      %347 = vmatpush1.bf16.msra.mxu0 %v326
      %348 = vmatprep.subr.bf16.mxu0 0
      %349 = vmatpush1.bf16.msra.mxu0 %v327
      %350 = vmatprep.subr.bf16.mxu0 0
      %351 = vmatpush1.bf16.msra.mxu0 %v328
      %352 = vmatprep.subr.bf16.mxu0 0
      %353 = vmatpush1.bf16.msra.mxu0 %v329
      %354 = vmatprep.subr.bf16.mxu0 0
      %355 = vmatpush1.bf16.msra.mxu0 0
      %356 = vmatprep.subr.bf16.mxu0 0
      %357 = vmatpush1.bf16.msra.mxu0 0
      %358 = vmatprep.subr.bf16.mxu0 0
      %359 = vmatpush1.bf16.msra.mxu0 0
      %360 = vmatprep.subr.bf16.mxu0 0
      %361 = vmatpush1.bf16.msra.mxu0 0
      %362 = vmatprep.subr.bf16.mxu0 0
      %363 = vmatpush1.bf16.msra.mxu0 0
      %364 = vmatprep.subr.bf16.mxu0 0
      %365 = vmatpush1.bf16.msra.mxu0 0
      %366 = vmatprep.subr.bf16.mxu0 0
      %367 = vmatpush1.bf16.msra.mxu0 0
      %368 = vmatprep.subr.bf16.mxu0 0
      %369 = vmatpush1.bf16.msra.mxu0 0
      %370 = vmatprep.mubr.bf16.mxu0 0
      %371 = vmatmul.mubr.bf16.gmra.mrb[0].mxu0 %v242
      %v372 = vpop.f32.mrb[0].mxu0
      %v373 = vadd.f32 0.0, %v372
      %v374 = vpop.f32.mrb[0].mxu0
      %v375 = vpop.f32.mrb[0].mxu0
      %v376 = vadd.f32 0.0, %v375
      %v377 = vpop.f32.mrb[0].mxu0
      %378 = vmatprep.mubr.bf16.mxu0 0
      %379 = vmatmul.mubr.bf16.gmra.mrb[0].mxu0 %v243
      %v380 = vpop.f32.mrb[0].mxu0
      %v381 = vadd.f32 0.0, %v380
      %v382 = vpop.f32.mrb[0].mxu0
      %v383 = vpop.f32.mrb[0].mxu0
      %v384 = vadd.f32 0.0, %v383
      %v385 = vpop.f32.mrb[0].mxu0
      %386 = vmatprep.mubr.bf16.mxu0 0
      %387 = vmatmul.mubr.bf16.gmra.mrb[0].mxu0 %v244
      %v388 = vpop.f32.mrb[0].mxu0
      %v389 = vadd.f32 0.0, %v388
      %v390 = vpop.f32.mrb[0].mxu0
      %v391 = vpop.f32.mrb[0].mxu0
      %v392 = vadd.f32 0.0, %v391
      %v393 = vpop.f32.mrb[0].mxu0
      %394 = vmatprep.mubr.bf16.mxu0 0
      %395 = vmatmul.mubr.bf16.gmra.mrb[0].mxu0 %v245
      %v396 = vpop.f32.mrb[0].mxu0
      %v397 = vadd.f32 0.0, %v396
      %v398 = vpop.f32.mrb[0].mxu0
      %v399 = vpop.f32.mrb[0].mxu0
      %v400 = vadd.f32 0.0, %v399
      %v401 = vpop.f32.mrb[0].mxu0
      %402 = vmatprep.mubr.bf16.mxu0 0
      %403 = vmatmul.mubr.bf16.gmra.mrb[0].mxu0 %v246
      %v404 = vpop.f32.mrb[0].mxu0
      %v405 = vadd.f32 0.0, %v404
      %v406 = vpop.f32.mrb[0].mxu0
      %v407 = vpop.f32.mrb[0].mxu0
      %v408 = vadd.f32 0.0, %v407
      %v409 = vpop.f32.mrb[0].mxu0
      %410 = vmatprep.mubr.bf16.mxu0 0
      %411 = vmatmul.mubr.bf16.gmra.mrb[0].mxu0 %v247
      %v412 = vpop.f32.mrb[0].mxu0
      %v413 = vadd.f32 0.0, %v412
      %v414 = vpop.f32.mrb[0].mxu0
      %v415 = vpop.f32.mrb[0].mxu0
      %v416 = vadd.f32 0.0, %v415
      %v417 = vpop.f32.mrb[0].mxu0
      %418 = vmatprep.mubr.bf16.mxu0 0
      %419 = vmatmul.mubr.bf16.gmra.mrb[0].mxu0 %v248
      %v420 = vpop.f32.mrb[0].mxu0
      %v421 = vadd.f32 0.0, %v420
      %v422 = vpop.f32.mrb[0].mxu0
      %v423 = vpop.f32.mrb[0].mxu0
      %v424 = vadd.f32 0.0, %v423
      %v425 = vpop.f32.mrb[0].mxu0
      %426 = vmatprep.mubr.bf16.mxu0 0
      %427 = vmatmul.mubr.bf16.gmra.mrb[0].mxu0 %v249
      %v428 = vpop.f32.mrb[0].mxu0
      %v429 = vadd.f32 0.0, %v428
      %v430 = vpop.f32.mrb[0].mxu0
      %v431 = vpop.f32.mrb[0].mxu0
      %v432 = vadd.f32 0.0, %v431
      %v433 = vpop.f32.mrb[0].mxu0
      %434 = vmatprep.mubr.bf16.mxu0 0
      %435 = vmatmul.mubr.bf16.gmra.mrb[0].mxu0 %v250
      %v436 = vpop.f32.mrb[0].mxu0
      %v437 = vadd.f32 0.0, %v436
      %v438 = vpop.f32.mrb[0].mxu0
      %v439 = vpop.f32.mrb[0].mxu0
      %v440 = vadd.f32 0.0, %v439
      %v441 = vpop.f32.mrb[0].mxu0
      %442 = vmatprep.mubr.bf16.mxu0 0
      %443 = vmatmul.mubr.bf16.gmra.mrb[0].mxu0 %v251
      %v444 = vpop.f32.mrb[0].mxu0
      %v445 = vadd.f32 0.0, %v444
      %v446 = vpop.f32.mrb[0].mxu0
      %v447 = vpop.f32.mrb[0].mxu0
      %v448 = vadd.f32 0.0, %v447
      %v449 = vpop.f32.mrb[0].mxu0
      %450 = vmatprep.mubr.bf16.mxu0 0
      %451 = vmatmul.mubr.bf16.gmra.mrb[0].mxu0 %v252
      %v452 = vpop.f32.mrb[0].mxu0
      %v453 = vadd.f32 0.0, %v452
      %v454 = vpop.f32.mrb[0].mxu0
      %v455 = vpop.f32.mrb[0].mxu0
      %v456 = vadd.f32 0.0, %v455
      %v457 = vpop.f32.mrb[0].mxu0
      %458 = vmatprep.mubr.bf16.mxu0 0
      %459 = vmatmul.mubr.bf16.gmra.mrb[0].mxu0 %v253
      %v460 = vpop.f32.mrb[0].mxu0
      %v461 = vadd.f32 0.0, %v460
      %v462 = vpop.f32.mrb[0].mxu0
      %v463 = vpop.f32.mrb[0].mxu0
      %v464 = vadd.f32 0.0, %v463
      %v465 = vpop.f32.mrb[0].mxu0
      %466 = vmatprep.mubr.bf16.mxu0 0
      %467 = vmatmul.mubr.bf16.gmra.mrb[0].mxu0 %v254
      %v468 = vpop.f32.mrb[0].mxu0
      %v469 = vadd.f32 0.0, %v468
      %v470 = vpop.f32.mrb[0].mxu0
      %v471 = vpop.f32.mrb[0].mxu0
      %v472 = vadd.f32 0.0, %v471
      %v473 = vpop.f32.mrb[0].mxu0
      %474 = vmatprep.mubr.bf16.mxu0 0
      %475 = vmatmul.mubr.bf16.gmra.mrb[0].mxu0 %v255
      %v476 = vpop.f32.mrb[0].mxu0
      %v477 = vadd.f32 0.0, %v476
      %v478 = vpop.f32.mrb[0].mxu0
      %v479 = vpop.f32.mrb[0].mxu0
      %v480 = vadd.f32 0.0, %v479
      %v481 = vpop.f32.mrb[0].mxu0
      %482 = vmatprep.mubr.bf16.mxu0 0
      %483 = vmatmul.mubr.bf16.gmra.mrb[0].mxu0 %v256
      %v484 = vpop.f32.mrb[0].mxu0
      %v485 = vadd.f32 0.0, %v484
      %v486 = vpop.f32.mrb[0].mxu0
      %v487 = vpop.f32.mrb[0].mxu0
      %v488 = vadd.f32 0.0, %v487
      %v489 = vpop.f32.mrb[0].mxu0
      %490 = vmatprep.mubr.bf16.mxu0 0
      %491 = vmatmul.mubr.bf16.gmra.mrb[0].mxu0 %v257
      %v492 = vpop.f32.mrb[0].mxu0
      %v493 = vadd.f32 0.0, %v492
      %v494 = vpop.f32.mrb[0].mxu0
      %v495 = vpop.f32.mrb[0].mxu0
      %v496 = vadd.f32 0.0, %v495
      %v497 = vpop.f32.mrb[0].mxu0
      %498 = vmatprep.mubr.bf16.mxu0 0
      %499 = vmatmul.mubr.bf16.gmra.mrb[0].mxu0 %v258
      %v500 = vpop.f32.mrb[0].mxu0
      %v501 = vadd.f32 0.0, %v500
      %v502 = vpop.f32.mrb[0].mxu0
      %v503 = vpop.f32.mrb[0].mxu0
      %v504 = vadd.f32 0.0, %v503
      %v505 = vpop.f32.mrb[0].mxu0
      %506 = vmatprep.mubr.bf16.mxu0 0
      %507 = vmatmul.mubr.bf16.gmra.mrb[0].mxu0 %v259
      %v508 = vpop.f32.mrb[0].mxu0
      %v509 = vadd.f32 0.0, %v508
      %v510 = vpop.f32.mrb[0].mxu0
      %v511 = vpop.f32.mrb[0].mxu0
      %v512 = vadd.f32 0.0, %v511
      %v513 = vpop.f32.mrb[0].mxu0
      %514 = vmatprep.mubr.bf16.mxu0 0
      %515 = vmatmul.mubr.bf16.gmra.mrb[0].mxu0 %v260
      %v516 = vpop.f32.mrb[0].mxu0
      %v517 = vadd.f32 0.0, %v516
      %v518 = vpop.f32.mrb[0].mxu0
      %v519 = vpop.f32.mrb[0].mxu0
      %v520 = vadd.f32 0.0, %v519
      %v521 = vpop.f32.mrb[0].mxu0
      %522 = vmatprep.mubr.bf16.mxu0 0
      %523 = vmatmul.mubr.bf16.gmra.mrb[0].mxu0 %v261
      %v524 = vpop.f32.mrb[0].mxu0
      %v525 = vadd.f32 0.0, %v524
      %v526 = vpop.f32.mrb[0].mxu0
      %v527 = vpop.f32.mrb[0].mxu0
      %v528 = vadd.f32 0.0, %v527
      %v529 = vpop.f32.mrb[0].mxu0
      %530 = vmatprep.mubr.bf16.mxu0 0
      %531 = vmatmul.mubr.bf16.gmra.mrb[0].mxu0 %v262
      %v532 = vpop.f32.mrb[0].mxu0
      %v533 = vadd.f32 0.0, %v532
      %v534 = vpop.f32.mrb[0].mxu0
      %v535 = vpop.f32.mrb[0].mxu0
      %v536 = vadd.f32 0.0, %v535
      %v537 = vpop.f32.mrb[0].mxu0
      %538 = vmatprep.mubr.bf16.mxu0 0
      %539 = vmatmul.mubr.bf16.gmra.mrb[0].mxu0 %v263
      %v540 = vpop.f32.mrb[0].mxu0
      %v541 = vadd.f32 0.0, %v540
      %v542 = vpop.f32.mrb[0].mxu0
      %v543 = vpop.f32.mrb[0].mxu0
      %v544 = vadd.f32 0.0, %v543
      %v545 = vpop.f32.mrb[0].mxu0
      %546 = vmatprep.mubr.bf16.mxu0 0
      %547 = vmatmul.mubr.bf16.gmra.mrb[0].mxu0 %v264
      %v548 = vpop.f32.mrb[0].mxu0
      %v549 = vadd.f32 0.0, %v548
      %v550 = vpop.f32.mrb[0].mxu0
      %v551 = vpop.f32.mrb[0].mxu0
      %v552 = vadd.f32 0.0, %v551
      %v553 = vpop.f32.mrb[0].mxu0
      %554 = vmatprep.mubr.bf16.mxu0 0
      %555 = vmatmul.mubr.bf16.gmra.mrb[0].mxu0 %v265
      %v556 = vpop.f32.mrb[0].mxu0
      %v557 = vadd.f32 0.0, %v556
      %v558 = vpop.f32.mrb[0].mxu0
      %v559 = vpop.f32.mrb[0].mxu0
      %v560 = vadd.f32 0.0, %v559
      %v561 = vpop.f32.mrb[0].mxu0
      %562 = vmatprep.mubr.bf16.mxu0 0
      %563 = vmatmul.mubr.bf16.gmra.mrb[0].mxu0 %v266
      %v564 = vpop.f32.mrb[0].mxu0
      %v565 = vadd.f32 0.0, %v564
      %v566 = vpop.f32.mrb[0].mxu0
      %v567 = vpop.f32.mrb[0].mxu0
      %v568 = vadd.f32 0.0, %v567
      %v569 = vpop.f32.mrb[0].mxu0
      %570 = vmatprep.mubr.bf16.mxu0 0
      %571 = vmatmul.mubr.bf16.gmra.mrb[0].mxu0 %v267
      %v572 = vpop.f32.mrb[0].mxu0
      %v573 = vadd.f32 0.0, %v572
      %v574 = vpop.f32.mrb[0].mxu0
      %v575 = vpop.f32.mrb[0].mxu0
      %v576 = vadd.f32 0.0, %v575
      %v577 = vpop.f32.mrb[0].mxu0
      %578 = vmatprep.mubr.bf16.mxu0 0
      %579 = vmatmul.mubr.bf16.gmra.mrb[0].mxu0 %v268
      %v580 = vpop.f32.mrb[0].mxu0
      %v581 = vadd.f32 0.0, %v580
      %v582 = vpop.f32.mrb[0].mxu0
      %v583 = vpop.f32.mrb[0].mxu0
      %v584 = vadd.f32 0.0, %v583
      %v585 = vpop.f32.mrb[0].mxu0
      %586 = vmatprep.mubr.bf16.mxu0 0
      %587 = vmatmul.mubr.bf16.gmra.mrb[0].mxu0 %v269
      %v588 = vpop.f32.mrb[0].mxu0
      %v589 = vadd.f32 0.0, %v588
      %v590 = vpop.f32.mrb[0].mxu0
      %v591 = vpop.f32.mrb[0].mxu0
      %v592 = vadd.f32 0.0, %v591
      %v593 = vpop.f32.mrb[0].mxu0
      %594 = vmatprep.mubr.bf16.mxu0 0
      %595 = vmatmul.mubr.bf16.gmra.mrb[0].mxu0 %v270
      %v596 = vpop.f32.mrb[0].mxu0
      %v597 = vadd.f32 0.0, %v596
      %v598 = vpop.f32.mrb[0].mxu0
      %v599 = vpop.f32.mrb[0].mxu0
      %v600 = vadd.f32 0.0, %v599
      %v601 = vpop.f32.mrb[0].mxu0
      %602 = vmatprep.mubr.bf16.mxu0 0
      %603 = vmatmul.mubr.bf16.gmra.mrb[0].mxu0 %v271
      %v604 = vpop.f32.mrb[0].mxu0
      %v605 = vadd.f32 0.0, %v604
      %v606 = vpop.f32.mrb[0].mxu0
      %v607 = vpop.f32.mrb[0].mxu0
      %v608 = vadd.f32 0.0, %v607
      %v609 = vpop.f32.mrb[0].mxu0
      %610 = vmatprep.mubr.bf16.mxu0 0
      %611 = vmatmul.mubr.bf16.gmra.mrb[0].mxu0 %v272
      %v612 = vpop.f32.mrb[0].mxu0
      %v613 = vadd.f32 0.0, %v612
      %v614 = vpop.f32.mrb[0].mxu0
      %v615 = vpop.f32.mrb[0].mxu0
      %v616 = vadd.f32 0.0, %v615
      %v617 = vpop.f32.mrb[0].mxu0
      %618 = vmatprep.mubr.bf16.mxu0 0
      %619 = vmatmul.mubr.bf16.gmra.mrb[0].mxu0 %v273
      %v620 = vpop.f32.mrb[0].mxu0
      %v621 = vadd.f32 0.0, %v620
      %v622 = vpop.f32.mrb[0].mxu0
      %v623 = vpop.f32.mrb[0].mxu0
      %v624 = vadd.f32 0.0, %v623
      %v625 = vpop.f32.mrb[0].mxu0
      %626 = vdwg.mxu0
      %627 = vst [vmem:[%s170] sm:$0xff] %v373
      %628 = vst [vmem:[%s170 + $0x8] sm:$0xff] %v376
      %629 = vst [vmem:[%s170 + $0x10] sm:$0xff] %v381
      %630 = vst [vmem:[%s170 + $0x18] sm:$0xff] %v384
      %631 = vst [vmem:[%s170 + $0x20] sm:$0xff] %v389
      %632 = vst [vmem:[%s170 + $0x28] sm:$0xff] %v392
      %633 = vst [vmem:[%s170 + $0x30] sm:$0xff] %v397
      %634 = vst [vmem:[%s170 + $0x38] sm:$0xff] %v400
      %635 = vst [vmem:[%s170 + $0x40] sm:$0xff] %v405
      %636 = vst [vmem:[%s170 + $0x48] sm:$0xff] %v408
      %637 = vst [vmem:[%s170 + $0x50] sm:$0xff] %v413
      %638 = vst [vmem:[%s170 + $0x58] sm:$0xff] %v416
      %639 = vst [vmem:[%s170 + $0x60] sm:$0xff] %v421
      %640 = vst [vmem:[%s170 + $0x68] sm:$0xff] %v424
      %641 = vst [vmem:[%s170 + $0x70] sm:$0xff] %v429
      %642 = vst [vmem:[%s170 + $0x78] sm:$0xff] %v432
      %643 = vst [vmem:[%s170 + $0x80] sm:$0xff] %v437
      %644 = vst [vmem:[%s170 + $0x88] sm:$0xff] %v440
      %645 = vst [vmem:[%s170 + $0x90] sm:$0xff] %v445
      %646 = vst [vmem:[%s170 + $0x98] sm:$0xff] %v448
      %647 = vst [vmem:[%s170 + $0xa0] sm:$0xff] %v453
      %648 = vst [vmem:[%s170 + $0xa8] sm:$0xff] %v456
      %649 = vst [vmem:[%s170 + $0xb0] sm:$0xff] %v461
      %650 = vst [vmem:[%s170 + $0xb8] sm:$0xff] %v464
      %651 = vst [vmem:[%s170 + $0xc0] sm:$0xff] %v469
      %652 = vst [vmem:[%s170 + $0xc8] sm:$0xff] %v472
      %653 = vst [vmem:[%s170 + $0xd0] sm:$0xff] %v477
      %654 = vst [vmem:[%s170 + $0xd8] sm:$0xff] %v480
      %655 = vst [vmem:[%s170 + $0xe0] sm:$0xff] %v485
      %656 = vst [vmem:[%s170 + $0xe8] sm:$0xff] %v488
      %657 = vst [vmem:[%s170 + $0xf0] sm:$0xff] %v493
      %658 = vst [vmem:[%s170 + $0xf8] sm:$0xff] %v496
      %659 = vst [vmem:[%s170 + $0x100] sm:$0xff] %v501
      %660 = vst [vmem:[%s170 + $0x108] sm:$0xff] %v504
      %661 = vst [vmem:[%s170 + $0x110] sm:$0xff] %v509
      %662 = vst [vmem:[%s170 + $0x118] sm:$0xff] %v512
      %663 = vst [vmem:[%s170 + $0x120] sm:$0xff] %v517
      %664 = vst [vmem:[%s170 + $0x128] sm:$0xff] %v520
      %665 = vst [vmem:[%s170 + $0x130] sm:$0xff] %v525
      %666 = vst [vmem:[%s170 + $0x138] sm:$0xff] %v528
      %667 = vst [vmem:[%s170 + $0x140] sm:$0xff] %v533
      %668 = vst [vmem:[%s170 + $0x148] sm:$0xff] %v536
      %669 = vst [vmem:[%s170 + $0x150] sm:$0xff] %v541
      %670 = vst [vmem:[%s170 + $0x158] sm:$0xff] %v544
      %671 = vst [vmem:[%s170 + $0x160] sm:$0xff] %v549
      %672 = vst [vmem:[%s170 + $0x168] sm:$0xff] %v552
      %673 = vst [vmem:[%s170 + $0x170] sm:$0xff] %v557
      %674 = vst [vmem:[%s170 + $0x178] sm:$0xff] %v560
      %675 = vst [vmem:[%s170 + $0x180] sm:$0xff] %v565
      %676 = vst [vmem:[%s170 + $0x188] sm:$0xff] %v568
      %677 = vst [vmem:[%s170 + $0x190] sm:$0xff] %v573
      %678 = vst [vmem:[%s170 + $0x198] sm:$0xff] %v576
      %679 = vst [vmem:[%s170 + $0x1a0] sm:$0xff] %v581
      %680 = vst [vmem:[%s170 + $0x1a8] sm:$0xff] %v584
      %681 = vst [vmem:[%s170 + $0x1b0] sm:$0xff] %v589
      %682 = vst [vmem:[%s170 + $0x1b8] sm:$0xff] %v592
      %683 = vst [vmem:[%s170 + $0x1c0] sm:$0xff] %v597
      %684 = vst [vmem:[%s170 + $0x1c8] sm:$0xff] %v600
      %685 = vst [vmem:[%s170 + $0x1d0] sm:$0xff] %v605
      %686 = vst [vmem:[%s170 + $0x1d8] sm:$0xff] %v608
      %687 = vst [vmem:[%s170 + $0x1e0] sm:$0xff] %v613
      %688 = vst [vmem:[%s170 + $0x1e8] sm:$0xff] %v616
      %689 = vst [vmem:[%s170 + $0x1f0] sm:$0xff] %v621
      %690 = vst [vmem:[%s170 + $0x1f8] sm:$0xff] %v624
      %v691 = vld [vmem:[%s3] sm:$0x3]
      %v692 = vadd.f32 %v373, %v376
      %v693 = vadd.f32 %v692, %v381
      %v694 = vadd.f32 %v693, %v384
      %v695 = vadd.f32 %v694, %v389
      %v696 = vadd.f32 %v695, %v392
      %v697 = vadd.f32 %v696, %v397
      %v698 = vadd.f32 %v697, %v400
      %v699 = vadd.f32 %v698, %v405
      %v700 = vadd.f32 %v699, %v408
      %v701 = vadd.f32 %v700, %v413
      %v702 = vadd.f32 %v701, %v416
      %v703 = vadd.f32 %v702, %v421
      %v704 = vadd.f32 %v703, %v424
      %v705 = vadd.f32 %v704, %v429
      %v706 = vadd.f32 %v705, %v432
      %v707 = vadd.f32 %v706, %v437
      %v708 = vadd.f32 %v707, %v440
      %v709 = vadd.f32 %v708, %v445
      %v710 = vadd.f32 %v709, %v448
      %v711 = vadd.f32 %v710, %v453
      %v712 = vadd.f32 %v711, %v456
      %v713 = vadd.f32 %v712, %v461
      %v714 = vadd.f32 %v713, %v464
      %v715 = vadd.f32 %v714, %v469
      %v716 = vadd.f32 %v715, %v472
      %v717 = vadd.f32 %v716, %v477
      %v718 = vadd.f32 %v717, %v480
      %v719 = vadd.f32 %v718, %v485
      %v720 = vadd.f32 %v719, %v488
      %v721 = vadd.f32 %v720, %v493
      %v722 = vadd.f32 %v721, %v496
      %v723 = vadd.f32 %v722, %v501
      %v724 = vadd.f32 %v723, %v504
      %v725 = vadd.f32 %v724, %v509
      %v726 = vadd.f32 %v725, %v512
      %v727 = vadd.f32 %v726, %v517
      %v728 = vadd.f32 %v727, %v520
      %v729 = vadd.f32 %v728, %v525
      %v730 = vadd.f32 %v729, %v528
      %v731 = vadd.f32 %v730, %v533
      %v732 = vadd.f32 %v731, %v536
      %v733 = vadd.f32 %v732, %v541
      %v734 = vadd.f32 %v733, %v544
      %v735 = vadd.f32 %v734, %v549
      %v736 = vadd.f32 %v735, %v552
      %v737 = vadd.f32 %v736, %v557
      %v738 = vadd.f32 %v737, %v560
      %v739 = vadd.f32 %v738, %v565
      %v740 = vadd.f32 %v739, %v568
      %v741 = vadd.f32 %v740, %v573
      %v742 = vadd.f32 %v741, %v576
      %v743 = vadd.f32 %v742, %v581
      %v744 = vadd.f32 %v743, %v584
      %v745 = vadd.f32 %v744, %v589
      %v746 = vadd.f32 %v745, %v592
      %v747 = vadd.f32 %v746, %v597
      %v748 = vadd.f32 %v747, %v600
      %v749 = vadd.f32 %v748, %v605
      %v750 = vadd.f32 %v749, %v608
      %v751 = vadd.f32 %v750, %v613
      %v752 = vadd.f32 %v751, %v616
      %v753 = vadd.f32 %v752, %v621
      %v754 = vadd.f32 %v753, %v624
      %v755 = vrot.slane %v754, 4
      %v756 = vadd.f32 %v754, %v755
      %v757 = vrot.slane %v756, 2
      %v758 = vadd.f32 %v756, %v757
      %v759 = vrot.slane %v758, 1
      %v760 = vadd.f32 %v758, %v759
      %v761 = vmul.f32 %v373, %v373
      %v762 = vmul.f32 %v376, %v376
      %v763 = vmul.f32 %v381, %v381
      %v764 = vmul.f32 %v384, %v384
      %v765 = vmul.f32 %v389, %v389
      %v766 = vmul.f32 %v392, %v392
      %v767 = vmul.f32 %v397, %v397
      %v768 = vmul.f32 %v400, %v400
      %v769 = vmul.f32 %v405, %v405
      %v770 = vmul.f32 %v408, %v408
      %v771 = vmul.f32 %v413, %v413
      %v772 = vmul.f32 %v416, %v416
      %v773 = vmul.f32 %v421, %v421
      %v774 = vmul.f32 %v424, %v424
      %v775 = vmul.f32 %v429, %v429
      %v776 = vmul.f32 %v432, %v432
      %v777 = vmul.f32 %v437, %v437
      %v778 = vmul.f32 %v440, %v440
      %v779 = vmul.f32 %v445, %v445
      %v780 = vmul.f32 %v448, %v448
      %v781 = vmul.f32 %v453, %v453
      %v782 = vmul.f32 %v456, %v456
      %v783 = vmul.f32 %v461, %v461
      %v784 = vmul.f32 %v464, %v464
      %v785 = vmul.f32 %v469, %v469
      %v786 = vmul.f32 %v472, %v472
      %v787 = vmul.f32 %v477, %v477
      %v788 = vmul.f32 %v480, %v480
      %v789 = vmul.f32 %v485, %v485
      %v790 = vmul.f32 %v488, %v488
      %v791 = vmul.f32 %v493, %v493
      %v792 = vmul.f32 %v496, %v496
      %v793 = vmul.f32 %v501, %v501
      %v794 = vmul.f32 %v504, %v504
      %v795 = vmul.f32 %v509, %v509
      %v796 = vmul.f32 %v512, %v512
      %v797 = vmul.f32 %v517, %v517
      %v798 = vmul.f32 %v520, %v520
      %v799 = vmul.f32 %v525, %v525
      %v800 = vmul.f32 %v528, %v528
      %v801 = vmul.f32 %v533, %v533
      %v802 = vmul.f32 %v536, %v536
      %v803 = vmul.f32 %v541, %v541
      %v804 = vmul.f32 %v544, %v544
      %v805 = vmul.f32 %v549, %v549
      %v806 = vmul.f32 %v552, %v552
      %v807 = vmul.f32 %v557, %v557
      %v808 = vmul.f32 %v560, %v560
      %v809 = vmul.f32 %v565, %v565
      %v810 = vmul.f32 %v568, %v568
      %v811 = vmul.f32 %v573, %v573
      %v812 = vmul.f32 %v576, %v576
      %v813 = vmul.f32 %v581, %v581
      %v814 = vmul.f32 %v584, %v584
      %v815 = vmul.f32 %v589, %v589
      %v816 = vmul.f32 %v592, %v592
      %v817 = vmul.f32 %v597, %v597
      %v818 = vmul.f32 %v600, %v600
      %v819 = vmul.f32 %v605, %v605
      %v820 = vmul.f32 %v608, %v608
      %v821 = vmul.f32 %v613, %v613
      %v822 = vmul.f32 %v616, %v616
      %v823 = vmul.f32 %v621, %v621
      %v824 = vmul.f32 %v624, %v624
      %v825 = vadd.f32 %v761, %v762
      %v826 = vadd.f32 %v825, %v763
      %v827 = vadd.f32 %v826, %v764
      %v828 = vadd.f32 %v827, %v765
      %v829 = vadd.f32 %v828, %v766
      %v830 = vadd.f32 %v829, %v767
      %v831 = vadd.f32 %v830, %v768
      %v832 = vadd.f32 %v831, %v769
      %v833 = vadd.f32 %v832, %v770
      %v834 = vadd.f32 %v833, %v771
      %v835 = vadd.f32 %v834, %v772
      %v836 = vadd.f32 %v835, %v773
      %v837 = vadd.f32 %v836, %v774
      %v838 = vadd.f32 %v837, %v775
      %v839 = vadd.f32 %v838, %v776
      %v840 = vadd.f32 %v839, %v777
      %v841 = vadd.f32 %v840, %v778
      %v842 = vadd.f32 %v841, %v779
      %v843 = vadd.f32 %v842, %v780
      %v844 = vadd.f32 %v843, %v781
      %v845 = vadd.f32 %v844, %v782
      %v846 = vadd.f32 %v845, %v783
      %v847 = vadd.f32 %v846, %v784
      %v848 = vadd.f32 %v847, %v785
      %v849 = vadd.f32 %v848, %v786
      %v850 = vadd.f32 %v849, %v787
      %v851 = vadd.f32 %v850, %v788
      %v852 = vadd.f32 %v851, %v789
      %v853 = vadd.f32 %v852, %v790
      %v854 = vadd.f32 %v853, %v791
      %v855 = vadd.f32 %v854, %v792
      %v856 = vadd.f32 %v855, %v793
      %v857 = vadd.f32 %v856, %v794
      %v858 = vadd.f32 %v857, %v795
      %v859 = vadd.f32 %v858, %v796
      %v860 = vadd.f32 %v859, %v797
      %v861 = vadd.f32 %v860, %v798
      %v862 = vadd.f32 %v861, %v799
      %v863 = vadd.f32 %v862, %v800
      %v864 = vadd.f32 %v863, %v801
      %v865 = vadd.f32 %v864, %v802
      %v866 = vadd.f32 %v865, %v803
      %v867 = vadd.f32 %v866, %v804
      %v868 = vadd.f32 %v867, %v805
      %v869 = vadd.f32 %v868, %v806
      %v870 = vadd.f32 %v869, %v807
      %v871 = vadd.f32 %v870, %v808
      %v872 = vadd.f32 %v871, %v809
      %v873 = vadd.f32 %v872, %v810
      %v874 = vadd.f32 %v873, %v811
      %v875 = vadd.f32 %v874, %v812
      %v876 = vadd.f32 %v875, %v813
      %v877 = vadd.f32 %v876, %v814
      %v878 = vadd.f32 %v877, %v815
      %v879 = vadd.f32 %v878, %v816
      %v880 = vadd.f32 %v879, %v817
      %v881 = vadd.f32 %v880, %v818
      %v882 = vadd.f32 %v881, %v819
      %v883 = vadd.f32 %v882, %v820
      %v884 = vadd.f32 %v883, %v821
      %v885 = vadd.f32 %v884, %v822
      %v886 = vadd.f32 %v885, %v823
      %v887 = vadd.f32 %v886, %v824
      %v888 = vrot.slane %v887, 4
      %v889 = vadd.f32 %v887, %v888
      %v890 = vrot.slane %v889, 2
      %v891 = vadd.f32 %v889, %v890
      %v892 = vrot.slane %v891, 1
      %v893 = vadd.f32 %v891, %v892
      %vm894 = vcmask 1040384
      %v895 = vsel %vm894, %v760, %v893
      %v896 = vadd.f32 %v691, %v895
      %897 = vst [vmem:[%s3] sm:$0x3] %v896
      %s898 = smul.u32 64, %s15
      %p899 = scmp.lt.s32.totalorder %s898, 191
      %s900 = scalar_select %p899, %s898, 191
      %s901 = smul.addr %s900, 8
      %s902 = scalar_lea.vmem %s2, %s901
      // Predicated region
      $region33: #{bottleneck_forward.8} parent=27 // pred_check
        %p903 = pneg %p80
      $region34: #{bottleneck_forward.8} parent=27 // pred_check_branch
        %905 = sbr.rel (%p903) target = $region36
      $region35: #{bottleneck_forward.8} parent=27 // pred_region
        %s906 = smul.u32 64, %s15
      $region36: #{bottleneck_forward.8} parent=27 // pred_fallthru
        _
      // Predicated region
      $region37: #{bottleneck_forward.8} parent=27 // pred_check
        %p907 = pneg %p101
      $region38: #{bottleneck_forward.8} parent=27 // pred_check_branch
        %909 = sbr.rel (%p907) target = $region40
      $region39: #{bottleneck_forward.8} parent=27 // pred_region
        _
      $region40: #{bottleneck_forward.8} parent=27 // pred_fallthru
        _
      // Predicated region
      $region41: #{bottleneck_forward.8} parent=27 // pred_check
        %p910 = pneg %p101
      $region42: #{bottleneck_forward.8} parent=27 // pred_check_branch
        %912 = sbr.rel (%p910) target = $region44
      $region43: #{bottleneck_forward.8} parent=27 // pred_region
        _
      $region44: #{bottleneck_forward.8} parent=27 // pred_fallthru
        _
    $region28: #{bottleneck_forward.8} parent=5 // pred_fallthru
      _
    %p913 = scmp.le.s32.totalorder 2, %s10
    // Predicated region
    $region45: #{bottleneck_forward.8} parent=5 // pred_check
      %p914 = pneg %p913
    $region46: #{bottleneck_forward.8} parent=5 // pred_check_branch
      %916 = sbr.rel (%p914) target = $region48
    $region47: #{bottleneck_forward.8} parent=5 // pred_region
      %s917 = ssub.s32 %s10, 2
      // Predicated region
      $region49: #{bottleneck_forward.8} parent=47 // pred_check
        %p918 = pneg %p86
      $region50: #{bottleneck_forward.8} parent=47 // pred_check_branch
        %920 = sbr.rel (%p918) target = $region52
      $region51: #{bottleneck_forward.8} parent=47 // pred_region
        %s921 = smul.u32 64, %s16
        %p922 = scmp.lt.s32.totalorder %s921, 191
        %s923 = scalar_select %p922, %s921, 191
        %s924 = smul.addr %s923, 8
        %s925 = scalar_lea.vmem %s2, %s924
      $region52: #{bottleneck_forward.8} parent=47 // pred_fallthru
        _
    $region48: #{bottleneck_forward.8} parent=5 // pred_fallthru
      _
  $region6: #{bottleneck_forward.8} parent=0 // loop_footer
    %s14 = sadd.s32 1, %s10
  $region7: #{bottleneck_forward.8} parent=0 // loop_footer_branch
    %9 = sbr.rel target = $region3
  $region8: #{bottleneck_forward.8} parent=0 // loop_exit
    _

// kernel: bottleneck_forward.13
$region0: #{bottleneck_forward.13}
  #allocation0 [shape = 'u32[]', space=smem, size = 0x4, offset = 0x4, fixed_abs, tag = 'smem constant byte address 0x4 - core index']
  #allocation1 [shape = 'u32[144,128]{1,0:T(1,128)}', space=vmem, size = 0x12000, scoped, tag = 'internal scratch']
  %s0 = inlined_call_operand.vmem [shape: f32[1536,128], index: 0, kind: input, shape index: {}]
  %s1 = inlined_call_operand.vmem [shape: f32[1,128], index: 1, kind: input, shape index: {}]
  %s2 = inlined_call_operand.vmem [shape: f32[1,128], index: 2, kind: input, shape index: {}]
  %s3 = inlined_call_operand.vmem [shape: f32[1536,128], index: 3, kind: output, shape index: {}]
  %s4 = sld [smem:[#allocation0]]
  $region45: #{bottleneck_forward.13} parent=0
    _
  %s6 = ssub.s32 1, %s4
  %s7 = scalar_select 0, %s6, %s4
  loop: start=0, step=1, limit=5
  $region2: #{bottleneck_forward.13} parent=0 // loop_pre_header
    _
  $region3: #{bottleneck_forward.13} parent=0 // loop_header
    %s9 = sphi 0, %s13
    %p10 = scmp.ge.s32.totalorder %s9, 5
    %s19 = sphi 0, %s21
    %s22 = sphi 0, %s19
    %s23 = sphi 0, %s22
    %s39 = sphi 0, %s23
    %s43 = sphi 0, %s43
    %s45 = sphi 0, %s43
    %s46 = sphi 0, %s45
    %s60 = sphi 0, %s46
    %s64 = sphi 0, %s64
    %s66 = sphi 0, %s64
    %s67 = sphi 0, %s66
    %s81 = sphi 0, %s67
    %s87 = sphi 0, %s89
    %s90 = sphi 0, %s87
    %s91 = sphi 0, %s90
    %s107 = sphi 0, %s91
  $region4: #{bottleneck_forward.13} parent=0 // loop_header_branch
    %12 = sbr.rel (%p10) target = $region8
  $region5: #{bottleneck_forward.13} parent=0 // loop_body
    %s14 = ssub.s32 %s9, 1
    %s15 = ssub.s32 %s9, 2
    %s16 = sadd.s32 %s9, 1
    %s17 = ssub.s32 %s9, %s16
    %p18 = scmp.eq.s32.totalorder %s17, 0
    %s20 = sadd.s32 %s19, 1
    %s21 = scalar_select %p18, %s19, %s20
    %p24 = pneg %p18
    %p25 = scmp.eq.s32.totalorder %s9, 2
    %p26 = por %p24, %p25
    %p27 = scmp.ne.s32.totalorder %s19, %s22
    %p28 = scmp.eq.s32.totalorder %s9, 0
    %p29 = por %p27, %p28
    %p30 = scmp.ne.s32.totalorder %s19, %s22
    %p31 = scmp.eq.s32.totalorder %s14, 2
    %p32 = por %p30, %p31
    %p33 = scmp.ne.s32.totalorder %s22, %s23
    %p34 = scmp.eq.s32.totalorder %s14, 0
    %p35 = por %p33, %p34
    %p36 = scmp.ne.s32.totalorder %s22, %s23
    %p37 = scmp.eq.s32.totalorder %s15, 2
    %p38 = por %p36, %p37
    %p40 = scmp.ne.s32.totalorder %s23, %s39
    %p41 = scmp.eq.s32.totalorder %s15, 0
    %p42 = por %p40, %p41
    %s44 = sadd.s32 %s43, 1
    %p47 = scmp.eq.s32.totalorder %s9, 2
    %p48 = scmp.ne.s32.totalorder %s43, %s45
    %p49 = scmp.eq.s32.totalorder %s9, 0
    %p50 = por %p48, %p49
    %p51 = scmp.ne.s32.totalorder %s43, %s45
    %p52 = scmp.eq.s32.totalorder %s14, 2
    %p53 = por %p51, %p52
    %p54 = scmp.ne.s32.totalorder %s45, %s46
    %p55 = scmp.eq.s32.totalorder %s14, 0
    %p56 = por %p54, %p55
    %p57 = scmp.ne.s32.totalorder %s45, %s46
    %p58 = scmp.eq.s32.totalorder %s15, 2
    %p59 = por %p57, %p58
    %p61 = scmp.ne.s32.totalorder %s46, %s60
    %p62 = scmp.eq.s32.totalorder %s15, 0
    %p63 = por %p61, %p62
    %s65 = sadd.s32 %s64, 1
    %p68 = scmp.eq.s32.totalorder %s9, 2
    %p69 = scmp.ne.s32.totalorder %s64, %s66
    %p70 = scmp.eq.s32.totalorder %s9, 0
    %p71 = por %p69, %p70
    %p72 = scmp.ne.s32.totalorder %s64, %s66
    %p73 = scmp.eq.s32.totalorder %s14, 2
    %p74 = por %p72, %p73
    %p75 = scmp.ne.s32.totalorder %s66, %s67
    %p76 = scmp.eq.s32.totalorder %s14, 0
    %p77 = por %p75, %p76
    %p78 = scmp.ne.s32.totalorder %s66, %s67
    %p79 = scmp.eq.s32.totalorder %s15, 2
    %p80 = por %p78, %p79
    %p82 = scmp.ne.s32.totalorder %s67, %s81
    %p83 = scmp.eq.s32.totalorder %s15, 0
    %p84 = por %p82, %p83
    %s85 = ssub.s32 %s9, %s16
    %p86 = scmp.eq.s32.totalorder %s85, 0
    %s88 = sadd.s32 %s87, 1
    %s89 = scalar_select %p86, %s87, %s88
    %p92 = pneg %p86
    %p93 = scmp.eq.s32.totalorder %s9, 2
    %p94 = por %p92, %p93
    %p95 = scmp.ne.s32.totalorder %s87, %s90
    %p96 = scmp.eq.s32.totalorder %s9, 0
    %p97 = por %p95, %p96
    %p98 = scmp.ne.s32.totalorder %s87, %s90
    %p99 = scmp.eq.s32.totalorder %s14, 2
    %p100 = por %p98, %p99
    %p101 = scmp.ne.s32.totalorder %s90, %s91
    %p102 = scmp.eq.s32.totalorder %s14, 0
    %p103 = por %p101, %p102
    %p104 = scmp.ne.s32.totalorder %s90, %s91
    %p105 = scmp.eq.s32.totalorder %s15, 2
    %p106 = por %p104, %p105
    %p108 = scmp.ne.s32.totalorder %s91, %s107
    %p109 = scmp.eq.s32.totalorder %s15, 0
    %p110 = por %p108, %p109
    %p111 = scmp.le.s32.totalorder 1, %s9
    %p112 = scmp.lt.s32.totalorder %s9, 4
    %p113 = pnand %p111, %p112
    %p114 = pneg %p113
    // Predicated region
    $region9: #{bottleneck_forward.13} parent=5 // pred_check
      _
    $region10: #{bottleneck_forward.13} parent=5 // pred_check_branch
      %116 = sbr.rel (%p113) target = $region12
    $region11: #{bottleneck_forward.13} parent=5 // pred_region
      %s117 = ssub.s32 %s9, 1
      // Predicated region
      $region13: #{bottleneck_forward.13} parent=11 // pred_check
        %p118 = pneg %p56
      $region14: #{bottleneck_forward.13} parent=11 // pred_check_branch
        %120 = sbr.rel (%p118) target = $region16
      $region15: #{bottleneck_forward.13} parent=11 // pred_region
        _
      $region16: #{bottleneck_forward.13} parent=11 // pred_fallthru
        _
      // Predicated region
      $region17: #{bottleneck_forward.13} parent=11 // pred_check
        %p121 = pneg %p77
      $region18: #{bottleneck_forward.13} parent=11 // pred_check_branch
        %123 = sbr.rel (%p121) target = $region20
      $region19: #{bottleneck_forward.13} parent=11 // pred_region
        _
      $region20: #{bottleneck_forward.13} parent=11 // pred_fallthru
        _
    $region12: #{bottleneck_forward.13} parent=5 // pred_fallthru
      _
    %p124 = scmp.lt.s32.totalorder %s9, 3
    // Predicated region
    $region21: #{bottleneck_forward.13} parent=5 // pred_check
      %p125 = pneg %p124
    $region22: #{bottleneck_forward.13} parent=5 // pred_check_branch
      %127 = sbr.rel (%p125) target = $region24
    $region23: #{bottleneck_forward.13} parent=5 // pred_region
      // Predicated region
      $region25: #{bottleneck_forward.13} parent=23 // pred_check
        %p128 = pneg %p29
      $region26: #{bottleneck_forward.13} parent=23 // pred_check_branch
        %130 = sbr.rel (%p128) target = $region28
      $region27: #{bottleneck_forward.13} parent=23 // pred_region
        %s131 = smul.u32 64, %s9
        %p132 = scmp.lt.s32.totalorder %s131, 191
        %s133 = scalar_select %p132, %s131, 191
        %s134 = smul.addr %s133, 8
        %s135 = scalar_lea.vmem %s0, %s134
        %s136 = smul.u32 64, %s9
      $region28: #{bottleneck_forward.13} parent=23 // pred_fallthru
        _
    $region24: #{bottleneck_forward.13} parent=5 // pred_fallthru
      _
    %p137 = scmp.le.s32.totalorder 1, %s9
    %p138 = scmp.lt.s32.totalorder %s9, 4
    %p139 = pnand %p137, %p138
    %p140 = pneg %p139
    // Predicated region
    $region29: #{bottleneck_forward.13} parent=5 // pred_check
      _
    $region30: #{bottleneck_forward.13} parent=5 // pred_check_branch
      %142 = sbr.rel (%p139) target = $region32
    $region31: #{bottleneck_forward.13} parent=5 // pred_region
      %s143 = ssub.s32 %s9, 1
      %s144 = smul.u32 64, %s14
      %p145 = scmp.lt.s32.totalorder %s144, 191
      %s146 = scalar_select %p145, %s144, 191
      %s147 = smul.addr %s146, 8
      %s148 = scalar_lea.vmem %s0, %s147
      %p149 = pneg %p35
      %p150 = pneg %p32
      %p151 = pneg %p56
      %p152 = pneg %p53
      %p153 = pneg %p77
      %p154 = pneg %p74
      %p155 = pneg %p103
      %p156 = pneg %p100
      %s157 = smul.u32 64, %s14
      %p158 = scmp.lt.s32.totalorder %s157, 191
      %s159 = scalar_select %p158, %s157, 191
      %s160 = smul.addr %s159, 8
      %s161 = scalar_lea.vmem %s3, %s160
      %s162 = smul.u32 64, %s14
      %p163 = scmp.lt.s32.totalorder %s162, 191
      %s164 = scalar_select %p163, %s162, 191
      %s165 = smul.addr %s164, 8
      %s166 = scalar_lea.vmem %s0, %s165
      %s167 = smul.u32 64, %s14
      %s168 = smul.u32 64, %s14
      %p169 = scmp.lt.s32.totalorder %s168, 191
      %s170 = scalar_select %p169, %s168, 191
      %s171 = smul.addr %s170, 8
      %s172 = scalar_lea.vmem %s3, %s171
      %s173 = smul.u32 64, %s14
      %v174 = vld [vmem:[%s166] sm:$0xff]
      %v175 = vld [vmem:[%s166 + $0x8] sm:$0xff]
      %v176 = vld [vmem:[%s166 + $0x10] sm:$0xff]
      %v177 = vld [vmem:[%s166 + $0x18] sm:$0xff]
      %v178 = vld [vmem:[%s166 + $0x20] sm:$0xff]
      %v179 = vld [vmem:[%s166 + $0x28] sm:$0xff]
      %v180 = vld [vmem:[%s166 + $0x30] sm:$0xff]
      %v181 = vld [vmem:[%s166 + $0x38] sm:$0xff]
      %v182 = vld [vmem:[%s166 + $0x40] sm:$0xff]
      %v183 = vld [vmem:[%s166 + $0x48] sm:$0xff]
      %v184 = vld [vmem:[%s166 + $0x50] sm:$0xff]
      %v185 = vld [vmem:[%s166 + $0x58] sm:$0xff]
      %v186 = vld [vmem:[%s166 + $0x60] sm:$0xff]
      %v187 = vld [vmem:[%s166 + $0x68] sm:$0xff]
      %v188 = vld [vmem:[%s166 + $0x70] sm:$0xff]
      %v189 = vld [vmem:[%s166 + $0x78] sm:$0xff]
      %v190 = vld [vmem:[%s166 + $0x80] sm:$0xff]
      %v191 = vld [vmem:[%s166 + $0x88] sm:$0xff]
      %v192 = vld [vmem:[%s166 + $0x90] sm:$0xff]
      %v193 = vld [vmem:[%s166 + $0x98] sm:$0xff]
      %v194 = vld [vmem:[%s166 + $0xa0] sm:$0xff]
      %v195 = vld [vmem:[%s166 + $0xa8] sm:$0xff]
      %v196 = vld [vmem:[%s166 + $0xb0] sm:$0xff]
      %v197 = vld [vmem:[%s166 + $0xb8] sm:$0xff]
      %v198 = vld [vmem:[%s166 + $0xc0] sm:$0xff]
      %v199 = vld [vmem:[%s166 + $0xc8] sm:$0xff]
      %v200 = vld [vmem:[%s166 + $0xd0] sm:$0xff]
      %v201 = vld [vmem:[%s166 + $0xd8] sm:$0xff]
      %v202 = vld [vmem:[%s166 + $0xe0] sm:$0xff]
      %v203 = vld [vmem:[%s166 + $0xe8] sm:$0xff]
      %v204 = vld [vmem:[%s166 + $0xf0] sm:$0xff]
      %v205 = vld [vmem:[%s166 + $0xf8] sm:$0xff]
      %v206 = vld [vmem:[%s166 + $0x100] sm:$0xff]
      %v207 = vld [vmem:[%s166 + $0x108] sm:$0xff]
      %v208 = vld [vmem:[%s166 + $0x110] sm:$0xff]
      %v209 = vld [vmem:[%s166 + $0x118] sm:$0xff]
      %v210 = vld [vmem:[%s166 + $0x120] sm:$0xff]
      %v211 = vld [vmem:[%s166 + $0x128] sm:$0xff]
      %v212 = vld [vmem:[%s166 + $0x130] sm:$0xff]
      %v213 = vld [vmem:[%s166 + $0x138] sm:$0xff]
      %v214 = vld [vmem:[%s166 + $0x140] sm:$0xff]
      %v215 = vld [vmem:[%s166 + $0x148] sm:$0xff]
      %v216 = vld [vmem:[%s166 + $0x150] sm:$0xff]
      %v217 = vld [vmem:[%s166 + $0x158] sm:$0xff]
      %v218 = vld [vmem:[%s166 + $0x160] sm:$0xff]
      %v219 = vld [vmem:[%s166 + $0x168] sm:$0xff]
      %v220 = vld [vmem:[%s166 + $0x170] sm:$0xff]
      %v221 = vld [vmem:[%s166 + $0x178] sm:$0xff]
      %v222 = vld [vmem:[%s166 + $0x180] sm:$0xff]
      %v223 = vld [vmem:[%s166 + $0x188] sm:$0xff]
      %v224 = vld [vmem:[%s166 + $0x190] sm:$0xff]
      %v225 = vld [vmem:[%s166 + $0x198] sm:$0xff]
      %v226 = vld [vmem:[%s166 + $0x1a0] sm:$0xff]
      %v227 = vld [vmem:[%s166 + $0x1a8] sm:$0xff]
      %v228 = vld [vmem:[%s166 + $0x1b0] sm:$0xff]
      %v229 = vld [vmem:[%s166 + $0x1b8] sm:$0xff]
      %v230 = vld [vmem:[%s166 + $0x1c0] sm:$0xff]
      %v231 = vld [vmem:[%s166 + $0x1c8] sm:$0xff]
      %v232 = vld [vmem:[%s166 + $0x1d0] sm:$0xff]
      %v233 = vld [vmem:[%s166 + $0x1d8] sm:$0xff]
      %v234 = vld [vmem:[%s166 + $0x1e0] sm:$0xff]
      %v235 = vld [vmem:[%s166 + $0x1e8] sm:$0xff]
      %v236 = vld [vmem:[%s166 + $0x1f0] sm:$0xff]
      %v237 = vld [vmem:[%s166 + $0x1f8] sm:$0xff]
      %v238 = vld [vmem:[%s1] sm:$0x1]
      %v240 = vlaneseq
      %v241 = vshrl.u32 %v240, 7
      %v242 = vsub.s32 0, %v241
      %v243 = vrot.slane %v238, %v242
      %v245 = vmul.f32 %v174, %v243
      %v246 = vmul.f32 %v175, %v243
      %v247 = vmul.f32 %v176, %v243
      %v248 = vmul.f32 %v177, %v243
      %v249 = vmul.f32 %v178, %v243
      %v250 = vmul.f32 %v179, %v243
      %v251 = vmul.f32 %v180, %v243
      %v252 = vmul.f32 %v181, %v243
      %v253 = vmul.f32 %v182, %v243
      %v254 = vmul.f32 %v183, %v243
      %v255 = vmul.f32 %v184, %v243
      %v256 = vmul.f32 %v185, %v243
      %v257 = vmul.f32 %v186, %v243
      %v258 = vmul.f32 %v187, %v243
      %v259 = vmul.f32 %v188, %v243
      %v260 = vmul.f32 %v189, %v243
      %v261 = vmul.f32 %v190, %v243
      %v262 = vmul.f32 %v191, %v243
      %v263 = vmul.f32 %v192, %v243
      %v264 = vmul.f32 %v193, %v243
      %v265 = vmul.f32 %v194, %v243
      %v266 = vmul.f32 %v195, %v243
      %v267 = vmul.f32 %v196, %v243
      %v268 = vmul.f32 %v197, %v243
      %v269 = vmul.f32 %v198, %v243
      %v270 = vmul.f32 %v199, %v243
      %v271 = vmul.f32 %v200, %v243
      %v272 = vmul.f32 %v201, %v243
      %v273 = vmul.f32 %v202, %v243
      %v274 = vmul.f32 %v203, %v243
      %v275 = vmul.f32 %v204, %v243
      %v276 = vmul.f32 %v205, %v243
      %v277 = vmul.f32 %v206, %v243
      %v278 = vmul.f32 %v207, %v243
      %v279 = vmul.f32 %v208, %v243
      %v280 = vmul.f32 %v209, %v243
      %v281 = vmul.f32 %v210, %v243
      %v282 = vmul.f32 %v211, %v243
      %v283 = vmul.f32 %v212, %v243
      %v284 = vmul.f32 %v213, %v243
      %v285 = vmul.f32 %v214, %v243
      %v286 = vmul.f32 %v215, %v243
      %v287 = vmul.f32 %v216, %v243
      %v288 = vmul.f32 %v217, %v243
      %v289 = vmul.f32 %v218, %v243
      %v290 = vmul.f32 %v219, %v243
      %v291 = vmul.f32 %v220, %v243
      %v292 = vmul.f32 %v221, %v243
      %v293 = vmul.f32 %v222, %v243
      %v294 = vmul.f32 %v223, %v243
      %v295 = vmul.f32 %v224, %v243
      %v296 = vmul.f32 %v225, %v243
      %v297 = vmul.f32 %v226, %v243
      %v298 = vmul.f32 %v227, %v243
      %v299 = vmul.f32 %v228, %v243
      %v300 = vmul.f32 %v229, %v243
      %v301 = vmul.f32 %v230, %v243
      %v302 = vmul.f32 %v231, %v243
      %v303 = vmul.f32 %v232, %v243
      %v304 = vmul.f32 %v233, %v243
      %v305 = vmul.f32 %v234, %v243
      %v306 = vmul.f32 %v235, %v243
      %v307 = vmul.f32 %v236, %v243
      %v308 = vmul.f32 %v237, %v243
      %v309 = vld [vmem:[%s2] sm:$0x1]
      %v311 = vlaneseq
      %v312 = vshrl.u32 %v311, 7
      %v313 = vsub.s32 0, %v312
      %v314 = vrot.slane %v309, %v313
      %v316 = vadd.f32 %v245, %v314
      %v317 = vadd.f32 %v246, %v314
      %v318 = vadd.f32 %v247, %v314
      %v319 = vadd.f32 %v248, %v314
      %v320 = vadd.f32 %v249, %v314
      %v321 = vadd.f32 %v250, %v314
      %v322 = vadd.f32 %v251, %v314
      %v323 = vadd.f32 %v252, %v314
      %v324 = vadd.f32 %v253, %v314
      %v325 = vadd.f32 %v254, %v314
      %v326 = vadd.f32 %v255, %v314
      %v327 = vadd.f32 %v256, %v314
      %v328 = vadd.f32 %v257, %v314
      %v329 = vadd.f32 %v258, %v314
      %v330 = vadd.f32 %v259, %v314
      %v331 = vadd.f32 %v260, %v314
      %v332 = vadd.f32 %v261, %v314
      %v333 = vadd.f32 %v262, %v314
      %v334 = vadd.f32 %v263, %v314
      %v335 = vadd.f32 %v264, %v314
      %v336 = vadd.f32 %v265, %v314
      %v337 = vadd.f32 %v266, %v314
      %v338 = vadd.f32 %v267, %v314
      %v339 = vadd.f32 %v268, %v314
      %v340 = vadd.f32 %v269, %v314
      %v341 = vadd.f32 %v270, %v314
      %v342 = vadd.f32 %v271, %v314
      %v343 = vadd.f32 %v272, %v314
      %v344 = vadd.f32 %v273, %v314
      %v345 = vadd.f32 %v274, %v314
      %v346 = vadd.f32 %v275, %v314
      %v347 = vadd.f32 %v276, %v314
      %v348 = vadd.f32 %v277, %v314
      %v349 = vadd.f32 %v278, %v314
      %v350 = vadd.f32 %v279, %v314
      %v351 = vadd.f32 %v280, %v314
      %v352 = vadd.f32 %v281, %v314
      %v353 = vadd.f32 %v282, %v314
      %v354 = vadd.f32 %v283, %v314
      %v355 = vadd.f32 %v284, %v314
      %v356 = vadd.f32 %v285, %v314
      %v357 = vadd.f32 %v286, %v314
      %v358 = vadd.f32 %v287, %v314
      %v359 = vadd.f32 %v288, %v314
      %v360 = vadd.f32 %v289, %v314
      %v361 = vadd.f32 %v290, %v314
      %v362 = vadd.f32 %v291, %v314
      %v363 = vadd.f32 %v292, %v314
      %v364 = vadd.f32 %v293, %v314
      %v365 = vadd.f32 %v294, %v314
      %v366 = vadd.f32 %v295, %v314
      %v367 = vadd.f32 %v296, %v314
      %v368 = vadd.f32 %v297, %v314
      %v369 = vadd.f32 %v298, %v314
      %v370 = vadd.f32 %v299, %v314
      %v371 = vadd.f32 %v300, %v314
      %v372 = vadd.f32 %v301, %v314
      %v373 = vadd.f32 %v302, %v314
      %v374 = vadd.f32 %v303, %v314
      %v375 = vadd.f32 %v304, %v314
      %v376 = vadd.f32 %v305, %v314
      %v377 = vadd.f32 %v306, %v314
      %v378 = vadd.f32 %v307, %v314
      %v379 = vadd.f32 %v308, %v314
      %380 = vst [vmem:[%s172] sm:$0xff] %v316
      %381 = vst [vmem:[%s172 + $0x8] sm:$0xff] %v317
      %382 = vst [vmem:[%s172 + $0x10] sm:$0xff] %v318
      %383 = vst [vmem:[%s172 + $0x18] sm:$0xff] %v319
      %384 = vst [vmem:[%s172 + $0x20] sm:$0xff] %v320
      %385 = vst [vmem:[%s172 + $0x28] sm:$0xff] %v321
      %386 = vst [vmem:[%s172 + $0x30] sm:$0xff] %v322
      %387 = vst [vmem:[%s172 + $0x38] sm:$0xff] %v323
      %388 = vst [vmem:[%s172 + $0x40] sm:$0xff] %v324
      %389 = vst [vmem:[%s172 + $0x48] sm:$0xff] %v325
      %390 = vst [vmem:[%s172 + $0x50] sm:$0xff] %v326
      %391 = vst [vmem:[%s172 + $0x58] sm:$0xff] %v327
      %392 = vst [vmem:[%s172 + $0x60] sm:$0xff] %v328
      %393 = vst [vmem:[%s172 + $0x68] sm:$0xff] %v329
      %394 = vst [vmem:[%s172 + $0x70] sm:$0xff] %v330
      %395 = vst [vmem:[%s172 + $0x78] sm:$0xff] %v331
      %396 = vst [vmem:[%s172 + $0x80] sm:$0xff] %v332
      %397 = vst [vmem:[%s172 + $0x88] sm:$0xff] %v333
      %398 = vst [vmem:[%s172 + $0x90] sm:$0xff] %v334
      %399 = vst [vmem:[%s172 + $0x98] sm:$0xff] %v335
      %400 = vst [vmem:[%s172 + $0xa0] sm:$0xff] %v336
      %401 = vst [vmem:[%s172 + $0xa8] sm:$0xff] %v337
      %402 = vst [vmem:[%s172 + $0xb0] sm:$0xff] %v338
      %403 = vst [vmem:[%s172 + $0xb8] sm:$0xff] %v339
      %404 = vst [vmem:[%s172 + $0xc0] sm:$0xff] %v340
      %405 = vst [vmem:[%s172 + $0xc8] sm:$0xff] %v341
      %406 = vst [vmem:[%s172 + $0xd0] sm:$0xff] %v342
      %407 = vst [vmem:[%s172 + $0xd8] sm:$0xff] %v343
      %408 = vst [vmem:[%s172 + $0xe0] sm:$0xff] %v344
      %409 = vst [vmem:[%s172 + $0xe8] sm:$0xff] %v345
      %410 = vst [vmem:[%s172 + $0xf0] sm:$0xff] %v346
      %411 = vst [vmem:[%s172 + $0xf8] sm:$0xff] %v347
      %412 = vst [vmem:[%s172 + $0x100] sm:$0xff] %v348
      %413 = vst [vmem:[%s172 + $0x108] sm:$0xff] %v349
      %414 = vst [vmem:[%s172 + $0x110] sm:$0xff] %v350
      %415 = vst [vmem:[%s172 + $0x118] sm:$0xff] %v351
      %416 = vst [vmem:[%s172 + $0x120] sm:$0xff] %v352
      %417 = vst [vmem:[%s172 + $0x128] sm:$0xff] %v353
      %418 = vst [vmem:[%s172 + $0x130] sm:$0xff] %v354
      %419 = vst [vmem:[%s172 + $0x138] sm:$0xff] %v355
      %420 = vst [vmem:[%s172 + $0x140] sm:$0xff] %v356
      %421 = vst [vmem:[%s172 + $0x148] sm:$0xff] %v357
      %422 = vst [vmem:[%s172 + $0x150] sm:$0xff] %v358
      %423 = vst [vmem:[%s172 + $0x158] sm:$0xff] %v359
      %424 = vst [vmem:[%s172 + $0x160] sm:$0xff] %v360
      %425 = vst [vmem:[%s172 + $0x168] sm:$0xff] %v361
      %426 = vst [vmem:[%s172 + $0x170] sm:$0xff] %v362
      %427 = vst [vmem:[%s172 + $0x178] sm:$0xff] %v363
      %428 = vst [vmem:[%s172 + $0x180] sm:$0xff] %v364
      %429 = vst [vmem:[%s172 + $0x188] sm:$0xff] %v365
      %430 = vst [vmem:[%s172 + $0x190] sm:$0xff] %v366
      %431 = vst [vmem:[%s172 + $0x198] sm:$0xff] %v367
      %432 = vst [vmem:[%s172 + $0x1a0] sm:$0xff] %v368
      %433 = vst [vmem:[%s172 + $0x1a8] sm:$0xff] %v369
      %434 = vst [vmem:[%s172 + $0x1b0] sm:$0xff] %v370
      %435 = vst [vmem:[%s172 + $0x1b8] sm:$0xff] %v371
      %436 = vst [vmem:[%s172 + $0x1c0] sm:$0xff] %v372
      %437 = vst [vmem:[%s172 + $0x1c8] sm:$0xff] %v373
      %438 = vst [vmem:[%s172 + $0x1d0] sm:$0xff] %v374
      %439 = vst [vmem:[%s172 + $0x1d8] sm:$0xff] %v375
      %440 = vst [vmem:[%s172 + $0x1e0] sm:$0xff] %v376
      %441 = vst [vmem:[%s172 + $0x1e8] sm:$0xff] %v377
      %442 = vst [vmem:[%s172 + $0x1f0] sm:$0xff] %v378
      %443 = vst [vmem:[%s172 + $0x1f8] sm:$0xff] %v379
      %s444 = smul.u32 64, %s14
      %p445 = scmp.lt.s32.totalorder %s444, 191
      %s446 = scalar_select %p445, %s444, 191
      %s447 = smul.addr %s446, 8
      %s448 = scalar_lea.vmem %s3, %s447
      // Predicated region
      $region33: #{bottleneck_forward.13} parent=31 // pred_check
        %p449 = pneg %p100
      $region34: #{bottleneck_forward.13} parent=31 // pred_check_branch
        %451 = sbr.rel (%p449) target = $region36
      $region35: #{bottleneck_forward.13} parent=31 // pred_region
        %s452 = smul.u32 64, %s14
      $region36: #{bottleneck_forward.13} parent=31 // pred_fallthru
        _
    $region32: #{bottleneck_forward.13} parent=5 // pred_fallthru
      _
    %p453 = scmp.le.s32.totalorder 2, %s9
    // Predicated region
    $region37: #{bottleneck_forward.13} parent=5 // pred_check
      %p454 = pneg %p453
    $region38: #{bottleneck_forward.13} parent=5 // pred_check_branch
      %456 = sbr.rel (%p454) target = $region40
    $region39: #{bottleneck_forward.13} parent=5 // pred_region
      %s457 = ssub.s32 %s9, 2
      // Predicated region
      $region41: #{bottleneck_forward.13} parent=39 // pred_check
        %p458 = pneg %p106
      $region42: #{bottleneck_forward.13} parent=39 // pred_check_branch
        %460 = sbr.rel (%p458) target = $region44
      $region43: #{bottleneck_forward.13} parent=39 // pred_region
        %s461 = smul.u32 64, %s15
        %p462 = scmp.lt.s32.totalorder %s461, 191
        %s463 = scalar_select %p462, %s461, 191
        %s464 = smul.addr %s463, 8
        %s465 = scalar_lea.vmem %s3, %s464
      $region44: #{bottleneck_forward.13} parent=39 // pred_fallthru
        _
    $region40: #{bottleneck_forward.13} parent=5 // pred_fallthru
      _
  $region6: #{bottleneck_forward.13} parent=0 // loop_footer
    %s13 = sadd.s32 1, %s9
  $region7: #{bottleneck_forward.13} parent=0 // loop_footer_branch
    %8 = sbr.rel target = $region3
  $region8: #{bottleneck_forward.13} parent=0 // loop_exit
    _

// kernel: bottleneck_forward.15
$region0: #{bottleneck_forward.15}
  #allocation0 [shape = 'u32[]', space=smem, size = 0x4, offset = 0x4, fixed_abs, tag = 'smem constant byte address 0x4 - core index']
  #allocation1 [shape = 'u32[144,128]{1,0:T(1,128)}', space=vmem, size = 0x12000, scoped, tag = 'internal scratch']
  %s0 = inlined_call_operand.vmem [shape: f32[1536,128], index: 0, kind: input, shape index: {}]
  %s1 = inlined_call_operand.vmem [shape: f32[1,128], index: 1, kind: input, shape index: {}]
  %s2 = inlined_call_operand.vmem [shape: f32[1,128], index: 2, kind: input, shape index: {}]
  %s3 = inlined_call_operand.vmem [shape: f32[1536,128], index: 3, kind: input, shape index: {}]
  %s4 = inlined_call_operand.vmem [shape: f32[1536,128], index: 4, kind: output, shape index: {}]
  %s5 = sld [smem:[#allocation0]]
  $region49: #{bottleneck_forward.15} parent=0
    _
  %s7 = ssub.s32 1, %s5
  %s8 = scalar_select 0, %s7, %s5
  loop: start=0, step=1, limit=5
  $region2: #{bottleneck_forward.15} parent=0 // loop_pre_header
    _
  $region3: #{bottleneck_forward.15} parent=0 // loop_header
    %s10 = sphi 0, %s14
    %p11 = scmp.ge.s32.totalorder %s10, 5
    %s20 = sphi 0, %s22
    %s23 = sphi 0, %s20
    %s24 = sphi 0, %s23
    %s40 = sphi 0, %s24
    %s44 = sphi 0, %s44
    %s46 = sphi 0, %s44
    %s47 = sphi 0, %s46
    %s61 = sphi 0, %s47
    %s65 = sphi 0, %s65
    %s67 = sphi 0, %s65
    %s68 = sphi 0, %s67
    %s82 = sphi 0, %s68
    %s88 = sphi 0, %s90
    %s91 = sphi 0, %s88
    %s92 = sphi 0, %s91
    %s108 = sphi 0, %s92
    %s114 = sphi 0, %s116
    %s117 = sphi 0, %s114
    %s118 = sphi 0, %s117
    %s134 = sphi 0, %s118
  $region4: #{bottleneck_forward.15} parent=0 // loop_header_branch
    %13 = sbr.rel (%p11) target = $region8
  $region5: #{bottleneck_forward.15} parent=0 // loop_body
    %s15 = ssub.s32 %s10, 1
    %s16 = ssub.s32 %s10, 2
    %s17 = sadd.s32 %s10, 1
    %s18 = ssub.s32 %s10, %s17
    %p19 = scmp.eq.s32.totalorder %s18, 0
    %s21 = sadd.s32 %s20, 1
    %s22 = scalar_select %p19, %s20, %s21
    %p25 = pneg %p19
    %p26 = scmp.eq.s32.totalorder %s10, 2
    %p27 = por %p25, %p26
    %p28 = scmp.ne.s32.totalorder %s20, %s23
    %p29 = scmp.eq.s32.totalorder %s10, 0
    %p30 = por %p28, %p29
    %p31 = scmp.ne.s32.totalorder %s20, %s23
    %p32 = scmp.eq.s32.totalorder %s15, 2
    %p33 = por %p31, %p32
    %p34 = scmp.ne.s32.totalorder %s23, %s24
    %p35 = scmp.eq.s32.totalorder %s15, 0
    %p36 = por %p34, %p35
    %p37 = scmp.ne.s32.totalorder %s23, %s24
    %p38 = scmp.eq.s32.totalorder %s16, 2
    %p39 = por %p37, %p38
    %p41 = scmp.ne.s32.totalorder %s24, %s40
    %p42 = scmp.eq.s32.totalorder %s16, 0
    %p43 = por %p41, %p42
    %s45 = sadd.s32 %s44, 1
    %p48 = scmp.eq.s32.totalorder %s10, 2
    %p49 = scmp.ne.s32.totalorder %s44, %s46
    %p50 = scmp.eq.s32.totalorder %s10, 0
    %p51 = por %p49, %p50
    %p52 = scmp.ne.s32.totalorder %s44, %s46
    %p53 = scmp.eq.s32.totalorder %s15, 2
    %p54 = por %p52, %p53
    %p55 = scmp.ne.s32.totalorder %s46, %s47
    %p56 = scmp.eq.s32.totalorder %s15, 0
    %p57 = por %p55, %p56
    %p58 = scmp.ne.s32.totalorder %s46, %s47
    %p59 = scmp.eq.s32.totalorder %s16, 2
    %p60 = por %p58, %p59
    %p62 = scmp.ne.s32.totalorder %s47, %s61
    %p63 = scmp.eq.s32.totalorder %s16, 0
    %p64 = por %p62, %p63
    %s66 = sadd.s32 %s65, 1
    %p69 = scmp.eq.s32.totalorder %s10, 2
    %p70 = scmp.ne.s32.totalorder %s65, %s67
    %p71 = scmp.eq.s32.totalorder %s10, 0
    %p72 = por %p70, %p71
    %p73 = scmp.ne.s32.totalorder %s65, %s67
    %p74 = scmp.eq.s32.totalorder %s15, 2
    %p75 = por %p73, %p74
    %p76 = scmp.ne.s32.totalorder %s67, %s68
    %p77 = scmp.eq.s32.totalorder %s15, 0
    %p78 = por %p76, %p77
    %p79 = scmp.ne.s32.totalorder %s67, %s68
    %p80 = scmp.eq.s32.totalorder %s16, 2
    %p81 = por %p79, %p80
    %p83 = scmp.ne.s32.totalorder %s68, %s82
    %p84 = scmp.eq.s32.totalorder %s16, 0
    %p85 = por %p83, %p84
    %s86 = ssub.s32 %s10, %s17
    %p87 = scmp.eq.s32.totalorder %s86, 0
    %s89 = sadd.s32 %s88, 1
    %s90 = scalar_select %p87, %s88, %s89
    %p93 = pneg %p87
    %p94 = scmp.eq.s32.totalorder %s10, 2
    %p95 = por %p93, %p94
    %p96 = scmp.ne.s32.totalorder %s88, %s91
    %p97 = scmp.eq.s32.totalorder %s10, 0
    %p98 = por %p96, %p97
    %p99 = scmp.ne.s32.totalorder %s88, %s91
    %p100 = scmp.eq.s32.totalorder %s15, 2
    %p101 = por %p99, %p100
    %p102 = scmp.ne.s32.totalorder %s91, %s92
    %p103 = scmp.eq.s32.totalorder %s15, 0
    %p104 = por %p102, %p103
    %p105 = scmp.ne.s32.totalorder %s91, %s92
    %p106 = scmp.eq.s32.totalorder %s16, 2
    %p107 = por %p105, %p106
    %p109 = scmp.ne.s32.totalorder %s92, %s108
    %p110 = scmp.eq.s32.totalorder %s16, 0
    %p111 = por %p109, %p110
    %s112 = ssub.s32 %s10, %s17
    %p113 = scmp.eq.s32.totalorder %s112, 0
    %s115 = sadd.s32 %s114, 1
    %s116 = scalar_select %p113, %s114, %s115
    %p119 = pneg %p113
    %p120 = scmp.eq.s32.totalorder %s10, 2
    %p121 = por %p119, %p120
    %p122 = scmp.ne.s32.totalorder %s114, %s117
    %p123 = scmp.eq.s32.totalorder %s10, 0
    %p124 = por %p122, %p123
    %p125 = scmp.ne.s32.totalorder %s114, %s117
    %p126 = scmp.eq.s32.totalorder %s15, 2
    %p127 = por %p125, %p126
    %p128 = scmp.ne.s32.totalorder %s117, %s118
    %p129 = scmp.eq.s32.totalorder %s15, 0
    %p130 = por %p128, %p129
    %p131 = scmp.ne.s32.totalorder %s117, %s118
    %p132 = scmp.eq.s32.totalorder %s16, 2
    %p133 = por %p131, %p132
    %p135 = scmp.ne.s32.totalorder %s118, %s134
    %p136 = scmp.eq.s32.totalorder %s16, 0
    %p137 = por %p135, %p136
    %p138 = scmp.le.s32.totalorder 1, %s10
    %p139 = scmp.lt.s32.totalorder %s10, 4
    %p140 = pnand %p138, %p139
    %p141 = pneg %p140
    // Predicated region
    $region9: #{bottleneck_forward.15} parent=5 // pred_check
      _
    $region10: #{bottleneck_forward.15} parent=5 // pred_check_branch
      %143 = sbr.rel (%p140) target = $region12
    $region11: #{bottleneck_forward.15} parent=5 // pred_region
      %s144 = ssub.s32 %s10, 1
      // Predicated region
      $region13: #{bottleneck_forward.15} parent=11 // pred_check
        %p145 = pneg %p57
      $region14: #{bottleneck_forward.15} parent=11 // pred_check_branch
        %147 = sbr.rel (%p145) target = $region16
      $region15: #{bottleneck_forward.15} parent=11 // pred_region
        _
      $region16: #{bottleneck_forward.15} parent=11 // pred_fallthru
        _
      // Predicated region
      $region17: #{bottleneck_forward.15} parent=11 // pred_check
        %p148 = pneg %p78
      $region18: #{bottleneck_forward.15} parent=11 // pred_check_branch
        %150 = sbr.rel (%p148) target = $region20
      $region19: #{bottleneck_forward.15} parent=11 // pred_region
        _
      $region20: #{bottleneck_forward.15} parent=11 // pred_fallthru
        _
    $region12: #{bottleneck_forward.15} parent=5 // pred_fallthru
      _
    %p151 = scmp.lt.s32.totalorder %s10, 3
    // Predicated region
    $region21: #{bottleneck_forward.15} parent=5 // pred_check
      %p152 = pneg %p151
    $region22: #{bottleneck_forward.15} parent=5 // pred_check_branch
      %154 = sbr.rel (%p152) target = $region24
    $region23: #{bottleneck_forward.15} parent=5 // pred_region
      // Predicated region
      $region25: #{bottleneck_forward.15} parent=23 // pred_check
        %p155 = pneg %p30
      $region26: #{bottleneck_forward.15} parent=23 // pred_check_branch
        %157 = sbr.rel (%p155) target = $region28
      $region27: #{bottleneck_forward.15} parent=23 // pred_region
        %s158 = smul.u32 64, %s10
        %p159 = scmp.lt.s32.totalorder %s158, 191
        %s160 = scalar_select %p159, %s158, 191
        %s161 = smul.addr %s160, 8
        %s162 = scalar_lea.vmem %s0, %s161
        %s163 = smul.u32 64, %s10
      $region28: #{bottleneck_forward.15} parent=23 // pred_fallthru
        _
      // Predicated region
      $region29: #{bottleneck_forward.15} parent=23 // pred_check
        %p164 = pneg %p98
      $region30: #{bottleneck_forward.15} parent=23 // pred_check_branch
        %166 = sbr.rel (%p164) target = $region32
      $region31: #{bottleneck_forward.15} parent=23 // pred_region
        %s167 = smul.u32 64, %s10
        %p168 = scmp.lt.s32.totalorder %s167, 191
        %s169 = scalar_select %p168, %s167, 191
        %s170 = smul.addr %s169, 8
        %s171 = scalar_lea.vmem %s3, %s170
        %s172 = smul.u32 64, %s10
      $region32: #{bottleneck_forward.15} parent=23 // pred_fallthru
        _
    $region24: #{bottleneck_forward.15} parent=5 // pred_fallthru
      _
    %p173 = scmp.le.s32.totalorder 1, %s10
    %p174 = scmp.lt.s32.totalorder %s10, 4
    %p175 = pnand %p173, %p174
    %p176 = pneg %p175
    // Predicated region
    $region33: #{bottleneck_forward.15} parent=5 // pred_check
      _
    $region34: #{bottleneck_forward.15} parent=5 // pred_check_branch
      %178 = sbr.rel (%p175) target = $region36
    $region35: #{bottleneck_forward.15} parent=5 // pred_region
      %s179 = ssub.s32 %s10, 1
      %s180 = smul.u32 64, %s15
      %p181 = scmp.lt.s32.totalorder %s180, 191
      %s182 = scalar_select %p181, %s180, 191
      %s183 = smul.addr %s182, 8
      %s184 = scalar_lea.vmem %s0, %s183
      %p185 = pneg %p36
      %p186 = pneg %p33
      %p187 = pneg %p57
      %p188 = pneg %p54
      %p189 = pneg %p78
      %p190 = pneg %p75
      %s191 = smul.u32 64, %s15
      %p192 = scmp.lt.s32.totalorder %s191, 191
      %s193 = scalar_select %p192, %s191, 191
      %s194 = smul.addr %s193, 8
      %s195 = scalar_lea.vmem %s3, %s194
      %p196 = pneg %p104
      %p197 = pneg %p101
      %p198 = pneg %p130
      %p199 = pneg %p127
      %s200 = smul.u32 64, %s15
      %p201 = scmp.lt.s32.totalorder %s200, 191
      %s202 = scalar_select %p201, %s200, 191
      %s203 = smul.addr %s202, 8
      %s204 = scalar_lea.vmem %s4, %s203
      %s205 = smul.u32 64, %s15
      %p206 = scmp.lt.s32.totalorder %s205, 191
      %s207 = scalar_select %p206, %s205, 191
      %s208 = smul.addr %s207, 8
      %s209 = scalar_lea.vmem %s0, %s208
      %s210 = smul.u32 64, %s15
      %s211 = smul.u32 64, %s15
      %p212 = scmp.lt.s32.totalorder %s211, 191
      %s213 = scalar_select %p212, %s211, 191
      %s214 = smul.addr %s213, 8
      %s215 = scalar_lea.vmem %s3, %s214
      %s216 = smul.u32 64, %s15
      %s217 = smul.u32 64, %s15
      %p218 = scmp.lt.s32.totalorder %s217, 191
      %s219 = scalar_select %p218, %s217, 191
      %s220 = smul.addr %s219, 8
      %s221 = scalar_lea.vmem %s4, %s220
      %s222 = smul.u32 64, %s15
      %v223 = vld [vmem:[%s209] sm:$0xff]
      %v224 = vld [vmem:[%s209 + $0x8] sm:$0xff]
      %v225 = vld [vmem:[%s209 + $0x10] sm:$0xff]
      %v226 = vld [vmem:[%s209 + $0x18] sm:$0xff]
      %v227 = vld [vmem:[%s209 + $0x20] sm:$0xff]
      %v228 = vld [vmem:[%s209 + $0x28] sm:$0xff]
      %v229 = vld [vmem:[%s209 + $0x30] sm:$0xff]
      %v230 = vld [vmem:[%s209 + $0x38] sm:$0xff]
      %v231 = vld [vmem:[%s209 + $0x40] sm:$0xff]
      %v232 = vld [vmem:[%s209 + $0x48] sm:$0xff]
      %v233 = vld [vmem:[%s209 + $0x50] sm:$0xff]
      %v234 = vld [vmem:[%s209 + $0x58] sm:$0xff]
      %v235 = vld [vmem:[%s209 + $0x60] sm:$0xff]
      %v236 = vld [vmem:[%s209 + $0x68] sm:$0xff]
      %v237 = vld [vmem:[%s209 + $0x70] sm:$0xff]
      %v238 = vld [vmem:[%s209 + $0x78] sm:$0xff]
      %v239 = vld [vmem:[%s209 + $0x80] sm:$0xff]
      %v240 = vld [vmem:[%s209 + $0x88] sm:$0xff]
      %v241 = vld [vmem:[%s209 + $0x90] sm:$0xff]
      %v242 = vld [vmem:[%s209 + $0x98] sm:$0xff]
      %v243 = vld [vmem:[%s209 + $0xa0] sm:$0xff]
      %v244 = vld [vmem:[%s209 + $0xa8] sm:$0xff]
      %v245 = vld [vmem:[%s209 + $0xb0] sm:$0xff]
      %v246 = vld [vmem:[%s209 + $0xb8] sm:$0xff]
      %v247 = vld [vmem:[%s209 + $0xc0] sm:$0xff]
      %v248 = vld [vmem:[%s209 + $0xc8] sm:$0xff]
      %v249 = vld [vmem:[%s209 + $0xd0] sm:$0xff]
      %v250 = vld [vmem:[%s209 + $0xd8] sm:$0xff]
      %v251 = vld [vmem:[%s209 + $0xe0] sm:$0xff]
      %v252 = vld [vmem:[%s209 + $0xe8] sm:$0xff]
      %v253 = vld [vmem:[%s209 + $0xf0] sm:$0xff]
      %v254 = vld [vmem:[%s209 + $0xf8] sm:$0xff]
      %v255 = vld [vmem:[%s209 + $0x100] sm:$0xff]
      %v256 = vld [vmem:[%s209 + $0x108] sm:$0xff]
      %v257 = vld [vmem:[%s209 + $0x110] sm:$0xff]
      %v258 = vld [vmem:[%s209 + $0x118] sm:$0xff]
      %v259 = vld [vmem:[%s209 + $0x120] sm:$0xff]
      %v260 = vld [vmem:[%s209 + $0x128] sm:$0xff]
      %v261 = vld [vmem:[%s209 + $0x130] sm:$0xff]
      %v262 = vld [vmem:[%s209 + $0x138] sm:$0xff]
      %v263 = vld [vmem:[%s209 + $0x140] sm:$0xff]
      %v264 = vld [vmem:[%s209 + $0x148] sm:$0xff]
      %v265 = vld [vmem:[%s209 + $0x150] sm:$0xff]
      %v266 = vld [vmem:[%s209 + $0x158] sm:$0xff]
      %v267 = vld [vmem:[%s209 + $0x160] sm:$0xff]
      %v268 = vld [vmem:[%s209 + $0x168] sm:$0xff]
      %v269 = vld [vmem:[%s209 + $0x170] sm:$0xff]
      %v270 = vld [vmem:[%s209 + $0x178] sm:$0xff]
      %v271 = vld [vmem:[%s209 + $0x180] sm:$0xff]
      %v272 = vld [vmem:[%s209 + $0x188] sm:$0xff]
      %v273 = vld [vmem:[%s209 + $0x190] sm:$0xff]
      %v274 = vld [vmem:[%s209 + $0x198] sm:$0xff]
      %v275 = vld [vmem:[%s209 + $0x1a0] sm:$0xff]
      %v276 = vld [vmem:[%s209 + $0x1a8] sm:$0xff]
      %v277 = vld [vmem:[%s209 + $0x1b0] sm:$0xff]
      %v278 = vld [vmem:[%s209 + $0x1b8] sm:$0xff]
      %v279 = vld [vmem:[%s209 + $0x1c0] sm:$0xff]
      %v280 = vld [vmem:[%s209 + $0x1c8] sm:$0xff]
      %v281 = vld [vmem:[%s209 + $0x1d0] sm:$0xff]
      %v282 = vld [vmem:[%s209 + $0x1d8] sm:$0xff]
      %v283 = vld [vmem:[%s209 + $0x1e0] sm:$0xff]
      %v284 = vld [vmem:[%s209 + $0x1e8] sm:$0xff]
      %v285 = vld [vmem:[%s209 + $0x1f0] sm:$0xff]
      %v286 = vld [vmem:[%s209 + $0x1f8] sm:$0xff]
      %v287 = vld [vmem:[%s1] sm:$0x1]
      %v289 = vlaneseq
      %v290 = vshrl.u32 %v289, 7
      %v291 = vsub.s32 0, %v290
      %v292 = vrot.slane %v287, %v291
      %v294 = vmul.f32 %v223, %v292
      %v295 = vmul.f32 %v224, %v292
      %v296 = vmul.f32 %v225, %v292
      %v297 = vmul.f32 %v226, %v292
      %v298 = vmul.f32 %v227, %v292
      %v299 = vmul.f32 %v228, %v292
      %v300 = vmul.f32 %v229, %v292
      %v301 = vmul.f32 %v230, %v292
      %v302 = vmul.f32 %v231, %v292
      %v303 = vmul.f32 %v232, %v292
      %v304 = vmul.f32 %v233, %v292
      %v305 = vmul.f32 %v234, %v292
      %v306 = vmul.f32 %v235, %v292
      %v307 = vmul.f32 %v236, %v292
      %v308 = vmul.f32 %v237, %v292
      %v309 = vmul.f32 %v238, %v292
      %v310 = vmul.f32 %v239, %v292
      %v311 = vmul.f32 %v240, %v292
      %v312 = vmul.f32 %v241, %v292
      %v313 = vmul.f32 %v242, %v292
      %v314 = vmul.f32 %v243, %v292
      %v315 = vmul.f32 %v244, %v292
      %v316 = vmul.f32 %v245, %v292
      %v317 = vmul.f32 %v246, %v292
      %v318 = vmul.f32 %v247, %v292
      %v319 = vmul.f32 %v248, %v292
      %v320 = vmul.f32 %v249, %v292
      %v321 = vmul.f32 %v250, %v292
      %v322 = vmul.f32 %v251, %v292
      %v323 = vmul.f32 %v252, %v292
      %v324 = vmul.f32 %v253, %v292
      %v325 = vmul.f32 %v254, %v292
      %v326 = vmul.f32 %v255, %v292
      %v327 = vmul.f32 %v256, %v292
      %v328 = vmul.f32 %v257, %v292
      %v329 = vmul.f32 %v258, %v292
      %v330 = vmul.f32 %v259, %v292
      %v331 = vmul.f32 %v260, %v292
      %v332 = vmul.f32 %v261, %v292
      %v333 = vmul.f32 %v262, %v292
      %v334 = vmul.f32 %v263, %v292
      %v335 = vmul.f32 %v264, %v292
      %v336 = vmul.f32 %v265, %v292
      %v337 = vmul.f32 %v266, %v292
      %v338 = vmul.f32 %v267, %v292
      %v339 = vmul.f32 %v268, %v292
      %v340 = vmul.f32 %v269, %v292
      %v341 = vmul.f32 %v270, %v292
      %v342 = vmul.f32 %v271, %v292
      %v343 = vmul.f32 %v272, %v292
      %v344 = vmul.f32 %v273, %v292
      %v345 = vmul.f32 %v274, %v292
      %v346 = vmul.f32 %v275, %v292
      %v347 = vmul.f32 %v276, %v292
      %v348 = vmul.f32 %v277, %v292
      %v349 = vmul.f32 %v278, %v292
      %v350 = vmul.f32 %v279, %v292
      %v351 = vmul.f32 %v280, %v292
      %v352 = vmul.f32 %v281, %v292
      %v353 = vmul.f32 %v282, %v292
      %v354 = vmul.f32 %v283, %v292
      %v355 = vmul.f32 %v284, %v292
      %v356 = vmul.f32 %v285, %v292
      %v357 = vmul.f32 %v286, %v292
      %v358 = vld [vmem:[%s2] sm:$0x1]
      %v360 = vlaneseq
      %v361 = vshrl.u32 %v360, 7
      %v362 = vsub.s32 0, %v361
      %v363 = vrot.slane %v358, %v362
      %v365 = vadd.f32 %v294, %v363
      %v366 = vadd.f32 %v295, %v363
      %v367 = vadd.f32 %v296, %v363
      %v368 = vadd.f32 %v297, %v363
      %v369 = vadd.f32 %v298, %v363
      %v370 = vadd.f32 %v299, %v363
      %v371 = vadd.f32 %v300, %v363
      %v372 = vadd.f32 %v301, %v363
      %v373 = vadd.f32 %v302, %v363
      %v374 = vadd.f32 %v303, %v363
      %v375 = vadd.f32 %v304, %v363
      %v376 = vadd.f32 %v305, %v363
      %v377 = vadd.f32 %v306, %v363
      %v378 = vadd.f32 %v307, %v363
      %v379 = vadd.f32 %v308, %v363
      %v380 = vadd.f32 %v309, %v363
      %v381 = vadd.f32 %v310, %v363
      %v382 = vadd.f32 %v311, %v363
      %v383 = vadd.f32 %v312, %v363
      %v384 = vadd.f32 %v313, %v363
      %v385 = vadd.f32 %v314, %v363
      %v386 = vadd.f32 %v315, %v363
      %v387 = vadd.f32 %v316, %v363
      %v388 = vadd.f32 %v317, %v363
      %v389 = vadd.f32 %v318, %v363
      %v390 = vadd.f32 %v319, %v363
      %v391 = vadd.f32 %v320, %v363
      %v392 = vadd.f32 %v321, %v363
      %v393 = vadd.f32 %v322, %v363
      %v394 = vadd.f32 %v323, %v363
      %v395 = vadd.f32 %v324, %v363
      %v396 = vadd.f32 %v325, %v363
      %v397 = vadd.f32 %v326, %v363
      %v398 = vadd.f32 %v327, %v363
      %v399 = vadd.f32 %v328, %v363
      %v400 = vadd.f32 %v329, %v363
      %v401 = vadd.f32 %v330, %v363
      %v402 = vadd.f32 %v331, %v363
      %v403 = vadd.f32 %v332, %v363
      %v404 = vadd.f32 %v333, %v363
      %v405 = vadd.f32 %v334, %v363
      %v406 = vadd.f32 %v335, %v363
      %v407 = vadd.f32 %v336, %v363
      %v408 = vadd.f32 %v337, %v363
      %v409 = vadd.f32 %v338, %v363
      %v410 = vadd.f32 %v339, %v363
      %v411 = vadd.f32 %v340, %v363
      %v412 = vadd.f32 %v341, %v363
      %v413 = vadd.f32 %v342, %v363
      %v414 = vadd.f32 %v343, %v363
      %v415 = vadd.f32 %v344, %v363
      %v416 = vadd.f32 %v345, %v363
      %v417 = vadd.f32 %v346, %v363
      %v418 = vadd.f32 %v347, %v363
      %v419 = vadd.f32 %v348, %v363
      %v420 = vadd.f32 %v349, %v363
      %v421 = vadd.f32 %v350, %v363
      %v422 = vadd.f32 %v351, %v363
      %v423 = vadd.f32 %v352, %v363
      %v424 = vadd.f32 %v353, %v363
      %v425 = vadd.f32 %v354, %v363
      %v426 = vadd.f32 %v355, %v363
      %v427 = vadd.f32 %v356, %v363
      %v428 = vadd.f32 %v357, %v363
      %v429 = vld [vmem:[%s215] sm:$0xff]
      %v430 = vld [vmem:[%s215 + $0x8] sm:$0xff]
      %v431 = vld [vmem:[%s215 + $0x10] sm:$0xff]
      %v432 = vld [vmem:[%s215 + $0x18] sm:$0xff]
      %v433 = vld [vmem:[%s215 + $0x20] sm:$0xff]
      %v434 = vld [vmem:[%s215 + $0x28] sm:$0xff]
      %v435 = vld [vmem:[%s215 + $0x30] sm:$0xff]
      %v436 = vld [vmem:[%s215 + $0x38] sm:$0xff]
      %v437 = vld [vmem:[%s215 + $0x40] sm:$0xff]
      %v438 = vld [vmem:[%s215 + $0x48] sm:$0xff]
      %v439 = vld [vmem:[%s215 + $0x50] sm:$0xff]
      %v440 = vld [vmem:[%s215 + $0x58] sm:$0xff]
      %v441 = vld [vmem:[%s215 + $0x60] sm:$0xff]
      %v442 = vld [vmem:[%s215 + $0x68] sm:$0xff]
      %v443 = vld [vmem:[%s215 + $0x70] sm:$0xff]
      %v444 = vld [vmem:[%s215 + $0x78] sm:$0xff]
      %v445 = vld [vmem:[%s215 + $0x80] sm:$0xff]
      %v446 = vld [vmem:[%s215 + $0x88] sm:$0xff]
      %v447 = vld [vmem:[%s215 + $0x90] sm:$0xff]
      %v448 = vld [vmem:[%s215 + $0x98] sm:$0xff]
      %v449 = vld [vmem:[%s215 + $0xa0] sm:$0xff]
      %v450 = vld [vmem:[%s215 + $0xa8] sm:$0xff]
      %v451 = vld [vmem:[%s215 + $0xb0] sm:$0xff]
      %v452 = vld [vmem:[%s215 + $0xb8] sm:$0xff]
      %v453 = vld [vmem:[%s215 + $0xc0] sm:$0xff]
      %v454 = vld [vmem:[%s215 + $0xc8] sm:$0xff]
      %v455 = vld [vmem:[%s215 + $0xd0] sm:$0xff]
      %v456 = vld [vmem:[%s215 + $0xd8] sm:$0xff]
      %v457 = vld [vmem:[%s215 + $0xe0] sm:$0xff]
      %v458 = vld [vmem:[%s215 + $0xe8] sm:$0xff]
      %v459 = vld [vmem:[%s215 + $0xf0] sm:$0xff]
      %v460 = vld [vmem:[%s215 + $0xf8] sm:$0xff]
      %v461 = vld [vmem:[%s215 + $0x100] sm:$0xff]
      %v462 = vld [vmem:[%s215 + $0x108] sm:$0xff]
      %v463 = vld [vmem:[%s215 + $0x110] sm:$0xff]
      %v464 = vld [vmem:[%s215 + $0x118] sm:$0xff]
      %v465 = vld [vmem:[%s215 + $0x120] sm:$0xff]
      %v466 = vld [vmem:[%s215 + $0x128] sm:$0xff]
      %v467 = vld [vmem:[%s215 + $0x130] sm:$0xff]
      %v468 = vld [vmem:[%s215 + $0x138] sm:$0xff]
      %v469 = vld [vmem:[%s215 + $0x140] sm:$0xff]
      %v470 = vld [vmem:[%s215 + $0x148] sm:$0xff]
      %v471 = vld [vmem:[%s215 + $0x150] sm:$0xff]
      %v472 = vld [vmem:[%s215 + $0x158] sm:$0xff]
      %v473 = vld [vmem:[%s215 + $0x160] sm:$0xff]
      %v474 = vld [vmem:[%s215 + $0x168] sm:$0xff]
      %v475 = vld [vmem:[%s215 + $0x170] sm:$0xff]
      %v476 = vld [vmem:[%s215 + $0x178] sm:$0xff]
      %v477 = vld [vmem:[%s215 + $0x180] sm:$0xff]
      %v478 = vld [vmem:[%s215 + $0x188] sm:$0xff]
      %v479 = vld [vmem:[%s215 + $0x190] sm:$0xff]
      %v480 = vld [vmem:[%s215 + $0x198] sm:$0xff]
      %v481 = vld [vmem:[%s215 + $0x1a0] sm:$0xff]
      %v482 = vld [vmem:[%s215 + $0x1a8] sm:$0xff]
      %v483 = vld [vmem:[%s215 + $0x1b0] sm:$0xff]
      %v484 = vld [vmem:[%s215 + $0x1b8] sm:$0xff]
      %v485 = vld [vmem:[%s215 + $0x1c0] sm:$0xff]
      %v486 = vld [vmem:[%s215 + $0x1c8] sm:$0xff]
      %v487 = vld [vmem:[%s215 + $0x1d0] sm:$0xff]
      %v488 = vld [vmem:[%s215 + $0x1d8] sm:$0xff]
      %v489 = vld [vmem:[%s215 + $0x1e0] sm:$0xff]
      %v490 = vld [vmem:[%s215 + $0x1e8] sm:$0xff]
      %v491 = vld [vmem:[%s215 + $0x1f0] sm:$0xff]
      %v492 = vld [vmem:[%s215 + $0x1f8] sm:$0xff]
      %v493 = vadd.f32 %v365, %v429
      %v494 = vadd.f32 %v366, %v430
      %v495 = vadd.f32 %v367, %v431
      %v496 = vadd.f32 %v368, %v432
      %v497 = vadd.f32 %v369, %v433
      %v498 = vadd.f32 %v370, %v434
      %v499 = vadd.f32 %v371, %v435
      %v500 = vadd.f32 %v372, %v436
      %v501 = vadd.f32 %v373, %v437
      %v502 = vadd.f32 %v374, %v438
      %v503 = vadd.f32 %v375, %v439
      %v504 = vadd.f32 %v376, %v440
      %v505 = vadd.f32 %v377, %v441
      %v506 = vadd.f32 %v378, %v442
      %v507 = vadd.f32 %v379, %v443
      %v508 = vadd.f32 %v380, %v444
      %v509 = vadd.f32 %v381, %v445
      %v510 = vadd.f32 %v382, %v446
      %v511 = vadd.f32 %v383, %v447
      %v512 = vadd.f32 %v384, %v448
      %v513 = vadd.f32 %v385, %v449
      %v514 = vadd.f32 %v386, %v450
      %v515 = vadd.f32 %v387, %v451
      %v516 = vadd.f32 %v388, %v452
      %v517 = vadd.f32 %v389, %v453
      %v518 = vadd.f32 %v390, %v454
      %v519 = vadd.f32 %v391, %v455
      %v520 = vadd.f32 %v392, %v456
      %v521 = vadd.f32 %v393, %v457
      %v522 = vadd.f32 %v394, %v458
      %v523 = vadd.f32 %v395, %v459
      %v524 = vadd.f32 %v396, %v460
      %v525 = vadd.f32 %v397, %v461
      %v526 = vadd.f32 %v398, %v462
      %v527 = vadd.f32 %v399, %v463
      %v528 = vadd.f32 %v400, %v464
      %v529 = vadd.f32 %v401, %v465
      %v530 = vadd.f32 %v402, %v466
      %v531 = vadd.f32 %v403, %v467
      %v532 = vadd.f32 %v404, %v468
      %v533 = vadd.f32 %v405, %v469
      %v534 = vadd.f32 %v406, %v470
      %v535 = vadd.f32 %v407, %v471
      %v536 = vadd.f32 %v408, %v472
      %v537 = vadd.f32 %v409, %v473
      %v538 = vadd.f32 %v410, %v474
      %v539 = vadd.f32 %v411, %v475
      %v540 = vadd.f32 %v412, %v476
      %v541 = vadd.f32 %v413, %v477
      %v542 = vadd.f32 %v414, %v478
      %v543 = vadd.f32 %v415, %v479
      %v544 = vadd.f32 %v416, %v480
      %v545 = vadd.f32 %v417, %v481
      %v546 = vadd.f32 %v418, %v482
      %v547 = vadd.f32 %v419, %v483
      %v548 = vadd.f32 %v420, %v484
      %v549 = vadd.f32 %v421, %v485
      %v550 = vadd.f32 %v422, %v486
      %v551 = vadd.f32 %v423, %v487
      %v552 = vadd.f32 %v424, %v488
      %v553 = vadd.f32 %v425, %v489
      %v554 = vadd.f32 %v426, %v490
      %v555 = vadd.f32 %v427, %v491
      %v556 = vadd.f32 %v428, %v492
      %v557 = vmax.f32 %v493, 0.0
      %v558 = vmax.f32 %v494, 0.0
      %v559 = vmax.f32 %v495, 0.0
      %v560 = vmax.f32 %v496, 0.0
      %v561 = vmax.f32 %v497, 0.0
      %v562 = vmax.f32 %v498, 0.0
      %v563 = vmax.f32 %v499, 0.0
      %v564 = vmax.f32 %v500, 0.0
      %v565 = vmax.f32 %v501, 0.0
      %v566 = vmax.f32 %v502, 0.0
      %v567 = vmax.f32 %v503, 0.0
      %v568 = vmax.f32 %v504, 0.0
      %v569 = vmax.f32 %v505, 0.0
      %v570 = vmax.f32 %v506, 0.0
      %v571 = vmax.f32 %v507, 0.0
      %v572 = vmax.f32 %v508, 0.0
      %v573 = vmax.f32 %v509, 0.0
      %v574 = vmax.f32 %v510, 0.0
      %v575 = vmax.f32 %v511, 0.0
      %v576 = vmax.f32 %v512, 0.0
      %v577 = vmax.f32 %v513, 0.0
      %v578 = vmax.f32 %v514, 0.0
      %v579 = vmax.f32 %v515, 0.0
      %v580 = vmax.f32 %v516, 0.0
      %v581 = vmax.f32 %v517, 0.0
      %v582 = vmax.f32 %v518, 0.0
      %v583 = vmax.f32 %v519, 0.0
      %v584 = vmax.f32 %v520, 0.0
      %v585 = vmax.f32 %v521, 0.0
      %v586 = vmax.f32 %v522, 0.0
      %v587 = vmax.f32 %v523, 0.0
      %v588 = vmax.f32 %v524, 0.0
      %v589 = vmax.f32 %v525, 0.0
      %v590 = vmax.f32 %v526, 0.0
      %v591 = vmax.f32 %v527, 0.0
      %v592 = vmax.f32 %v528, 0.0
      %v593 = vmax.f32 %v529, 0.0
      %v594 = vmax.f32 %v530, 0.0
      %v595 = vmax.f32 %v531, 0.0
      %v596 = vmax.f32 %v532, 0.0
      %v597 = vmax.f32 %v533, 0.0
      %v598 = vmax.f32 %v534, 0.0
      %v599 = vmax.f32 %v535, 0.0
      %v600 = vmax.f32 %v536, 0.0
      %v601 = vmax.f32 %v537, 0.0
      %v602 = vmax.f32 %v538, 0.0
      %v603 = vmax.f32 %v539, 0.0
      %v604 = vmax.f32 %v540, 0.0
      %v605 = vmax.f32 %v541, 0.0
      %v606 = vmax.f32 %v542, 0.0
      %v607 = vmax.f32 %v543, 0.0
      %v608 = vmax.f32 %v544, 0.0
      %v609 = vmax.f32 %v545, 0.0
      %v610 = vmax.f32 %v546, 0.0
      %v611 = vmax.f32 %v547, 0.0
      %v612 = vmax.f32 %v548, 0.0
      %v613 = vmax.f32 %v549, 0.0
      %v614 = vmax.f32 %v550, 0.0
      %v615 = vmax.f32 %v551, 0.0
      %v616 = vmax.f32 %v552, 0.0
      %v617 = vmax.f32 %v553, 0.0
      %v618 = vmax.f32 %v554, 0.0
      %v619 = vmax.f32 %v555, 0.0
      %v620 = vmax.f32 %v556, 0.0
      %621 = vst [vmem:[%s221] sm:$0xff] %v557
      %622 = vst [vmem:[%s221 + $0x8] sm:$0xff] %v558
      %623 = vst [vmem:[%s221 + $0x10] sm:$0xff] %v559
      %624 = vst [vmem:[%s221 + $0x18] sm:$0xff] %v560
      %625 = vst [vmem:[%s221 + $0x20] sm:$0xff] %v561
      %626 = vst [vmem:[%s221 + $0x28] sm:$0xff] %v562
      %627 = vst [vmem:[%s221 + $0x30] sm:$0xff] %v563
      %628 = vst [vmem:[%s221 + $0x38] sm:$0xff] %v564
      %629 = vst [vmem:[%s221 + $0x40] sm:$0xff] %v565
      %630 = vst [vmem:[%s221 + $0x48] sm:$0xff] %v566
      %631 = vst [vmem:[%s221 + $0x50] sm:$0xff] %v567
      %632 = vst [vmem:[%s221 + $0x58] sm:$0xff] %v568
      %633 = vst [vmem:[%s221 + $0x60] sm:$0xff] %v569
      %634 = vst [vmem:[%s221 + $0x68] sm:$0xff] %v570
      %635 = vst [vmem:[%s221 + $0x70] sm:$0xff] %v571
      %636 = vst [vmem:[%s221 + $0x78] sm:$0xff] %v572
      %637 = vst [vmem:[%s221 + $0x80] sm:$0xff] %v573
      %638 = vst [vmem:[%s221 + $0x88] sm:$0xff] %v574
      %639 = vst [vmem:[%s221 + $0x90] sm:$0xff] %v575
      %640 = vst [vmem:[%s221 + $0x98] sm:$0xff] %v576
      %641 = vst [vmem:[%s221 + $0xa0] sm:$0xff] %v577
      %642 = vst [vmem:[%s221 + $0xa8] sm:$0xff] %v578
      %643 = vst [vmem:[%s221 + $0xb0] sm:$0xff] %v579
      %644 = vst [vmem:[%s221 + $0xb8] sm:$0xff] %v580
      %645 = vst [vmem:[%s221 + $0xc0] sm:$0xff] %v581
      %646 = vst [vmem:[%s221 + $0xc8] sm:$0xff] %v582
      %647 = vst [vmem:[%s221 + $0xd0] sm:$0xff] %v583
      %648 = vst [vmem:[%s221 + $0xd8] sm:$0xff] %v584
      %649 = vst [vmem:[%s221 + $0xe0] sm:$0xff] %v585
      %650 = vst [vmem:[%s221 + $0xe8] sm:$0xff] %v586
      %651 = vst [vmem:[%s221 + $0xf0] sm:$0xff] %v587
      %652 = vst [vmem:[%s221 + $0xf8] sm:$0xff] %v588
      %653 = vst [vmem:[%s221 + $0x100] sm:$0xff] %v589
      %654 = vst [vmem:[%s221 + $0x108] sm:$0xff] %v590
      %655 = vst [vmem:[%s221 + $0x110] sm:$0xff] %v591
      %656 = vst [vmem:[%s221 + $0x118] sm:$0xff] %v592
      %657 = vst [vmem:[%s221 + $0x120] sm:$0xff] %v593
      %658 = vst [vmem:[%s221 + $0x128] sm:$0xff] %v594
      %659 = vst [vmem:[%s221 + $0x130] sm:$0xff] %v595
      %660 = vst [vmem:[%s221 + $0x138] sm:$0xff] %v596
      %661 = vst [vmem:[%s221 + $0x140] sm:$0xff] %v597
      %662 = vst [vmem:[%s221 + $0x148] sm:$0xff] %v598
      %663 = vst [vmem:[%s221 + $0x150] sm:$0xff] %v599
      %664 = vst [vmem:[%s221 + $0x158] sm:$0xff] %v600
      %665 = vst [vmem:[%s221 + $0x160] sm:$0xff] %v601
      %666 = vst [vmem:[%s221 + $0x168] sm:$0xff] %v602
      %667 = vst [vmem:[%s221 + $0x170] sm:$0xff] %v603
      %668 = vst [vmem:[%s221 + $0x178] sm:$0xff] %v604
      %669 = vst [vmem:[%s221 + $0x180] sm:$0xff] %v605
      %670 = vst [vmem:[%s221 + $0x188] sm:$0xff] %v606
      %671 = vst [vmem:[%s221 + $0x190] sm:$0xff] %v607
      %672 = vst [vmem:[%s221 + $0x198] sm:$0xff] %v608
      %673 = vst [vmem:[%s221 + $0x1a0] sm:$0xff] %v609
      %674 = vst [vmem:[%s221 + $0x1a8] sm:$0xff] %v610
      %675 = vst [vmem:[%s221 + $0x1b0] sm:$0xff] %v611
      %676 = vst [vmem:[%s221 + $0x1b8] sm:$0xff] %v612
      %677 = vst [vmem:[%s221 + $0x1c0] sm:$0xff] %v613
      %678 = vst [vmem:[%s221 + $0x1c8] sm:$0xff] %v614
      %679 = vst [vmem:[%s221 + $0x1d0] sm:$0xff] %v615
      %680 = vst [vmem:[%s221 + $0x1d8] sm:$0xff] %v616
      %681 = vst [vmem:[%s221 + $0x1e0] sm:$0xff] %v617
      %682 = vst [vmem:[%s221 + $0x1e8] sm:$0xff] %v618
      %683 = vst [vmem:[%s221 + $0x1f0] sm:$0xff] %v619
      %684 = vst [vmem:[%s221 + $0x1f8] sm:$0xff] %v620
      %s685 = smul.u32 64, %s15
      %p686 = scmp.lt.s32.totalorder %s685, 191
      %s687 = scalar_select %p686, %s685, 191
      %s688 = smul.addr %s687, 8
      %s689 = scalar_lea.vmem %s4, %s688
      // Predicated region
      $region37: #{bottleneck_forward.15} parent=35 // pred_check
        %p690 = pneg %p127
      $region38: #{bottleneck_forward.15} parent=35 // pred_check_branch
        %692 = sbr.rel (%p690) target = $region40
      $region39: #{bottleneck_forward.15} parent=35 // pred_region
        %s693 = smul.u32 64, %s15
      $region40: #{bottleneck_forward.15} parent=35 // pred_fallthru
        _
    $region36: #{bottleneck_forward.15} parent=5 // pred_fallthru
      _
    %p694 = scmp.le.s32.totalorder 2, %s10
    // Predicated region
    $region41: #{bottleneck_forward.15} parent=5 // pred_check
      %p695 = pneg %p694
    $region42: #{bottleneck_forward.15} parent=5 // pred_check_branch
      %697 = sbr.rel (%p695) target = $region44
    $region43: #{bottleneck_forward.15} parent=5 // pred_region
      %s698 = ssub.s32 %s10, 2
      // Predicated region
      $region45: #{bottleneck_forward.15} parent=43 // pred_check
        %p699 = pneg %p133
      $region46: #{bottleneck_forward.15} parent=43 // pred_check_branch
        %701 = sbr.rel (%p699) target = $region48
      $region47: #{bottleneck_forward.15} parent=43 // pred_region
        %s702 = smul.u32 64, %s16
        %p703 = scmp.lt.s32.totalorder %s702, 191
        %s704 = scalar_select %p703, %s702, 191
        %s705 = smul.addr %s704, 8
        %s706 = scalar_lea.vmem %s4, %s705
      $region48: #{bottleneck_forward.15} parent=43 // pred_fallthru
        _
    $region44: #{bottleneck_forward.15} parent=5 // pred_fallthru
      _
  $region6: #{bottleneck_forward.15} parent=0 // loop_footer
    %s14 = sadd.s32 1, %s10
  $region7: #{bottleneck_forward.15} parent=0 // loop_footer_branch
    %9 = sbr.rel target = $region3
  $region8: #{bottleneck_forward.15} parent=0 // loop_exit
    _

// kernel: bottleneck_forward.10
$region0: #{bottleneck_forward.10}
  #allocation0 [shape = 'u32[]', space=smem, size = 0x4, offset = 0x4, fixed_abs, tag = 'smem constant byte address 0x4 - core index']
  #allocation1 [shape = 'u32[144,128]{1,0:T(1,128)}', space=vmem, size = 0x12000, scoped, tag = 'internal scratch']
  %s0 = inlined_call_operand.vmem [shape: f32[2,26,26,128], index: 0, kind: input, shape index: {}]
  %s1 = inlined_call_operand.vmem [shape: bf16[1152,128], index: 1, kind: input, shape index: {}]
  %s2 = inlined_call_operand.vmem [shape: f32[2,576,128], index: 2, kind: output, shape index: {0}]
  %s3 = inlined_call_operand.vmem [shape: f32[2,128], index: 3, kind: output, shape index: {1}]
  %4 = xla_tuple %s2, %s3
  %s5 = sld [smem:[#allocation0]]
  $region53: #{bottleneck_forward.10} parent=0
    _
  %s7 = ssub.s32 1, %s5
  %s8 = scalar_select 0, %s7, %s5
  loop: start=0, step=1, limit=4
  $region2: #{bottleneck_forward.10} parent=0 // loop_pre_header
    _
  $region3: #{bottleneck_forward.10} parent=0 // loop_header
    %s10 = sphi 0, %s14
    %p11 = scmp.ge.s32.totalorder %s10, 4
    %s20 = sphi 0, %s22
    %s23 = sphi 0, %s20
    %s24 = sphi 0, %s23
    %s40 = sphi 0, %s24
    %s44 = sphi 0, %s44
    %s46 = sphi 0, %s44
    %s47 = sphi 0, %s46
    %s61 = sphi 0, %s47
    %s67 = sphi 0, %s69
    %s70 = sphi 0, %s67
    %s71 = sphi 0, %s70
    %s87 = sphi 0, %s71
    %s91 = sphi 0, %s91
    %s93 = sphi 0, %s91
    %s94 = sphi 0, %s93
    %s108 = sphi 0, %s94
  $region4: #{bottleneck_forward.10} parent=0 // loop_header_branch
    %13 = sbr.rel (%p11) target = $region8
  $region5: #{bottleneck_forward.10} parent=0 // loop_body
    %s15 = ssub.s32 %s10, 1
    %s16 = ssub.s32 %s10, 2
    %s17 = sadd.s32 %s10, 1
    %s18 = ssub.s32 %s10, %s17
    %p19 = scmp.eq.s32.totalorder %s18, 0
    %s21 = sadd.s32 %s20, 1
    %s22 = scalar_select %p19, %s20, %s21
    %p25 = pneg %p19
    %p26 = scmp.eq.s32.totalorder %s10, 1
    %p27 = por %p25, %p26
    %p28 = scmp.ne.s32.totalorder %s20, %s23
    %p29 = scmp.eq.s32.totalorder %s10, 0
    %p30 = por %p28, %p29
    %p31 = scmp.ne.s32.totalorder %s20, %s23
    %p32 = scmp.eq.s32.totalorder %s15, 1
    %p33 = por %p31, %p32
    %p34 = scmp.ne.s32.totalorder %s23, %s24
    %p35 = scmp.eq.s32.totalorder %s15, 0
    %p36 = por %p34, %p35
    %p37 = scmp.ne.s32.totalorder %s23, %s24
    %p38 = scmp.eq.s32.totalorder %s16, 1
    %p39 = por %p37, %p38
    %p41 = scmp.ne.s32.totalorder %s24, %s40
    %p42 = scmp.eq.s32.totalorder %s16, 0
    %p43 = por %p41, %p42
    %s45 = sadd.s32 %s44, 1
    %p48 = scmp.eq.s32.totalorder %s10, 1
    %p49 = scmp.ne.s32.totalorder %s44, %s46
    %p50 = scmp.eq.s32.totalorder %s10, 0
    %p51 = por %p49, %p50
    %p52 = scmp.ne.s32.totalorder %s44, %s46
    %p53 = scmp.eq.s32.totalorder %s15, 1
    %p54 = por %p52, %p53
    %p55 = scmp.ne.s32.totalorder %s46, %s47
    %p56 = scmp.eq.s32.totalorder %s15, 0
    %p57 = por %p55, %p56
    %p58 = scmp.ne.s32.totalorder %s46, %s47
    %p59 = scmp.eq.s32.totalorder %s16, 1
    %p60 = por %p58, %p59
    %p62 = scmp.ne.s32.totalorder %s47, %s61
    %p63 = scmp.eq.s32.totalorder %s16, 0
    %p64 = por %p62, %p63
    %s65 = ssub.s32 %s10, %s17
    %p66 = scmp.eq.s32.totalorder %s65, 0
    %s68 = sadd.s32 %s67, 1
    %s69 = scalar_select %p66, %s67, %s68
    %p72 = pneg %p66
    %p73 = scmp.eq.s32.totalorder %s10, 1
    %p74 = por %p72, %p73
    %p75 = scmp.ne.s32.totalorder %s67, %s70
    %p76 = scmp.eq.s32.totalorder %s10, 0
    %p77 = por %p75, %p76
    %p78 = scmp.ne.s32.totalorder %s67, %s70
    %p79 = scmp.eq.s32.totalorder %s15, 1
    %p80 = por %p78, %p79
    %p81 = scmp.ne.s32.totalorder %s70, %s71
    %p82 = scmp.eq.s32.totalorder %s15, 0
    %p83 = por %p81, %p82
    %p84 = scmp.ne.s32.totalorder %s70, %s71
    %p85 = scmp.eq.s32.totalorder %s16, 1
    %p86 = por %p84, %p85
    %p88 = scmp.ne.s32.totalorder %s71, %s87
    %p89 = scmp.eq.s32.totalorder %s16, 0
    %p90 = por %p88, %p89
    %s92 = sadd.s32 %s91, 1
    %p95 = scmp.eq.s32.totalorder %s10, 1
    %p96 = scmp.ne.s32.totalorder %s91, %s93
    %p97 = scmp.eq.s32.totalorder %s10, 0
    %p98 = por %p96, %p97
    %p99 = scmp.ne.s32.totalorder %s91, %s93
    %p100 = scmp.eq.s32.totalorder %s15, 1
    %p101 = por %p99, %p100
    %p102 = scmp.ne.s32.totalorder %s93, %s94
    %p103 = scmp.eq.s32.totalorder %s15, 0
    %p104 = por %p102, %p103
    %p105 = scmp.ne.s32.totalorder %s93, %s94
    %p106 = scmp.eq.s32.totalorder %s16, 1
    %p107 = por %p105, %p106
    %p109 = scmp.ne.s32.totalorder %s94, %s108
    %p110 = scmp.eq.s32.totalorder %s16, 0
    %p111 = por %p109, %p110
    %p112 = scmp.le.s32.totalorder 1, %s10
    %p113 = scmp.lt.s32.totalorder %s10, 3
    %p114 = pnand %p112, %p113
    %p115 = pneg %p114
    // Predicated region
    $region9: #{bottleneck_forward.10} parent=5 // pred_check
      _
    $region10: #{bottleneck_forward.10} parent=5 // pred_check_branch
      %117 = sbr.rel (%p114) target = $region12
    $region11: #{bottleneck_forward.10} parent=5 // pred_region
      %s118 = ssub.s32 %s10, 1
      // Predicated region
      $region13: #{bottleneck_forward.10} parent=11 // pred_check
        %p119 = pneg %p57
      $region14: #{bottleneck_forward.10} parent=11 // pred_check_branch
        %121 = sbr.rel (%p119) target = $region16
      $region15: #{bottleneck_forward.10} parent=11 // pred_region
        _
      $region16: #{bottleneck_forward.10} parent=11 // pred_fallthru
        _
    $region12: #{bottleneck_forward.10} parent=5 // pred_fallthru
      _
    %p122 = scmp.lt.s32.totalorder %s10, 2
    // Predicated region
    $region17: #{bottleneck_forward.10} parent=5 // pred_check
      %p123 = pneg %p122
    $region18: #{bottleneck_forward.10} parent=5 // pred_check_branch
      %125 = sbr.rel (%p123) target = $region20
    $region19: #{bottleneck_forward.10} parent=5 // pred_region
      // Predicated region
      $region21: #{bottleneck_forward.10} parent=19 // pred_check
        %p126 = pneg %p30
      $region22: #{bottleneck_forward.10} parent=19 // pred_check_branch
        %128 = sbr.rel (%p126) target = $region24
      $region23: #{bottleneck_forward.10} parent=19 // pred_region
        %p129 = scmp.lt.s32.totalorder %s10, 1
        %s130 = scalar_select %p129, %s10, 1
        %s131 = smul.addr %s130, 104
        %s132 = smul.addr %s131, 8
        %s133 = scalar_lea.vmem %s0, %s132
      $region24: #{bottleneck_forward.10} parent=19 // pred_fallthru
        _
    $region20: #{bottleneck_forward.10} parent=5 // pred_fallthru
      _
    %p134 = scmp.le.s32.totalorder 1, %s10
    %p135 = scmp.lt.s32.totalorder %s10, 3
    %p136 = pnand %p134, %p135
    %p137 = pneg %p136
    // Predicated region
    $region25: #{bottleneck_forward.10} parent=5 // pred_check
      _
    $region26: #{bottleneck_forward.10} parent=5 // pred_check_branch
      %139 = sbr.rel (%p136) target = $region28
    $region27: #{bottleneck_forward.10} parent=5 // pred_region
      %s140 = ssub.s32 %s10, 1
      %p141 = scmp.lt.s32.totalorder %s15, 1
      %s142 = scalar_select %p141, %s15, 1
      %s143 = smul.addr %s142, 104
      %s144 = smul.addr %s143, 8
      %s145 = scalar_lea.vmem %s0, %s144
      %p146 = pneg %p36
      %p147 = pneg %p33
      %p148 = pneg %p57
      %p149 = pneg %p54
      %p150 = pneg %p83
      %p151 = pneg %p80
      %p152 = scmp.lt.s32.totalorder %s15, 1
      %s153 = scalar_select %p152, %s15, 1
      %s154 = smul.addr %s153, 72
      %s155 = smul.addr %s154, 8
      %s156 = scalar_lea.vmem %s2, %s155
      %p157 = pneg %p104
      %p158 = pneg %p101
      %p159 = scmp.lt.s32.totalorder %s15, 1
      %s160 = scalar_select %p159, %s15, 1
      %s161 = smul.addr %s160, 104
      %s162 = smul.addr %s161, 8
      %s163 = scalar_lea.vmem %s0, %s162
      %p164 = scmp.lt.s32.totalorder %s15, 1
      %s165 = scalar_select %p164, %s15, 1
      %s166 = smul.addr %s165, 72
      %s167 = smul.addr %s166, 8
      %s168 = scalar_lea.vmem %s2, %s167
      %p170 = scmp.eq.s32.totalorder %s15, 0
      // Predicated region
      $region29: #{bottleneck_forward.10} parent=27 // pred_check
        %p171 = pneg %p170
      $region30: #{bottleneck_forward.10} parent=27 // pred_check_branch
        %173 = sbr.rel (%p171) target = $region32
      $region31: #{bottleneck_forward.10} parent=27 // pred_region
        %174 = vst [vmem:[%s3] sm:$0x3] 0.0
      $region32: #{bottleneck_forward.10} parent=27 // pred_fallthru
        _
      %v175 = vld [vmem:[%s163] sm:$0xff]
      %v176 = vld [vmem:[%s163 + $0x8] sm:$0xff]
      %v177 = vld [vmem:[%s163 + $0x10] sm:$0xff]
      %v178 = vld [vmem:[%s163 + $0x18] sm:$0x3]
      %v179 = vld [vmem:[%s163 + $0x20] sm:$0xff]
      %v180 = vld [vmem:[%s163 + $0x28] sm:$0xff]
      %v181 = vld [vmem:[%s163 + $0x30] sm:$0xff]
      %v182 = vld [vmem:[%s163 + $0x38] sm:$0x3]
      %v183 = vld [vmem:[%s163 + $0x40] sm:$0xff]
      %v184 = vld [vmem:[%s163 + $0x48] sm:$0xff]
      %v185 = vld [vmem:[%s163 + $0x50] sm:$0xff]
      %v186 = vld [vmem:[%s163 + $0x58] sm:$0x3]
      %v187 = vld [vmem:[%s163 + $0x60] sm:$0xff]
      %v188 = vld [vmem:[%s163 + $0x68] sm:$0xff]
      %v189 = vld [vmem:[%s163 + $0x70] sm:$0xff]
      %v190 = vld [vmem:[%s163 + $0x78] sm:$0x3]
      %v191 = vld [vmem:[%s163 + $0x80] sm:$0xff]
      %v192 = vld [vmem:[%s163 + $0x88] sm:$0xff]
      %v193 = vld [vmem:[%s163 + $0x90] sm:$0xff]
      %v194 = vld [vmem:[%s163 + $0x98] sm:$0x3]
      %v195 = vld [vmem:[%s163 + $0xa0] sm:$0xff]
      %v196 = vld [vmem:[%s163 + $0xa8] sm:$0xff]
      %v197 = vld [vmem:[%s163 + $0xb0] sm:$0xff]
      %v198 = vld [vmem:[%s163 + $0xb8] sm:$0x3]
      %v199 = vld [vmem:[%s163 + $0xc0] sm:$0xff]
      %v200 = vld [vmem:[%s163 + $0xc8] sm:$0xff]
      %v201 = vld [vmem:[%s163 + $0xd0] sm:$0xff]
      %v202 = vld [vmem:[%s163 + $0xd8] sm:$0x3]
      %v203 = vld [vmem:[%s163 + $0xe0] sm:$0xff]
      %v204 = vld [vmem:[%s163 + $0xe8] sm:$0xff]
      %v205 = vld [vmem:[%s163 + $0xf0] sm:$0xff]
      %v206 = vld [vmem:[%s163 + $0xf8] sm:$0x3]
      %v207 = vld [vmem:[%s163 + $0x100] sm:$0xff]
      %v208 = vld [vmem:[%s163 + $0x108] sm:$0xff]
      %v209 = vld [vmem:[%s163 + $0x110] sm:$0xff]
      %v210 = vld [vmem:[%s163 + $0x118] sm:$0x3]
      %v211 = vld [vmem:[%s163 + $0x120] sm:$0xff]
      %v212 = vld [vmem:[%s163 + $0x128] sm:$0xff]
      %v213 = vld [vmem:[%s163 + $0x130] sm:$0xff]
      %v214 = vld [vmem:[%s163 + $0x138] sm:$0x3]
      %v215 = vld [vmem:[%s163 + $0x140] sm:$0xff]
      %v216 = vld [vmem:[%s163 + $0x148] sm:$0xff]
      %v217 = vld [vmem:[%s163 + $0x150] sm:$0xff]
      %v218 = vld [vmem:[%s163 + $0x158] sm:$0x3]
      %v219 = vld [vmem:[%s163 + $0x160] sm:$0xff]
      %v220 = vld [vmem:[%s163 + $0x168] sm:$0xff]
      %v221 = vld [vmem:[%s163 + $0x170] sm:$0xff]
      %v222 = vld [vmem:[%s163 + $0x178] sm:$0x3]
      %v223 = vld [vmem:[%s163 + $0x180] sm:$0xff]
      %v224 = vld [vmem:[%s163 + $0x188] sm:$0xff]
      %v225 = vld [vmem:[%s163 + $0x190] sm:$0xff]
      %v226 = vld [vmem:[%s163 + $0x198] sm:$0x3]
      %v227 = vld [vmem:[%s163 + $0x1a0] sm:$0xff]
      %v228 = vld [vmem:[%s163 + $0x1a8] sm:$0xff]
      %v229 = vld [vmem:[%s163 + $0x1b0] sm:$0xff]
      %v230 = vld [vmem:[%s163 + $0x1b8] sm:$0x3]
      %v231 = vld [vmem:[%s163 + $0x1c0] sm:$0xff]
      %v232 = vld [vmem:[%s163 + $0x1c8] sm:$0xff]
      %v233 = vld [vmem:[%s163 + $0x1d0] sm:$0xff]
      %v234 = vld [vmem:[%s163 + $0x1d8] sm:$0x3]
      %v235 = vld [vmem:[%s163 + $0x1e0] sm:$0xff]
      %v236 = vld [vmem:[%s163 + $0x1e8] sm:$0xff]
      %v237 = vld [vmem:[%s163 + $0x1f0] sm:$0xff]
      %v238 = vld [vmem:[%s163 + $0x1f8] sm:$0x3]
      %v239 = vld [vmem:[%s163 + $0x200] sm:$0xff]
      %v240 = vld [vmem:[%s163 + $0x208] sm:$0xff]
      %v241 = vld [vmem:[%s163 + $0x210] sm:$0xff]
      %v242 = vld [vmem:[%s163 + $0x218] sm:$0x3]
      %v243 = vld [vmem:[%s163 + $0x220] sm:$0xff]
      %v244 = vld [vmem:[%s163 + $0x228] sm:$0xff]
      %v245 = vld [vmem:[%s163 + $0x230] sm:$0xff]
      %v246 = vld [vmem:[%s163 + $0x238] sm:$0x3]
      %v247 = vld [vmem:[%s163 + $0x240] sm:$0xff]
      %v248 = vld [vmem:[%s163 + $0x248] sm:$0xff]
      %v249 = vld [vmem:[%s163 + $0x250] sm:$0xff]
      %v250 = vld [vmem:[%s163 + $0x258] sm:$0x3]
      %v251 = vld [vmem:[%s163 + $0x260] sm:$0xff]
      %v252 = vld [vmem:[%s163 + $0x268] sm:$0xff]
      %v253 = vld [vmem:[%s163 + $0x270] sm:$0xff]
      %v254 = vld [vmem:[%s163 + $0x278] sm:$0x3]
      %v255 = vld [vmem:[%s163 + $0x280] sm:$0xff]
      %v256 = vld [vmem:[%s163 + $0x288] sm:$0xff]
      %v257 = vld [vmem:[%s163 + $0x290] sm:$0xff]
      %v258 = vld [vmem:[%s163 + $0x298] sm:$0x3]
      %v259 = vld [vmem:[%s163 + $0x2a0] sm:$0xff]
      %v260 = vld [vmem:[%s163 + $0x2a8] sm:$0xff]
      %v261 = vld [vmem:[%s163 + $0x2b0] sm:$0xff]
      %v262 = vld [vmem:[%s163 + $0x2b8] sm:$0x3]
      %v263 = vld [vmem:[%s163 + $0x2c0] sm:$0xff]
      %v264 = vld [vmem:[%s163 + $0x2c8] sm:$0xff]
      %v265 = vld [vmem:[%s163 + $0x2d0] sm:$0xff]
      %v266 = vld [vmem:[%s163 + $0x2d8] sm:$0x3]
      %v267 = vld [vmem:[%s163 + $0x2e0] sm:$0xff]
      %v268 = vld [vmem:[%s163 + $0x2e8] sm:$0xff]
      %v269 = vld [vmem:[%s163 + $0x2f0] sm:$0xff]
      %v270 = vld [vmem:[%s163 + $0x2f8] sm:$0x3]
      %v271 = vld [vmem:[%s163 + $0x300] sm:$0xff]
      %v272 = vld [vmem:[%s163 + $0x308] sm:$0xff]
      %v273 = vld [vmem:[%s163 + $0x310] sm:$0xff]
      %v274 = vld [vmem:[%s163 + $0x318] sm:$0x3]
      %v275 = vld [vmem:[%s163 + $0x320] sm:$0xff]
      %v276 = vld [vmem:[%s163 + $0x328] sm:$0xff]
      %v277 = vld [vmem:[%s163 + $0x330] sm:$0xff]
      %v278 = vld [vmem:[%s163 + $0x338] sm:$0x3]
      %vm375 = vcmask 1046528
      %v376 = vrot.slane %v175, 1
      %v377 = vrot.slane %v176, 1
      %v378 = vsel %vm375, %v376, %v377
      %v379 = vrot.slane %v177, 1
      %v380 = vsel %vm375, %v377, %v379
      %v381 = vrot.slane %v178, 1
      %v382 = vsel %vm375, %v379, %v381
      %v383 = vrot.slane %v179, 1
      %v384 = vrot.slane %v180, 1
      %v385 = vsel %vm375, %v383, %v384
      %v386 = vrot.slane %v181, 1
      %v387 = vsel %vm375, %v384, %v386
      %v388 = vrot.slane %v182, 1
      %v389 = vsel %vm375, %v386, %v388
      %v390 = vrot.slane %v183, 1
      %v391 = vrot.slane %v184, 1
      %v392 = vsel %vm375, %v390, %v391
      %v393 = vrot.slane %v185, 1
      %v394 = vsel %vm375, %v391, %v393
      %v395 = vrot.slane %v186, 1
      %v396 = vsel %vm375, %v393, %v395
      %v397 = vrot.slane %v187, 1
      %v398 = vrot.slane %v188, 1
      %v399 = vsel %vm375, %v397, %v398
      %v400 = vrot.slane %v189, 1
      %v401 = vsel %vm375, %v398, %v400
      %v402 = vrot.slane %v190, 1
      %v403 = vsel %vm375, %v400, %v402
      %v404 = vrot.slane %v191, 1
      %v405 = vrot.slane %v192, 1
      %v406 = vsel %vm375, %v404, %v405
      %v407 = vrot.slane %v193, 1
      %v408 = vsel %vm375, %v405, %v407
      %v409 = vrot.slane %v194, 1
      %v410 = vsel %vm375, %v407, %v409
      %v411 = vrot.slane %v195, 1
      %v412 = vrot.slane %v196, 1
      %v413 = vsel %vm375, %v411, %v412
      %v414 = vrot.slane %v197, 1
      %v415 = vsel %vm375, %v412, %v414
      %v416 = vrot.slane %v198, 1
      %v417 = vsel %vm375, %v414, %v416
      %v418 = vrot.slane %v199, 1
      %v419 = vrot.slane %v200, 1
      %v420 = vsel %vm375, %v418, %v419
      %v421 = vrot.slane %v201, 1
      %v422 = vsel %vm375, %v419, %v421
      %v423 = vrot.slane %v202, 1
      %v424 = vsel %vm375, %v421, %v423
      %v425 = vrot.slane %v203, 1
      %v426 = vrot.slane %v204, 1
      %v427 = vsel %vm375, %v425, %v426
      %v428 = vrot.slane %v205, 1
      %v429 = vsel %vm375, %v426, %v428
      %v430 = vrot.slane %v206, 1
      %v431 = vsel %vm375, %v428, %v430
      %v432 = vrot.slane %v207, 1
      %v433 = vrot.slane %v208, 1
      %v434 = vsel %vm375, %v432, %v433
      %v435 = vrot.slane %v209, 1
      %v436 = vsel %vm375, %v433, %v435
      %v437 = vrot.slane %v210, 1
      %v438 = vsel %vm375, %v435, %v437
      %v439 = vrot.slane %v211, 1
      %v440 = vrot.slane %v212, 1
      %v441 = vsel %vm375, %v439, %v440
      %v442 = vrot.slane %v213, 1
      %v443 = vsel %vm375, %v440, %v442
      %v444 = vrot.slane %v214, 1
      %v445 = vsel %vm375, %v442, %v444
      %v446 = vrot.slane %v215, 1
      %v447 = vrot.slane %v216, 1
      %v448 = vsel %vm375, %v446, %v447
      %v449 = vrot.slane %v217, 1
      %v450 = vsel %vm375, %v447, %v449
      %v451 = vrot.slane %v218, 1
      %v452 = vsel %vm375, %v449, %v451
      %v453 = vrot.slane %v219, 1
      %v454 = vrot.slane %v220, 1
      %v455 = vsel %vm375, %v453, %v454
      %v456 = vrot.slane %v221, 1
      %v457 = vsel %vm375, %v454, %v456
      %v458 = vrot.slane %v222, 1
      %v459 = vsel %vm375, %v456, %v458
      %v460 = vrot.slane %v223, 1
      %v461 = vrot.slane %v224, 1
      %v462 = vsel %vm375, %v460, %v461
      %v463 = vrot.slane %v225, 1
      %v464 = vsel %vm375, %v461, %v463
      %v465 = vrot.slane %v226, 1
      %v466 = vsel %vm375, %v463, %v465
      %v467 = vrot.slane %v227, 1
      %v468 = vrot.slane %v228, 1
      %v469 = vsel %vm375, %v467, %v468
      %v470 = vrot.slane %v229, 1
      %v471 = vsel %vm375, %v468, %v470
      %v472 = vrot.slane %v230, 1
      %v473 = vsel %vm375, %v470, %v472
      %v474 = vrot.slane %v231, 1
      %v475 = vrot.slane %v232, 1
      %v476 = vsel %vm375, %v474, %v475
      %v477 = vrot.slane %v233, 1
      %v478 = vsel %vm375, %v475, %v477
      %v479 = vrot.slane %v234, 1
      %v480 = vsel %vm375, %v477, %v479
      %v481 = vrot.slane %v235, 1
      %v482 = vrot.slane %v236, 1
      %v483 = vsel %vm375, %v481, %v482
      %v484 = vrot.slane %v237, 1
      %v485 = vsel %vm375, %v482, %v484
      %v486 = vrot.slane %v238, 1
      %v487 = vsel %vm375, %v484, %v486
      %v488 = vrot.slane %v239, 1
      %v489 = vrot.slane %v240, 1
      %v490 = vsel %vm375, %v488, %v489
      %v491 = vrot.slane %v241, 1
      %v492 = vsel %vm375, %v489, %v491
      %v493 = vrot.slane %v242, 1
      %v494 = vsel %vm375, %v491, %v493
      %v495 = vrot.slane %v243, 1
      %v496 = vrot.slane %v244, 1
      %v497 = vsel %vm375, %v495, %v496
      %v498 = vrot.slane %v245, 1
      %v499 = vsel %vm375, %v496, %v498
      %v500 = vrot.slane %v246, 1
      %v501 = vsel %vm375, %v498, %v500
      %v502 = vrot.slane %v247, 1
      %v503 = vrot.slane %v248, 1
      %v504 = vsel %vm375, %v502, %v503
      %v505 = vrot.slane %v249, 1
      %v506 = vsel %vm375, %v503, %v505
      %v507 = vrot.slane %v250, 1
      %v508 = vsel %vm375, %v505, %v507
      %v509 = vrot.slane %v251, 1
      %v510 = vrot.slane %v252, 1
      %v511 = vsel %vm375, %v509, %v510
      %v512 = vrot.slane %v253, 1
      %v513 = vsel %vm375, %v510, %v512
      %v514 = vrot.slane %v254, 1
      %v515 = vsel %vm375, %v512, %v514
      %v516 = vrot.slane %v255, 1
      %v517 = vrot.slane %v256, 1
      %v518 = vsel %vm375, %v516, %v517
      %v519 = vrot.slane %v257, 1
      %v520 = vsel %vm375, %v517, %v519
      %v521 = vrot.slane %v258, 1
      %v522 = vsel %vm375, %v519, %v521
      %v523 = vrot.slane %v259, 1
      %v524 = vrot.slane %v260, 1
      %v525 = vsel %vm375, %v523, %v524
      %v526 = vrot.slane %v261, 1
      %v527 = vsel %vm375, %v524, %v526
      %v528 = vrot.slane %v262, 1
      %v529 = vsel %vm375, %v526, %v528
      %v530 = vrot.slane %v263, 1
      %v531 = vrot.slane %v264, 1
      %v532 = vsel %vm375, %v530, %v531
      %v533 = vrot.slane %v265, 1
      %v534 = vsel %vm375, %v531, %v533
      %v535 = vrot.slane %v266, 1
      %v536 = vsel %vm375, %v533, %v535
      %v537 = vrot.slane %v267, 1
      %v538 = vrot.slane %v268, 1
      %v539 = vsel %vm375, %v537, %v538
      %v540 = vrot.slane %v269, 1
      %v541 = vsel %vm375, %v538, %v540
      %v542 = vrot.slane %v270, 1
      %v543 = vsel %vm375, %v540, %v542
      %vm616 = vcmask 1045504
      %v617 = vrot.slane %v175, 2
      %v618 = vrot.slane %v176, 2
      %v619 = vsel %vm616, %v617, %v618
      %v620 = vrot.slane %v177, 2
      %v621 = vsel %vm616, %v618, %v620
      %v622 = vrot.slane %v178, 2
      %v623 = vsel %vm616, %v620, %v622
      %v624 = vrot.slane %v179, 2
      %v625 = vrot.slane %v180, 2
      %v626 = vsel %vm616, %v624, %v625
      %v627 = vrot.slane %v181, 2
      %v628 = vsel %vm616, %v625, %v627
      %v629 = vrot.slane %v182, 2
      %v630 = vsel %vm616, %v627, %v629
      %v631 = vrot.slane %v183, 2
      %v632 = vrot.slane %v184, 2
      %v633 = vsel %vm616, %v631, %v632
      %v634 = vrot.slane %v185, 2
      %v635 = vsel %vm616, %v632, %v634
      %v636 = vrot.slane %v186, 2
      %v637 = vsel %vm616, %v634, %v636
      %v638 = vrot.slane %v187, 2
      %v639 = vrot.slane %v188, 2
      %v640 = vsel %vm616, %v638, %v639
      %v641 = vrot.slane %v189, 2
      %v642 = vsel %vm616, %v639, %v641
      %v643 = vrot.slane %v190, 2
      %v644 = vsel %vm616, %v641, %v643
      %v645 = vrot.slane %v191, 2
      %v646 = vrot.slane %v192, 2
      %v647 = vsel %vm616, %v645, %v646
      %v648 = vrot.slane %v193, 2
      %v649 = vsel %vm616, %v646, %v648
      %v650 = vrot.slane %v194, 2
      %v651 = vsel %vm616, %v648, %v650
      %v652 = vrot.slane %v195, 2
      %v653 = vrot.slane %v196, 2
      %v654 = vsel %vm616, %v652, %v653
      %v655 = vrot.slane %v197, 2
      %v656 = vsel %vm616, %v653, %v655
      %v657 = vrot.slane %v198, 2
      %v658 = vsel %vm616, %v655, %v657
      %v659 = vrot.slane %v199, 2
      %v660 = vrot.slane %v200, 2
      %v661 = vsel %vm616, %v659, %v660
      %v662 = vrot.slane %v201, 2
      %v663 = vsel %vm616, %v660, %v662
      %v664 = vrot.slane %v202, 2
      %v665 = vsel %vm616, %v662, %v664
      %v666 = vrot.slane %v203, 2
      %v667 = vrot.slane %v204, 2
      %v668 = vsel %vm616, %v666, %v667
      %v669 = vrot.slane %v205, 2
      %v670 = vsel %vm616, %v667, %v669
      %v671 = vrot.slane %v206, 2
      %v672 = vsel %vm616, %v669, %v671
      %v673 = vrot.slane %v207, 2
      %v674 = vrot.slane %v208, 2
      %v675 = vsel %vm616, %v673, %v674
      %v676 = vrot.slane %v209, 2
      %v677 = vsel %vm616, %v674, %v676
      %v678 = vrot.slane %v210, 2
      %v679 = vsel %vm616, %v676, %v678
      %v680 = vrot.slane %v211, 2
      %v681 = vrot.slane %v212, 2
      %v682 = vsel %vm616, %v680, %v681
      %v683 = vrot.slane %v213, 2
      %v684 = vsel %vm616, %v681, %v683
      %v685 = vrot.slane %v214, 2
      %v686 = vsel %vm616, %v683, %v685
      %v687 = vrot.slane %v215, 2
      %v688 = vrot.slane %v216, 2
      %v689 = vsel %vm616, %v687, %v688
      %v690 = vrot.slane %v217, 2
      %v691 = vsel %vm616, %v688, %v690
      %v692 = vrot.slane %v218, 2
      %v693 = vsel %vm616, %v690, %v692
      %v694 = vrot.slane %v219, 2
      %v695 = vrot.slane %v220, 2
      %v696 = vsel %vm616, %v694, %v695
      %v697 = vrot.slane %v221, 2
      %v698 = vsel %vm616, %v695, %v697
      %v699 = vrot.slane %v222, 2
      %v700 = vsel %vm616, %v697, %v699
      %v701 = vrot.slane %v223, 2
      %v702 = vrot.slane %v224, 2
      %v703 = vsel %vm616, %v701, %v702
      %v704 = vrot.slane %v225, 2
      %v705 = vsel %vm616, %v702, %v704
      %v706 = vrot.slane %v226, 2
      %v707 = vsel %vm616, %v704, %v706
      %v708 = vrot.slane %v227, 2
      %v709 = vrot.slane %v228, 2
      %v710 = vsel %vm616, %v708, %v709
      %v711 = vrot.slane %v229, 2
      %v712 = vsel %vm616, %v709, %v711
      %v713 = vrot.slane %v230, 2
      %v714 = vsel %vm616, %v711, %v713
      %v715 = vrot.slane %v231, 2
      %v716 = vrot.slane %v232, 2
      %v717 = vsel %vm616, %v715, %v716
      %v718 = vrot.slane %v233, 2
      %v719 = vsel %vm616, %v716, %v718
      %v720 = vrot.slane %v234, 2
      %v721 = vsel %vm616, %v718, %v720
      %v722 = vrot.slane %v235, 2
      %v723 = vrot.slane %v236, 2
      %v724 = vsel %vm616, %v722, %v723
      %v725 = vrot.slane %v237, 2
      %v726 = vsel %vm616, %v723, %v725
      %v727 = vrot.slane %v238, 2
      %v728 = vsel %vm616, %v725, %v727
      %v729 = vrot.slane %v239, 2
      %v730 = vrot.slane %v240, 2
      %v731 = vsel %vm616, %v729, %v730
      %v732 = vrot.slane %v241, 2
      %v733 = vsel %vm616, %v730, %v732
      %v734 = vrot.slane %v242, 2
      %v735 = vsel %vm616, %v732, %v734
      %v736 = vrot.slane %v243, 2
      %v737 = vrot.slane %v244, 2
      %v738 = vsel %vm616, %v736, %v737
      %v739 = vrot.slane %v245, 2
      %v740 = vsel %vm616, %v737, %v739
      %v741 = vrot.slane %v246, 2
      %v742 = vsel %vm616, %v739, %v741
      %v743 = vrot.slane %v247, 2
      %v744 = vrot.slane %v248, 2
      %v745 = vsel %vm616, %v743, %v744
      %v746 = vrot.slane %v249, 2
      %v747 = vsel %vm616, %v744, %v746
      %v748 = vrot.slane %v250, 2
      %v749 = vsel %vm616, %v746, %v748
      %v750 = vrot.slane %v251, 2
      %v751 = vrot.slane %v252, 2
      %v752 = vsel %vm616, %v750, %v751
      %v753 = vrot.slane %v253, 2
      %v754 = vsel %vm616, %v751, %v753
      %v755 = vrot.slane %v254, 2
      %v756 = vsel %vm616, %v753, %v755
      %v757 = vrot.slane %v255, 2
      %v758 = vrot.slane %v256, 2
      %v759 = vsel %vm616, %v757, %v758
      %v760 = vrot.slane %v257, 2
      %v761 = vsel %vm616, %v758, %v760
      %v762 = vrot.slane %v258, 2
      %v763 = vsel %vm616, %v760, %v762
      %v764 = vrot.slane %v259, 2
      %v765 = vrot.slane %v260, 2
      %v766 = vsel %vm616, %v764, %v765
      %v767 = vrot.slane %v261, 2
      %v768 = vsel %vm616, %v765, %v767
      %v769 = vrot.slane %v262, 2
      %v770 = vsel %vm616, %v767, %v769
      %v771 = vrot.slane %v263, 2
      %v772 = vrot.slane %v264, 2
      %v773 = vsel %vm616, %v771, %v772
      %v774 = vrot.slane %v265, 2
      %v775 = vsel %vm616, %v772, %v774
      %v776 = vrot.slane %v266, 2
      %v777 = vsel %vm616, %v774, %v776
      %v778 = vrot.slane %v267, 2
      %v779 = vrot.slane %v268, 2
      %v780 = vsel %vm616, %v778, %v779
      %v781 = vrot.slane %v269, 2
      %v782 = vsel %vm616, %v779, %v781
      %v783 = vrot.slane %v270, 2
      %v784 = vsel %vm616, %v781, %v783
      %v861 = vrot.slane %v271, 1
      %v862 = vrot.slane %v272, 1
      %v863 = vsel %vm375, %v861, %v862
      %v864 = vrot.slane %v273, 1
      %v865 = vsel %vm375, %v862, %v864
      %v866 = vrot.slane %v274, 1
      %v867 = vsel %vm375, %v864, %v866
      %v871 = vrot.slane %v271, 2
      %v872 = vrot.slane %v272, 2
      %v873 = vsel %vm616, %v871, %v872
      %v874 = vrot.slane %v273, 2
      %v875 = vsel %vm616, %v872, %v874
      %v876 = vrot.slane %v274, 2
      %v877 = vsel %vm616, %v874, %v876
      %v885 = vrot.slane %v275, 1
      %v886 = vrot.slane %v276, 1
      %v887 = vsel %vm375, %v885, %v886
      %v888 = vrot.slane %v277, 1
      %v889 = vsel %vm375, %v886, %v888
      %v890 = vrot.slane %v278, 1
      %v891 = vsel %vm375, %v888, %v890
      %v895 = vrot.slane %v275, 2
      %v896 = vrot.slane %v276, 2
      %v897 = vsel %vm616, %v895, %v896
      %v898 = vrot.slane %v277, 2
      %v899 = vsel %vm616, %v896, %v898
      %v900 = vrot.slane %v278, 2
      %v901 = vsel %vm616, %v898, %v900
      %v905 = vpack.c.bf16 %v176, %v175
      %v906 = vpack.c.bf16 %v380, %v378
      %v907 = vpack.c.bf16 %v621, %v619
      %v908 = vpack.c.bf16 %v180, %v179
      %v909 = vpack.c.bf16 %v387, %v385
      %v910 = vpack.c.bf16 %v628, %v626
      %v911 = vpack.c.bf16 %v184, %v183
      %v912 = vpack.c.bf16 %v394, %v392
      %v913 = vpack.c.bf16 %v635, %v633
      %v914 = vpack.c.bf16 %v179, %v177
      %v915 = vpack.c.bf16 %v385, %v382
      %v916 = vpack.c.bf16 %v626, %v623
      %v917 = vpack.c.bf16 %v183, %v181
      %v918 = vpack.c.bf16 %v392, %v389
      %v919 = vpack.c.bf16 %v633, %v630
      %v920 = vpack.c.bf16 %v187, %v185
      %v921 = vpack.c.bf16 %v399, %v396
      %v922 = vpack.c.bf16 %v640, %v637
      %v923 = vpack.c.bf16 %v181, %v180
      %v924 = vpack.c.bf16 %v389, %v387
      %v925 = vpack.c.bf16 %v630, %v628
      %v926 = vpack.c.bf16 %v185, %v184
      %v927 = vpack.c.bf16 %v396, %v394
      %v928 = vpack.c.bf16 %v637, %v635
      %v929 = vpack.c.bf16 %v189, %v188
      %v930 = vpack.c.bf16 %v403, %v401
      %v931 = vpack.c.bf16 %v644, %v642
      %v932 = vpack.c.bf16 %v188, %v187
      %v933 = vpack.c.bf16 %v401, %v399
      %v934 = vpack.c.bf16 %v642, %v640
      %v935 = vpack.c.bf16 %v192, %v191
      %v936 = vpack.c.bf16 %v408, %v406
      %v937 = vpack.c.bf16 %v649, %v647
      %v938 = vpack.c.bf16 %v191, %v189
      %v939 = vpack.c.bf16 %v406, %v403
      %v940 = vpack.c.bf16 %v647, %v644
      %v941 = vpack.c.bf16 %v195, %v193
      %v942 = vpack.c.bf16 %v413, %v410
      %v943 = vpack.c.bf16 %v654, %v651
      %v944 = vpack.c.bf16 %v193, %v192
      %v945 = vpack.c.bf16 %v410, %v408
      %v946 = vpack.c.bf16 %v651, %v649
      %v947 = vpack.c.bf16 %v197, %v196
      %v948 = vpack.c.bf16 %v417, %v415
      %v949 = vpack.c.bf16 %v658, %v656
      %v950 = vpack.c.bf16 %v196, %v195
      %v951 = vpack.c.bf16 %v415, %v413
      %v952 = vpack.c.bf16 %v656, %v654
      %v953 = vpack.c.bf16 %v200, %v199
      %v954 = vpack.c.bf16 %v422, %v420
      %v955 = vpack.c.bf16 %v663, %v661
      %v956 = vpack.c.bf16 %v199, %v197
      %v957 = vpack.c.bf16 %v420, %v417
      %v958 = vpack.c.bf16 %v661, %v658
      %v959 = vpack.c.bf16 %v203, %v201
      %v960 = vpack.c.bf16 %v427, %v424
      %v961 = vpack.c.bf16 %v668, %v665
      %v962 = vpack.c.bf16 %v201, %v200
      %v963 = vpack.c.bf16 %v424, %v422
      %v964 = vpack.c.bf16 %v665, %v663
      %v965 = vpack.c.bf16 %v205, %v204
      %v966 = vpack.c.bf16 %v431, %v429
      %v967 = vpack.c.bf16 %v672, %v670
      %v968 = vpack.c.bf16 %v204, %v203
      %v969 = vpack.c.bf16 %v429, %v427
      %v970 = vpack.c.bf16 %v670, %v668
      %v971 = vpack.c.bf16 %v208, %v207
      %v972 = vpack.c.bf16 %v436, %v434
      %v973 = vpack.c.bf16 %v677, %v675
      %v974 = vpack.c.bf16 %v207, %v205
      %v975 = vpack.c.bf16 %v434, %v431
      %v976 = vpack.c.bf16 %v675, %v672
      %v977 = vpack.c.bf16 %v211, %v209
      %v978 = vpack.c.bf16 %v441, %v438
      %v979 = vpack.c.bf16 %v682, %v679
      %v980 = vpack.c.bf16 %v209, %v208
      %v981 = vpack.c.bf16 %v438, %v436
      %v982 = vpack.c.bf16 %v679, %v677
      %v983 = vpack.c.bf16 %v213, %v212
      %v984 = vpack.c.bf16 %v445, %v443
      %v985 = vpack.c.bf16 %v686, %v684
      %v986 = vpack.c.bf16 %v212, %v211
      %v987 = vpack.c.bf16 %v443, %v441
      %v988 = vpack.c.bf16 %v684, %v682
      %v989 = vpack.c.bf16 %v216, %v215
      %v990 = vpack.c.bf16 %v450, %v448
      %v991 = vpack.c.bf16 %v691, %v689
      %v992 = vpack.c.bf16 %v215, %v213
      %v993 = vpack.c.bf16 %v448, %v445
      %v994 = vpack.c.bf16 %v689, %v686
      %v995 = vpack.c.bf16 %v219, %v217
      %v996 = vpack.c.bf16 %v455, %v452
      %v997 = vpack.c.bf16 %v696, %v693
      %v998 = vpack.c.bf16 %v217, %v216
      %v999 = vpack.c.bf16 %v452, %v450
      %v1000 = vpack.c.bf16 %v693, %v691
      %v1001 = vpack.c.bf16 %v221, %v220
      %v1002 = vpack.c.bf16 %v459, %v457
      %v1003 = vpack.c.bf16 %v700, %v698
      %v1004 = vpack.c.bf16 %v220, %v219
      %v1005 = vpack.c.bf16 %v457, %v455
      %v1006 = vpack.c.bf16 %v698, %v696
      %v1007 = vpack.c.bf16 %v224, %v223
      %v1008 = vpack.c.bf16 %v464, %v462
      %v1009 = vpack.c.bf16 %v705, %v703
      %v1010 = vpack.c.bf16 %v223, %v221
      %v1011 = vpack.c.bf16 %v462, %v459
      %v1012 = vpack.c.bf16 %v703, %v700
      %v1013 = vpack.c.bf16 %v227, %v225
      %v1014 = vpack.c.bf16 %v469, %v466
      %v1015 = vpack.c.bf16 %v710, %v707
      %v1016 = vpack.c.bf16 %v225, %v224
      %v1017 = vpack.c.bf16 %v466, %v464
      %v1018 = vpack.c.bf16 %v707, %v705
      %v1019 = vpack.c.bf16 %v229, %v228
      %v1020 = vpack.c.bf16 %v473, %v471
      %v1021 = vpack.c.bf16 %v714, %v712
      %v1022 = vpack.c.bf16 %v228, %v227
      %v1023 = vpack.c.bf16 %v471, %v469
      %v1024 = vpack.c.bf16 %v712, %v710
      %v1025 = vpack.c.bf16 %v232, %v231
      %v1026 = vpack.c.bf16 %v478, %v476
      %v1027 = vpack.c.bf16 %v719, %v717
      %v1028 = vpack.c.bf16 %v231, %v229
      %v1029 = vpack.c.bf16 %v476, %v473
      %v1030 = vpack.c.bf16 %v717, %v714
      %v1031 = vpack.c.bf16 %v235, %v233
      %v1032 = vpack.c.bf16 %v483, %v480
      %v1033 = vpack.c.bf16 %v724, %v721
      %v1034 = vpack.c.bf16 %v233, %v232
      %v1035 = vpack.c.bf16 %v480, %v478
      %v1036 = vpack.c.bf16 %v721, %v719
      %v1037 = vpack.c.bf16 %v237, %v236
      %v1038 = vpack.c.bf16 %v487, %v485
      %v1039 = vpack.c.bf16 %v728, %v726
      %v1040 = vpack.c.bf16 %v236, %v235
      %v1041 = vpack.c.bf16 %v485, %v483
      %v1042 = vpack.c.bf16 %v726, %v724
      %v1043 = vpack.c.bf16 %v240, %v239
      %v1044 = vpack.c.bf16 %v492, %v490
      %v1045 = vpack.c.bf16 %v733, %v731
      %v1046 = vpack.c.bf16 %v239, %v237
      %v1047 = vpack.c.bf16 %v490, %v487
      %v1048 = vpack.c.bf16 %v731, %v728
      %v1049 = vpack.c.bf16 %v243, %v241
      %v1050 = vpack.c.bf16 %v497, %v494
      %v1051 = vpack.c.bf16 %v738, %v735
      %v1052 = vpack.c.bf16 %v241, %v240
      %v1053 = vpack.c.bf16 %v494, %v492
      %v1054 = vpack.c.bf16 %v735, %v733
      %v1055 = vpack.c.bf16 %v245, %v244
      %v1056 = vpack.c.bf16 %v501, %v499
      %v1057 = vpack.c.bf16 %v742, %v740
      %v1058 = vpack.c.bf16 %v244, %v243
      %v1059 = vpack.c.bf16 %v499, %v497
      %v1060 = vpack.c.bf16 %v740, %v738
      %v1061 = vpack.c.bf16 %v248, %v247
      %v1062 = vpack.c.bf16 %v506, %v504
      %v1063 = vpack.c.bf16 %v747, %v745
      %v1064 = vpack.c.bf16 %v247, %v245
      %v1065 = vpack.c.bf16 %v504, %v501
      %v1066 = vpack.c.bf16 %v745, %v742
      %v1067 = vpack.c.bf16 %v251, %v249
      %v1068 = vpack.c.bf16 %v511, %v508
      %v1069 = vpack.c.bf16 %v752, %v749
      %v1070 = vpack.c.bf16 %v249, %v248
      %v1071 = vpack.c.bf16 %v508, %v506
      %v1072 = vpack.c.bf16 %v749, %v747
      %v1073 = vpack.c.bf16 %v253, %v252
      %v1074 = vpack.c.bf16 %v515, %v513
      %v1075 = vpack.c.bf16 %v756, %v754
      %v1076 = vpack.c.bf16 %v252, %v251
      %v1077 = vpack.c.bf16 %v513, %v511
      %v1078 = vpack.c.bf16 %v754, %v752
      %v1079 = vpack.c.bf16 %v256, %v255
      %v1080 = vpack.c.bf16 %v520, %v518
      %v1081 = vpack.c.bf16 %v761, %v759
      %v1082 = vpack.c.bf16 %v255, %v253
      %v1083 = vpack.c.bf16 %v518, %v515
      %v1084 = vpack.c.bf16 %v759, %v756
      %v1085 = vpack.c.bf16 %v259, %v257
      %v1086 = vpack.c.bf16 %v525, %v522
      %v1087 = vpack.c.bf16 %v766, %v763
      %v1088 = vpack.c.bf16 %v257, %v256
      %v1089 = vpack.c.bf16 %v522, %v520
      %v1090 = vpack.c.bf16 %v763, %v761
      %v1091 = vpack.c.bf16 %v261, %v260
      %v1092 = vpack.c.bf16 %v529, %v527
      %v1093 = vpack.c.bf16 %v770, %v768
      %v1094 = vpack.c.bf16 %v260, %v259
      %v1095 = vpack.c.bf16 %v527, %v525
      %v1096 = vpack.c.bf16 %v768, %v766
      %v1097 = vpack.c.bf16 %v264, %v263
      %v1098 = vpack.c.bf16 %v534, %v532
      %v1099 = vpack.c.bf16 %v775, %v773
      %v1100 = vpack.c.bf16 %v263, %v261
      %v1101 = vpack.c.bf16 %v532, %v529
      %v1102 = vpack.c.bf16 %v773, %v770
      %v1103 = vpack.c.bf16 %v267, %v265
      %v1104 = vpack.c.bf16 %v539, %v536
      %v1105 = vpack.c.bf16 %v780, %v777
      %v1106 = vpack.c.bf16 %v265, %v264
      %v1107 = vpack.c.bf16 %v536, %v534
      %v1108 = vpack.c.bf16 %v777, %v775
      %v1109 = vpack.c.bf16 %v269, %v268
      %v1110 = vpack.c.bf16 %v543, %v541
      %v1111 = vpack.c.bf16 %v784, %v782
      %v1112 = vpack.c.bf16 %v268, %v267
      %v1113 = vpack.c.bf16 %v541, %v539
      %v1114 = vpack.c.bf16 %v782, %v780
      %v1115 = vpack.c.bf16 %v272, %v271
      %v1116 = vpack.c.bf16 %v865, %v863
      %v1117 = vpack.c.bf16 %v875, %v873
      %v1118 = vpack.c.bf16 %v271, %v269
      %v1119 = vpack.c.bf16 %v863, %v543
      %v1120 = vpack.c.bf16 %v873, %v784
      %v1121 = vpack.c.bf16 %v275, %v273
      %v1122 = vpack.c.bf16 %v887, %v867
      %v1123 = vpack.c.bf16 %v897, %v877
      %v1124 = vpack.c.bf16 %v273, %v272
      %v1125 = vpack.c.bf16 %v867, %v865
      %v1126 = vpack.c.bf16 %v877, %v875
      %v1127 = vpack.c.bf16 %v277, %v276
      %v1128 = vpack.c.bf16 %v891, %v889
      %v1129 = vpack.c.bf16 %v901, %v899
      %v1130 = vld [vmem:[%s1] sm:$0xf]
      %v1131 = vld [vmem:[%s1 + $0x4] sm:$0xf]
      %v1132 = vld [vmem:[%s1 + $0x8] sm:$0xf]
      %v1133 = vld [vmem:[%s1 + $0xc] sm:$0xf]
      %v1134 = vld [vmem:[%s1 + $0x10] sm:$0xf]
      %v1135 = vld [vmem:[%s1 + $0x14] sm:$0xf]
      %v1136 = vld [vmem:[%s1 + $0x18] sm:$0xf]
      %v1137 = vld [vmem:[%s1 + $0x1c] sm:$0xf]
      %v1138 = vld [vmem:[%s1 + $0x20] sm:$0xf]
      %v1139 = vld [vmem:[%s1 + $0x24] sm:$0xf]
      %v1140 = vld [vmem:[%s1 + $0x28] sm:$0xf]
      %v1141 = vld [vmem:[%s1 + $0x2c] sm:$0xf]
      %v1142 = vld [vmem:[%s1 + $0x30] sm:$0xf]
      %v1143 = vld [vmem:[%s1 + $0x34] sm:$0xf]
      %v1144 = vld [vmem:[%s1 + $0x38] sm:$0xf]
      %v1145 = vld [vmem:[%s1 + $0x3c] sm:$0xf]
      %v1146 = vld [vmem:[%s1 + $0x40] sm:$0xf]
      %v1147 = vld [vmem:[%s1 + $0x44] sm:$0xf]
      %v1148 = vld [vmem:[%s1 + $0x48] sm:$0xf]
      %v1149 = vld [vmem:[%s1 + $0x4c] sm:$0xf]
      %v1150 = vld [vmem:[%s1 + $0x50] sm:$0xf]
      %v1151 = vld [vmem:[%s1 + $0x54] sm:$0xf]
      %v1152 = vld [vmem:[%s1 + $0x58] sm:$0xf]
      %v1153 = vld [vmem:[%s1 + $0x5c] sm:$0xf]
      %v1154 = vld [vmem:[%s1 + $0x60] sm:$0xf]
      %v1155 = vld [vmem:[%s1 + $0x64] sm:$0xf]
      %v1156 = vld [vmem:[%s1 + $0x68] sm:$0xf]
      %v1157 = vld [vmem:[%s1 + $0x6c] sm:$0xf]
      %v1158 = vld [vmem:[%s1 + $0x70] sm:$0xf]
      %v1159 = vld [vmem:[%s1 + $0x74] sm:$0xf]
      %v1160 = vld [vmem:[%s1 + $0x78] sm:$0xf]
      %v1161 = vld [vmem:[%s1 + $0x7c] sm:$0xf]
      %v1162 = vld [vmem:[%s1 + $0x80] sm:$0xf]
      %v1163 = vld [vmem:[%s1 + $0x84] sm:$0xf]
      %v1164 = vld [vmem:[%s1 + $0x88] sm:$0xf]
      %v1165 = vld [vmem:[%s1 + $0x8c] sm:$0xf]
      %v1166 = vld [vmem:[%s1 + $0x90] sm:$0xf]
      %v1167 = vld [vmem:[%s1 + $0x94] sm:$0xf]
      %v1168 = vld [vmem:[%s1 + $0x98] sm:$0xf]
      %v1169 = vld [vmem:[%s1 + $0x9c] sm:$0xf]
      %v1170 = vld [vmem:[%s1 + $0xa0] sm:$0xf]
      %v1171 = vld [vmem:[%s1 + $0xa4] sm:$0xf]
      %v1172 = vld [vmem:[%s1 + $0xa8] sm:$0xf]
      %v1173 = vld [vmem:[%s1 + $0xac] sm:$0xf]
      %v1174 = vld [vmem:[%s1 + $0xb0] sm:$0xf]
      %v1175 = vld [vmem:[%s1 + $0xb4] sm:$0xf]
      %v1176 = vld [vmem:[%s1 + $0xb8] sm:$0xf]
      %v1177 = vld [vmem:[%s1 + $0xbc] sm:$0xf]
      %v1178 = vld [vmem:[%s1 + $0xc0] sm:$0xf]
      %v1179 = vld [vmem:[%s1 + $0xc4] sm:$0xf]
      %v1180 = vld [vmem:[%s1 + $0xc8] sm:$0xf]
      %v1181 = vld [vmem:[%s1 + $0xcc] sm:$0xf]
      %v1182 = vld [vmem:[%s1 + $0xd0] sm:$0xf]
      %v1183 = vld [vmem:[%s1 + $0xd4] sm:$0xf]
      %v1184 = vld [vmem:[%s1 + $0xd8] sm:$0xf]
      %v1185 = vld [vmem:[%s1 + $0xdc] sm:$0xf]
      %v1186 = vld [vmem:[%s1 + $0xe0] sm:$0xf]
      %v1187 = vld [vmem:[%s1 + $0xe4] sm:$0xf]
      %v1188 = vld [vmem:[%s1 + $0xe8] sm:$0xf]
      %v1189 = vld [vmem:[%s1 + $0xec] sm:$0xf]
      %v1190 = vld [vmem:[%s1 + $0xf0] sm:$0xf]
      %v1191 = vld [vmem:[%s1 + $0xf4] sm:$0xf]
      %v1192 = vld [vmem:[%s1 + $0xf8] sm:$0xf]
      %v1193 = vld [vmem:[%s1 + $0xfc] sm:$0xf]
      %v1194 = vld [vmem:[%s1 + $0x100] sm:$0xf]
      %v1195 = vld [vmem:[%s1 + $0x104] sm:$0xf]
      %v1196 = vld [vmem:[%s1 + $0x108] sm:$0xf]
      %v1197 = vld [vmem:[%s1 + $0x10c] sm:$0xf]
      %v1198 = vld [vmem:[%s1 + $0x110] sm:$0xf]
      %v1199 = vld [vmem:[%s1 + $0x114] sm:$0xf]
      %v1200 = vld [vmem:[%s1 + $0x118] sm:$0xf]
      %v1201 = vld [vmem:[%s1 + $0x11c] sm:$0xf]
      %v1202 = vld [vmem:[%s1 + $0x120] sm:$0xf]
      %v1203 = vld [vmem:[%s1 + $0x124] sm:$0xf]
      %v1204 = vld [vmem:[%s1 + $0x128] sm:$0xf]
      %v1205 = vld [vmem:[%s1 + $0x12c] sm:$0xf]
      %v1206 = vld [vmem:[%s1 + $0x130] sm:$0xf]
      %v1207 = vld [vmem:[%s1 + $0x134] sm:$0xf]
      %v1208 = vld [vmem:[%s1 + $0x138] sm:$0xf]
      %v1209 = vld [vmem:[%s1 + $0x13c] sm:$0xf]
      %v1210 = vld [vmem:[%s1 + $0x140] sm:$0xf]
      %v1211 = vld [vmem:[%s1 + $0x144] sm:$0xf]
      %v1212 = vld [vmem:[%s1 + $0x148] sm:$0xf]
      %v1213 = vld [vmem:[%s1 + $0x14c] sm:$0xf]
      %v1214 = vld [vmem:[%s1 + $0x150] sm:$0xf]
      %v1215 = vld [vmem:[%s1 + $0x154] sm:$0xf]
      %v1216 = vld [vmem:[%s1 + $0x158] sm:$0xf]
      %v1217 = vld [vmem:[%s1 + $0x15c] sm:$0xf]
      %v1218 = vld [vmem:[%s1 + $0x160] sm:$0xf]
      %v1219 = vld [vmem:[%s1 + $0x164] sm:$0xf]
      %v1220 = vld [vmem:[%s1 + $0x168] sm:$0xf]
      %v1221 = vld [vmem:[%s1 + $0x16c] sm:$0xf]
      %v1222 = vld [vmem:[%s1 + $0x170] sm:$0xf]
      %v1223 = vld [vmem:[%s1 + $0x174] sm:$0xf]
      %v1224 = vld [vmem:[%s1 + $0x178] sm:$0xf]
      %v1225 = vld [vmem:[%s1 + $0x17c] sm:$0xf]
      %v1226 = vld [vmem:[%s1 + $0x180] sm:$0xf]
      %v1227 = vld [vmem:[%s1 + $0x184] sm:$0xf]
      %v1228 = vld [vmem:[%s1 + $0x188] sm:$0xf]
      %v1229 = vld [vmem:[%s1 + $0x18c] sm:$0xf]
      %v1230 = vld [vmem:[%s1 + $0x190] sm:$0xf]
      %v1231 = vld [vmem:[%s1 + $0x194] sm:$0xf]
      %v1232 = vld [vmem:[%s1 + $0x198] sm:$0xf]
      %v1233 = vld [vmem:[%s1 + $0x19c] sm:$0xf]
      %v1234 = vld [vmem:[%s1 + $0x1a0] sm:$0xf]
      %v1235 = vld [vmem:[%s1 + $0x1a4] sm:$0xf]
      %v1236 = vld [vmem:[%s1 + $0x1a8] sm:$0xf]
      %v1237 = vld [vmem:[%s1 + $0x1ac] sm:$0xf]
      %v1238 = vld [vmem:[%s1 + $0x1b0] sm:$0xf]
      %v1239 = vld [vmem:[%s1 + $0x1b4] sm:$0xf]
      %v1240 = vld [vmem:[%s1 + $0x1b8] sm:$0xf]
      %v1241 = vld [vmem:[%s1 + $0x1bc] sm:$0xf]
      %v1242 = vld [vmem:[%s1 + $0x1c0] sm:$0xf]
      %v1243 = vld [vmem:[%s1 + $0x1c4] sm:$0xf]
      %v1244 = vld [vmem:[%s1 + $0x1c8] sm:$0xf]
      %v1245 = vld [vmem:[%s1 + $0x1cc] sm:$0xf]
      %v1246 = vld [vmem:[%s1 + $0x1d0] sm:$0xf]
      %v1247 = vld [vmem:[%s1 + $0x1d4] sm:$0xf]
      %v1248 = vld [vmem:[%s1 + $0x1d8] sm:$0xf]
      %v1249 = vld [vmem:[%s1 + $0x1dc] sm:$0xf]
      %v1250 = vld [vmem:[%s1 + $0x1e0] sm:$0xf]
      %v1251 = vld [vmem:[%s1 + $0x1e4] sm:$0xf]
      %v1252 = vld [vmem:[%s1 + $0x1e8] sm:$0xf]
      %v1253 = vld [vmem:[%s1 + $0x1ec] sm:$0xf]
      %v1254 = vld [vmem:[%s1 + $0x1f0] sm:$0xf]
      %v1255 = vld [vmem:[%s1 + $0x1f4] sm:$0xf]
      %v1256 = vld [vmem:[%s1 + $0x1f8] sm:$0xf]
      %v1257 = vld [vmem:[%s1 + $0x1fc] sm:$0xf]
      %v1258 = vld [vmem:[%s1 + $0x200] sm:$0xf]
      %v1259 = vld [vmem:[%s1 + $0x204] sm:$0xf]
      %v1260 = vld [vmem:[%s1 + $0x208] sm:$0xf]
      %v1261 = vld [vmem:[%s1 + $0x20c] sm:$0xf]
      %v1262 = vld [vmem:[%s1 + $0x210] sm:$0xf]
      %v1263 = vld [vmem:[%s1 + $0x214] sm:$0xf]
      %v1264 = vld [vmem:[%s1 + $0x218] sm:$0xf]
      %v1265 = vld [vmem:[%s1 + $0x21c] sm:$0xf]
      %v1266 = vld [vmem:[%s1 + $0x220] sm:$0xf]
      %v1267 = vld [vmem:[%s1 + $0x224] sm:$0xf]
      %v1268 = vld [vmem:[%s1 + $0x228] sm:$0xf]
      %v1269 = vld [vmem:[%s1 + $0x22c] sm:$0xf]
      %v1270 = vld [vmem:[%s1 + $0x230] sm:$0xf]
      %v1271 = vld [vmem:[%s1 + $0x234] sm:$0xf]
      %v1272 = vld [vmem:[%s1 + $0x238] sm:$0xf]
      %v1273 = vld [vmem:[%s1 + $0x23c] sm:$0xf]
      %v1418 = vunpack.c.l.b16 %v1130
      %v1419 = vunpack.c.l.b16 %v1131
      %v1420 = vunpack.c.l.b16 %v1132
      %v1421 = vunpack.c.l.b16 %v1133
      %v1422 = vunpack.c.l.b16 %v1134
      %v1423 = vunpack.c.l.b16 %v1135
      %v1424 = vunpack.c.l.b16 %v1136
      %v1425 = vunpack.c.l.b16 %v1137
      %v1426 = vunpack.c.l.b16 %v1138
      %v1427 = vunpack.c.l.b16 %v1139
      %v1428 = vunpack.c.l.b16 %v1140
      %v1429 = vunpack.c.l.b16 %v1141
      %v1430 = vunpack.c.l.b16 %v1142
      %v1431 = vunpack.c.l.b16 %v1143
      %v1432 = vunpack.c.l.b16 %v1144
      %v1433 = vunpack.c.l.b16 %v1145
      %v1434 = vunpack.c.l.b16 %v1146
      %v1435 = vunpack.c.l.b16 %v1147
      %v1436 = vunpack.c.l.b16 %v1148
      %v1437 = vunpack.c.l.b16 %v1149
      %v1438 = vunpack.c.l.b16 %v1150
      %v1439 = vunpack.c.l.b16 %v1151
      %v1440 = vunpack.c.l.b16 %v1152
      %v1441 = vunpack.c.l.b16 %v1153
      %v1442 = vunpack.c.l.b16 %v1154
      %v1443 = vunpack.c.l.b16 %v1155
      %v1444 = vunpack.c.l.b16 %v1156
      %v1445 = vunpack.c.l.b16 %v1157
      %v1446 = vunpack.c.l.b16 %v1158
      %v1447 = vunpack.c.l.b16 %v1159
      %v1448 = vunpack.c.l.b16 %v1160
      %v1449 = vunpack.c.l.b16 %v1161
      %v1450 = vunpack.c.l.b16 %v1162
      %v1451 = vunpack.c.l.b16 %v1163
      %v1452 = vunpack.c.l.b16 %v1164
      %v1453 = vunpack.c.l.b16 %v1165
      %v1454 = vunpack.c.l.b16 %v1166
      %v1455 = vunpack.c.l.b16 %v1167
      %v1456 = vunpack.c.l.b16 %v1168
      %v1457 = vunpack.c.l.b16 %v1169
      %v1458 = vunpack.c.l.b16 %v1170
      %v1459 = vunpack.c.l.b16 %v1171
      %v1460 = vunpack.c.l.b16 %v1172
      %v1461 = vunpack.c.l.b16 %v1173
      %v1462 = vunpack.c.l.b16 %v1174
      %v1463 = vunpack.c.l.b16 %v1175
      %v1464 = vunpack.c.l.b16 %v1176
      %v1465 = vunpack.c.l.b16 %v1177
      %v1466 = vunpack.c.l.b16 %v1178
      %v1467 = vunpack.c.l.b16 %v1179
      %v1468 = vunpack.c.l.b16 %v1180
      %v1469 = vunpack.c.l.b16 %v1181
      %v1470 = vunpack.c.l.b16 %v1182
      %v1471 = vunpack.c.l.b16 %v1183
      %v1472 = vunpack.c.l.b16 %v1184
      %v1473 = vunpack.c.l.b16 %v1185
      %v1474 = vunpack.c.l.b16 %v1186
      %v1475 = vunpack.c.l.b16 %v1187
      %v1476 = vunpack.c.l.b16 %v1188
      %v1477 = vunpack.c.l.b16 %v1189
      %v1478 = vunpack.c.l.b16 %v1190
      %v1479 = vunpack.c.l.b16 %v1191
      %v1480 = vunpack.c.l.b16 %v1192
      %v1481 = vunpack.c.l.b16 %v1193
      %v1482 = vunpack.c.l.b16 %v1194
      %v1483 = vunpack.c.l.b16 %v1195
      %v1484 = vunpack.c.l.b16 %v1196
      %v1485 = vunpack.c.l.b16 %v1197
      %v1486 = vunpack.c.l.b16 %v1198
      %v1487 = vunpack.c.l.b16 %v1199
      %v1488 = vunpack.c.l.b16 %v1200
      %v1489 = vunpack.c.l.b16 %v1201
      %v1490 = vunpack.c.l.b16 %v1202
      %v1491 = vunpack.c.l.b16 %v1203
      %v1492 = vunpack.c.l.b16 %v1204
      %v1493 = vunpack.c.l.b16 %v1205
      %v1494 = vunpack.c.l.b16 %v1206
      %v1495 = vunpack.c.l.b16 %v1207
      %v1496 = vunpack.c.l.b16 %v1208
      %v1497 = vunpack.c.l.b16 %v1209
      %v1498 = vunpack.c.l.b16 %v1210
      %v1499 = vunpack.c.l.b16 %v1211
      %v1500 = vunpack.c.l.b16 %v1212
      %v1501 = vunpack.c.l.b16 %v1213
      %v1502 = vunpack.c.l.b16 %v1214
      %v1503 = vunpack.c.l.b16 %v1215
      %v1504 = vunpack.c.l.b16 %v1216
      %v1505 = vunpack.c.l.b16 %v1217
      %v1506 = vunpack.c.l.b16 %v1218
      %v1507 = vunpack.c.l.b16 %v1219
      %v1508 = vunpack.c.l.b16 %v1220
      %v1509 = vunpack.c.l.b16 %v1221
      %v1510 = vunpack.c.l.b16 %v1222
      %v1511 = vunpack.c.l.b16 %v1223
      %v1512 = vunpack.c.l.b16 %v1224
      %v1513 = vunpack.c.l.b16 %v1225
      %v1514 = vunpack.c.l.b16 %v1226
      %v1515 = vunpack.c.l.b16 %v1227
      %v1516 = vunpack.c.l.b16 %v1228
      %v1517 = vunpack.c.l.b16 %v1229
      %v1518 = vunpack.c.l.b16 %v1230
      %v1519 = vunpack.c.l.b16 %v1231
      %v1520 = vunpack.c.l.b16 %v1232
      %v1521 = vunpack.c.l.b16 %v1233
      %v1522 = vunpack.c.l.b16 %v1234
      %v1523 = vunpack.c.l.b16 %v1235
      %v1524 = vunpack.c.l.b16 %v1236
      %v1525 = vunpack.c.l.b16 %v1237
      %v1526 = vunpack.c.l.b16 %v1238
      %v1527 = vunpack.c.l.b16 %v1239
      %v1528 = vunpack.c.l.b16 %v1240
      %v1529 = vunpack.c.l.b16 %v1241
      %v1530 = vunpack.c.l.b16 %v1242
      %v1531 = vunpack.c.l.b16 %v1243
      %v1532 = vunpack.c.l.b16 %v1244
      %v1533 = vunpack.c.l.b16 %v1245
      %v1534 = vunpack.c.l.b16 %v1246
      %v1535 = vunpack.c.l.b16 %v1247
      %v1536 = vunpack.c.l.b16 %v1248
      %v1537 = vunpack.c.l.b16 %v1249
      %v1538 = vunpack.c.l.b16 %v1250
      %v1539 = vunpack.c.l.b16 %v1251
      %v1540 = vunpack.c.l.b16 %v1252
      %v1541 = vunpack.c.l.b16 %v1253
      %v1542 = vunpack.c.l.b16 %v1254
      %v1543 = vunpack.c.l.b16 %v1255
      %v1544 = vunpack.c.l.b16 %v1256
      %v1545 = vunpack.c.l.b16 %v1257
      %v1546 = vunpack.c.l.b16 %v1258
      %v1547 = vunpack.c.l.b16 %v1259
      %v1548 = vunpack.c.l.b16 %v1260
      %v1549 = vunpack.c.l.b16 %v1261
      %v1550 = vunpack.c.l.b16 %v1262
      %v1551 = vunpack.c.l.b16 %v1263
      %v1552 = vunpack.c.l.b16 %v1264
      %v1553 = vunpack.c.l.b16 %v1265
      %v1554 = vunpack.c.l.b16 %v1266
      %v1555 = vunpack.c.l.b16 %v1267
      %v1556 = vunpack.c.l.b16 %v1268
      %v1557 = vunpack.c.l.b16 %v1269
      %v1558 = vunpack.c.l.b16 %v1270
      %v1559 = vunpack.c.l.b16 %v1271
      %v1560 = vunpack.c.l.b16 %v1272
      %v1561 = vunpack.c.l.b16 %v1273
      %v1562 = vpack.c.b16 %v1419, %v1418
      %v1563 = vpack.c.b16 %v1421, %v1420
      %v1564 = vpack.c.b16 %v1423, %v1422
      %v1565 = vpack.c.b16 %v1425, %v1424
      %v1566 = vpack.c.b16 %v1427, %v1426
      %v1567 = vpack.c.b16 %v1429, %v1428
      %v1568 = vpack.c.b16 %v1431, %v1430
      %v1569 = vpack.c.b16 %v1433, %v1432
      %v1570 = vpack.c.b16 %v1435, %v1434
      %v1571 = vpack.c.b16 %v1437, %v1436
      %v1572 = vpack.c.b16 %v1439, %v1438
      %v1573 = vpack.c.b16 %v1441, %v1440
      %v1574 = vpack.c.b16 %v1443, %v1442
      %v1575 = vpack.c.b16 %v1445, %v1444
      %v1576 = vpack.c.b16 %v1447, %v1446
      %v1577 = vpack.c.b16 %v1449, %v1448
      %v1578 = vpack.c.b16 %v1451, %v1450
      %v1579 = vpack.c.b16 %v1453, %v1452
      %v1580 = vpack.c.b16 %v1455, %v1454
      %v1581 = vpack.c.b16 %v1457, %v1456
      %v1582 = vpack.c.b16 %v1459, %v1458
      %v1583 = vpack.c.b16 %v1461, %v1460
      %v1584 = vpack.c.b16 %v1463, %v1462
      %v1585 = vpack.c.b16 %v1465, %v1464
      %v1586 = vpack.c.b16 %v1467, %v1466
      %v1587 = vpack.c.b16 %v1469, %v1468
      %v1588 = vpack.c.b16 %v1471, %v1470
      %v1589 = vpack.c.b16 %v1473, %v1472
      %v1590 = vpack.c.b16 %v1475, %v1474
      %v1591 = vpack.c.b16 %v1477, %v1476
      %v1592 = vpack.c.b16 %v1479, %v1478
      %v1593 = vpack.c.b16 %v1481, %v1480
      %v1594 = vpack.c.b16 %v1483, %v1482
      %v1595 = vpack.c.b16 %v1485, %v1484
      %v1596 = vpack.c.b16 %v1487, %v1486
      %v1597 = vpack.c.b16 %v1489, %v1488
      %v1598 = vpack.c.b16 %v1491, %v1490
      %v1599 = vpack.c.b16 %v1493, %v1492
      %v1600 = vpack.c.b16 %v1495, %v1494
      %v1601 = vpack.c.b16 %v1497, %v1496
      %v1602 = vpack.c.b16 %v1499, %v1498
      %v1603 = vpack.c.b16 %v1501, %v1500
      %v1604 = vpack.c.b16 %v1503, %v1502
      %v1605 = vpack.c.b16 %v1505, %v1504
      %v1606 = vpack.c.b16 %v1507, %v1506
      %v1607 = vpack.c.b16 %v1509, %v1508
      %v1608 = vpack.c.b16 %v1511, %v1510
      %v1609 = vpack.c.b16 %v1513, %v1512
      %v1610 = vpack.c.b16 %v1515, %v1514
      %v1611 = vpack.c.b16 %v1517, %v1516
      %v1612 = vpack.c.b16 %v1519, %v1518
      %v1613 = vpack.c.b16 %v1521, %v1520
      %v1614 = vpack.c.b16 %v1523, %v1522
      %v1615 = vpack.c.b16 %v1525, %v1524
      %v1616 = vpack.c.b16 %v1527, %v1526
      %v1617 = vpack.c.b16 %v1529, %v1528
      %v1618 = vpack.c.b16 %v1531, %v1530
      %v1619 = vpack.c.b16 %v1533, %v1532
      %v1620 = vpack.c.b16 %v1535, %v1534
      %v1621 = vpack.c.b16 %v1537, %v1536
      %v1622 = vpack.c.b16 %v1539, %v1538
      %v1623 = vpack.c.b16 %v1541, %v1540
      %v1624 = vpack.c.b16 %v1543, %v1542
      %v1625 = vpack.c.b16 %v1545, %v1544
      %v1626 = vpack.c.b16 %v1547, %v1546
      %v1627 = vpack.c.b16 %v1549, %v1548
      %v1628 = vpack.c.b16 %v1551, %v1550
      %v1629 = vpack.c.b16 %v1553, %v1552
      %v1630 = vpack.c.b16 %v1555, %v1554
      %v1631 = vpack.c.b16 %v1557, %v1556
      %v1632 = vpack.c.b16 %v1559, %v1558
      %v1633 = vpack.c.b16 %v1561, %v1560
      %1706 = vmatprep.subr.bf16.mxu0 0
      %1707 = vmatpush1.bf16.msra.mxu0 %v1562
      %1708 = vmatprep.subr.bf16.mxu0 0
      %1709 = vmatpush1.bf16.msra.mxu0 %v1563
      %1710 = vmatprep.subr.bf16.mxu0 0
      %1711 = vmatpush1.bf16.msra.mxu0 %v1564
      %1712 = vmatprep.subr.bf16.mxu0 0
      %1713 = vmatpush1.bf16.msra.mxu0 %v1565
      %1714 = vmatprep.subr.bf16.mxu0 0
      %1715 = vmatpush1.bf16.msra.mxu0 %v1566
      %1716 = vmatprep.subr.bf16.mxu0 0
      %1717 = vmatpush1.bf16.msra.mxu0 %v1567
      %1718 = vmatprep.subr.bf16.mxu0 0
      %1719 = vmatpush1.bf16.msra.mxu0 %v1568
      %1720 = vmatprep.subr.bf16.mxu0 0
      %1721 = vmatpush1.bf16.msra.mxu0 %v1569
      %1722 = vmatprep.subr.bf16.mxu0 0
      %1723 = vmatpush1.bf16.msra.mxu0 %v1570
      %1724 = vmatprep.subr.bf16.mxu0 0
      %1725 = vmatpush1.bf16.msra.mxu0 %v1571
      %1726 = vmatprep.subr.bf16.mxu0 0
      %1727 = vmatpush1.bf16.msra.mxu0 %v1572
      %1728 = vmatprep.subr.bf16.mxu0 0
      %1729 = vmatpush1.bf16.msra.mxu0 %v1573
      %1730 = vmatprep.subr.bf16.mxu0 0
      %1731 = vmatpush1.bf16.msra.mxu0 %v1574
      %1732 = vmatprep.subr.bf16.mxu0 0
      %1733 = vmatpush1.bf16.msra.mxu0 %v1575
      %1734 = vmatprep.subr.bf16.mxu0 0
      %1735 = vmatpush1.bf16.msra.mxu0 %v1576
      %1736 = vmatprep.subr.bf16.mxu0 0
      %1737 = vmatpush1.bf16.msra.mxu0 %v1577
      %1738 = vmatprep.mubr.bf16.mxu0 %v906
      %1739 = vmatmul.mubr.bf16.gmra.mrb[0].mxu0 %v905
      %v1740 = vpop.f32.mrb[0].mxu0
      %v1741 = vadd.f32 0.0, %v1740
      %v1742 = vpop.f32.mrb[0].mxu0
      %v1743 = vpop.f32.mrb[0].mxu0
      %v1744 = vadd.f32 0.0, %v1743
      %v1745 = vpop.f32.mrb[0].mxu0
      %1746 = vmatprep.mubr.bf16.mxu0 %v915
      %1747 = vmatmul.mubr.bf16.gmra.mrb[0].mxu0 %v914
      %v1748 = vpop.f32.mrb[0].mxu0
      %v1749 = vadd.f32 0.0, %v1748
      %v1750 = vpop.f32.mrb[0].mxu0
      %v1751 = vpop.f32.mrb[0].mxu0
      %v1752 = vadd.f32 0.0, %v1751
      %v1753 = vpop.f32.mrb[0].mxu0
      %1754 = vmatprep.mubr.bf16.mxu0 %v924
      %1755 = vmatmul.mubr.bf16.gmra.mrb[0].mxu0 %v923
      %v1756 = vpop.f32.mrb[0].mxu0
      %v1757 = vadd.f32 0.0, %v1756
      %v1758 = vpop.f32.mrb[0].mxu0
      %v1759 = vpop.f32.mrb[0].mxu0
      %v1760 = vadd.f32 0.0, %v1759
      %v1761 = vpop.f32.mrb[0].mxu0
      %1762 = vmatprep.mubr.bf16.mxu0 %v912
      %1763 = vmatmul.mubr.bf16.gmra.mrb[0].mxu0 %v911
      %v1764 = vpop.f32.mrb[0].mxu0
      %v1765 = vadd.f32 0.0, %v1764
      %v1766 = vpop.f32.mrb[0].mxu0
      %v1767 = vpop.f32.mrb[0].mxu0
      %v1768 = vadd.f32 0.0, %v1767
      %v1769 = vpop.f32.mrb[0].mxu0
      %1770 = vmatprep.mubr.bf16.mxu0 %v921
      %1771 = vmatmul.mubr.bf16.gmra.mrb[0].mxu0 %v920
      %v1772 = vpop.f32.mrb[0].mxu0
      %v1773 = vadd.f32 0.0, %v1772
      %v1774 = vpop.f32.mrb[0].mxu0
      %v1775 = vpop.f32.mrb[0].mxu0
      %v1776 = vadd.f32 0.0, %v1775
      %v1777 = vpop.f32.mrb[0].mxu0
      %1778 = vmatprep.mubr.bf16.mxu0 %v930
      %1779 = vmatmul.mubr.bf16.gmra.mrb[0].mxu0 %v929
      %v1780 = vpop.f32.mrb[0].mxu0
      %v1781 = vadd.f32 0.0, %v1780
      %v1782 = vpop.f32.mrb[0].mxu0
      %v1783 = vpop.f32.mrb[0].mxu0
      %v1784 = vadd.f32 0.0, %v1783
      %v1785 = vpop.f32.mrb[0].mxu0
      %1786 = vmatprep.mubr.bf16.mxu0 %v936
      %1787 = vmatmul.mubr.bf16.gmra.mrb[0].mxu0 %v935
      %v1788 = vpop.f32.mrb[0].mxu0
      %v1789 = vadd.f32 0.0, %v1788
      %v1790 = vpop.f32.mrb[0].mxu0
      %v1791 = vpop.f32.mrb[0].mxu0
      %v1792 = vadd.f32 0.0, %v1791
      %v1793 = vpop.f32.mrb[0].mxu0
      %1794 = vmatprep.mubr.bf16.mxu0 %v942
      %1795 = vmatmul.mubr.bf16.gmra.mrb[0].mxu0 %v941
      %v1796 = vpop.f32.mrb[0].mxu0
      %v1797 = vadd.f32 0.0, %v1796
      %v1798 = vpop.f32.mrb[0].mxu0
      %v1799 = vpop.f32.mrb[0].mxu0
      %v1800 = vadd.f32 0.0, %v1799
      %v1801 = vpop.f32.mrb[0].mxu0
      %1802 = vmatprep.mubr.bf16.mxu0 %v948
      %1803 = vmatmul.mubr.bf16.gmra.mrb[0].mxu0 %v947
      %v1804 = vpop.f32.mrb[0].mxu0
      %v1805 = vadd.f32 0.0, %v1804
      %v1806 = vpop.f32.mrb[0].mxu0
      %v1807 = vpop.f32.mrb[0].mxu0
      %v1808 = vadd.f32 0.0, %v1807
      %v1809 = vpop.f32.mrb[0].mxu0
      %1810 = vmatprep.mubr.bf16.mxu0 %v954
      %1811 = vmatmul.mubr.bf16.gmra.mrb[0].mxu0 %v953
      %v1812 = vpop.f32.mrb[0].mxu0
      %v1813 = vadd.f32 0.0, %v1812
      %v1814 = vpop.f32.mrb[0].mxu0
      %v1815 = vpop.f32.mrb[0].mxu0
      %v1816 = vadd.f32 0.0, %v1815
      %v1817 = vpop.f32.mrb[0].mxu0
      %1818 = vmatprep.mubr.bf16.mxu0 %v960
      %1819 = vmatmul.mubr.bf16.gmra.mrb[0].mxu0 %v959
      %v1820 = vpop.f32.mrb[0].mxu0
      %v1821 = vadd.f32 0.0, %v1820
      %v1822 = vpop.f32.mrb[0].mxu0
      %v1823 = vpop.f32.mrb[0].mxu0
      %v1824 = vadd.f32 0.0, %v1823
      %v1825 = vpop.f32.mrb[0].mxu0
      %1826 = vmatprep.mubr.bf16.mxu0 %v966
      %1827 = vmatmul.mubr.bf16.gmra.mrb[0].mxu0 %v965
      %v1828 = vpop.f32.mrb[0].mxu0
      %v1829 = vadd.f32 0.0, %v1828
      %v1830 = vpop.f32.mrb[0].mxu0
      %v1831 = vpop.f32.mrb[0].mxu0
      %v1832 = vadd.f32 0.0, %v1831
      %v1833 = vpop.f32.mrb[0].mxu0
      %1834 = vmatprep.mubr.bf16.mxu0 %v972
      %1835 = vmatmul.mubr.bf16.gmra.mrb[0].mxu0 %v971
      %v1836 = vpop.f32.mrb[0].mxu0
      %v1837 = vadd.f32 0.0, %v1836
      %v1838 = vpop.f32.mrb[0].mxu0
      %v1839 = vpop.f32.mrb[0].mxu0
      %v1840 = vadd.f32 0.0, %v1839
      %v1841 = vpop.f32.mrb[0].mxu0
      %1842 = vmatprep.mubr.bf16.mxu0 %v978
      %1843 = vmatmul.mubr.bf16.gmra.mrb[0].mxu0 %v977
      %v1844 = vpop.f32.mrb[0].mxu0
      %v1845 = vadd.f32 0.0, %v1844
      %v1846 = vpop.f32.mrb[0].mxu0
      %v1847 = vpop.f32.mrb[0].mxu0
      %v1848 = vadd.f32 0.0, %v1847
      %v1849 = vpop.f32.mrb[0].mxu0
      %1850 = vmatprep.mubr.bf16.mxu0 %v984
      %1851 = vmatmul.mubr.bf16.gmra.mrb[0].mxu0 %v983
      %v1852 = vpop.f32.mrb[0].mxu0
      %v1853 = vadd.f32 0.0, %v1852
      %v1854 = vpop.f32.mrb[0].mxu0
      %v1855 = vpop.f32.mrb[0].mxu0
      %v1856 = vadd.f32 0.0, %v1855
      %v1857 = vpop.f32.mrb[0].mxu0
      %1858 = vmatprep.mubr.bf16.mxu0 %v990
      %1859 = vmatmul.mubr.bf16.gmra.mrb[0].mxu0 %v989
      %v1860 = vpop.f32.mrb[0].mxu0
      %v1861 = vadd.f32 0.0, %v1860
      %v1862 = vpop.f32.mrb[0].mxu0
      %v1863 = vpop.f32.mrb[0].mxu0
      %v1864 = vadd.f32 0.0, %v1863
      %v1865 = vpop.f32.mrb[0].mxu0
      %1866 = vmatprep.mubr.bf16.mxu0 %v996
      %1867 = vmatmul.mubr.bf16.gmra.mrb[0].mxu0 %v995
      %v1868 = vpop.f32.mrb[0].mxu0
      %v1869 = vadd.f32 0.0, %v1868
      %v1870 = vpop.f32.mrb[0].mxu0
      %v1871 = vpop.f32.mrb[0].mxu0
      %v1872 = vadd.f32 0.0, %v1871
      %v1873 = vpop.f32.mrb[0].mxu0
      %1874 = vmatprep.mubr.bf16.mxu0 %v1002
      %1875 = vmatmul.mubr.bf16.gmra.mrb[0].mxu0 %v1001
      %v1876 = vpop.f32.mrb[0].mxu0
      %v1877 = vadd.f32 0.0, %v1876
      %v1878 = vpop.f32.mrb[0].mxu0
      %v1879 = vpop.f32.mrb[0].mxu0
      %v1880 = vadd.f32 0.0, %v1879
      %v1881 = vpop.f32.mrb[0].mxu0
      %1882 = vmatprep.mubr.bf16.mxu0 %v1008
      %1883 = vmatmul.mubr.bf16.gmra.mrb[0].mxu0 %v1007
      %v1884 = vpop.f32.mrb[0].mxu0
      %v1885 = vadd.f32 0.0, %v1884
      %v1886 = vpop.f32.mrb[0].mxu0
      %v1887 = vpop.f32.mrb[0].mxu0
      %v1888 = vadd.f32 0.0, %v1887
      %v1889 = vpop.f32.mrb[0].mxu0
      %1890 = vmatprep.mubr.bf16.mxu0 %v1014
      %1891 = vmatmul.mubr.bf16.gmra.mrb[0].mxu0 %v1013
      %v1892 = vpop.f32.mrb[0].mxu0
      %v1893 = vadd.f32 0.0, %v1892
      %v1894 = vpop.f32.mrb[0].mxu0
      %v1895 = vpop.f32.mrb[0].mxu0
      %v1896 = vadd.f32 0.0, %v1895
      %v1897 = vpop.f32.mrb[0].mxu0
      %1898 = vmatprep.mubr.bf16.mxu0 %v1020
      %1899 = vmatmul.mubr.bf16.gmra.mrb[0].mxu0 %v1019
      %v1900 = vpop.f32.mrb[0].mxu0
      %v1901 = vadd.f32 0.0, %v1900
      %v1902 = vpop.f32.mrb[0].mxu0
      %v1903 = vpop.f32.mrb[0].mxu0
      %v1904 = vadd.f32 0.0, %v1903
      %v1905 = vpop.f32.mrb[0].mxu0
      %1906 = vmatprep.mubr.bf16.mxu0 %v1026
      %1907 = vmatmul.mubr.bf16.gmra.mrb[0].mxu0 %v1025
      %v1908 = vpop.f32.mrb[0].mxu0
      %v1909 = vadd.f32 0.0, %v1908
      %v1910 = vpop.f32.mrb[0].mxu0
      %v1911 = vpop.f32.mrb[0].mxu0
      %v1912 = vadd.f32 0.0, %v1911
      %v1913 = vpop.f32.mrb[0].mxu0
      %1914 = vmatprep.mubr.bf16.mxu0 %v1032
      %1915 = vmatmul.mubr.bf16.gmra.mrb[0].mxu0 %v1031
      %v1916 = vpop.f32.mrb[0].mxu0
      %v1917 = vadd.f32 0.0, %v1916
      %v1918 = vpop.f32.mrb[0].mxu0
      %v1919 = vpop.f32.mrb[0].mxu0
      %v1920 = vadd.f32 0.0, %v1919
      %v1921 = vpop.f32.mrb[0].mxu0
      %1922 = vmatprep.mubr.bf16.mxu0 %v1038
      %1923 = vmatmul.mubr.bf16.gmra.mrb[0].mxu0 %v1037
      %v1924 = vpop.f32.mrb[0].mxu0
      %v1925 = vadd.f32 0.0, %v1924
      %v1926 = vpop.f32.mrb[0].mxu0
      %v1927 = vpop.f32.mrb[0].mxu0
      %v1928 = vadd.f32 0.0, %v1927
      %v1929 = vpop.f32.mrb[0].mxu0
      %1930 = vmatprep.mubr.bf16.mxu0 %v1044
      %1931 = vmatmul.mubr.bf16.gmra.mrb[0].mxu0 %v1043
      %v1932 = vpop.f32.mrb[0].mxu0
      %v1933 = vadd.f32 0.0, %v1932
      %v1934 = vpop.f32.mrb[0].mxu0
      %v1935 = vpop.f32.mrb[0].mxu0
      %v1936 = vadd.f32 0.0, %v1935
      %v1937 = vpop.f32.mrb[0].mxu0
      %1938 = vmatprep.mubr.bf16.mxu0 %v1050
      %1939 = vmatmul.mubr.bf16.gmra.mrb[0].mxu0 %v1049
      %v1940 = vpop.f32.mrb[0].mxu0
      %v1941 = vadd.f32 0.0, %v1940
      %v1942 = vpop.f32.mrb[0].mxu0
      %v1943 = vpop.f32.mrb[0].mxu0
      %v1944 = vadd.f32 0.0, %v1943
      %v1945 = vpop.f32.mrb[0].mxu0
      %1946 = vmatprep.mubr.bf16.mxu0 %v1056
      %1947 = vmatmul.mubr.bf16.gmra.mrb[0].mxu0 %v1055
      %v1948 = vpop.f32.mrb[0].mxu0
      %v1949 = vadd.f32 0.0, %v1948
      %v1950 = vpop.f32.mrb[0].mxu0
      %v1951 = vpop.f32.mrb[0].mxu0
      %v1952 = vadd.f32 0.0, %v1951
      %v1953 = vpop.f32.mrb[0].mxu0
      %1954 = vmatprep.mubr.bf16.mxu0 %v1062
      %1955 = vmatmul.mubr.bf16.gmra.mrb[0].mxu0 %v1061
      %v1956 = vpop.f32.mrb[0].mxu0
      %v1957 = vadd.f32 0.0, %v1956
      %v1958 = vpop.f32.mrb[0].mxu0
      %v1959 = vpop.f32.mrb[0].mxu0
      %v1960 = vadd.f32 0.0, %v1959
      %v1961 = vpop.f32.mrb[0].mxu0
      %1962 = vmatprep.mubr.bf16.mxu0 %v1068
      %1963 = vmatmul.mubr.bf16.gmra.mrb[0].mxu0 %v1067
      %v1964 = vpop.f32.mrb[0].mxu0
      %v1965 = vadd.f32 0.0, %v1964
      %v1966 = vpop.f32.mrb[0].mxu0
      %v1967 = vpop.f32.mrb[0].mxu0
      %v1968 = vadd.f32 0.0, %v1967
      %v1969 = vpop.f32.mrb[0].mxu0
      %1970 = vmatprep.mubr.bf16.mxu0 %v1074
      %1971 = vmatmul.mubr.bf16.gmra.mrb[0].mxu0 %v1073
      %v1972 = vpop.f32.mrb[0].mxu0
      %v1973 = vadd.f32 0.0, %v1972
      %v1974 = vpop.f32.mrb[0].mxu0
      %v1975 = vpop.f32.mrb[0].mxu0
      %v1976 = vadd.f32 0.0, %v1975
      %v1977 = vpop.f32.mrb[0].mxu0
      %1978 = vmatprep.mubr.bf16.mxu0 %v1080
      %1979 = vmatmul.mubr.bf16.gmra.mrb[0].mxu0 %v1079
      %v1980 = vpop.f32.mrb[0].mxu0
      %v1981 = vadd.f32 0.0, %v1980
      %v1982 = vpop.f32.mrb[0].mxu0
      %v1983 = vpop.f32.mrb[0].mxu0
      %v1984 = vadd.f32 0.0, %v1983
      %v1985 = vpop.f32.mrb[0].mxu0
      %1986 = vmatprep.mubr.bf16.mxu0 %v1086
      %1987 = vmatmul.mubr.bf16.gmra.mrb[0].mxu0 %v1085
      %v1988 = vpop.f32.mrb[0].mxu0
      %v1989 = vadd.f32 0.0, %v1988
      %v1990 = vpop.f32.mrb[0].mxu0
      %v1991 = vpop.f32.mrb[0].mxu0
      %v1992 = vadd.f32 0.0, %v1991
      %v1993 = vpop.f32.mrb[0].mxu0
      %1994 = vmatprep.mubr.bf16.mxu0 %v1092
      %1995 = vmatmul.mubr.bf16.gmra.mrb[0].mxu0 %v1091
      %v1996 = vpop.f32.mrb[0].mxu0
      %v1997 = vadd.f32 0.0, %v1996
      %v1998 = vpop.f32.mrb[0].mxu0
      %v1999 = vpop.f32.mrb[0].mxu0
      %v2000 = vadd.f32 0.0, %v1999
      %v2001 = vpop.f32.mrb[0].mxu0
      %2002 = vmatprep.mubr.bf16.mxu0 %v1098
      %2003 = vmatmul.mubr.bf16.gmra.mrb[0].mxu0 %v1097
      %v2004 = vpop.f32.mrb[0].mxu0
      %v2005 = vadd.f32 0.0, %v2004
      %v2006 = vpop.f32.mrb[0].mxu0
      %v2007 = vpop.f32.mrb[0].mxu0
      %v2008 = vadd.f32 0.0, %v2007
      %v2009 = vpop.f32.mrb[0].mxu0
      %2010 = vmatprep.mubr.bf16.mxu0 %v1104
      %2011 = vmatmul.mubr.bf16.gmra.mrb[0].mxu0 %v1103
      %v2012 = vpop.f32.mrb[0].mxu0
      %v2013 = vadd.f32 0.0, %v2012
      %v2014 = vpop.f32.mrb[0].mxu0
      %v2015 = vpop.f32.mrb[0].mxu0
      %v2016 = vadd.f32 0.0, %v2015
      %v2017 = vpop.f32.mrb[0].mxu0
      %2018 = vmatprep.mubr.bf16.mxu0 %v1110
      %2019 = vmatmul.mubr.bf16.gmra.mrb[0].mxu0 %v1109
      %v2020 = vpop.f32.mrb[0].mxu0
      %v2021 = vadd.f32 0.0, %v2020
      %v2022 = vpop.f32.mrb[0].mxu0
      %v2023 = vpop.f32.mrb[0].mxu0
      %v2024 = vadd.f32 0.0, %v2023
      %v2025 = vpop.f32.mrb[0].mxu0
      %2026 = vdwg.mxu0
      %2027 = vmatprep.subr.bf16.mxu0 0
      %2028 = vmatpush1.bf16.msra.mxu0 %v1578
      %2029 = vmatprep.subr.bf16.mxu0 0
      %2030 = vmatpush1.bf16.msra.mxu0 %v1579
      %2031 = vmatprep.subr.bf16.mxu0 0
      %2032 = vmatpush1.bf16.msra.mxu0 %v1580
      %2033 = vmatprep.subr.bf16.mxu0 0
      %2034 = vmatpush1.bf16.msra.mxu0 %v1581
      %2035 = vmatprep.subr.bf16.mxu0 0
      %2036 = vmatpush1.bf16.msra.mxu0 %v1582
      %2037 = vmatprep.subr.bf16.mxu0 0
      %2038 = vmatpush1.bf16.msra.mxu0 %v1583
      %2039 = vmatprep.subr.bf16.mxu0 0
      %2040 = vmatpush1.bf16.msra.mxu0 %v1584
      %2041 = vmatprep.subr.bf16.mxu0 0
      %2042 = vmatpush1.bf16.msra.mxu0 %v1585
      %2043 = vmatprep.subr.bf16.mxu0 0
      %2044 = vmatpush1.bf16.msra.mxu0 %v1586
      %2045 = vmatprep.subr.bf16.mxu0 0
      %2046 = vmatpush1.bf16.msra.mxu0 %v1587
      %2047 = vmatprep.subr.bf16.mxu0 0
      %2048 = vmatpush1.bf16.msra.mxu0 %v1588
      %2049 = vmatprep.subr.bf16.mxu0 0
      %2050 = vmatpush1.bf16.msra.mxu0 %v1589
      %2051 = vmatprep.subr.bf16.mxu0 0
      %2052 = vmatpush1.bf16.msra.mxu0 %v1590
      %2053 = vmatprep.subr.bf16.mxu0 0
      %2054 = vmatpush1.bf16.msra.mxu0 %v1591
      %2055 = vmatprep.subr.bf16.mxu0 0
      %2056 = vmatpush1.bf16.msra.mxu0 %v1592
      %2057 = vmatprep.subr.bf16.mxu0 0
      %2058 = vmatpush1.bf16.msra.mxu0 %v1593
      %2059 = vmatprep.mubr.bf16.mxu0 %v908
      %2060 = vmatmul.mubr.bf16.gmra.mrb[0].mxu0 %v907
      %v2061 = vpop.f32.mrb[0].mxu0
      %v2062 = vadd.f32 %v1741, %v2061
      %v2063 = vpop.f32.mrb[0].mxu0
      %v2064 = vpop.f32.mrb[0].mxu0
      %v2065 = vadd.f32 %v1744, %v2064
      %v2066 = vpop.f32.mrb[0].mxu0
      %2067 = vmatprep.mubr.bf16.mxu0 %v917
      %2068 = vmatmul.mubr.bf16.gmra.mrb[0].mxu0 %v916
      %v2069 = vpop.f32.mrb[0].mxu0
      %v2070 = vadd.f32 %v1749, %v2069
      %v2071 = vpop.f32.mrb[0].mxu0
      %v2072 = vpop.f32.mrb[0].mxu0
      %v2073 = vadd.f32 %v1752, %v2072
      %v2074 = vpop.f32.mrb[0].mxu0
      %2075 = vmatprep.mubr.bf16.mxu0 %v926
      %2076 = vmatmul.mubr.bf16.gmra.mrb[0].mxu0 %v925
      %v2077 = vpop.f32.mrb[0].mxu0
      %v2078 = vadd.f32 %v1757, %v2077
      %v2079 = vpop.f32.mrb[0].mxu0
      %v2080 = vpop.f32.mrb[0].mxu0
      %v2081 = vadd.f32 %v1760, %v2080
      %v2082 = vpop.f32.mrb[0].mxu0
      %2083 = vmatprep.mubr.bf16.mxu0 %v932
      %2084 = vmatmul.mubr.bf16.gmra.mrb[0].mxu0 %v913
      %v2085 = vpop.f32.mrb[0].mxu0
      %v2086 = vadd.f32 %v1765, %v2085
      %v2087 = vpop.f32.mrb[0].mxu0
      %v2088 = vpop.f32.mrb[0].mxu0
      %v2089 = vadd.f32 %v1768, %v2088
      %v2090 = vpop.f32.mrb[0].mxu0
      %2091 = vmatprep.mubr.bf16.mxu0 %v938
      %2092 = vmatmul.mubr.bf16.gmra.mrb[0].mxu0 %v922
      %v2093 = vpop.f32.mrb[0].mxu0
      %v2094 = vadd.f32 %v1773, %v2093
      %v2095 = vpop.f32.mrb[0].mxu0
      %v2096 = vpop.f32.mrb[0].mxu0
      %v2097 = vadd.f32 %v1776, %v2096
      %v2098 = vpop.f32.mrb[0].mxu0
      %2099 = vmatprep.mubr.bf16.mxu0 %v944
      %2100 = vmatmul.mubr.bf16.gmra.mrb[0].mxu0 %v931
      %v2101 = vpop.f32.mrb[0].mxu0
      %v2102 = vadd.f32 %v1781, %v2101
      %v2103 = vpop.f32.mrb[0].mxu0
      %v2104 = vpop.f32.mrb[0].mxu0
      %v2105 = vadd.f32 %v1784, %v2104
      %v2106 = vpop.f32.mrb[0].mxu0
      %2107 = vmatprep.mubr.bf16.mxu0 %v950
      %2108 = vmatmul.mubr.bf16.gmra.mrb[0].mxu0 %v937
      %v2109 = vpop.f32.mrb[0].mxu0
      %v2110 = vadd.f32 %v1789, %v2109
      %v2111 = vpop.f32.mrb[0].mxu0
      %v2112 = vpop.f32.mrb[0].mxu0
      %v2113 = vadd.f32 %v1792, %v2112
      %v2114 = vpop.f32.mrb[0].mxu0
      %2115 = vmatprep.mubr.bf16.mxu0 %v956
      %2116 = vmatmul.mubr.bf16.gmra.mrb[0].mxu0 %v943
      %v2117 = vpop.f32.mrb[0].mxu0
      %v2118 = vadd.f32 %v1797, %v2117
      %v2119 = vpop.f32.mrb[0].mxu0
      %v2120 = vpop.f32.mrb[0].mxu0
      %v2121 = vadd.f32 %v1800, %v2120
      %v2122 = vpop.f32.mrb[0].mxu0
      %2123 = vmatprep.mubr.bf16.mxu0 %v962
      %2124 = vmatmul.mubr.bf16.gmra.mrb[0].mxu0 %v949
      %v2125 = vpop.f32.mrb[0].mxu0
      %v2126 = vadd.f32 %v1805, %v2125
      %v2127 = vpop.f32.mrb[0].mxu0
      %v2128 = vpop.f32.mrb[0].mxu0
      %v2129 = vadd.f32 %v1808, %v2128
      %v2130 = vpop.f32.mrb[0].mxu0
      %2131 = vmatprep.mubr.bf16.mxu0 %v968
      %2132 = vmatmul.mubr.bf16.gmra.mrb[0].mxu0 %v955
      %v2133 = vpop.f32.mrb[0].mxu0
      %v2134 = vadd.f32 %v1813, %v2133
      %v2135 = vpop.f32.mrb[0].mxu0
      %v2136 = vpop.f32.mrb[0].mxu0
      %v2137 = vadd.f32 %v1816, %v2136
      %v2138 = vpop.f32.mrb[0].mxu0
      %2139 = vmatprep.mubr.bf16.mxu0 %v974
      %2140 = vmatmul.mubr.bf16.gmra.mrb[0].mxu0 %v961
      %v2141 = vpop.f32.mrb[0].mxu0
      %v2142 = vadd.f32 %v1821, %v2141
      %v2143 = vpop.f32.mrb[0].mxu0
      %v2144 = vpop.f32.mrb[0].mxu0
      %v2145 = vadd.f32 %v1824, %v2144
      %v2146 = vpop.f32.mrb[0].mxu0
      %2147 = vmatprep.mubr.bf16.mxu0 %v980
      %2148 = vmatmul.mubr.bf16.gmra.mrb[0].mxu0 %v967
      %v2149 = vpop.f32.mrb[0].mxu0
      %v2150 = vadd.f32 %v1829, %v2149
      %v2151 = vpop.f32.mrb[0].mxu0
      %v2152 = vpop.f32.mrb[0].mxu0
      %v2153 = vadd.f32 %v1832, %v2152
      %v2154 = vpop.f32.mrb[0].mxu0
      %2155 = vmatprep.mubr.bf16.mxu0 %v986
      %2156 = vmatmul.mubr.bf16.gmra.mrb[0].mxu0 %v973
      %v2157 = vpop.f32.mrb[0].mxu0
      %v2158 = vadd.f32 %v1837, %v2157
      %v2159 = vpop.f32.mrb[0].mxu0
      %v2160 = vpop.f32.mrb[0].mxu0
      %v2161 = vadd.f32 %v1840, %v2160
      %v2162 = vpop.f32.mrb[0].mxu0
      %2163 = vmatprep.mubr.bf16.mxu0 %v992
      %2164 = vmatmul.mubr.bf16.gmra.mrb[0].mxu0 %v979
      %v2165 = vpop.f32.mrb[0].mxu0
      %v2166 = vadd.f32 %v1845, %v2165
      %v2167 = vpop.f32.mrb[0].mxu0
      %v2168 = vpop.f32.mrb[0].mxu0
      %v2169 = vadd.f32 %v1848, %v2168
      %v2170 = vpop.f32.mrb[0].mxu0
      %2171 = vmatprep.mubr.bf16.mxu0 %v998
      %2172 = vmatmul.mubr.bf16.gmra.mrb[0].mxu0 %v985
      %v2173 = vpop.f32.mrb[0].mxu0
      %v2174 = vadd.f32 %v1853, %v2173
      %v2175 = vpop.f32.mrb[0].mxu0
      %v2176 = vpop.f32.mrb[0].mxu0
      %v2177 = vadd.f32 %v1856, %v2176
      %v2178 = vpop.f32.mrb[0].mxu0
      %2179 = vmatprep.mubr.bf16.mxu0 %v1004
      %2180 = vmatmul.mubr.bf16.gmra.mrb[0].mxu0 %v991
      %v2181 = vpop.f32.mrb[0].mxu0
      %v2182 = vadd.f32 %v1861, %v2181
      %v2183 = vpop.f32.mrb[0].mxu0
      %v2184 = vpop.f32.mrb[0].mxu0
      %v2185 = vadd.f32 %v1864, %v2184
      %v2186 = vpop.f32.mrb[0].mxu0
      %2187 = vmatprep.mubr.bf16.mxu0 %v1010
      %2188 = vmatmul.mubr.bf16.gmra.mrb[0].mxu0 %v997
      %v2189 = vpop.f32.mrb[0].mxu0
      %v2190 = vadd.f32 %v1869, %v2189
      %v2191 = vpop.f32.mrb[0].mxu0
      %v2192 = vpop.f32.mrb[0].mxu0
      %v2193 = vadd.f32 %v1872, %v2192
      %v2194 = vpop.f32.mrb[0].mxu0
      %2195 = vmatprep.mubr.bf16.mxu0 %v1016
      %2196 = vmatmul.mubr.bf16.gmra.mrb[0].mxu0 %v1003
      %v2197 = vpop.f32.mrb[0].mxu0
      %v2198 = vadd.f32 %v1877, %v2197
      %v2199 = vpop.f32.mrb[0].mxu0
      %v2200 = vpop.f32.mrb[0].mxu0
      %v2201 = vadd.f32 %v1880, %v2200
      %v2202 = vpop.f32.mrb[0].mxu0
      %2203 = vmatprep.mubr.bf16.mxu0 %v1022
      %2204 = vmatmul.mubr.bf16.gmra.mrb[0].mxu0 %v1009
      %v2205 = vpop.f32.mrb[0].mxu0
      %v2206 = vadd.f32 %v1885, %v2205
      %v2207 = vpop.f32.mrb[0].mxu0
      %v2208 = vpop.f32.mrb[0].mxu0
      %v2209 = vadd.f32 %v1888, %v2208
      %v2210 = vpop.f32.mrb[0].mxu0
      %2211 = vmatprep.mubr.bf16.mxu0 %v1028
      %2212 = vmatmul.mubr.bf16.gmra.mrb[0].mxu0 %v1015
      %v2213 = vpop.f32.mrb[0].mxu0
      %v2214 = vadd.f32 %v1893, %v2213
      %v2215 = vpop.f32.mrb[0].mxu0
      %v2216 = vpop.f32.mrb[0].mxu0
      %v2217 = vadd.f32 %v1896, %v2216
      %v2218 = vpop.f32.mrb[0].mxu0
      %2219 = vmatprep.mubr.bf16.mxu0 %v1034
      %2220 = vmatmul.mubr.bf16.gmra.mrb[0].mxu0 %v1021
      %v2221 = vpop.f32.mrb[0].mxu0
      %v2222 = vadd.f32 %v1901, %v2221
      %v2223 = vpop.f32.mrb[0].mxu0
      %v2224 = vpop.f32.mrb[0].mxu0
      %v2225 = vadd.f32 %v1904, %v2224
      %v2226 = vpop.f32.mrb[0].mxu0
      %2227 = vmatprep.mubr.bf16.mxu0 %v1040
      %2228 = vmatmul.mubr.bf16.gmra.mrb[0].mxu0 %v1027
      %v2229 = vpop.f32.mrb[0].mxu0
      %v2230 = vadd.f32 %v1909, %v2229
      %v2231 = vpop.f32.mrb[0].mxu0
      %v2232 = vpop.f32.mrb[0].mxu0
      %v2233 = vadd.f32 %v1912, %v2232
      %v2234 = vpop.f32.mrb[0].mxu0
      %2235 = vmatprep.mubr.bf16.mxu0 %v1046
      %2236 = vmatmul.mubr.bf16.gmra.mrb[0].mxu0 %v1033
      %v2237 = vpop.f32.mrb[0].mxu0
      %v2238 = vadd.f32 %v1917, %v2237
      %v2239 = vpop.f32.mrb[0].mxu0
      %v2240 = vpop.f32.mrb[0].mxu0
      %v2241 = vadd.f32 %v1920, %v2240
      %v2242 = vpop.f32.mrb[0].mxu0
      %2243 = vmatprep.mubr.bf16.mxu0 %v1052
      %2244 = vmatmul.mubr.bf16.gmra.mrb[0].mxu0 %v1039
      %v2245 = vpop.f32.mrb[0].mxu0
      %v2246 = vadd.f32 %v1925, %v2245
      %v2247 = vpop.f32.mrb[0].mxu0
      %v2248 = vpop.f32.mrb[0].mxu0
      %v2249 = vadd.f32 %v1928, %v2248
      %v2250 = vpop.f32.mrb[0].mxu0
      %2251 = vmatprep.mubr.bf16.mxu0 %v1058
      %2252 = vmatmul.mubr.bf16.gmra.mrb[0].mxu0 %v1045
      %v2253 = vpop.f32.mrb[0].mxu0
      %v2254 = vadd.f32 %v1933, %v2253
      %v2255 = vpop.f32.mrb[0].mxu0
      %v2256 = vpop.f32.mrb[0].mxu0
      %v2257 = vadd.f32 %v1936, %v2256
      %v2258 = vpop.f32.mrb[0].mxu0
      %2259 = vmatprep.mubr.bf16.mxu0 %v1064
      %2260 = vmatmul.mubr.bf16.gmra.mrb[0].mxu0 %v1051
      %v2261 = vpop.f32.mrb[0].mxu0
      %v2262 = vadd.f32 %v1941, %v2261
      %v2263 = vpop.f32.mrb[0].mxu0
      %v2264 = vpop.f32.mrb[0].mxu0
      %v2265 = vadd.f32 %v1944, %v2264
      %v2266 = vpop.f32.mrb[0].mxu0
      %2267 = vmatprep.mubr.bf16.mxu0 %v1070
      %2268 = vmatmul.mubr.bf16.gmra.mrb[0].mxu0 %v1057
      %v2269 = vpop.f32.mrb[0].mxu0
      %v2270 = vadd.f32 %v1949, %v2269
      %v2271 = vpop.f32.mrb[0].mxu0
      %v2272 = vpop.f32.mrb[0].mxu0
      %v2273 = vadd.f32 %v1952, %v2272
      %v2274 = vpop.f32.mrb[0].mxu0
      %2275 = vmatprep.mubr.bf16.mxu0 %v1076
      %2276 = vmatmul.mubr.bf16.gmra.mrb[0].mxu0 %v1063
      %v2277 = vpop.f32.mrb[0].mxu0
      %v2278 = vadd.f32 %v1957, %v2277
      %v2279 = vpop.f32.mrb[0].mxu0
      %v2280 = vpop.f32.mrb[0].mxu0
      %v2281 = vadd.f32 %v1960, %v2280
      %v2282 = vpop.f32.mrb[0].mxu0
      %2283 = vmatprep.mubr.bf16.mxu0 %v1082
      %2284 = vmatmul.mubr.bf16.gmra.mrb[0].mxu0 %v1069
      %v2285 = vpop.f32.mrb[0].mxu0
      %v2286 = vadd.f32 %v1965, %v2285
      %v2287 = vpop.f32.mrb[0].mxu0
      %v2288 = vpop.f32.mrb[0].mxu0
      %v2289 = vadd.f32 %v1968, %v2288
      %v2290 = vpop.f32.mrb[0].mxu0
      %2291 = vmatprep.mubr.bf16.mxu0 %v1088
      %2292 = vmatmul.mubr.bf16.gmra.mrb[0].mxu0 %v1075
      %v2293 = vpop.f32.mrb[0].mxu0
      %v2294 = vadd.f32 %v1973, %v2293
      %v2295 = vpop.f32.mrb[0].mxu0
      %v2296 = vpop.f32.mrb[0].mxu0
      %v2297 = vadd.f32 %v1976, %v2296
      %v2298 = vpop.f32.mrb[0].mxu0
      %2299 = vmatprep.mubr.bf16.mxu0 %v1094
      %2300 = vmatmul.mubr.bf16.gmra.mrb[0].mxu0 %v1081
      %v2301 = vpop.f32.mrb[0].mxu0
      %v2302 = vadd.f32 %v1981, %v2301
      %v2303 = vpop.f32.mrb[0].mxu0
      %v2304 = vpop.f32.mrb[0].mxu0
      %v2305 = vadd.f32 %v1984, %v2304
      %v2306 = vpop.f32.mrb[0].mxu0
      %2307 = vmatprep.mubr.bf16.mxu0 %v1100
      %2308 = vmatmul.mubr.bf16.gmra.mrb[0].mxu0 %v1087
      %v2309 = vpop.f32.mrb[0].mxu0
      %v2310 = vadd.f32 %v1989, %v2309
      %v2311 = vpop.f32.mrb[0].mxu0
      %v2312 = vpop.f32.mrb[0].mxu0
      %v2313 = vadd.f32 %v1992, %v2312
      %v2314 = vpop.f32.mrb[0].mxu0
      %2315 = vmatprep.mubr.bf16.mxu0 %v1106
      %2316 = vmatmul.mubr.bf16.gmra.mrb[0].mxu0 %v1093
      %v2317 = vpop.f32.mrb[0].mxu0
      %v2318 = vadd.f32 %v1997, %v2317
      %v2319 = vpop.f32.mrb[0].mxu0
      %v2320 = vpop.f32.mrb[0].mxu0
      %v2321 = vadd.f32 %v2000, %v2320
      %v2322 = vpop.f32.mrb[0].mxu0
      %2323 = vmatprep.mubr.bf16.mxu0 %v1112
      %2324 = vmatmul.mubr.bf16.gmra.mrb[0].mxu0 %v1099
      %v2325 = vpop.f32.mrb[0].mxu0
      %v2326 = vadd.f32 %v2005, %v2325
      %v2327 = vpop.f32.mrb[0].mxu0
      %v2328 = vpop.f32.mrb[0].mxu0
      %v2329 = vadd.f32 %v2008, %v2328
      %v2330 = vpop.f32.mrb[0].mxu0
      %2331 = vmatprep.mubr.bf16.mxu0 %v1118
      %2332 = vmatmul.mubr.bf16.gmra.mrb[0].mxu0 %v1105
      %v2333 = vpop.f32.mrb[0].mxu0
      %v2334 = vadd.f32 %v2013, %v2333
      %v2335 = vpop.f32.mrb[0].mxu0
      %v2336 = vpop.f32.mrb[0].mxu0
      %v2337 = vadd.f32 %v2016, %v2336
      %v2338 = vpop.f32.mrb[0].mxu0
      %2339 = vmatprep.mubr.bf16.mxu0 %v1124
      %2340 = vmatmul.mubr.bf16.gmra.mrb[0].mxu0 %v1111
      %v2341 = vpop.f32.mrb[0].mxu0
      %v2342 = vadd.f32 %v2021, %v2341
      %v2343 = vpop.f32.mrb[0].mxu0
      %v2344 = vpop.f32.mrb[0].mxu0
      %v2345 = vadd.f32 %v2024, %v2344
      %v2346 = vpop.f32.mrb[0].mxu0
      %2347 = vdwg.mxu0
      %2348 = vmatprep.subr.bf16.mxu0 0
      %2349 = vmatpush1.bf16.msra.mxu0 %v1594
      %2350 = vmatprep.subr.bf16.mxu0 0
      %2351 = vmatpush1.bf16.msra.mxu0 %v1595
      %2352 = vmatprep.subr.bf16.mxu0 0
      %2353 = vmatpush1.bf16.msra.mxu0 %v1596
      %2354 = vmatprep.subr.bf16.mxu0 0
      %2355 = vmatpush1.bf16.msra.mxu0 %v1597
      %2356 = vmatprep.subr.bf16.mxu0 0
      %2357 = vmatpush1.bf16.msra.mxu0 %v1598
      %2358 = vmatprep.subr.bf16.mxu0 0
      %2359 = vmatpush1.bf16.msra.mxu0 %v1599
      %2360 = vmatprep.subr.bf16.mxu0 0
      %2361 = vmatpush1.bf16.msra.mxu0 %v1600
      %2362 = vmatprep.subr.bf16.mxu0 0
      %2363 = vmatpush1.bf16.msra.mxu0 %v1601
      %2364 = vmatprep.subr.bf16.mxu0 0
      %2365 = vmatpush1.bf16.msra.mxu0 %v1602
      %2366 = vmatprep.subr.bf16.mxu0 0
      %2367 = vmatpush1.bf16.msra.mxu0 %v1603
      %2368 = vmatprep.subr.bf16.mxu0 0
      %2369 = vmatpush1.bf16.msra.mxu0 %v1604
      %2370 = vmatprep.subr.bf16.mxu0 0
      %2371 = vmatpush1.bf16.msra.mxu0 %v1605
      %2372 = vmatprep.subr.bf16.mxu0 0
      %2373 = vmatpush1.bf16.msra.mxu0 %v1606
      %2374 = vmatprep.subr.bf16.mxu0 0
      %2375 = vmatpush1.bf16.msra.mxu0 %v1607
      %2376 = vmatprep.subr.bf16.mxu0 0
      %2377 = vmatpush1.bf16.msra.mxu0 %v1608
      %2378 = vmatprep.subr.bf16.mxu0 0
      %2379 = vmatpush1.bf16.msra.mxu0 %v1609
      %2380 = vmatprep.mubr.bf16.mxu0 %v910
      %2381 = vmatmul.mubr.bf16.gmra.mrb[0].mxu0 %v909
      %v2382 = vpop.f32.mrb[0].mxu0
      %v2383 = vadd.f32 %v2062, %v2382
      %v2384 = vpop.f32.mrb[0].mxu0
      %v2385 = vpop.f32.mrb[0].mxu0
      %v2386 = vadd.f32 %v2065, %v2385
      %v2387 = vpop.f32.mrb[0].mxu0
      %2388 = vmatprep.mubr.bf16.mxu0 %v919
      %2389 = vmatmul.mubr.bf16.gmra.mrb[0].mxu0 %v918
      %v2390 = vpop.f32.mrb[0].mxu0
      %v2391 = vadd.f32 %v2070, %v2390
      %v2392 = vpop.f32.mrb[0].mxu0
      %v2393 = vpop.f32.mrb[0].mxu0
      %v2394 = vadd.f32 %v2073, %v2393
      %v2395 = vpop.f32.mrb[0].mxu0
      %2396 = vmatprep.mubr.bf16.mxu0 %v928
      %2397 = vmatmul.mubr.bf16.gmra.mrb[0].mxu0 %v927
      %v2398 = vpop.f32.mrb[0].mxu0
      %v2399 = vadd.f32 %v2078, %v2398
      %v2400 = vpop.f32.mrb[0].mxu0
      %v2401 = vpop.f32.mrb[0].mxu0
      %v2402 = vadd.f32 %v2081, %v2401
      %v2403 = vpop.f32.mrb[0].mxu0
      %2404 = vmatprep.mubr.bf16.mxu0 %v934
      %2405 = vmatmul.mubr.bf16.gmra.mrb[0].mxu0 %v933
      %v2406 = vpop.f32.mrb[0].mxu0
      %v2407 = vadd.f32 %v2086, %v2406
      %v2408 = vpop.f32.mrb[0].mxu0
      %v2409 = vpop.f32.mrb[0].mxu0
      %v2410 = vadd.f32 %v2089, %v2409
      %v2411 = vpop.f32.mrb[0].mxu0
      %2412 = vmatprep.mubr.bf16.mxu0 %v940
      %2413 = vmatmul.mubr.bf16.gmra.mrb[0].mxu0 %v939
      %v2414 = vpop.f32.mrb[0].mxu0
      %v2415 = vadd.f32 %v2094, %v2414
      %v2416 = vpop.f32.mrb[0].mxu0
      %v2417 = vpop.f32.mrb[0].mxu0
      %v2418 = vadd.f32 %v2097, %v2417
      %v2419 = vpop.f32.mrb[0].mxu0
      %2420 = vmatprep.mubr.bf16.mxu0 %v946
      %2421 = vmatmul.mubr.bf16.gmra.mrb[0].mxu0 %v945
      %v2422 = vpop.f32.mrb[0].mxu0
      %v2423 = vadd.f32 %v2102, %v2422
      %v2424 = vpop.f32.mrb[0].mxu0
      %v2425 = vpop.f32.mrb[0].mxu0
      %v2426 = vadd.f32 %v2105, %v2425
      %v2427 = vpop.f32.mrb[0].mxu0
      %2428 = vmatprep.mubr.bf16.mxu0 %v952
      %2429 = vmatmul.mubr.bf16.gmra.mrb[0].mxu0 %v951
      %v2430 = vpop.f32.mrb[0].mxu0
      %v2431 = vadd.f32 %v2110, %v2430
      %v2432 = vpop.f32.mrb[0].mxu0
      %v2433 = vpop.f32.mrb[0].mxu0
      %v2434 = vadd.f32 %v2113, %v2433
      %v2435 = vpop.f32.mrb[0].mxu0
      %2436 = vmatprep.mubr.bf16.mxu0 %v958
      %2437 = vmatmul.mubr.bf16.gmra.mrb[0].mxu0 %v957
      %v2438 = vpop.f32.mrb[0].mxu0
      %v2439 = vadd.f32 %v2118, %v2438
      %v2440 = vpop.f32.mrb[0].mxu0
      %v2441 = vpop.f32.mrb[0].mxu0
      %v2442 = vadd.f32 %v2121, %v2441
      %v2443 = vpop.f32.mrb[0].mxu0
      %2444 = vmatprep.mubr.bf16.mxu0 %v964
      %2445 = vmatmul.mubr.bf16.gmra.mrb[0].mxu0 %v963
      %v2446 = vpop.f32.mrb[0].mxu0
      %v2447 = vadd.f32 %v2126, %v2446
      %v2448 = vpop.f32.mrb[0].mxu0
      %v2449 = vpop.f32.mrb[0].mxu0
      %v2450 = vadd.f32 %v2129, %v2449
      %v2451 = vpop.f32.mrb[0].mxu0
      %2452 = vmatprep.mubr.bf16.mxu0 %v970
      %2453 = vmatmul.mubr.bf16.gmra.mrb[0].mxu0 %v969
      %v2454 = vpop.f32.mrb[0].mxu0
      %v2455 = vadd.f32 %v2134, %v2454
      %v2456 = vpop.f32.mrb[0].mxu0
      %v2457 = vpop.f32.mrb[0].mxu0
      %v2458 = vadd.f32 %v2137, %v2457
      %v2459 = vpop.f32.mrb[0].mxu0
      %2460 = vmatprep.mubr.bf16.mxu0 %v976
      %2461 = vmatmul.mubr.bf16.gmra.mrb[0].mxu0 %v975
      %v2462 = vpop.f32.mrb[0].mxu0
      %v2463 = vadd.f32 %v2142, %v2462
      %v2464 = vpop.f32.mrb[0].mxu0
      %v2465 = vpop.f32.mrb[0].mxu0
      %v2466 = vadd.f32 %v2145, %v2465
      %v2467 = vpop.f32.mrb[0].mxu0
      %2468 = vmatprep.mubr.bf16.mxu0 %v982
      %2469 = vmatmul.mubr.bf16.gmra.mrb[0].mxu0 %v981
      %v2470 = vpop.f32.mrb[0].mxu0
      %v2471 = vadd.f32 %v2150, %v2470
      %v2472 = vpop.f32.mrb[0].mxu0
      %v2473 = vpop.f32.mrb[0].mxu0
      %v2474 = vadd.f32 %v2153, %v2473
      %v2475 = vpop.f32.mrb[0].mxu0
      %2476 = vmatprep.mubr.bf16.mxu0 %v988
      %2477 = vmatmul.mubr.bf16.gmra.mrb[0].mxu0 %v987
      %v2478 = vpop.f32.mrb[0].mxu0
      %v2479 = vadd.f32 %v2158, %v2478
      %v2480 = vpop.f32.mrb[0].mxu0
      %v2481 = vpop.f32.mrb[0].mxu0
      %v2482 = vadd.f32 %v2161, %v2481
      %v2483 = vpop.f32.mrb[0].mxu0
      %2484 = vmatprep.mubr.bf16.mxu0 %v994
      %2485 = vmatmul.mubr.bf16.gmra.mrb[0].mxu0 %v993
      %v2486 = vpop.f32.mrb[0].mxu0
      %v2487 = vadd.f32 %v2166, %v2486
      %v2488 = vpop.f32.mrb[0].mxu0
      %v2489 = vpop.f32.mrb[0].mxu0
      %v2490 = vadd.f32 %v2169, %v2489
      %v2491 = vpop.f32.mrb[0].mxu0
      %2492 = vmatprep.mubr.bf16.mxu0 %v1000
      %2493 = vmatmul.mubr.bf16.gmra.mrb[0].mxu0 %v999
      %v2494 = vpop.f32.mrb[0].mxu0
      %v2495 = vadd.f32 %v2174, %v2494
      %v2496 = vpop.f32.mrb[0].mxu0
      %v2497 = vpop.f32.mrb[0].mxu0
      %v2498 = vadd.f32 %v2177, %v2497
      %v2499 = vpop.f32.mrb[0].mxu0
      %2500 = vmatprep.mubr.bf16.mxu0 %v1006
      %2501 = vmatmul.mubr.bf16.gmra.mrb[0].mxu0 %v1005
      %v2502 = vpop.f32.mrb[0].mxu0
      %v2503 = vadd.f32 %v2182, %v2502
      %v2504 = vpop.f32.mrb[0].mxu0
      %v2505 = vpop.f32.mrb[0].mxu0
      %v2506 = vadd.f32 %v2185, %v2505
      %v2507 = vpop.f32.mrb[0].mxu0
      %2508 = vmatprep.mubr.bf16.mxu0 %v1012
      %2509 = vmatmul.mubr.bf16.gmra.mrb[0].mxu0 %v1011
      %v2510 = vpop.f32.mrb[0].mxu0
      %v2511 = vadd.f32 %v2190, %v2510
      %v2512 = vpop.f32.mrb[0].mxu0
      %v2513 = vpop.f32.mrb[0].mxu0
      %v2514 = vadd.f32 %v2193, %v2513
      %v2515 = vpop.f32.mrb[0].mxu0
      %2516 = vmatprep.mubr.bf16.mxu0 %v1018
      %2517 = vmatmul.mubr.bf16.gmra.mrb[0].mxu0 %v1017
      %v2518 = vpop.f32.mrb[0].mxu0
      %v2519 = vadd.f32 %v2198, %v2518
      %v2520 = vpop.f32.mrb[0].mxu0
      %v2521 = vpop.f32.mrb[0].mxu0
      %v2522 = vadd.f32 %v2201, %v2521
      %v2523 = vpop.f32.mrb[0].mxu0
      %2524 = vmatprep.mubr.bf16.mxu0 %v1024
      %2525 = vmatmul.mubr.bf16.gmra.mrb[0].mxu0 %v1023
      %v2526 = vpop.f32.mrb[0].mxu0
      %v2527 = vadd.f32 %v2206, %v2526
      %v2528 = vpop.f32.mrb[0].mxu0
      %v2529 = vpop.f32.mrb[0].mxu0
      %v2530 = vadd.f32 %v2209, %v2529
      %v2531 = vpop.f32.mrb[0].mxu0
      %2532 = vmatprep.mubr.bf16.mxu0 %v1030
      %2533 = vmatmul.mubr.bf16.gmra.mrb[0].mxu0 %v1029
      %v2534 = vpop.f32.mrb[0].mxu0
      %v2535 = vadd.f32 %v2214, %v2534
      %v2536 = vpop.f32.mrb[0].mxu0
      %v2537 = vpop.f32.mrb[0].mxu0
      %v2538 = vadd.f32 %v2217, %v2537
      %v2539 = vpop.f32.mrb[0].mxu0
      %2540 = vmatprep.mubr.bf16.mxu0 %v1036
      %2541 = vmatmul.mubr.bf16.gmra.mrb[0].mxu0 %v1035
      %v2542 = vpop.f32.mrb[0].mxu0
      %v2543 = vadd.f32 %v2222, %v2542
      %v2544 = vpop.f32.mrb[0].mxu0
      %v2545 = vpop.f32.mrb[0].mxu0
      %v2546 = vadd.f32 %v2225, %v2545
      %v2547 = vpop.f32.mrb[0].mxu0
      %2548 = vmatprep.mubr.bf16.mxu0 %v1042
      %2549 = vmatmul.mubr.bf16.gmra.mrb[0].mxu0 %v1041
      %v2550 = vpop.f32.mrb[0].mxu0
      %v2551 = vadd.f32 %v2230, %v2550
      %v2552 = vpop.f32.mrb[0].mxu0
      %v2553 = vpop.f32.mrb[0].mxu0
      %v2554 = vadd.f32 %v2233, %v2553
      %v2555 = vpop.f32.mrb[0].mxu0
      %2556 = vmatprep.mubr.bf16.mxu0 %v1048
      %2557 = vmatmul.mubr.bf16.gmra.mrb[0].mxu0 %v1047
      %v2558 = vpop.f32.mrb[0].mxu0
      %v2559 = vadd.f32 %v2238, %v2558
      %v2560 = vpop.f32.mrb[0].mxu0
      %v2561 = vpop.f32.mrb[0].mxu0
      %v2562 = vadd.f32 %v2241, %v2561
      %v2563 = vpop.f32.mrb[0].mxu0
      %2564 = vmatprep.mubr.bf16.mxu0 %v1054
      %2565 = vmatmul.mubr.bf16.gmra.mrb[0].mxu0 %v1053
      %v2566 = vpop.f32.mrb[0].mxu0
      %v2567 = vadd.f32 %v2246, %v2566
      %v2568 = vpop.f32.mrb[0].mxu0
      %v2569 = vpop.f32.mrb[0].mxu0
      %v2570 = vadd.f32 %v2249, %v2569
      %v2571 = vpop.f32.mrb[0].mxu0
      %2572 = vmatprep.mubr.bf16.mxu0 %v1060
      %2573 = vmatmul.mubr.bf16.gmra.mrb[0].mxu0 %v1059
      %v2574 = vpop.f32.mrb[0].mxu0
      %v2575 = vadd.f32 %v2254, %v2574
      %v2576 = vpop.f32.mrb[0].mxu0
      %v2577 = vpop.f32.mrb[0].mxu0
      %v2578 = vadd.f32 %v2257, %v2577
      %v2579 = vpop.f32.mrb[0].mxu0
      %2580 = vmatprep.mubr.bf16.mxu0 %v1066
      %2581 = vmatmul.mubr.bf16.gmra.mrb[0].mxu0 %v1065
      %v2582 = vpop.f32.mrb[0].mxu0
      %v2583 = vadd.f32 %v2262, %v2582
      %v2584 = vpop.f32.mrb[0].mxu0
      %v2585 = vpop.f32.mrb[0].mxu0
      %v2586 = vadd.f32 %v2265, %v2585
      %v2587 = vpop.f32.mrb[0].mxu0
      %2588 = vmatprep.mubr.bf16.mxu0 %v1072
      %2589 = vmatmul.mubr.bf16.gmra.mrb[0].mxu0 %v1071
      %v2590 = vpop.f32.mrb[0].mxu0
      %v2591 = vadd.f32 %v2270, %v2590
      %v2592 = vpop.f32.mrb[0].mxu0
      %v2593 = vpop.f32.mrb[0].mxu0
      %v2594 = vadd.f32 %v2273, %v2593
      %v2595 = vpop.f32.mrb[0].mxu0
      %2596 = vmatprep.mubr.bf16.mxu0 %v1078
      %2597 = vmatmul.mubr.bf16.gmra.mrb[0].mxu0 %v1077
      %v2598 = vpop.f32.mrb[0].mxu0
      %v2599 = vadd.f32 %v2278, %v2598
      %v2600 = vpop.f32.mrb[0].mxu0
      %v2601 = vpop.f32.mrb[0].mxu0
      %v2602 = vadd.f32 %v2281, %v2601
      %v2603 = vpop.f32.mrb[0].mxu0
      %2604 = vmatprep.mubr.bf16.mxu0 %v1084
      %2605 = vmatmul.mubr.bf16.gmra.mrb[0].mxu0 %v1083
      %v2606 = vpop.f32.mrb[0].mxu0
      %v2607 = vadd.f32 %v2286, %v2606
      %v2608 = vpop.f32.mrb[0].mxu0
      %v2609 = vpop.f32.mrb[0].mxu0
      %v2610 = vadd.f32 %v2289, %v2609
      %v2611 = vpop.f32.mrb[0].mxu0
      %2612 = vmatprep.mubr.bf16.mxu0 %v1090
      %2613 = vmatmul.mubr.bf16.gmra.mrb[0].mxu0 %v1089
      %v2614 = vpop.f32.mrb[0].mxu0
      %v2615 = vadd.f32 %v2294, %v2614
      %v2616 = vpop.f32.mrb[0].mxu0
      %v2617 = vpop.f32.mrb[0].mxu0
      %v2618 = vadd.f32 %v2297, %v2617
      %v2619 = vpop.f32.mrb[0].mxu0
      %2620 = vmatprep.mubr.bf16.mxu0 %v1096
      %2621 = vmatmul.mubr.bf16.gmra.mrb[0].mxu0 %v1095
      %v2622 = vpop.f32.mrb[0].mxu0
      %v2623 = vadd.f32 %v2302, %v2622
      %v2624 = vpop.f32.mrb[0].mxu0
      %v2625 = vpop.f32.mrb[0].mxu0
      %v2626 = vadd.f32 %v2305, %v2625
      %v2627 = vpop.f32.mrb[0].mxu0
      %2628 = vmatprep.mubr.bf16.mxu0 %v1102
      %2629 = vmatmul.mubr.bf16.gmra.mrb[0].mxu0 %v1101
      %v2630 = vpop.f32.mrb[0].mxu0
      %v2631 = vadd.f32 %v2310, %v2630
      %v2632 = vpop.f32.mrb[0].mxu0
      %v2633 = vpop.f32.mrb[0].mxu0
      %v2634 = vadd.f32 %v2313, %v2633
      %v2635 = vpop.f32.mrb[0].mxu0
      %2636 = vmatprep.mubr.bf16.mxu0 %v1108
      %2637 = vmatmul.mubr.bf16.gmra.mrb[0].mxu0 %v1107
      %v2638 = vpop.f32.mrb[0].mxu0
      %v2639 = vadd.f32 %v2318, %v2638
      %v2640 = vpop.f32.mrb[0].mxu0
      %v2641 = vpop.f32.mrb[0].mxu0
      %v2642 = vadd.f32 %v2321, %v2641
      %v2643 = vpop.f32.mrb[0].mxu0
      %2644 = vmatprep.mubr.bf16.mxu0 %v1114
      %2645 = vmatmul.mubr.bf16.gmra.mrb[0].mxu0 %v1113
      %v2646 = vpop.f32.mrb[0].mxu0
      %v2647 = vadd.f32 %v2326, %v2646
      %v2648 = vpop.f32.mrb[0].mxu0
      %v2649 = vpop.f32.mrb[0].mxu0
      %v2650 = vadd.f32 %v2329, %v2649
      %v2651 = vpop.f32.mrb[0].mxu0
      %2652 = vmatprep.mubr.bf16.mxu0 %v1120
      %2653 = vmatmul.mubr.bf16.gmra.mrb[0].mxu0 %v1119
      %v2654 = vpop.f32.mrb[0].mxu0
      %v2655 = vadd.f32 %v2334, %v2654
      %v2656 = vpop.f32.mrb[0].mxu0
      %v2657 = vpop.f32.mrb[0].mxu0
      %v2658 = vadd.f32 %v2337, %v2657
      %v2659 = vpop.f32.mrb[0].mxu0
      %2660 = vmatprep.mubr.bf16.mxu0 %v1126
      %2661 = vmatmul.mubr.bf16.gmra.mrb[0].mxu0 %v1125
      %v2662 = vpop.f32.mrb[0].mxu0
      %v2663 = vadd.f32 %v2342, %v2662
      %v2664 = vpop.f32.mrb[0].mxu0
      %v2665 = vpop.f32.mrb[0].mxu0
      %v2666 = vadd.f32 %v2345, %v2665
      %v2667 = vpop.f32.mrb[0].mxu0
      %2668 = vdwg.mxu0
      %2669 = vmatprep.subr.bf16.mxu0 0
      %2670 = vmatpush1.bf16.msra.mxu0 %v1610
      %2671 = vmatprep.subr.bf16.mxu0 0
      %2672 = vmatpush1.bf16.msra.mxu0 %v1611
      %2673 = vmatprep.subr.bf16.mxu0 0
      %2674 = vmatpush1.bf16.msra.mxu0 %v1612
      %2675 = vmatprep.subr.bf16.mxu0 0
      %2676 = vmatpush1.bf16.msra.mxu0 %v1613
      %2677 = vmatprep.subr.bf16.mxu0 0
      %2678 = vmatpush1.bf16.msra.mxu0 %v1614
      %2679 = vmatprep.subr.bf16.mxu0 0
      %2680 = vmatpush1.bf16.msra.mxu0 %v1615
      %2681 = vmatprep.subr.bf16.mxu0 0
      %2682 = vmatpush1.bf16.msra.mxu0 %v1616
      %2683 = vmatprep.subr.bf16.mxu0 0
      %2684 = vmatpush1.bf16.msra.mxu0 %v1617
      %2685 = vmatprep.subr.bf16.mxu0 0
      %2686 = vmatpush1.bf16.msra.mxu0 %v1618
      %2687 = vmatprep.subr.bf16.mxu0 0
      %2688 = vmatpush1.bf16.msra.mxu0 %v1619
      %2689 = vmatprep.subr.bf16.mxu0 0
      %2690 = vmatpush1.bf16.msra.mxu0 %v1620
      %2691 = vmatprep.subr.bf16.mxu0 0
      %2692 = vmatpush1.bf16.msra.mxu0 %v1621
      %2693 = vmatprep.subr.bf16.mxu0 0
      %2694 = vmatpush1.bf16.msra.mxu0 %v1622
      %2695 = vmatprep.subr.bf16.mxu0 0
      %2696 = vmatpush1.bf16.msra.mxu0 %v1623
      %2697 = vmatprep.subr.bf16.mxu0 0
      %2698 = vmatpush1.bf16.msra.mxu0 %v1624
      %2699 = vmatprep.subr.bf16.mxu0 0
      %2700 = vmatpush1.bf16.msra.mxu0 %v1625
      %2701 = vmatprep.mubr.bf16.mxu0 %v912
      %2702 = vmatmul.mubr.bf16.gmra.mrb[0].mxu0 %v911
      %v2703 = vpop.f32.mrb[0].mxu0
      %v2704 = vadd.f32 %v2383, %v2703
      %v2705 = vpop.f32.mrb[0].mxu0
      %v2706 = vpop.f32.mrb[0].mxu0
      %v2707 = vadd.f32 %v2386, %v2706
      %v2708 = vpop.f32.mrb[0].mxu0
      %2709 = vmatprep.mubr.bf16.mxu0 %v921
      %2710 = vmatmul.mubr.bf16.gmra.mrb[0].mxu0 %v920
      %v2711 = vpop.f32.mrb[0].mxu0
      %v2712 = vadd.f32 %v2391, %v2711
      %v2713 = vpop.f32.mrb[0].mxu0
      %v2714 = vpop.f32.mrb[0].mxu0
      %v2715 = vadd.f32 %v2394, %v2714
      %v2716 = vpop.f32.mrb[0].mxu0
      %2717 = vmatprep.mubr.bf16.mxu0 %v930
      %2718 = vmatmul.mubr.bf16.gmra.mrb[0].mxu0 %v929
      %v2719 = vpop.f32.mrb[0].mxu0
      %v2720 = vadd.f32 %v2399, %v2719
      %v2721 = vpop.f32.mrb[0].mxu0
      %v2722 = vpop.f32.mrb[0].mxu0
      %v2723 = vadd.f32 %v2402, %v2722
      %v2724 = vpop.f32.mrb[0].mxu0
      %2725 = vmatprep.mubr.bf16.mxu0 %v936
      %2726 = vmatmul.mubr.bf16.gmra.mrb[0].mxu0 %v935
      %v2727 = vpop.f32.mrb[0].mxu0
      %v2728 = vadd.f32 %v2407, %v2727
      %v2729 = vpop.f32.mrb[0].mxu0
      %v2730 = vpop.f32.mrb[0].mxu0
      %v2731 = vadd.f32 %v2410, %v2730
      %v2732 = vpop.f32.mrb[0].mxu0
      %2733 = vmatprep.mubr.bf16.mxu0 %v942
      %2734 = vmatmul.mubr.bf16.gmra.mrb[0].mxu0 %v941
      %v2735 = vpop.f32.mrb[0].mxu0
      %v2736 = vadd.f32 %v2415, %v2735
      %v2737 = vpop.f32.mrb[0].mxu0
      %v2738 = vpop.f32.mrb[0].mxu0
      %v2739 = vadd.f32 %v2418, %v2738
      %v2740 = vpop.f32.mrb[0].mxu0
      %2741 = vmatprep.mubr.bf16.mxu0 %v948
      %2742 = vmatmul.mubr.bf16.gmra.mrb[0].mxu0 %v947
      %v2743 = vpop.f32.mrb[0].mxu0
      %v2744 = vadd.f32 %v2423, %v2743
      %v2745 = vpop.f32.mrb[0].mxu0
      %v2746 = vpop.f32.mrb[0].mxu0
      %v2747 = vadd.f32 %v2426, %v2746
      %v2748 = vpop.f32.mrb[0].mxu0
      %2749 = vmatprep.mubr.bf16.mxu0 %v954
      %2750 = vmatmul.mubr.bf16.gmra.mrb[0].mxu0 %v953
      %v2751 = vpop.f32.mrb[0].mxu0
      %v2752 = vadd.f32 %v2431, %v2751
      %v2753 = vpop.f32.mrb[0].mxu0
      %v2754 = vpop.f32.mrb[0].mxu0
      %v2755 = vadd.f32 %v2434, %v2754
      %v2756 = vpop.f32.mrb[0].mxu0
      %2757 = vmatprep.mubr.bf16.mxu0 %v960
      %2758 = vmatmul.mubr.bf16.gmra.mrb[0].mxu0 %v959
      %v2759 = vpop.f32.mrb[0].mxu0
      %v2760 = vadd.f32 %v2439, %v2759
      %v2761 = vpop.f32.mrb[0].mxu0
      %v2762 = vpop.f32.mrb[0].mxu0
      %v2763 = vadd.f32 %v2442, %v2762
      %v2764 = vpop.f32.mrb[0].mxu0
      %2765 = vmatprep.mubr.bf16.mxu0 %v966
      %2766 = vmatmul.mubr.bf16.gmra.mrb[0].mxu0 %v965
      %v2767 = vpop.f32.mrb[0].mxu0
      %v2768 = vadd.f32 %v2447, %v2767
      %v2769 = vpop.f32.mrb[0].mxu0
      %v2770 = vpop.f32.mrb[0].mxu0
      %v2771 = vadd.f32 %v2450, %v2770
      %v2772 = vpop.f32.mrb[0].mxu0
      %2773 = vmatprep.mubr.bf16.mxu0 %v972
      %2774 = vmatmul.mubr.bf16.gmra.mrb[0].mxu0 %v971
      %v2775 = vpop.f32.mrb[0].mxu0
      %v2776 = vadd.f32 %v2455, %v2775
      %v2777 = vpop.f32.mrb[0].mxu0
      %v2778 = vpop.f32.mrb[0].mxu0
      %v2779 = vadd.f32 %v2458, %v2778
      %v2780 = vpop.f32.mrb[0].mxu0
      %2781 = vmatprep.mubr.bf16.mxu0 %v978
      %2782 = vmatmul.mubr.bf16.gmra.mrb[0].mxu0 %v977
      %v2783 = vpop.f32.mrb[0].mxu0
      %v2784 = vadd.f32 %v2463, %v2783
      %v2785 = vpop.f32.mrb[0].mxu0
      %v2786 = vpop.f32.mrb[0].mxu0
      %v2787 = vadd.f32 %v2466, %v2786
      %v2788 = vpop.f32.mrb[0].mxu0
      %2789 = vmatprep.mubr.bf16.mxu0 %v984
      %2790 = vmatmul.mubr.bf16.gmra.mrb[0].mxu0 %v983
      %v2791 = vpop.f32.mrb[0].mxu0
      %v2792 = vadd.f32 %v2471, %v2791
      %v2793 = vpop.f32.mrb[0].mxu0
      %v2794 = vpop.f32.mrb[0].mxu0
      %v2795 = vadd.f32 %v2474, %v2794
      %v2796 = vpop.f32.mrb[0].mxu0
      %2797 = vmatprep.mubr.bf16.mxu0 %v990
      %2798 = vmatmul.mubr.bf16.gmra.mrb[0].mxu0 %v989
      %v2799 = vpop.f32.mrb[0].mxu0
      %v2800 = vadd.f32 %v2479, %v2799
      %v2801 = vpop.f32.mrb[0].mxu0
      %v2802 = vpop.f32.mrb[0].mxu0
      %v2803 = vadd.f32 %v2482, %v2802
      %v2804 = vpop.f32.mrb[0].mxu0
      %2805 = vmatprep.mubr.bf16.mxu0 %v996
      %2806 = vmatmul.mubr.bf16.gmra.mrb[0].mxu0 %v995
      %v2807 = vpop.f32.mrb[0].mxu0
      %v2808 = vadd.f32 %v2487, %v2807
      %v2809 = vpop.f32.mrb[0].mxu0
      %v2810 = vpop.f32.mrb[0].mxu0
      %v2811 = vadd.f32 %v2490, %v2810
      %v2812 = vpop.f32.mrb[0].mxu0
      %2813 = vmatprep.mubr.bf16.mxu0 %v1002
      %2814 = vmatmul.mubr.bf16.gmra.mrb[0].mxu0 %v1001
      %v2815 = vpop.f32.mrb[0].mxu0
      %v2816 = vadd.f32 %v2495, %v2815
      %v2817 = vpop.f32.mrb[0].mxu0
      %v2818 = vpop.f32.mrb[0].mxu0
      %v2819 = vadd.f32 %v2498, %v2818
      %v2820 = vpop.f32.mrb[0].mxu0
      %2821 = vmatprep.mubr.bf16.mxu0 %v1008
      %2822 = vmatmul.mubr.bf16.gmra.mrb[0].mxu0 %v1007
      %v2823 = vpop.f32.mrb[0].mxu0
      %v2824 = vadd.f32 %v2503, %v2823
      %v2825 = vpop.f32.mrb[0].mxu0
      %v2826 = vpop.f32.mrb[0].mxu0
      %v2827 = vadd.f32 %v2506, %v2826
      %v2828 = vpop.f32.mrb[0].mxu0
      %2829 = vmatprep.mubr.bf16.mxu0 %v1014
      %2830 = vmatmul.mubr.bf16.gmra.mrb[0].mxu0 %v1013
      %v2831 = vpop.f32.mrb[0].mxu0
      %v2832 = vadd.f32 %v2511, %v2831
      %v2833 = vpop.f32.mrb[0].mxu0
      %v2834 = vpop.f32.mrb[0].mxu0
      %v2835 = vadd.f32 %v2514, %v2834
      %v2836 = vpop.f32.mrb[0].mxu0
      %2837 = vmatprep.mubr.bf16.mxu0 %v1020
      %2838 = vmatmul.mubr.bf16.gmra.mrb[0].mxu0 %v1019
      %v2839 = vpop.f32.mrb[0].mxu0
      %v2840 = vadd.f32 %v2519, %v2839
      %v2841 = vpop.f32.mrb[0].mxu0
      %v2842 = vpop.f32.mrb[0].mxu0
      %v2843 = vadd.f32 %v2522, %v2842
      %v2844 = vpop.f32.mrb[0].mxu0
      %2845 = vmatprep.mubr.bf16.mxu0 %v1026
      %2846 = vmatmul.mubr.bf16.gmra.mrb[0].mxu0 %v1025
      %v2847 = vpop.f32.mrb[0].mxu0
      %v2848 = vadd.f32 %v2527, %v2847
      %v2849 = vpop.f32.mrb[0].mxu0
      %v2850 = vpop.f32.mrb[0].mxu0
      %v2851 = vadd.f32 %v2530, %v2850
      %v2852 = vpop.f32.mrb[0].mxu0
      %2853 = vmatprep.mubr.bf16.mxu0 %v1032
      %2854 = vmatmul.mubr.bf16.gmra.mrb[0].mxu0 %v1031
      %v2855 = vpop.f32.mrb[0].mxu0
      %v2856 = vadd.f32 %v2535, %v2855
      %v2857 = vpop.f32.mrb[0].mxu0
      %v2858 = vpop.f32.mrb[0].mxu0
      %v2859 = vadd.f32 %v2538, %v2858
      %v2860 = vpop.f32.mrb[0].mxu0
      %2861 = vmatprep.mubr.bf16.mxu0 %v1038
      %2862 = vmatmul.mubr.bf16.gmra.mrb[0].mxu0 %v1037
      %v2863 = vpop.f32.mrb[0].mxu0
      %v2864 = vadd.f32 %v2543, %v2863
      %v2865 = vpop.f32.mrb[0].mxu0
      %v2866 = vpop.f32.mrb[0].mxu0
      %v2867 = vadd.f32 %v2546, %v2866
      %v2868 = vpop.f32.mrb[0].mxu0
      %2869 = vmatprep.mubr.bf16.mxu0 %v1044
      %2870 = vmatmul.mubr.bf16.gmra.mrb[0].mxu0 %v1043
      %v2871 = vpop.f32.mrb[0].mxu0
      %v2872 = vadd.f32 %v2551, %v2871
      %v2873 = vpop.f32.mrb[0].mxu0
      %v2874 = vpop.f32.mrb[0].mxu0
      %v2875 = vadd.f32 %v2554, %v2874
      %v2876 = vpop.f32.mrb[0].mxu0
      %2877 = vmatprep.mubr.bf16.mxu0 %v1050
      %2878 = vmatmul.mubr.bf16.gmra.mrb[0].mxu0 %v1049
      %v2879 = vpop.f32.mrb[0].mxu0
      %v2880 = vadd.f32 %v2559, %v2879
      %v2881 = vpop.f32.mrb[0].mxu0
      %v2882 = vpop.f32.mrb[0].mxu0
      %v2883 = vadd.f32 %v2562, %v2882
      %v2884 = vpop.f32.mrb[0].mxu0
      %2885 = vmatprep.mubr.bf16.mxu0 %v1056
      %2886 = vmatmul.mubr.bf16.gmra.mrb[0].mxu0 %v1055
      %v2887 = vpop.f32.mrb[0].mxu0
      %v2888 = vadd.f32 %v2567, %v2887
      %v2889 = vpop.f32.mrb[0].mxu0
      %v2890 = vpop.f32.mrb[0].mxu0
      %v2891 = vadd.f32 %v2570, %v2890
      %v2892 = vpop.f32.mrb[0].mxu0
      %2893 = vmatprep.mubr.bf16.mxu0 %v1062
      %2894 = vmatmul.mubr.bf16.gmra.mrb[0].mxu0 %v1061
      %v2895 = vpop.f32.mrb[0].mxu0
      %v2896 = vadd.f32 %v2575, %v2895
      %v2897 = vpop.f32.mrb[0].mxu0
      %v2898 = vpop.f32.mrb[0].mxu0
      %v2899 = vadd.f32 %v2578, %v2898
      %v2900 = vpop.f32.mrb[0].mxu0
      %2901 = vmatprep.mubr.bf16.mxu0 %v1068
      %2902 = vmatmul.mubr.bf16.gmra.mrb[0].mxu0 %v1067
      %v2903 = vpop.f32.mrb[0].mxu0
      %v2904 = vadd.f32 %v2583, %v2903
      %v2905 = vpop.f32.mrb[0].mxu0
      %v2906 = vpop.f32.mrb[0].mxu0
      %v2907 = vadd.f32 %v2586, %v2906
      %v2908 = vpop.f32.mrb[0].mxu0
      %2909 = vmatprep.mubr.bf16.mxu0 %v1074
      %2910 = vmatmul.mubr.bf16.gmra.mrb[0].mxu0 %v1073
      %v2911 = vpop.f32.mrb[0].mxu0
      %v2912 = vadd.f32 %v2591, %v2911
      %v2913 = vpop.f32.mrb[0].mxu0
      %v2914 = vpop.f32.mrb[0].mxu0
      %v2915 = vadd.f32 %v2594, %v2914
      %v2916 = vpop.f32.mrb[0].mxu0
      %2917 = vmatprep.mubr.bf16.mxu0 %v1080
      %2918 = vmatmul.mubr.bf16.gmra.mrb[0].mxu0 %v1079
      %v2919 = vpop.f32.mrb[0].mxu0
      %v2920 = vadd.f32 %v2599, %v2919
      %v2921 = vpop.f32.mrb[0].mxu0
      %v2922 = vpop.f32.mrb[0].mxu0
      %v2923 = vadd.f32 %v2602, %v2922
      %v2924 = vpop.f32.mrb[0].mxu0
      %2925 = vmatprep.mubr.bf16.mxu0 %v1086
      %2926 = vmatmul.mubr.bf16.gmra.mrb[0].mxu0 %v1085
      %v2927 = vpop.f32.mrb[0].mxu0
      %v2928 = vadd.f32 %v2607, %v2927
      %v2929 = vpop.f32.mrb[0].mxu0
      %v2930 = vpop.f32.mrb[0].mxu0
      %v2931 = vadd.f32 %v2610, %v2930
      %v2932 = vpop.f32.mrb[0].mxu0
      %2933 = vmatprep.mubr.bf16.mxu0 %v1092
      %2934 = vmatmul.mubr.bf16.gmra.mrb[0].mxu0 %v1091
      %v2935 = vpop.f32.mrb[0].mxu0
      %v2936 = vadd.f32 %v2615, %v2935
      %v2937 = vpop.f32.mrb[0].mxu0
      %v2938 = vpop.f32.mrb[0].mxu0
      %v2939 = vadd.f32 %v2618, %v2938
      %v2940 = vpop.f32.mrb[0].mxu0
      %2941 = vmatprep.mubr.bf16.mxu0 %v1098
      %2942 = vmatmul.mubr.bf16.gmra.mrb[0].mxu0 %v1097
      %v2943 = vpop.f32.mrb[0].mxu0
      %v2944 = vadd.f32 %v2623, %v2943
      %v2945 = vpop.f32.mrb[0].mxu0
      %v2946 = vpop.f32.mrb[0].mxu0
      %v2947 = vadd.f32 %v2626, %v2946
      %v2948 = vpop.f32.mrb[0].mxu0
      %2949 = vmatprep.mubr.bf16.mxu0 %v1104
      %2950 = vmatmul.mubr.bf16.gmra.mrb[0].mxu0 %v1103
      %v2951 = vpop.f32.mrb[0].mxu0
      %v2952 = vadd.f32 %v2631, %v2951
      %v2953 = vpop.f32.mrb[0].mxu0
      %v2954 = vpop.f32.mrb[0].mxu0
      %v2955 = vadd.f32 %v2634, %v2954
      %v2956 = vpop.f32.mrb[0].mxu0
      %2957 = vmatprep.mubr.bf16.mxu0 %v1110
      %2958 = vmatmul.mubr.bf16.gmra.mrb[0].mxu0 %v1109
      %v2959 = vpop.f32.mrb[0].mxu0
      %v2960 = vadd.f32 %v2639, %v2959
      %v2961 = vpop.f32.mrb[0].mxu0
      %v2962 = vpop.f32.mrb[0].mxu0
      %v2963 = vadd.f32 %v2642, %v2962
      %v2964 = vpop.f32.mrb[0].mxu0
      %2965 = vmatprep.mubr.bf16.mxu0 %v1116
      %2966 = vmatmul.mubr.bf16.gmra.mrb[0].mxu0 %v1115
      %v2967 = vpop.f32.mrb[0].mxu0
      %v2968 = vadd.f32 %v2647, %v2967
      %v2969 = vpop.f32.mrb[0].mxu0
      %v2970 = vpop.f32.mrb[0].mxu0
      %v2971 = vadd.f32 %v2650, %v2970
      %v2972 = vpop.f32.mrb[0].mxu0
      %2973 = vmatprep.mubr.bf16.mxu0 %v1122
      %2974 = vmatmul.mubr.bf16.gmra.mrb[0].mxu0 %v1121
      %v2975 = vpop.f32.mrb[0].mxu0
      %v2976 = vadd.f32 %v2655, %v2975
      %v2977 = vpop.f32.mrb[0].mxu0
      %v2978 = vpop.f32.mrb[0].mxu0
      %v2979 = vadd.f32 %v2658, %v2978
      %v2980 = vpop.f32.mrb[0].mxu0
      %2981 = vmatprep.mubr.bf16.mxu0 %v1128
      %2982 = vmatmul.mubr.bf16.gmra.mrb[0].mxu0 %v1127
      %v2983 = vpop.f32.mrb[0].mxu0
      %v2984 = vadd.f32 %v2663, %v2983
      %v2985 = vpop.f32.mrb[0].mxu0
      %v2986 = vpop.f32.mrb[0].mxu0
      %v2987 = vadd.f32 %v2666, %v2986
      %v2988 = vpop.f32.mrb[0].mxu0
      %2989 = vdwg.mxu0
      %2990 = vmatprep.subr.bf16.mxu0 0
      %2991 = vmatpush1.bf16.msra.mxu0 %v1626
      %2992 = vmatprep.subr.bf16.mxu0 0
      %2993 = vmatpush1.bf16.msra.mxu0 %v1627
      %2994 = vmatprep.subr.bf16.mxu0 0
      %2995 = vmatpush1.bf16.msra.mxu0 %v1628
      %2996 = vmatprep.subr.bf16.mxu0 0
      %2997 = vmatpush1.bf16.msra.mxu0 %v1629
      %2998 = vmatprep.subr.bf16.mxu0 0
      %2999 = vmatpush1.bf16.msra.mxu0 %v1630
      %3000 = vmatprep.subr.bf16.mxu0 0
      %3001 = vmatpush1.bf16.msra.mxu0 %v1631
      %3002 = vmatprep.subr.bf16.mxu0 0
      %3003 = vmatpush1.bf16.msra.mxu0 %v1632
      %3004 = vmatprep.subr.bf16.mxu0 0
      %3005 = vmatpush1.bf16.msra.mxu0 %v1633
      %3006 = vmatprep.subr.bf16.mxu0 0
      %3007 = vmatpush1.bf16.msra.mxu0 0
      %3008 = vmatprep.subr.bf16.mxu0 0
      %3009 = vmatpush1.bf16.msra.mxu0 0
      %3010 = vmatprep.subr.bf16.mxu0 0
      %3011 = vmatpush1.bf16.msra.mxu0 0
      %3012 = vmatprep.subr.bf16.mxu0 0
      %3013 = vmatpush1.bf16.msra.mxu0 0
      %3014 = vmatprep.subr.bf16.mxu0 0
      %3015 = vmatpush1.bf16.msra.mxu0 0
      %3016 = vmatprep.subr.bf16.mxu0 0
      %3017 = vmatpush1.bf16.msra.mxu0 0
      %3018 = vmatprep.subr.bf16.mxu0 0
      %3019 = vmatpush1.bf16.msra.mxu0 0
      %3020 = vmatprep.subr.bf16.mxu0 0
      %3021 = vmatpush1.bf16.msra.mxu0 0
      %3022 = vmatprep.mubr.bf16.mxu0 0
      %3023 = vmatmul.mubr.bf16.gmra.mrb[0].mxu0 %v913
      %v3024 = vpop.f32.mrb[0].mxu0
      %v3025 = vadd.f32 %v2704, %v3024
      %v3026 = vpop.f32.mrb[0].mxu0
      %v3027 = vpop.f32.mrb[0].mxu0
      %v3028 = vadd.f32 %v2707, %v3027
      %v3029 = vpop.f32.mrb[0].mxu0
      %3030 = vmatprep.mubr.bf16.mxu0 0
      %3031 = vmatmul.mubr.bf16.gmra.mrb[0].mxu0 %v922
      %v3032 = vpop.f32.mrb[0].mxu0
      %v3033 = vadd.f32 %v2712, %v3032
      %v3034 = vpop.f32.mrb[0].mxu0
      %v3035 = vpop.f32.mrb[0].mxu0
      %v3036 = vadd.f32 %v2715, %v3035
      %v3037 = vpop.f32.mrb[0].mxu0
      %3038 = vmatprep.mubr.bf16.mxu0 0
      %3039 = vmatmul.mubr.bf16.gmra.mrb[0].mxu0 %v931
      %v3040 = vpop.f32.mrb[0].mxu0
      %v3041 = vadd.f32 %v2720, %v3040
      %v3042 = vpop.f32.mrb[0].mxu0
      %v3043 = vpop.f32.mrb[0].mxu0
      %v3044 = vadd.f32 %v2723, %v3043
      %v3045 = vpop.f32.mrb[0].mxu0
      %3046 = vmatprep.mubr.bf16.mxu0 0
      %3047 = vmatmul.mubr.bf16.gmra.mrb[0].mxu0 %v937
      %v3048 = vpop.f32.mrb[0].mxu0
      %v3049 = vadd.f32 %v2728, %v3048
      %v3050 = vpop.f32.mrb[0].mxu0
      %v3051 = vpop.f32.mrb[0].mxu0
      %v3052 = vadd.f32 %v2731, %v3051
      %v3053 = vpop.f32.mrb[0].mxu0
      %3054 = vmatprep.mubr.bf16.mxu0 0
      %3055 = vmatmul.mubr.bf16.gmra.mrb[0].mxu0 %v943
      %v3056 = vpop.f32.mrb[0].mxu0
      %v3057 = vadd.f32 %v2736, %v3056
      %v3058 = vpop.f32.mrb[0].mxu0
      %v3059 = vpop.f32.mrb[0].mxu0
      %v3060 = vadd.f32 %v2739, %v3059
      %v3061 = vpop.f32.mrb[0].mxu0
      %3062 = vmatprep.mubr.bf16.mxu0 0
      %3063 = vmatmul.mubr.bf16.gmra.mrb[0].mxu0 %v949
      %v3064 = vpop.f32.mrb[0].mxu0
      %v3065 = vadd.f32 %v2744, %v3064
      %v3066 = vpop.f32.mrb[0].mxu0
      %v3067 = vpop.f32.mrb[0].mxu0
      %v3068 = vadd.f32 %v2747, %v3067
      %v3069 = vpop.f32.mrb[0].mxu0
      %3070 = vmatprep.mubr.bf16.mxu0 0
      %3071 = vmatmul.mubr.bf16.gmra.mrb[0].mxu0 %v955
      %v3072 = vpop.f32.mrb[0].mxu0
      %v3073 = vadd.f32 %v2752, %v3072
      %v3074 = vpop.f32.mrb[0].mxu0
      %v3075 = vpop.f32.mrb[0].mxu0
      %v3076 = vadd.f32 %v2755, %v3075
      %v3077 = vpop.f32.mrb[0].mxu0
      %3078 = vmatprep.mubr.bf16.mxu0 0
      %3079 = vmatmul.mubr.bf16.gmra.mrb[0].mxu0 %v961
      %v3080 = vpop.f32.mrb[0].mxu0
      %v3081 = vadd.f32 %v2760, %v3080
      %v3082 = vpop.f32.mrb[0].mxu0
      %v3083 = vpop.f32.mrb[0].mxu0
      %v3084 = vadd.f32 %v2763, %v3083
      %v3085 = vpop.f32.mrb[0].mxu0
      %3086 = vmatprep.mubr.bf16.mxu0 0
      %3087 = vmatmul.mubr.bf16.gmra.mrb[0].mxu0 %v967
      %v3088 = vpop.f32.mrb[0].mxu0
      %v3089 = vadd.f32 %v2768, %v3088
      %v3090 = vpop.f32.mrb[0].mxu0
      %v3091 = vpop.f32.mrb[0].mxu0
      %v3092 = vadd.f32 %v2771, %v3091
      %v3093 = vpop.f32.mrb[0].mxu0
      %3094 = vmatprep.mubr.bf16.mxu0 0
      %3095 = vmatmul.mubr.bf16.gmra.mrb[0].mxu0 %v973
      %v3096 = vpop.f32.mrb[0].mxu0
      %v3097 = vadd.f32 %v2776, %v3096
      %v3098 = vpop.f32.mrb[0].mxu0
      %v3099 = vpop.f32.mrb[0].mxu0
      %v3100 = vadd.f32 %v2779, %v3099
      %v3101 = vpop.f32.mrb[0].mxu0
      %3102 = vmatprep.mubr.bf16.mxu0 0
      %3103 = vmatmul.mubr.bf16.gmra.mrb[0].mxu0 %v979
      %v3104 = vpop.f32.mrb[0].mxu0
      %v3105 = vadd.f32 %v2784, %v3104
      %v3106 = vpop.f32.mrb[0].mxu0
      %v3107 = vpop.f32.mrb[0].mxu0
      %v3108 = vadd.f32 %v2787, %v3107
      %v3109 = vpop.f32.mrb[0].mxu0
      %3110 = vmatprep.mubr.bf16.mxu0 0
      %3111 = vmatmul.mubr.bf16.gmra.mrb[0].mxu0 %v985
      %v3112 = vpop.f32.mrb[0].mxu0
      %v3113 = vadd.f32 %v2792, %v3112
      %v3114 = vpop.f32.mrb[0].mxu0
      %v3115 = vpop.f32.mrb[0].mxu0
      %v3116 = vadd.f32 %v2795, %v3115
      %v3117 = vpop.f32.mrb[0].mxu0
      %3118 = vmatprep.mubr.bf16.mxu0 0
      %3119 = vmatmul.mubr.bf16.gmra.mrb[0].mxu0 %v991
      %v3120 = vpop.f32.mrb[0].mxu0
      %v3121 = vadd.f32 %v2800, %v3120
      %v3122 = vpop.f32.mrb[0].mxu0
      %v3123 = vpop.f32.mrb[0].mxu0
      %v3124 = vadd.f32 %v2803, %v3123
      %v3125 = vpop.f32.mrb[0].mxu0
      %3126 = vmatprep.mubr.bf16.mxu0 0
      %3127 = vmatmul.mubr.bf16.gmra.mrb[0].mxu0 %v997
      %v3128 = vpop.f32.mrb[0].mxu0
      %v3129 = vadd.f32 %v2808, %v3128
      %v3130 = vpop.f32.mrb[0].mxu0
      %v3131 = vpop.f32.mrb[0].mxu0
      %v3132 = vadd.f32 %v2811, %v3131
      %v3133 = vpop.f32.mrb[0].mxu0
      %3134 = vmatprep.mubr.bf16.mxu0 0
      %3135 = vmatmul.mubr.bf16.gmra.mrb[0].mxu0 %v1003
      %v3136 = vpop.f32.mrb[0].mxu0
      %v3137 = vadd.f32 %v2816, %v3136
      %v3138 = vpop.f32.mrb[0].mxu0
      %v3139 = vpop.f32.mrb[0].mxu0
      %v3140 = vadd.f32 %v2819, %v3139
      %v3141 = vpop.f32.mrb[0].mxu0
      %3142 = vmatprep.mubr.bf16.mxu0 0
      %3143 = vmatmul.mubr.bf16.gmra.mrb[0].mxu0 %v1009
      %v3144 = vpop.f32.mrb[0].mxu0
      %v3145 = vadd.f32 %v2824, %v3144
      %v3146 = vpop.f32.mrb[0].mxu0
      %v3147 = vpop.f32.mrb[0].mxu0
      %v3148 = vadd.f32 %v2827, %v3147
      %v3149 = vpop.f32.mrb[0].mxu0
      %3150 = vmatprep.mubr.bf16.mxu0 0
      %3151 = vmatmul.mubr.bf16.gmra.mrb[0].mxu0 %v1015
      %v3152 = vpop.f32.mrb[0].mxu0
      %v3153 = vadd.f32 %v2832, %v3152
      %v3154 = vpop.f32.mrb[0].mxu0
      %v3155 = vpop.f32.mrb[0].mxu0
      %v3156 = vadd.f32 %v2835, %v3155
      %v3157 = vpop.f32.mrb[0].mxu0
      %3158 = vmatprep.mubr.bf16.mxu0 0
      %3159 = vmatmul.mubr.bf16.gmra.mrb[0].mxu0 %v1021
      %v3160 = vpop.f32.mrb[0].mxu0
      %v3161 = vadd.f32 %v2840, %v3160
      %v3162 = vpop.f32.mrb[0].mxu0
      %v3163 = vpop.f32.mrb[0].mxu0
      %v3164 = vadd.f32 %v2843, %v3163
      %v3165 = vpop.f32.mrb[0].mxu0
      %3166 = vmatprep.mubr.bf16.mxu0 0
      %3167 = vmatmul.mubr.bf16.gmra.mrb[0].mxu0 %v1027
      %v3168 = vpop.f32.mrb[0].mxu0
      %v3169 = vadd.f32 %v2848, %v3168
      %v3170 = vpop.f32.mrb[0].mxu0
      %v3171 = vpop.f32.mrb[0].mxu0
      %v3172 = vadd.f32 %v2851, %v3171
      %v3173 = vpop.f32.mrb[0].mxu0
      %3174 = vmatprep.mubr.bf16.mxu0 0
      %3175 = vmatmul.mubr.bf16.gmra.mrb[0].mxu0 %v1033
      %v3176 = vpop.f32.mrb[0].mxu0
      %v3177 = vadd.f32 %v2856, %v3176
      %v3178 = vpop.f32.mrb[0].mxu0
      %v3179 = vpop.f32.mrb[0].mxu0
      %v3180 = vadd.f32 %v2859, %v3179
      %v3181 = vpop.f32.mrb[0].mxu0
      %3182 = vmatprep.mubr.bf16.mxu0 0
      %3183 = vmatmul.mubr.bf16.gmra.mrb[0].mxu0 %v1039
      %v3184 = vpop.f32.mrb[0].mxu0
      %v3185 = vadd.f32 %v2864, %v3184
      %v3186 = vpop.f32.mrb[0].mxu0
      %v3187 = vpop.f32.mrb[0].mxu0
      %v3188 = vadd.f32 %v2867, %v3187
      %v3189 = vpop.f32.mrb[0].mxu0
      %3190 = vmatprep.mubr.bf16.mxu0 0
      %3191 = vmatmul.mubr.bf16.gmra.mrb[0].mxu0 %v1045
      %v3192 = vpop.f32.mrb[0].mxu0
      %v3193 = vadd.f32 %v2872, %v3192
      %v3194 = vpop.f32.mrb[0].mxu0
      %v3195 = vpop.f32.mrb[0].mxu0
      %v3196 = vadd.f32 %v2875, %v3195
      %v3197 = vpop.f32.mrb[0].mxu0
      %3198 = vmatprep.mubr.bf16.mxu0 0
      %3199 = vmatmul.mubr.bf16.gmra.mrb[0].mxu0 %v1051
      %v3200 = vpop.f32.mrb[0].mxu0
      %v3201 = vadd.f32 %v2880, %v3200
      %v3202 = vpop.f32.mrb[0].mxu0
      %v3203 = vpop.f32.mrb[0].mxu0
      %v3204 = vadd.f32 %v2883, %v3203
      %v3205 = vpop.f32.mrb[0].mxu0
      %3206 = vmatprep.mubr.bf16.mxu0 0
      %3207 = vmatmul.mubr.bf16.gmra.mrb[0].mxu0 %v1057
      %v3208 = vpop.f32.mrb[0].mxu0
      %v3209 = vadd.f32 %v2888, %v3208
      %v3210 = vpop.f32.mrb[0].mxu0
      %v3211 = vpop.f32.mrb[0].mxu0
      %v3212 = vadd.f32 %v2891, %v3211
      %v3213 = vpop.f32.mrb[0].mxu0
      %3214 = vmatprep.mubr.bf16.mxu0 0
      %3215 = vmatmul.mubr.bf16.gmra.mrb[0].mxu0 %v1063
      %v3216 = vpop.f32.mrb[0].mxu0
      %v3217 = vadd.f32 %v2896, %v3216
      %v3218 = vpop.f32.mrb[0].mxu0
      %v3219 = vpop.f32.mrb[0].mxu0
      %v3220 = vadd.f32 %v2899, %v3219
      %v3221 = vpop.f32.mrb[0].mxu0
      %3222 = vmatprep.mubr.bf16.mxu0 0
      %3223 = vmatmul.mubr.bf16.gmra.mrb[0].mxu0 %v1069
      %v3224 = vpop.f32.mrb[0].mxu0
      %v3225 = vadd.f32 %v2904, %v3224
      %v3226 = vpop.f32.mrb[0].mxu0
      %v3227 = vpop.f32.mrb[0].mxu0
      %v3228 = vadd.f32 %v2907, %v3227
      %v3229 = vpop.f32.mrb[0].mxu0
      %3230 = vmatprep.mubr.bf16.mxu0 0
      %3231 = vmatmul.mubr.bf16.gmra.mrb[0].mxu0 %v1075
      %v3232 = vpop.f32.mrb[0].mxu0
      %v3233 = vadd.f32 %v2912, %v3232
      %v3234 = vpop.f32.mrb[0].mxu0
      %v3235 = vpop.f32.mrb[0].mxu0
      %v3236 = vadd.f32 %v2915, %v3235
      %v3237 = vpop.f32.mrb[0].mxu0
      %3238 = vmatprep.mubr.bf16.mxu0 0
      %3239 = vmatmul.mubr.bf16.gmra.mrb[0].mxu0 %v1081
      %v3240 = vpop.f32.mrb[0].mxu0
      %v3241 = vadd.f32 %v2920, %v3240
      %v3242 = vpop.f32.mrb[0].mxu0
      %v3243 = vpop.f32.mrb[0].mxu0
      %v3244 = vadd.f32 %v2923, %v3243
      %v3245 = vpop.f32.mrb[0].mxu0
      %3246 = vmatprep.mubr.bf16.mxu0 0
      %3247 = vmatmul.mubr.bf16.gmra.mrb[0].mxu0 %v1087
      %v3248 = vpop.f32.mrb[0].mxu0
      %v3249 = vadd.f32 %v2928, %v3248
      %v3250 = vpop.f32.mrb[0].mxu0
      %v3251 = vpop.f32.mrb[0].mxu0
      %v3252 = vadd.f32 %v2931, %v3251
      %v3253 = vpop.f32.mrb[0].mxu0
      %3254 = vmatprep.mubr.bf16.mxu0 0
      %3255 = vmatmul.mubr.bf16.gmra.mrb[0].mxu0 %v1093
      %v3256 = vpop.f32.mrb[0].mxu0
      %v3257 = vadd.f32 %v2936, %v3256
      %v3258 = vpop.f32.mrb[0].mxu0
      %v3259 = vpop.f32.mrb[0].mxu0
      %v3260 = vadd.f32 %v2939, %v3259
      %v3261 = vpop.f32.mrb[0].mxu0
      %3262 = vmatprep.mubr.bf16.mxu0 0
      %3263 = vmatmul.mubr.bf16.gmra.mrb[0].mxu0 %v1099
      %v3264 = vpop.f32.mrb[0].mxu0
      %v3265 = vadd.f32 %v2944, %v3264
      %v3266 = vpop.f32.mrb[0].mxu0
      %v3267 = vpop.f32.mrb[0].mxu0
      %v3268 = vadd.f32 %v2947, %v3267
      %v3269 = vpop.f32.mrb[0].mxu0
      %3270 = vmatprep.mubr.bf16.mxu0 0
      %3271 = vmatmul.mubr.bf16.gmra.mrb[0].mxu0 %v1105
      %v3272 = vpop.f32.mrb[0].mxu0
      %v3273 = vadd.f32 %v2952, %v3272
      %v3274 = vpop.f32.mrb[0].mxu0
      %v3275 = vpop.f32.mrb[0].mxu0
      %v3276 = vadd.f32 %v2955, %v3275
      %v3277 = vpop.f32.mrb[0].mxu0
      %3278 = vmatprep.mubr.bf16.mxu0 0
      %3279 = vmatmul.mubr.bf16.gmra.mrb[0].mxu0 %v1111
      %v3280 = vpop.f32.mrb[0].mxu0
      %v3281 = vadd.f32 %v2960, %v3280
      %v3282 = vpop.f32.mrb[0].mxu0
      %v3283 = vpop.f32.mrb[0].mxu0
      %v3284 = vadd.f32 %v2963, %v3283
      %v3285 = vpop.f32.mrb[0].mxu0
      %3286 = vmatprep.mubr.bf16.mxu0 0
      %3287 = vmatmul.mubr.bf16.gmra.mrb[0].mxu0 %v1117
      %v3288 = vpop.f32.mrb[0].mxu0
      %v3289 = vadd.f32 %v2968, %v3288
      %v3290 = vpop.f32.mrb[0].mxu0
      %v3291 = vpop.f32.mrb[0].mxu0
      %v3292 = vadd.f32 %v2971, %v3291
      %v3293 = vpop.f32.mrb[0].mxu0
      %3294 = vmatprep.mubr.bf16.mxu0 0
      %3295 = vmatmul.mubr.bf16.gmra.mrb[0].mxu0 %v1123
      %v3296 = vpop.f32.mrb[0].mxu0
      %v3297 = vadd.f32 %v2976, %v3296
      %v3298 = vpop.f32.mrb[0].mxu0
      %v3299 = vpop.f32.mrb[0].mxu0
      %v3300 = vadd.f32 %v2979, %v3299
      %v3301 = vpop.f32.mrb[0].mxu0
      %3302 = vmatprep.mubr.bf16.mxu0 0
      %3303 = vmatmul.mubr.bf16.gmra.mrb[0].mxu0 %v1129
      %v3304 = vpop.f32.mrb[0].mxu0
      %v3305 = vadd.f32 %v2984, %v3304
      %v3306 = vpop.f32.mrb[0].mxu0
      %v3307 = vpop.f32.mrb[0].mxu0
      %v3308 = vadd.f32 %v2987, %v3307
      %v3309 = vpop.f32.mrb[0].mxu0
      %3310 = vdwg.mxu0
      %3311 = vst [vmem:[%s168] sm:$0xff] %v3025
      %3312 = vst [vmem:[%s168 + $0x8] sm:$0xff] %v3028
      %3313 = vst [vmem:[%s168 + $0x10] sm:$0xff] %v3033
      %3314 = vst [vmem:[%s168 + $0x18] sm:$0xff] %v3036
      %3315 = vst [vmem:[%s168 + $0x20] sm:$0xff] %v3041
      %3316 = vst [vmem:[%s168 + $0x28] sm:$0xff] %v3044
      %3317 = vst [vmem:[%s168 + $0x30] sm:$0xff] %v3049
      %3318 = vst [vmem:[%s168 + $0x38] sm:$0xff] %v3052
      %3319 = vst [vmem:[%s168 + $0x40] sm:$0xff] %v3057
      %3320 = vst [vmem:[%s168 + $0x48] sm:$0xff] %v3060
      %3321 = vst [vmem:[%s168 + $0x50] sm:$0xff] %v3065
      %3322 = vst [vmem:[%s168 + $0x58] sm:$0xff] %v3068
      %3323 = vst [vmem:[%s168 + $0x60] sm:$0xff] %v3073
      %3324 = vst [vmem:[%s168 + $0x68] sm:$0xff] %v3076
      %3325 = vst [vmem:[%s168 + $0x70] sm:$0xff] %v3081
      %3326 = vst [vmem:[%s168 + $0x78] sm:$0xff] %v3084
      %3327 = vst [vmem:[%s168 + $0x80] sm:$0xff] %v3089
      %3328 = vst [vmem:[%s168 + $0x88] sm:$0xff] %v3092
      %3329 = vst [vmem:[%s168 + $0x90] sm:$0xff] %v3097
      %3330 = vst [vmem:[%s168 + $0x98] sm:$0xff] %v3100
      %3331 = vst [vmem:[%s168 + $0xa0] sm:$0xff] %v3105
      %3332 = vst [vmem:[%s168 + $0xa8] sm:$0xff] %v3108
      %3333 = vst [vmem:[%s168 + $0xb0] sm:$0xff] %v3113
      %3334 = vst [vmem:[%s168 + $0xb8] sm:$0xff] %v3116
      %3335 = vst [vmem:[%s168 + $0xc0] sm:$0xff] %v3121
      %3336 = vst [vmem:[%s168 + $0xc8] sm:$0xff] %v3124
      %3337 = vst [vmem:[%s168 + $0xd0] sm:$0xff] %v3129
      %3338 = vst [vmem:[%s168 + $0xd8] sm:$0xff] %v3132
      %3339 = vst [vmem:[%s168 + $0xe0] sm:$0xff] %v3137
      %3340 = vst [vmem:[%s168 + $0xe8] sm:$0xff] %v3140
      %3341 = vst [vmem:[%s168 + $0xf0] sm:$0xff] %v3145
      %3342 = vst [vmem:[%s168 + $0xf8] sm:$0xff] %v3148
      %3343 = vst [vmem:[%s168 + $0x100] sm:$0xff] %v3153
      %3344 = vst [vmem:[%s168 + $0x108] sm:$0xff] %v3156
      %3345 = vst [vmem:[%s168 + $0x110] sm:$0xff] %v3161
      %3346 = vst [vmem:[%s168 + $0x118] sm:$0xff] %v3164
      %3347 = vst [vmem:[%s168 + $0x120] sm:$0xff] %v3169
      %3348 = vst [vmem:[%s168 + $0x128] sm:$0xff] %v3172
      %3349 = vst [vmem:[%s168 + $0x130] sm:$0xff] %v3177
      %3350 = vst [vmem:[%s168 + $0x138] sm:$0xff] %v3180
      %3351 = vst [vmem:[%s168 + $0x140] sm:$0xff] %v3185
      %3352 = vst [vmem:[%s168 + $0x148] sm:$0xff] %v3188
      %3353 = vst [vmem:[%s168 + $0x150] sm:$0xff] %v3193
      %3354 = vst [vmem:[%s168 + $0x158] sm:$0xff] %v3196
      %3355 = vst [vmem:[%s168 + $0x160] sm:$0xff] %v3201
      %3356 = vst [vmem:[%s168 + $0x168] sm:$0xff] %v3204
      %3357 = vst [vmem:[%s168 + $0x170] sm:$0xff] %v3209
      %3358 = vst [vmem:[%s168 + $0x178] sm:$0xff] %v3212
      %3359 = vst [vmem:[%s168 + $0x180] sm:$0xff] %v3217
      %3360 = vst [vmem:[%s168 + $0x188] sm:$0xff] %v3220
      %3361 = vst [vmem:[%s168 + $0x190] sm:$0xff] %v3225
      %3362 = vst [vmem:[%s168 + $0x198] sm:$0xff] %v3228
      %3363 = vst [vmem:[%s168 + $0x1a0] sm:$0xff] %v3233
      %3364 = vst [vmem:[%s168 + $0x1a8] sm:$0xff] %v3236
      %3365 = vst [vmem:[%s168 + $0x1b0] sm:$0xff] %v3241
      %3366 = vst [vmem:[%s168 + $0x1b8] sm:$0xff] %v3244
      %3367 = vst [vmem:[%s168 + $0x1c0] sm:$0xff] %v3249
      %3368 = vst [vmem:[%s168 + $0x1c8] sm:$0xff] %v3252
      %3369 = vst [vmem:[%s168 + $0x1d0] sm:$0xff] %v3257
      %3370 = vst [vmem:[%s168 + $0x1d8] sm:$0xff] %v3260
      %3371 = vst [vmem:[%s168 + $0x1e0] sm:$0xff] %v3265
      %3372 = vst [vmem:[%s168 + $0x1e8] sm:$0xff] %v3268
      %3373 = vst [vmem:[%s168 + $0x1f0] sm:$0xff] %v3273
      %3374 = vst [vmem:[%s168 + $0x1f8] sm:$0xff] %v3276
      %3375 = vst [vmem:[%s168 + $0x200] sm:$0xff] %v3281
      %3376 = vst [vmem:[%s168 + $0x208] sm:$0xff] %v3284
      %3377 = vst [vmem:[%s168 + $0x210] sm:$0xff] %v3289
      %3378 = vst [vmem:[%s168 + $0x218] sm:$0xff] %v3292
      %3379 = vst [vmem:[%s168 + $0x220] sm:$0xff] %v3297
      %3380 = vst [vmem:[%s168 + $0x228] sm:$0xff] %v3300
      %3381 = vst [vmem:[%s168 + $0x230] sm:$0xff] %v3305
      %3382 = vst [vmem:[%s168 + $0x238] sm:$0xff] %v3308
      %v3383 = vld [vmem:[%s3] sm:$0x3]
      %v3384 = vadd.f32 %v3025, %v3028
      %v3385 = vadd.f32 %v3384, %v3033
      %v3386 = vadd.f32 %v3385, %v3036
      %v3387 = vadd.f32 %v3386, %v3041
      %v3388 = vadd.f32 %v3387, %v3044
      %v3389 = vadd.f32 %v3388, %v3049
      %v3390 = vadd.f32 %v3389, %v3052
      %v3391 = vadd.f32 %v3390, %v3057
      %v3392 = vadd.f32 %v3391, %v3060
      %v3393 = vadd.f32 %v3392, %v3065
      %v3394 = vadd.f32 %v3393, %v3068
      %v3395 = vadd.f32 %v3394, %v3073
      %v3396 = vadd.f32 %v3395, %v3076
      %v3397 = vadd.f32 %v3396, %v3081
      %v3398 = vadd.f32 %v3397, %v3084
      %v3399 = vadd.f32 %v3398, %v3089
      %v3400 = vadd.f32 %v3399, %v3092
      %v3401 = vadd.f32 %v3400, %v3097
      %v3402 = vadd.f32 %v3401, %v3100
      %v3403 = vadd.f32 %v3402, %v3105
      %v3404 = vadd.f32 %v3403, %v3108
      %v3405 = vadd.f32 %v3404, %v3113
      %v3406 = vadd.f32 %v3405, %v3116
      %v3407 = vadd.f32 %v3406, %v3121
      %v3408 = vadd.f32 %v3407, %v3124
      %v3409 = vadd.f32 %v3408, %v3129
      %v3410 = vadd.f32 %v3409, %v3132
      %v3411 = vadd.f32 %v3410, %v3137
      %v3412 = vadd.f32 %v3411, %v3140
      %v3413 = vadd.f32 %v3412, %v3145
      %v3414 = vadd.f32 %v3413, %v3148
      %v3415 = vadd.f32 %v3414, %v3153
      %v3416 = vadd.f32 %v3415, %v3156
      %v3417 = vadd.f32 %v3416, %v3161
      %v3418 = vadd.f32 %v3417, %v3164
      %v3419 = vadd.f32 %v3418, %v3169
      %v3420 = vadd.f32 %v3419, %v3172
      %v3421 = vadd.f32 %v3420, %v3177
      %v3422 = vadd.f32 %v3421, %v3180
      %v3423 = vadd.f32 %v3422, %v3185
      %v3424 = vadd.f32 %v3423, %v3188
      %v3425 = vadd.f32 %v3424, %v3193
      %v3426 = vadd.f32 %v3425, %v3196
      %v3427 = vadd.f32 %v3426, %v3201
      %v3428 = vadd.f32 %v3427, %v3204
      %v3429 = vadd.f32 %v3428, %v3209
      %v3430 = vadd.f32 %v3429, %v3212
      %v3431 = vadd.f32 %v3430, %v3217
      %v3432 = vadd.f32 %v3431, %v3220
      %v3433 = vadd.f32 %v3432, %v3225
      %v3434 = vadd.f32 %v3433, %v3228
      %v3435 = vadd.f32 %v3434, %v3233
      %v3436 = vadd.f32 %v3435, %v3236
      %v3437 = vadd.f32 %v3436, %v3241
      %v3438 = vadd.f32 %v3437, %v3244
      %v3439 = vadd.f32 %v3438, %v3249
      %v3440 = vadd.f32 %v3439, %v3252
      %v3441 = vadd.f32 %v3440, %v3257
      %v3442 = vadd.f32 %v3441, %v3260
      %v3443 = vadd.f32 %v3442, %v3265
      %v3444 = vadd.f32 %v3443, %v3268
      %v3445 = vadd.f32 %v3444, %v3273
      %v3446 = vadd.f32 %v3445, %v3276
      %v3447 = vadd.f32 %v3446, %v3281
      %v3448 = vadd.f32 %v3447, %v3284
      %v3449 = vadd.f32 %v3448, %v3289
      %v3450 = vadd.f32 %v3449, %v3292
      %v3451 = vadd.f32 %v3450, %v3297
      %v3452 = vadd.f32 %v3451, %v3300
      %v3453 = vadd.f32 %v3452, %v3305
      %v3454 = vadd.f32 %v3453, %v3308
      %v3455 = vrot.slane %v3454, 4
      %v3456 = vadd.f32 %v3454, %v3455
      %v3457 = vrot.slane %v3456, 2
      %v3458 = vadd.f32 %v3456, %v3457
      %v3459 = vrot.slane %v3458, 1
      %v3460 = vadd.f32 %v3458, %v3459
      %v3461 = vmul.f32 %v3025, %v3025
      %v3462 = vmul.f32 %v3028, %v3028
      %v3463 = vmul.f32 %v3033, %v3033
      %v3464 = vmul.f32 %v3036, %v3036
      %v3465 = vmul.f32 %v3041, %v3041
      %v3466 = vmul.f32 %v3044, %v3044
      %v3467 = vmul.f32 %v3049, %v3049
      %v3468 = vmul.f32 %v3052, %v3052
      %v3469 = vmul.f32 %v3057, %v3057
      %v3470 = vmul.f32 %v3060, %v3060
      %v3471 = vmul.f32 %v3065, %v3065
      %v3472 = vmul.f32 %v3068, %v3068
      %v3473 = vmul.f32 %v3073, %v3073
      %v3474 = vmul.f32 %v3076, %v3076
      %v3475 = vmul.f32 %v3081, %v3081
      %v3476 = vmul.f32 %v3084, %v3084
      %v3477 = vmul.f32 %v3089, %v3089
      %v3478 = vmul.f32 %v3092, %v3092
      %v3479 = vmul.f32 %v3097, %v3097
      %v3480 = vmul.f32 %v3100, %v3100
      %v3481 = vmul.f32 %v3105, %v3105
      %v3482 = vmul.f32 %v3108, %v3108
      %v3483 = vmul.f32 %v3113, %v3113
      %v3484 = vmul.f32 %v3116, %v3116
      %v3485 = vmul.f32 %v3121, %v3121
      %v3486 = vmul.f32 %v3124, %v3124
      %v3487 = vmul.f32 %v3129, %v3129
      %v3488 = vmul.f32 %v3132, %v3132
      %v3489 = vmul.f32 %v3137, %v3137
      %v3490 = vmul.f32 %v3140, %v3140
      %v3491 = vmul.f32 %v3145, %v3145
      %v3492 = vmul.f32 %v3148, %v3148
      %v3493 = vmul.f32 %v3153, %v3153
      %v3494 = vmul.f32 %v3156, %v3156
      %v3495 = vmul.f32 %v3161, %v3161
      %v3496 = vmul.f32 %v3164, %v3164
      %v3497 = vmul.f32 %v3169, %v3169
      %v3498 = vmul.f32 %v3172, %v3172
      %v3499 = vmul.f32 %v3177, %v3177
      %v3500 = vmul.f32 %v3180, %v3180
      %v3501 = vmul.f32 %v3185, %v3185
      %v3502 = vmul.f32 %v3188, %v3188
      %v3503 = vmul.f32 %v3193, %v3193
      %v3504 = vmul.f32 %v3196, %v3196
      %v3505 = vmul.f32 %v3201, %v3201
      %v3506 = vmul.f32 %v3204, %v3204
      %v3507 = vmul.f32 %v3209, %v3209
      %v3508 = vmul.f32 %v3212, %v3212
      %v3509 = vmul.f32 %v3217, %v3217
      %v3510 = vmul.f32 %v3220, %v3220
      %v3511 = vmul.f32 %v3225, %v3225
      %v3512 = vmul.f32 %v3228, %v3228
      %v3513 = vmul.f32 %v3233, %v3233
      %v3514 = vmul.f32 %v3236, %v3236
      %v3515 = vmul.f32 %v3241, %v3241
      %v3516 = vmul.f32 %v3244, %v3244
      %v3517 = vmul.f32 %v3249, %v3249
      %v3518 = vmul.f32 %v3252, %v3252
      %v3519 = vmul.f32 %v3257, %v3257
      %v3520 = vmul.f32 %v3260, %v3260
      %v3521 = vmul.f32 %v3265, %v3265
      %v3522 = vmul.f32 %v3268, %v3268
      %v3523 = vmul.f32 %v3273, %v3273
      %v3524 = vmul.f32 %v3276, %v3276
      %v3525 = vmul.f32 %v3281, %v3281
      %v3526 = vmul.f32 %v3284, %v3284
      %v3527 = vmul.f32 %v3289, %v3289
      %v3528 = vmul.f32 %v3292, %v3292
      %v3529 = vmul.f32 %v3297, %v3297
      %v3530 = vmul.f32 %v3300, %v3300
      %v3531 = vmul.f32 %v3305, %v3305
      %v3532 = vmul.f32 %v3308, %v3308
      %v3533 = vadd.f32 %v3461, %v3462
      %v3534 = vadd.f32 %v3533, %v3463
      %v3535 = vadd.f32 %v3534, %v3464
      %v3536 = vadd.f32 %v3535, %v3465
      %v3537 = vadd.f32 %v3536, %v3466
      %v3538 = vadd.f32 %v3537, %v3467
      %v3539 = vadd.f32 %v3538, %v3468
      %v3540 = vadd.f32 %v3539, %v3469
      %v3541 = vadd.f32 %v3540, %v3470
      %v3542 = vadd.f32 %v3541, %v3471
      %v3543 = vadd.f32 %v3542, %v3472
      %v3544 = vadd.f32 %v3543, %v3473
      %v3545 = vadd.f32 %v3544, %v3474
      %v3546 = vadd.f32 %v3545, %v3475
      %v3547 = vadd.f32 %v3546, %v3476
      %v3548 = vadd.f32 %v3547, %v3477
      %v3549 = vadd.f32 %v3548, %v3478
      %v3550 = vadd.f32 %v3549, %v3479
      %v3551 = vadd.f32 %v3550, %v3480
      %v3552 = vadd.f32 %v3551, %v3481
      %v3553 = vadd.f32 %v3552, %v3482
      %v3554 = vadd.f32 %v3553, %v3483
      %v3555 = vadd.f32 %v3554, %v3484
      %v3556 = vadd.f32 %v3555, %v3485
      %v3557 = vadd.f32 %v3556, %v3486
      %v3558 = vadd.f32 %v3557, %v3487
      %v3559 = vadd.f32 %v3558, %v3488
      %v3560 = vadd.f32 %v3559, %v3489
      %v3561 = vadd.f32 %v3560, %v3490
      %v3562 = vadd.f32 %v3561, %v3491
      %v3563 = vadd.f32 %v3562, %v3492
      %v3564 = vadd.f32 %v3563, %v3493
      %v3565 = vadd.f32 %v3564, %v3494
      %v3566 = vadd.f32 %v3565, %v3495
      %v3567 = vadd.f32 %v3566, %v3496
      %v3568 = vadd.f32 %v3567, %v3497
      %v3569 = vadd.f32 %v3568, %v3498
      %v3570 = vadd.f32 %v3569, %v3499
      %v3571 = vadd.f32 %v3570, %v3500
      %v3572 = vadd.f32 %v3571, %v3501
      %v3573 = vadd.f32 %v3572, %v3502
      %v3574 = vadd.f32 %v3573, %v3503
      %v3575 = vadd.f32 %v3574, %v3504
      %v3576 = vadd.f32 %v3575, %v3505
      %v3577 = vadd.f32 %v3576, %v3506
      %v3578 = vadd.f32 %v3577, %v3507
      %v3579 = vadd.f32 %v3578, %v3508
      %v3580 = vadd.f32 %v3579, %v3509
      %v3581 = vadd.f32 %v3580, %v3510
      %v3582 = vadd.f32 %v3581, %v3511
      %v3583 = vadd.f32 %v3582, %v3512
      %v3584 = vadd.f32 %v3583, %v3513
      %v3585 = vadd.f32 %v3584, %v3514
      %v3586 = vadd.f32 %v3585, %v3515
      %v3587 = vadd.f32 %v3586, %v3516
      %v3588 = vadd.f32 %v3587, %v3517
      %v3589 = vadd.f32 %v3588, %v3518
      %v3590 = vadd.f32 %v3589, %v3519
      %v3591 = vadd.f32 %v3590, %v3520
      %v3592 = vadd.f32 %v3591, %v3521
      %v3593 = vadd.f32 %v3592, %v3522
      %v3594 = vadd.f32 %v3593, %v3523
      %v3595 = vadd.f32 %v3594, %v3524
      %v3596 = vadd.f32 %v3595, %v3525
      %v3597 = vadd.f32 %v3596, %v3526
      %v3598 = vadd.f32 %v3597, %v3527
      %v3599 = vadd.f32 %v3598, %v3528
      %v3600 = vadd.f32 %v3599, %v3529
      %v3601 = vadd.f32 %v3600, %v3530
      %v3602 = vadd.f32 %v3601, %v3531
      %v3603 = vadd.f32 %v3602, %v3532
      %v3604 = vrot.slane %v3603, 4
      %v3605 = vadd.f32 %v3603, %v3604
      %v3606 = vrot.slane %v3605, 2
      %v3607 = vadd.f32 %v3605, %v3606
      %v3608 = vrot.slane %v3607, 1
      %v3609 = vadd.f32 %v3607, %v3608
      %vm3610 = vcmask 1040384
      %v3611 = vsel %vm3610, %v3460, %v3609
      %v3612 = vadd.f32 %v3383, %v3611
      %3613 = vst [vmem:[%s3] sm:$0x3] %v3612
      %p3614 = scmp.lt.s32.totalorder %s15, 1
      %s3615 = scalar_select %p3614, %s15, 1
      %s3616 = smul.addr %s3615, 72
      %s3617 = smul.addr %s3616, 8
      %s3618 = scalar_lea.vmem %s2, %s3617
      // Predicated region
      $region33: #{bottleneck_forward.10} parent=27 // pred_check
        %p3619 = pneg %p80
      $region34: #{bottleneck_forward.10} parent=27 // pred_check_branch
        %3621 = sbr.rel (%p3619) target = $region36
      $region35: #{bottleneck_forward.10} parent=27 // pred_region
        _
      $region36: #{bottleneck_forward.10} parent=27 // pred_fallthru
        _
      // Predicated region
      $region37: #{bottleneck_forward.10} parent=27 // pred_check
        %p3622 = pneg %p101
      $region38: #{bottleneck_forward.10} parent=27 // pred_check_branch
        %3624 = sbr.rel (%p3622) target = $region40
      $region39: #{bottleneck_forward.10} parent=27 // pred_region
        _
      $region40: #{bottleneck_forward.10} parent=27 // pred_fallthru
        _
      // Predicated region
      $region41: #{bottleneck_forward.10} parent=27 // pred_check
        %p3625 = pneg %p101
      $region42: #{bottleneck_forward.10} parent=27 // pred_check_branch
        %3627 = sbr.rel (%p3625) target = $region44
      $region43: #{bottleneck_forward.10} parent=27 // pred_region
        _
      $region44: #{bottleneck_forward.10} parent=27 // pred_fallthru
        _
    $region28: #{bottleneck_forward.10} parent=5 // pred_fallthru
      _
    %p3628 = scmp.le.s32.totalorder 2, %s10
    // Predicated region
    $region45: #{bottleneck_forward.10} parent=5 // pred_check
      %p3629 = pneg %p3628
    $region46: #{bottleneck_forward.10} parent=5 // pred_check_branch
      %3631 = sbr.rel (%p3629) target = $region48
    $region47: #{bottleneck_forward.10} parent=5 // pred_region
      %s3632 = ssub.s32 %s10, 2
      // Predicated region
      $region49: #{bottleneck_forward.10} parent=47 // pred_check
        %p3633 = pneg %p86
      $region50: #{bottleneck_forward.10} parent=47 // pred_check_branch
        %3635 = sbr.rel (%p3633) target = $region52
      $region51: #{bottleneck_forward.10} parent=47 // pred_region
        %p3636 = scmp.lt.s32.totalorder %s16, 1
        %s3637 = scalar_select %p3636, %s16, 1
        %s3638 = smul.addr %s3637, 72
        %s3639 = smul.addr %s3638, 8
        %s3640 = scalar_lea.vmem %s2, %s3639
      $region52: #{bottleneck_forward.10} parent=47 // pred_fallthru
        _
    $region48: #{bottleneck_forward.10} parent=5 // pred_fallthru
      _
  $region6: #{bottleneck_forward.10} parent=0 // loop_footer
    %s14 = sadd.s32 1, %s10
  $region7: #{bottleneck_forward.10} parent=0 // loop_footer_branch
    %9 = sbr.rel target = $region3
  $region8: #{bottleneck_forward.10} parent=0 // loop_exit
    _

</llo_original>
